<compile_context>
chip_gen: v5e
topology: v5e:2x2
jax: 0.10.0
libtpu: 0.0.40
codegen_flags: <defaults>
</compile_context>

<pallas_src>
import jax
import jax.numpy as jnp
from jax.experimental import pallas as pl
from jax.experimental.pallas import tpu as pltpu

VMEM_LIMIT = 32 * 1024 * 1024   # scoped-VMEM budget, safe on v5e/v6e (128 MiB) and v7x (64 MiB)
MAX_TILE_ROWS = 512             # rows (= sequences_per_tile * L) per grid step (MXU M dim)
MIN_TILE_ROWS = 256             # only split into >=2 grid steps if M stays >= this


# ----------------------------------------------------------------------------
# Fused forward kernel
# ----------------------------------------------------------------------------
def _make_fused_kernel(L):
    def kernel(x_ref, mn_ref,
               w1a, a1a, w1b, a1b, wu1, au1,
               w2a, a2a, w2b, a2b, wu2, au2,
               w3a, a3a, w3b, a3b, wh, bh,
               o_ref):
        x = x_ref[...]                                       # (R, 128) bf16, channels on lanes
        R = x.shape[0]

        # Per-sequence boundary masks from the tile-local row index.  Tiles hold whole
        # sequences, so row % L is the position inside its sequence (no DMA stream).
        pos = jax.lax.broadcasted_iota(jnp.int32, (R, 1), 0) % L
        nf = (pos != 0).astype(jnp.bfloat16)        # row has a previous in-sequence row
        nl = (pos != L - 1).astype(jnp.bfloat16)    # row has a next in-sequence row

        def conv3(v, w_ref, a_ref, relu):
            """Conv1d(k=3, pad=1) + folded-BN/bias affine as ONE im2col matmul.

            v: (R, Cin) bf16.  w_ref: (3*Cin, Cout) bf16 with row blocks ordered
            [tap r-1 | tap r | tap r+1] (tap k block == torch weight[:, :, k].T).
            The +/-1-row neighbours are zero-padded bf16 row shifts, masked at
            sequence boundaries == Conv1d's per-sequence zero padding.
            """
            cin = v.shape[1]
            zrow = jnp.zeros((1, cin), v.dtype)
            vm1 = jnp.concatenate([zrow, v[:-1, :]], axis=0) * nf   # v[r-1]
            vp1 = jnp.concatenate([v[1:, :], zrow], axis=0) * nl    # v[r+1]
            lhs = jnp.concatenate([vm1, v, vp1], axis=1)            # (R, 3*Cin) im2col
            y = jnp.dot(lhs, w_ref[...], preferred_element_type=jnp.float32)
            y = y * a_ref[0:1, :] + a_ref[1:2, :]
            return jnp.maximum(y, 0.0) if relu else y

        def resblock(v, wa, aa, wb, ab):
            h = conv3(v, wa, aa, relu=True).astype(jnp.bfloat16)
            return conv3(h, wb, ab, relu=False) + v.astype(jnp.float32)   # f32 residual add

        h = resblock(x, w1a, a1a, w1b, a1b).astype(jnp.bfloat16)          # (R, 128)
        h = conv3(h, wu1, au1, relu=False).astype(jnp.bfloat16)           # (R, 256)
        h = resblock(h, w2a, a2a, w2b, a2b).astype(jnp.bfloat16)          # (R, 256)
        h = conv3(h, wu2, au2, relu=False).astype(jnp.bfloat16)           # (R, 512)
        y = resblock(h, w3a, a3a, w3b, a3b)                               # (R, 512) f32

        # 1x1 head (Conv1d(512 -> 1)) + mask weighting, VPU mul + lane reduce (N=1 would
        # waste an MXU pass).  Emit per-position weighted logits; the tiny O(B*L)
        # per-sequence sum + sigmoid runs outside the kernel.
        z = jnp.sum(y * wh[...], axis=1, keepdims=True) + bh[...]         # (R, 1) f32
        o_ref[...] = z * mn_ref[...]

    return kernel


# ----------------------------------------------------------------------------
# Parameter folding / host-side helpers
# ----------------------------------------------------------------------------
def _bn_affine(conv_bias, gamma, beta, mean, var, eps=1e-5):
    """Fold Conv1d bias + eval-mode BatchNorm1d into per-channel (scale, shift)."""
    s = gamma / jnp.sqrt(var + eps)
    return s, (conv_bias - mean) * s + beta


def _affine(scale, shift):
    return jnp.stack([scale, shift]).astype(jnp.float32)          # (2, C)


def _im2col_weight(w):
    """(3, Cin, Cout) conv taps -> (3*Cin, Cout) bf16 im2col weight."""
    k, cin, cout = w.shape
    return w.reshape(k * cin, cout).astype(jnp.bfloat16)


def _fold_resblock(p):
    a1 = _affine(*_bn_affine(p['b1'], p['bn1_gamma'], p['bn1_beta'],
                             p['bn1_mean'], p['bn1_var']))
    a2 = _affine(*_bn_affine(p['b2'], p['bn2_gamma'], p['bn2_beta'],
                             p['bn2_mean'], p['bn2_var']))
    return [_im2col_weight(p['w1']), a1, _im2col_weight(p['w2']), a2]


def _choose_seqs_per_tile(B, L):
    """Whole sequences per grid step: largest divisor of B whose row count fits the
    tile budget and the (8, 128) block rule; prefer >=2 grid steps (v7x megacore)
    when that keeps M >= MIN_TILE_ROWS."""
    cand = [bt for bt in range(1, B + 1)
            if B % bt == 0 and bt * L <= MAX_TILE_ROWS
            and (bt == B or (bt * L) % 8 == 0)]
    if not cand:
        # TODO(synk): a single sequence longer than the tile budget needs L-tiling with
        # a 1-row halo exchange; fall back to one whole-array block for now.
        return B
    bt = max(cand)
    if B // bt < 2:
        multi = [c for c in cand if B // c >= 2 and c * L >= MIN_TILE_ROWS]
        if multi:
            bt = max(multi)
    return bt


# ----------------------------------------------------------------------------
# pallas_call wrapper + full forward pass
# ----------------------------------------------------------------------------
def fused_forward(x, mn, weights, *, L):
    """x: (B*L, 128) bf16, mn: (B*L, 1) f32 normalised pooling mask.
    Returns (B*L, 1) f32 mask-weighted per-position logits."""
    BL, Cin = x.shape
    B = BL // L
    bt = _choose_seqs_per_tile(B, L)
    R = bt * L
    # TODO(synk): single-buffer the VMEM-resident weights (pl.Buffered(1) or one-time DMA
    # to scratch); constant index_maps already avoid re-fetching but keep two buffers.
    w_specs = [pl.BlockSpec(w.shape, lambda i: (0, 0)) for w in weights]
    return pl.pallas_call(
        _make_fused_kernel(L),
        grid=(B // bt,),
        in_specs=[pl.BlockSpec((R, Cin), lambda i: (i, 0)),
                  pl.BlockSpec((R, 1), lambda i: (i, 0))] + w_specs,
        out_specs=pl.BlockSpec((R, 1), lambda i: (i, 0)),
        out_shape=jax.ShapeDtypeStruct((BL, 1), jnp.float32),
        compiler_params=pltpu.CompilerParams(
            dimension_semantics=("parallel",),
            vmem_limit_bytes=VMEM_LIMIT),
    )(x, mn, *weights)


def cnn_forward(params, inputs, mask):
    B, L = inputs.shape
    # TODO(synk): the embedding gather stays in plain JAX (jnp.take); a scalar-prefetch
    # row-gather kernel only pays off for an HBM-resident vocabulary.
    x = jnp.take(params['emb'], inputs, axis=0)                    # (B, L, 128) f32
    x = x.astype(jnp.bfloat16).reshape(B * L, -1)                  # rows, channels->lanes

    m = mask.astype(jnp.float32)
    den = jnp.maximum(jnp.sum(m, axis=1, keepdims=True), 1e-9)
    mn = (m / den).reshape(B * L, 1)                               # (B*L, 1) pooling weights

    weights = (_fold_resblock(params['rb1'])
               + [_im2col_weight(params['up1_w']),
                  _affine(jnp.ones_like(params['up1_b']), params['up1_b'])]
               + _fold_resblock(params['rb2'])
               + [_im2col_weight(params['up2_w']),
                  _affine(jnp.ones_like(params['up2_b']), params['up2_b'])]
               + _fold_resblock(params['rb3'])
               + [params['lin_w'].reshape(1, -1).astype(jnp.float32),   # (1, 512) head w
                  params['lin_b'].reshape(1, 1).astype(jnp.float32)])   # (1, 1)  head b

    zw = fused_forward(x, mn, weights, L=L)                        # (B*L, 1)
    return jax.nn.sigmoid(jnp.sum(zw.reshape(B, L), axis=1))       # (B,)


# ----------------------------------------------------------------------------
# Plain-JAX f32 reference (for self-checking the fused kernel)
# ----------------------------------------------------------------------------
_HI = jax.lax.Precision.HIGHEST


def _ref_conv(x, w, scale, shift, relu=False):
    L = x.shape[1]
    xp = jnp.pad(x, ((0, 0), (1, 1), (0, 0)))
    y = sum(jnp.einsum('blc,cd->bld', xp[:, k:k + L, :], w[k], precision=_HI)
            for k in range(3))
    y = y * scale + shift
    return jnp.maximum(y, 0.0) if relu else y


def reference_forward(params, inputs, mask):
    def rb(x, p):
        s1, h1 = _bn_affine(p['b1'], p['bn1_gamma'], p['bn1_beta'], p['bn1_mean'], p['bn1_var'])
        s2, h2 = _bn_affine(p['b2'], p['bn2_gamma'], p['bn2_beta'], p['bn2_mean'], p['bn2_var'])
        h = _ref_conv(x, p['w1'], s1, h1, relu=True)
        return _ref_conv(h, p['w2'], s2, h2) + x

    x = jnp.take(params['emb'], inputs, axis=0)
    x = rb(x, params['rb1'])
    x = _ref_conv(x, params['up1_w'], jnp.ones_like(params['up1_b']), params['up1_b'])
    x = rb(x, params['rb2'])
    x = _ref_conv(x, params['up2_w'], jnp.ones_like(params['up2_b']), params['up2_b'])
    x = rb(x, params['rb3'])
    z = jnp.einsum('blc,c->bl', x, params['lin_w'], precision=_HI) + params['lin_b'][0]
    m = mask.astype(jnp.float32)
    num = jnp.sum(z * m, axis=1)
    den = jnp.maximum(jnp.sum(m, axis=1), 1e-9)
    return jax.nn.sigmoid(num / den)


# ----------------------------------------------------------------------------
# Deterministic synthetic parameters (shapes per the module __init__)
# ----------------------------------------------------------------------------
def init_params(key, vocab_size, emb_dim=128):
    keys = iter(jax.random.split(key, 64))
    nxt = lambda: next(keys)

    def conv_w(cin, cout, k=3):
        return jax.random.normal(nxt(), (k, cin, cout), jnp.float32) * (1.0 / (k * cin) ** 0.5)

    def vec(c, base=0.0, scale=0.02):
        return base + jax.random.normal(nxt(), (c,), jnp.float32) * scale

    def resblock(cin, cout):
        return dict(
            w1=conv_w(cin, cout), b1=vec(cout),
            bn1_gamma=vec(cout, 1.0), bn1_beta=vec(cout),
            bn1_mean=vec(cout), bn1_var=1.0 + jnp.abs(vec(cout, 0.0, 0.1)),
            w2=conv_w(cout, cout), b2=vec(cout),
            bn2_gamma=vec(cout, 1.0), bn2_beta=vec(cout),
            bn2_mean=vec(cout), bn2_var=1.0 + jnp.abs(vec(cout, 0.0, 0.1)),
        )

    return dict(
        emb=jax.random.normal(nxt(), (vocab_size, emb_dim), jnp.float32),
        rb1=resblock(128, 128),
        up1_w=conv_w(128, 256), up1_b=vec(256),
        rb2=resblock(256, 256),
        up2_w=conv_w(256, 512), up2_b=vec(512),
        rb3=resblock(512, 512),
        lin_w=jax.random.normal(nxt(), (512,), jnp.float32) * 0.02,
        lin_b=jax.random.normal(nxt(), (1,), jnp.float32) * 0.1,
    )


# ----------------------------------------------------------------------------
if __name__ == "__main__":
    B, L, VOCAB = 2, 8, 50

    key = jax.random.PRNGKey(0)
    k_param, k_tok = jax.random.split(key, 2)

    params = init_params(k_param, VOCAB)
    inputs = jax.random.randint(k_tok, (B, L), 0, VOCAB, dtype=jnp.int32)
    # deterministic attention mask: row 0 fully valid, row 1 valid length 5
    mask = (jnp.arange(L)[None, :] < jnp.array([[L], [5]])).astype(jnp.float32)

    out = jax.jit(cnn_forward)(params, inputs, mask)
    out = jax.block_until_ready(out)
    assert out.shape == (B,) and out.dtype == jnp.float32

    ref = reference_forward(params, inputs, mask)
    assert float(jnp.max(jnp.abs(out - ref))) < 0.1, "forward mismatch vs. reference"

    print("KERNEL_OK")
</pallas_src>

<mosaic_0001>
module attributes {stable_mosaic.version = 11 : i64} {
  func.func @kernel(%arg0: i32, %arg1: memref<16x128xbf16, #tpu.memory_space<vmem>>, %arg2: memref<16x1xf32, #tpu.memory_space<vmem>>, %arg3: memref<384x128xbf16, #tpu.memory_space<vmem>>, %arg4: memref<2x128xf32, #tpu.memory_space<vmem>>, %arg5: memref<384x128xbf16, #tpu.memory_space<vmem>>, %arg6: memref<2x128xf32, #tpu.memory_space<vmem>>, %arg7: memref<384x256xbf16, #tpu.memory_space<vmem>>, %arg8: memref<2x256xf32, #tpu.memory_space<vmem>>, %arg9: memref<768x256xbf16, #tpu.memory_space<vmem>>, %arg10: memref<2x256xf32, #tpu.memory_space<vmem>>, %arg11: memref<768x256xbf16, #tpu.memory_space<vmem>>, %arg12: memref<2x256xf32, #tpu.memory_space<vmem>>, %arg13: memref<768x512xbf16, #tpu.memory_space<vmem>>, %arg14: memref<2x512xf32, #tpu.memory_space<vmem>>, %arg15: memref<1536x512xbf16, #tpu.memory_space<vmem>>, %arg16: memref<2x512xf32, #tpu.memory_space<vmem>>, %arg17: memref<1536x512xbf16, #tpu.memory_space<vmem>>, %arg18: memref<2x512xf32, #tpu.memory_space<vmem>>, %arg19: memref<1x512xf32, #tpu.memory_space<vmem>>, %arg20: memref<1x1xf32, #tpu.memory_space<vmem>>, %arg21: memref<16x1xf32, #tpu.memory_space<vmem>>) attributes {dimension_semantics = [#tpu.dimension_semantics<parallel>], iteration_bounds = array<i64: 1>, scalar_prefetch = 0 : i64, scratch_operands = 0 : i64, tpu.core_type = #tpu.core_type<tc>, window_params = [{transform_indices = @transform_0, window_bounds = array<i64: 16, 128>}, {transform_indices = @transform_1, window_bounds = array<i64: 16, 1>}, {pipeline_mode = #tpu.pipeline_mode<synchronous>, transform_indices = @transform_2, window_bounds = array<i64: 384, 128>}, {pipeline_mode = #tpu.pipeline_mode<synchronous>, transform_indices = @transform_3, window_bounds = array<i64: 2, 128>}, {pipeline_mode = #tpu.pipeline_mode<synchronous>, transform_indices = @transform_4, window_bounds = array<i64: 384, 128>}, {pipeline_mode = #tpu.pipeline_mode<synchronous>, transform_indices = @transform_5, window_bounds = array<i64: 2, 128>}, {pipeline_mode = #tpu.pipeline_mode<synchronous>, transform_indices = @transform_6, window_bounds = array<i64: 384, 256>}, {pipeline_mode = #tpu.pipeline_mode<synchronous>, transform_indices = @transform_7, window_bounds = array<i64: 2, 256>}, {pipeline_mode = #tpu.pipeline_mode<synchronous>, transform_indices = @transform_8, window_bounds = array<i64: 768, 256>}, {pipeline_mode = #tpu.pipeline_mode<synchronous>, transform_indices = @transform_9, window_bounds = array<i64: 2, 256>}, {pipeline_mode = #tpu.pipeline_mode<synchronous>, transform_indices = @transform_10, window_bounds = array<i64: 768, 256>}, {pipeline_mode = #tpu.pipeline_mode<synchronous>, transform_indices = @transform_11, window_bounds = array<i64: 2, 256>}, {pipeline_mode = #tpu.pipeline_mode<synchronous>, transform_indices = @transform_12, window_bounds = array<i64: 768, 512>}, {pipeline_mode = #tpu.pipeline_mode<synchronous>, transform_indices = @transform_13, window_bounds = array<i64: 2, 512>}, {pipeline_mode = #tpu.pipeline_mode<synchronous>, transform_indices = @transform_14, window_bounds = array<i64: 1536, 512>}, {pipeline_mode = #tpu.pipeline_mode<synchronous>, transform_indices = @transform_15, window_bounds = array<i64: 2, 512>}, {pipeline_mode = #tpu.pipeline_mode<synchronous>, transform_indices = @transform_16, window_bounds = array<i64: 1536, 512>}, {pipeline_mode = #tpu.pipeline_mode<synchronous>, transform_indices = @transform_17, window_bounds = array<i64: 2, 512>}, {pipeline_mode = #tpu.pipeline_mode<synchronous>, transform_indices = @transform_18, window_bounds = array<i64: 1, 512>}, {pipeline_mode = #tpu.pipeline_mode<synchronous>, transform_indices = @transform_19, window_bounds = array<i64: 1, 1>}, {transform_indices = @transform_20, window_bounds = array<i64: 16, 1>}]} {
    %c0 = arith.constant 0 : index
    %c0_0 = arith.constant 0 : index
    %0 = vector.load %arg1[%c0, %c0_0] : memref<16x128xbf16, #tpu.memory_space<vmem>>, vector<16x128xbf16>
    %1 = tpu.iota {dimensions = array<i32: 0>} : vector<16x1xi32>
    %c8_i32 = arith.constant 8 : i32
    %c0_i32 = arith.constant 0 : i32
    %2 = arith.cmpi eq, %c8_i32, %c0_i32 : i32
    %c1_i32 = arith.constant 1 : i32
    %3 = arith.select %2, %c1_i32, %c8_i32 : i32
    %4 = vector.broadcast %3 : i32 to vector<16x1xi32>
    %5 = arith.remsi %1, %4 : vector<16x1xi32>
    %c0_i32_1 = arith.constant 0 : i32
    %6 = vector.broadcast %c0_i32_1 : i32 to vector<16x1xi32>
    %7 = arith.cmpi ne, %5, %6 : vector<16x1xi32>
    %c0_i32_2 = arith.constant 0 : i32
    %8 = vector.broadcast %c0_i32_2 : i32 to vector<16x1xi32>
    %9 = arith.cmpi slt, %5, %8 : vector<16x1xi32>
    %c0_i32_3 = arith.constant 0 : i32
    %10 = arith.cmpi slt, %3, %c0_i32_3 : i32
    %11 = vector.broadcast %10 : i1 to vector<16x1xi1>
    %12 = vector.broadcast %11 : vector<16x1xi1> to vector<16x1xi1>
    %13 = arith.xori %9, %12 : vector<16x1xi1>
    %14 = arith.andi %13, %7 : vector<16x1xi1>
    %15 = vector.broadcast %3 : i32 to vector<16x1xi32>
    %16 = arith.addi %5, %15 : vector<16x1xi32>
    %17 = arith.select %14, %16, %5 : vector<16x1xi1>, vector<16x1xi32>
    %c0_i32_4 = arith.constant 0 : i32
    %18 = vector.broadcast %c0_i32_4 : i32 to vector<16x1xi32>
    %19 = arith.cmpi ne, %17, %18 : vector<16x1xi32>
    %20 = arith.extui %19 : vector<16x1xi1> to vector<16x1xi32>
    %21 = arith.sitofp %20 : vector<16x1xi32> to vector<16x1xf32>
    %22 = arith.truncf %21 : vector<16x1xf32> to vector<16x1xbf16>
    %c7_i32 = arith.constant 7 : i32
    %23 = vector.broadcast %c7_i32 : i32 to vector<16x1xi32>
    %24 = arith.cmpi ne, %17, %23 : vector<16x1xi32>
    %25 = arith.extui %24 : vector<16x1xi1> to vector<16x1xi32>
    %26 = arith.sitofp %25 : vector<16x1xi32> to vector<16x1xf32>
    %27 = arith.truncf %26 : vector<16x1xf32> to vector<16x1xbf16>
    %cst = arith.constant 0.000000e+00 : bf16
    %28 = vector.broadcast %cst : bf16 to vector<1x128xbf16>
    %29 = vector.extract_strided_slice %0 {offsets = [0, 0], sizes = [15, 128], strides = [1, 1]} : vector<16x128xbf16> to vector<15x128xbf16>
    %30 = tpu.concatenate %28, %29 in 0 : vector<1x128xbf16>, vector<15x128xbf16> -> vector<16x128xbf16>
    %31 = vector.broadcast %22 : vector<16x1xbf16> to vector<16x128xbf16>
    %32 = arith.mulf %30, %31 : vector<16x128xbf16>
    %33 = vector.extract_strided_slice %0 {offsets = [1, 0], sizes = [15, 128], strides = [1, 1]} : vector<16x128xbf16> to vector<15x128xbf16>
    %34 = tpu.concatenate %33, %28 in 0 : vector<15x128xbf16>, vector<1x128xbf16> -> vector<16x128xbf16>
    %35 = vector.broadcast %27 : vector<16x1xbf16> to vector<16x128xbf16>
    %36 = arith.mulf %34, %35 : vector<16x128xbf16>
    %37 = tpu.concatenate %32, %0, %36 in 1 : vector<16x128xbf16>, vector<16x128xbf16>, vector<16x128xbf16> -> vector<16x384xbf16>
    %c0_5 = arith.constant 0 : index
    %c0_6 = arith.constant 0 : index
    %38 = vector.load %arg3[%c0_5, %c0_6] : memref<384x128xbf16, #tpu.memory_space<vmem>>, vector<384x128xbf16>
    %cst_7 = arith.constant dense<0.000000e+00> : vector<16x128xf32>
    %39 = tpu.matmul %37, %38, %cst_7 {dimension_numbers = #tpu.dot_dimension_numbers<[1], [0], [0], [1], [0, 0, 1, 1], [], []>} : vector<16x384xbf16>, vector<384x128xbf16>, vector<16x128xf32> -> vector<16x128xf32>
    %c0_8 = arith.constant 0 : index
    %c0_9 = arith.constant 0 : index
    %40 = vector.load %arg4[%c0_8, %c0_9] : memref<2x128xf32, #tpu.memory_space<vmem>>, vector<1x128xf32>
    %41 = vector.broadcast %40 : vector<1x128xf32> to vector<16x128xf32>
    %42 = arith.mulf %39, %41 : vector<16x128xf32>
    %c1 = arith.constant 1 : index
    %c0_10 = arith.constant 0 : index
    %43 = vector.load %arg4[%c1, %c0_10] : memref<2x128xf32, #tpu.memory_space<vmem>>, vector<1x128xf32>
    %44 = vector.broadcast %43 : vector<1x128xf32> to vector<16x128xf32>
    %45 = arith.addf %42, %44 : vector<16x128xf32>
    %cst_11 = arith.constant 0.000000e+00 : f32
    %46 = vector.broadcast %cst_11 : f32 to vector<16x128xf32>
    %47 = arith.maximumf %45, %46 : vector<16x128xf32>
    %48 = arith.truncf %47 : vector<16x128xf32> to vector<16x128xbf16>
    %cst_12 = arith.constant 0.000000e+00 : bf16
    %49 = vector.broadcast %cst_12 : bf16 to vector<1x128xbf16>
    %50 = vector.extract_strided_slice %48 {offsets = [0, 0], sizes = [15, 128], strides = [1, 1]} : vector<16x128xbf16> to vector<15x128xbf16>
    %51 = tpu.concatenate %49, %50 in 0 : vector<1x128xbf16>, vector<15x128xbf16> -> vector<16x128xbf16>
    %52 = vector.broadcast %22 : vector<16x1xbf16> to vector<16x128xbf16>
    %53 = arith.mulf %51, %52 : vector<16x128xbf16>
    %54 = vector.extract_strided_slice %48 {offsets = [1, 0], sizes = [15, 128], strides = [1, 1]} : vector<16x128xbf16> to vector<15x128xbf16>
    %55 = tpu.concatenate %54, %49 in 0 : vector<15x128xbf16>, vector<1x128xbf16> -> vector<16x128xbf16>
    %56 = vector.broadcast %27 : vector<16x1xbf16> to vector<16x128xbf16>
    %57 = arith.mulf %55, %56 : vector<16x128xbf16>
    %58 = tpu.concatenate %53, %48, %57 in 1 : vector<16x128xbf16>, vector<16x128xbf16>, vector<16x128xbf16> -> vector<16x384xbf16>
    %c0_13 = arith.constant 0 : index
    %c0_14 = arith.constant 0 : index
    %59 = vector.load %arg5[%c0_13, %c0_14] : memref<384x128xbf16, #tpu.memory_space<vmem>>, vector<384x128xbf16>
    %cst_15 = arith.constant dense<0.000000e+00> : vector<16x128xf32>
    %60 = tpu.matmul %58, %59, %cst_15 {dimension_numbers = #tpu.dot_dimension_numbers<[1], [0], [0], [1], [0, 0, 1, 1], [], []>} : vector<16x384xbf16>, vector<384x128xbf16>, vector<16x128xf32> -> vector<16x128xf32>
    %c0_16 = arith.constant 0 : index
    %c0_17 = arith.constant 0 : index
    %61 = vector.load %arg6[%c0_16, %c0_17] : memref<2x128xf32, #tpu.memory_space<vmem>>, vector<1x128xf32>
    %62 = vector.broadcast %61 : vector<1x128xf32> to vector<16x128xf32>
    %63 = arith.mulf %60, %62 : vector<16x128xf32>
    %c1_18 = arith.constant 1 : index
    %c0_19 = arith.constant 0 : index
    %64 = vector.load %arg6[%c1_18, %c0_19] : memref<2x128xf32, #tpu.memory_space<vmem>>, vector<1x128xf32>
    %65 = vector.broadcast %64 : vector<1x128xf32> to vector<16x128xf32>
    %66 = arith.addf %63, %65 : vector<16x128xf32>
    %67 = arith.extf %0 : vector<16x128xbf16> to vector<16x128xf32>
    %68 = arith.addf %66, %67 : vector<16x128xf32>
    %69 = arith.truncf %68 : vector<16x128xf32> to vector<16x128xbf16>
    %cst_20 = arith.constant 0.000000e+00 : bf16
    %70 = vector.broadcast %cst_20 : bf16 to vector<1x128xbf16>
    %71 = vector.extract_strided_slice %69 {offsets = [0, 0], sizes = [15, 128], strides = [1, 1]} : vector<16x128xbf16> to vector<15x128xbf16>
    %72 = tpu.concatenate %70, %71 in 0 : vector<1x128xbf16>, vector<15x128xbf16> -> vector<16x128xbf16>
    %73 = vector.broadcast %22 : vector<16x1xbf16> to vector<16x128xbf16>
    %74 = arith.mulf %72, %73 : vector<16x128xbf16>
    %75 = vector.extract_strided_slice %69 {offsets = [1, 0], sizes = [15, 128], strides = [1, 1]} : vector<16x128xbf16> to vector<15x128xbf16>
    %76 = tpu.concatenate %75, %70 in 0 : vector<15x128xbf16>, vector<1x128xbf16> -> vector<16x128xbf16>
    %77 = vector.broadcast %27 : vector<16x1xbf16> to vector<16x128xbf16>
    %78 = arith.mulf %76, %77 : vector<16x128xbf16>
    %79 = tpu.concatenate %74, %69, %78 in 1 : vector<16x128xbf16>, vector<16x128xbf16>, vector<16x128xbf16> -> vector<16x384xbf16>
    %c0_21 = arith.constant 0 : index
    %c0_22 = arith.constant 0 : index
    %80 = vector.load %arg7[%c0_21, %c0_22] : memref<384x256xbf16, #tpu.memory_space<vmem>>, vector<384x256xbf16>
    %cst_23 = arith.constant dense<0.000000e+00> : vector<16x256xf32>
    %81 = tpu.matmul %79, %80, %cst_23 {dimension_numbers = #tpu.dot_dimension_numbers<[1], [0], [0], [1], [0, 0, 1, 1], [], []>} : vector<16x384xbf16>, vector<384x256xbf16>, vector<16x256xf32> -> vector<16x256xf32>
    %c0_24 = arith.constant 0 : index
    %c0_25 = arith.constant 0 : index
    %82 = vector.load %arg8[%c0_24, %c0_25] : memref<2x256xf32, #tpu.memory_space<vmem>>, vector<1x256xf32>
    %83 = vector.broadcast %82 : vector<1x256xf32> to vector<16x256xf32>
    %84 = arith.mulf %81, %83 : vector<16x256xf32>
    %c1_26 = arith.constant 1 : index
    %c0_27 = arith.constant 0 : index
    %85 = vector.load %arg8[%c1_26, %c0_27] : memref<2x256xf32, #tpu.memory_space<vmem>>, vector<1x256xf32>
    %86 = vector.broadcast %85 : vector<1x256xf32> to vector<16x256xf32>
    %87 = arith.addf %84, %86 : vector<16x256xf32>
    %88 = arith.truncf %87 : vector<16x256xf32> to vector<16x256xbf16>
    %cst_28 = arith.constant 0.000000e+00 : bf16
    %89 = vector.broadcast %cst_28 : bf16 to vector<1x256xbf16>
    %90 = vector.extract_strided_slice %88 {offsets = [0, 0], sizes = [15, 256], strides = [1, 1]} : vector<16x256xbf16> to vector<15x256xbf16>
    %91 = tpu.concatenate %89, %90 in 0 : vector<1x256xbf16>, vector<15x256xbf16> -> vector<16x256xbf16>
    %92 = vector.broadcast %22 : vector<16x1xbf16> to vector<16x256xbf16>
    %93 = arith.mulf %91, %92 : vector<16x256xbf16>
    %94 = vector.extract_strided_slice %88 {offsets = [1, 0], sizes = [15, 256], strides = [1, 1]} : vector<16x256xbf16> to vector<15x256xbf16>
    %95 = tpu.concatenate %94, %89 in 0 : vector<15x256xbf16>, vector<1x256xbf16> -> vector<16x256xbf16>
    %96 = vector.broadcast %27 : vector<16x1xbf16> to vector<16x256xbf16>
    %97 = arith.mulf %95, %96 : vector<16x256xbf16>
    %98 = tpu.concatenate %93, %88, %97 in 1 : vector<16x256xbf16>, vector<16x256xbf16>, vector<16x256xbf16> -> vector<16x768xbf16>
    %c0_29 = arith.constant 0 : index
    %c0_30 = arith.constant 0 : index
    %99 = vector.load %arg9[%c0_29, %c0_30] : memref<768x256xbf16, #tpu.memory_space<vmem>>, vector<768x256xbf16>
    %cst_31 = arith.constant dense<0.000000e+00> : vector<16x256xf32>
    %100 = tpu.matmul %98, %99, %cst_31 {dimension_numbers = #tpu.dot_dimension_numbers<[1], [0], [0], [1], [0, 0, 1, 1], [], []>} : vector<16x768xbf16>, vector<768x256xbf16>, vector<16x256xf32> -> vector<16x256xf32>
    %c0_32 = arith.constant 0 : index
    %c0_33 = arith.constant 0 : index
    %101 = vector.load %arg10[%c0_32, %c0_33] : memref<2x256xf32, #tpu.memory_space<vmem>>, vector<1x256xf32>
    %102 = vector.broadcast %101 : vector<1x256xf32> to vector<16x256xf32>
    %103 = arith.mulf %100, %102 : vector<16x256xf32>
    %c1_34 = arith.constant 1 : index
    %c0_35 = arith.constant 0 : index
    %104 = vector.load %arg10[%c1_34, %c0_35] : memref<2x256xf32, #tpu.memory_space<vmem>>, vector<1x256xf32>
    %105 = vector.broadcast %104 : vector<1x256xf32> to vector<16x256xf32>
    %106 = arith.addf %103, %105 : vector<16x256xf32>
    %cst_36 = arith.constant 0.000000e+00 : f32
    %107 = vector.broadcast %cst_36 : f32 to vector<16x256xf32>
    %108 = arith.maximumf %106, %107 : vector<16x256xf32>
    %109 = arith.truncf %108 : vector<16x256xf32> to vector<16x256xbf16>
    %cst_37 = arith.constant 0.000000e+00 : bf16
    %110 = vector.broadcast %cst_37 : bf16 to vector<1x256xbf16>
    %111 = vector.extract_strided_slice %109 {offsets = [0, 0], sizes = [15, 256], strides = [1, 1]} : vector<16x256xbf16> to vector<15x256xbf16>
    %112 = tpu.concatenate %110, %111 in 0 : vector<1x256xbf16>, vector<15x256xbf16> -> vector<16x256xbf16>
    %113 = vector.broadcast %22 : vector<16x1xbf16> to vector<16x256xbf16>
    %114 = arith.mulf %112, %113 : vector<16x256xbf16>
    %115 = vector.extract_strided_slice %109 {offsets = [1, 0], sizes = [15, 256], strides = [1, 1]} : vector<16x256xbf16> to vector<15x256xbf16>
    %116 = tpu.concatenate %115, %110 in 0 : vector<15x256xbf16>, vector<1x256xbf16> -> vector<16x256xbf16>
    %117 = vector.broadcast %27 : vector<16x1xbf16> to vector<16x256xbf16>
    %118 = arith.mulf %116, %117 : vector<16x256xbf16>
    %119 = tpu.concatenate %114, %109, %118 in 1 : vector<16x256xbf16>, vector<16x256xbf16>, vector<16x256xbf16> -> vector<16x768xbf16>
    %c0_38 = arith.constant 0 : index
    %c0_39 = arith.constant 0 : index
    %120 = vector.load %arg11[%c0_38, %c0_39] : memref<768x256xbf16, #tpu.memory_space<vmem>>, vector<768x256xbf16>
    %cst_40 = arith.constant dense<0.000000e+00> : vector<16x256xf32>
    %121 = tpu.matmul %119, %120, %cst_40 {dimension_numbers = #tpu.dot_dimension_numbers<[1], [0], [0], [1], [0, 0, 1, 1], [], []>} : vector<16x768xbf16>, vector<768x256xbf16>, vector<16x256xf32> -> vector<16x256xf32>
    %c0_41 = arith.constant 0 : index
    %c0_42 = arith.constant 0 : index
    %122 = vector.load %arg12[%c0_41, %c0_42] : memref<2x256xf32, #tpu.memory_space<vmem>>, vector<1x256xf32>
    %123 = vector.broadcast %122 : vector<1x256xf32> to vector<16x256xf32>
    %124 = arith.mulf %121, %123 : vector<16x256xf32>
    %c1_43 = arith.constant 1 : index
    %c0_44 = arith.constant 0 : index
    %125 = vector.load %arg12[%c1_43, %c0_44] : memref<2x256xf32, #tpu.memory_space<vmem>>, vector<1x256xf32>
    %126 = vector.broadcast %125 : vector<1x256xf32> to vector<16x256xf32>
    %127 = arith.addf %124, %126 : vector<16x256xf32>
    %128 = arith.extf %88 : vector<16x256xbf16> to vector<16x256xf32>
    %129 = arith.addf %127, %128 : vector<16x256xf32>
    %130 = arith.truncf %129 : vector<16x256xf32> to vector<16x256xbf16>
    %cst_45 = arith.constant 0.000000e+00 : bf16
    %131 = vector.broadcast %cst_45 : bf16 to vector<1x256xbf16>
    %132 = vector.extract_strided_slice %130 {offsets = [0, 0], sizes = [15, 256], strides = [1, 1]} : vector<16x256xbf16> to vector<15x256xbf16>
    %133 = tpu.concatenate %131, %132 in 0 : vector<1x256xbf16>, vector<15x256xbf16> -> vector<16x256xbf16>
    %134 = vector.broadcast %22 : vector<16x1xbf16> to vector<16x256xbf16>
    %135 = arith.mulf %133, %134 : vector<16x256xbf16>
    %136 = vector.extract_strided_slice %130 {offsets = [1, 0], sizes = [15, 256], strides = [1, 1]} : vector<16x256xbf16> to vector<15x256xbf16>
    %137 = tpu.concatenate %136, %131 in 0 : vector<15x256xbf16>, vector<1x256xbf16> -> vector<16x256xbf16>
    %138 = vector.broadcast %27 : vector<16x1xbf16> to vector<16x256xbf16>
    %139 = arith.mulf %137, %138 : vector<16x256xbf16>
    %140 = tpu.concatenate %135, %130, %139 in 1 : vector<16x256xbf16>, vector<16x256xbf16>, vector<16x256xbf16> -> vector<16x768xbf16>
    %c0_46 = arith.constant 0 : index
    %c0_47 = arith.constant 0 : index
    %141 = vector.load %arg13[%c0_46, %c0_47] : memref<768x512xbf16, #tpu.memory_space<vmem>>, vector<768x512xbf16>
    %cst_48 = arith.constant dense<0.000000e+00> : vector<16x512xf32>
    %142 = tpu.matmul %140, %141, %cst_48 {dimension_numbers = #tpu.dot_dimension_numbers<[1], [0], [0], [1], [0, 0, 1, 1], [], []>} : vector<16x768xbf16>, vector<768x512xbf16>, vector<16x512xf32> -> vector<16x512xf32>
    %c0_49 = arith.constant 0 : index
    %c0_50 = arith.constant 0 : index
    %143 = vector.load %arg14[%c0_49, %c0_50] : memref<2x512xf32, #tpu.memory_space<vmem>>, vector<1x512xf32>
    %144 = vector.broadcast %143 : vector<1x512xf32> to vector<16x512xf32>
    %145 = arith.mulf %142, %144 : vector<16x512xf32>
    %c1_51 = arith.constant 1 : index
    %c0_52 = arith.constant 0 : index
    %146 = vector.load %arg14[%c1_51, %c0_52] : memref<2x512xf32, #tpu.memory_space<vmem>>, vector<1x512xf32>
    %147 = vector.broadcast %146 : vector<1x512xf32> to vector<16x512xf32>
    %148 = arith.addf %145, %147 : vector<16x512xf32>
    %149 = arith.truncf %148 : vector<16x512xf32> to vector<16x512xbf16>
    %cst_53 = arith.constant 0.000000e+00 : bf16
    %150 = vector.broadcast %cst_53 : bf16 to vector<1x512xbf16>
    %151 = vector.extract_strided_slice %149 {offsets = [0, 0], sizes = [15, 512], strides = [1, 1]} : vector<16x512xbf16> to vector<15x512xbf16>
    %152 = tpu.concatenate %150, %151 in 0 : vector<1x512xbf16>, vector<15x512xbf16> -> vector<16x512xbf16>
    %153 = vector.broadcast %22 : vector<16x1xbf16> to vector<16x512xbf16>
    %154 = arith.mulf %152, %153 : vector<16x512xbf16>
    %155 = vector.extract_strided_slice %149 {offsets = [1, 0], sizes = [15, 512], strides = [1, 1]} : vector<16x512xbf16> to vector<15x512xbf16>
    %156 = tpu.concatenate %155, %150 in 0 : vector<15x512xbf16>, vector<1x512xbf16> -> vector<16x512xbf16>
    %157 = vector.broadcast %27 : vector<16x1xbf16> to vector<16x512xbf16>
    %158 = arith.mulf %156, %157 : vector<16x512xbf16>
    %159 = tpu.concatenate %154, %149, %158 in 1 : vector<16x512xbf16>, vector<16x512xbf16>, vector<16x512xbf16> -> vector<16x1536xbf16>
    %c0_54 = arith.constant 0 : index
    %c0_55 = arith.constant 0 : index
    %160 = vector.load %arg15[%c0_54, %c0_55] : memref<1536x512xbf16, #tpu.memory_space<vmem>>, vector<1536x512xbf16>
    %cst_56 = arith.constant dense<0.000000e+00> : vector<16x512xf32>
    %161 = tpu.matmul %159, %160, %cst_56 {dimension_numbers = #tpu.dot_dimension_numbers<[1], [0], [0], [1], [0, 0, 1, 1], [], []>} : vector<16x1536xbf16>, vector<1536x512xbf16>, vector<16x512xf32> -> vector<16x512xf32>
    %c0_57 = arith.constant 0 : index
    %c0_58 = arith.constant 0 : index
    %162 = vector.load %arg16[%c0_57, %c0_58] : memref<2x512xf32, #tpu.memory_space<vmem>>, vector<1x512xf32>
    %163 = vector.broadcast %162 : vector<1x512xf32> to vector<16x512xf32>
    %164 = arith.mulf %161, %163 : vector<16x512xf32>
    %c1_59 = arith.constant 1 : index
    %c0_60 = arith.constant 0 : index
    %165 = vector.load %arg16[%c1_59, %c0_60] : memref<2x512xf32, #tpu.memory_space<vmem>>, vector<1x512xf32>
    %166 = vector.broadcast %165 : vector<1x512xf32> to vector<16x512xf32>
    %167 = arith.addf %164, %166 : vector<16x512xf32>
    %cst_61 = arith.constant 0.000000e+00 : f32
    %168 = vector.broadcast %cst_61 : f32 to vector<16x512xf32>
    %169 = arith.maximumf %167, %168 : vector<16x512xf32>
    %170 = arith.truncf %169 : vector<16x512xf32> to vector<16x512xbf16>
    %cst_62 = arith.constant 0.000000e+00 : bf16
    %171 = vector.broadcast %cst_62 : bf16 to vector<1x512xbf16>
    %172 = vector.extract_strided_slice %170 {offsets = [0, 0], sizes = [15, 512], strides = [1, 1]} : vector<16x512xbf16> to vector<15x512xbf16>
    %173 = tpu.concatenate %171, %172 in 0 : vector<1x512xbf16>, vector<15x512xbf16> -> vector<16x512xbf16>
    %174 = vector.broadcast %22 : vector<16x1xbf16> to vector<16x512xbf16>
    %175 = arith.mulf %173, %174 : vector<16x512xbf16>
    %176 = vector.extract_strided_slice %170 {offsets = [1, 0], sizes = [15, 512], strides = [1, 1]} : vector<16x512xbf16> to vector<15x512xbf16>
    %177 = tpu.concatenate %176, %171 in 0 : vector<15x512xbf16>, vector<1x512xbf16> -> vector<16x512xbf16>
    %178 = vector.broadcast %27 : vector<16x1xbf16> to vector<16x512xbf16>
    %179 = arith.mulf %177, %178 : vector<16x512xbf16>
    %180 = tpu.concatenate %175, %170, %179 in 1 : vector<16x512xbf16>, vector<16x512xbf16>, vector<16x512xbf16> -> vector<16x1536xbf16>
    %c0_63 = arith.constant 0 : index
    %c0_64 = arith.constant 0 : index
    %181 = vector.load %arg17[%c0_63, %c0_64] : memref<1536x512xbf16, #tpu.memory_space<vmem>>, vector<1536x512xbf16>
    %cst_65 = arith.constant dense<0.000000e+00> : vector<16x512xf32>
    %182 = tpu.matmul %180, %181, %cst_65 {dimension_numbers = #tpu.dot_dimension_numbers<[1], [0], [0], [1], [0, 0, 1, 1], [], []>} : vector<16x1536xbf16>, vector<1536x512xbf16>, vector<16x512xf32> -> vector<16x512xf32>
    %c0_66 = arith.constant 0 : index
    %c0_67 = arith.constant 0 : index
    %183 = vector.load %arg18[%c0_66, %c0_67] : memref<2x512xf32, #tpu.memory_space<vmem>>, vector<1x512xf32>
    %184 = vector.broadcast %183 : vector<1x512xf32> to vector<16x512xf32>
    %185 = arith.mulf %182, %184 : vector<16x512xf32>
    %c1_68 = arith.constant 1 : index
    %c0_69 = arith.constant 0 : index
    %186 = vector.load %arg18[%c1_68, %c0_69] : memref<2x512xf32, #tpu.memory_space<vmem>>, vector<1x512xf32>
    %187 = vector.broadcast %186 : vector<1x512xf32> to vector<16x512xf32>
    %188 = arith.addf %185, %187 : vector<16x512xf32>
    %189 = arith.extf %149 : vector<16x512xbf16> to vector<16x512xf32>
    %190 = arith.addf %188, %189 : vector<16x512xf32>
    %c0_70 = arith.constant 0 : index
    %c0_71 = arith.constant 0 : index
    %191 = vector.load %arg19[%c0_70, %c0_71] : memref<1x512xf32, #tpu.memory_space<vmem>>, vector<1x512xf32>
    %192 = vector.broadcast %191 : vector<1x512xf32> to vector<16x512xf32>
    %193 = arith.mulf %190, %192 : vector<16x512xf32>
    %cst_72 = arith.constant dense<0.000000e+00> : vector<16xf32>
    %194 = vector.multi_reduction <add>, %193, %cst_72 [1] : vector<16x512xf32> to vector<16xf32>
    %195 = vector.shape_cast %194 : vector<16xf32> to vector<16x1xf32>
    %c0_73 = arith.constant 0 : index
    %c0_74 = arith.constant 0 : index
    %196 = vector.load %arg20[%c0_73, %c0_74] : memref<1x1xf32, #tpu.memory_space<vmem>>, vector<1x1xf32>
    %197 = vector.broadcast %196 : vector<1x1xf32> to vector<16x1xf32>
    %198 = arith.addf %195, %197 : vector<16x1xf32>
    %c0_75 = arith.constant 0 : index
    %c0_76 = arith.constant 0 : index
    %199 = vector.load %arg2[%c0_75, %c0_76] : memref<16x1xf32, #tpu.memory_space<vmem>>, vector<16x1xf32>
    %200 = arith.mulf %198, %199 : vector<16x1xf32>
    %c0_77 = arith.constant 0 : index
    %c0_78 = arith.constant 0 : index
    %201 = vector.load %arg21[%c0_77, %c0_78] : memref<16x1xf32, #tpu.memory_space<vmem>>, vector<16x1xf32>
    tpu.vector_store %arg21[%c0_77, %c0_78], %200 {strides = array<i32>} : memref<16x1xf32, #tpu.memory_space<vmem>>, vector<16x1xf32>,
    return
  }
  func.func @transform_0(%arg0: i32) -> (i32, i32) {
    %c0_i32 = arith.constant 0 : i32
    %c0_i32_0 = arith.constant 0 : i32
    return %arg0, %c0_i32 : i32, i32
  }
  func.func @transform_1(%arg0: i32) -> (i32, i32) {
    %c0_i32 = arith.constant 0 : i32
    %c0_i32_0 = arith.constant 0 : i32
    return %arg0, %c0_i32 : i32, i32
  }
  func.func @transform_2(%arg0: i32) -> (i32, i32) {
    %c0_i32 = arith.constant 0 : i32
    %c0_i32_0 = arith.constant 0 : i32
    %c0_i32_1 = arith.constant 0 : i32
    return %c0_i32, %c0_i32_0 : i32, i32
  }
  func.func @transform_3(%arg0: i32) -> (i32, i32) {
    %c0_i32 = arith.constant 0 : i32
    %c0_i32_0 = arith.constant 0 : i32
    %c0_i32_1 = arith.constant 0 : i32
    return %c0_i32, %c0_i32_0 : i32, i32
  }
  func.func @transform_4(%arg0: i32) -> (i32, i32) {
    %c0_i32 = arith.constant 0 : i32
    %c0_i32_0 = arith.constant 0 : i32
    %c0_i32_1 = arith.constant 0 : i32
    return %c0_i32, %c0_i32_0 : i32, i32
  }
  func.func @transform_5(%arg0: i32) -> (i32, i32) {
    %c0_i32 = arith.constant 0 : i32
    %c0_i32_0 = arith.constant 0 : i32
    %c0_i32_1 = arith.constant 0 : i32
    return %c0_i32, %c0_i32_0 : i32, i32
  }
  func.func @transform_6(%arg0: i32) -> (i32, i32) {
    %c0_i32 = arith.constant 0 : i32
    %c0_i32_0 = arith.constant 0 : i32
    %c0_i32_1 = arith.constant 0 : i32
    return %c0_i32, %c0_i32_0 : i32, i32
  }
  func.func @transform_7(%arg0: i32) -> (i32, i32) {
    %c0_i32 = arith.constant 0 : i32
    %c0_i32_0 = arith.constant 0 : i32
    %c0_i32_1 = arith.constant 0 : i32
    return %c0_i32, %c0_i32_0 : i32, i32
  }
  func.func @transform_8(%arg0: i32) -> (i32, i32) {
    %c0_i32 = arith.constant 0 : i32
    %c0_i32_0 = arith.constant 0 : i32
    %c0_i32_1 = arith.constant 0 : i32
    return %c0_i32, %c0_i32_0 : i32, i32
  }
  func.func @transform_9(%arg0: i32) -> (i32, i32) {
    %c0_i32 = arith.constant 0 : i32
    %c0_i32_0 = arith.constant 0 : i32
    %c0_i32_1 = arith.constant 0 : i32
    return %c0_i32, %c0_i32_0 : i32, i32
  }
  func.func @transform_10(%arg0: i32) -> (i32, i32) {
    %c0_i32 = arith.constant 0 : i32
    %c0_i32_0 = arith.constant 0 : i32
    %c0_i32_1 = arith.constant 0 : i32
    return %c0_i32, %c0_i32_0 : i32, i32
  }
  func.func @transform_11(%arg0: i32) -> (i32, i32) {
    %c0_i32 = arith.constant 0 : i32
    %c0_i32_0 = arith.constant 0 : i32
    %c0_i32_1 = arith.constant 0 : i32
    return %c0_i32, %c0_i32_0 : i32, i32
  }
  func.func @transform_12(%arg0: i32) -> (i32, i32) {
    %c0_i32 = arith.constant 0 : i32
    %c0_i32_0 = arith.constant 0 : i32
    %c0_i32_1 = arith.constant 0 : i32
    return %c0_i32, %c0_i32_0 : i32, i32
  }
  func.func @transform_13(%arg0: i32) -> (i32, i32) {
    %c0_i32 = arith.constant 0 : i32
    %c0_i32_0 = arith.constant 0 : i32
    %c0_i32_1 = arith.constant 0 : i32
    return %c0_i32, %c0_i32_0 : i32, i32
  }
  func.func @transform_14(%arg0: i32) -> (i32, i32) {
    %c0_i32 = arith.constant 0 : i32
    %c0_i32_0 = arith.constant 0 : i32
    %c0_i32_1 = arith.constant 0 : i32
    return %c0_i32, %c0_i32_0 : i32, i32
  }
  func.func @transform_15(%arg0: i32) -> (i32, i32) {
    %c0_i32 = arith.constant 0 : i32
    %c0_i32_0 = arith.constant 0 : i32
    %c0_i32_1 = arith.constant 0 : i32
    return %c0_i32, %c0_i32_0 : i32, i32
  }
  func.func @transform_16(%arg0: i32) -> (i32, i32) {
    %c0_i32 = arith.constant 0 : i32
    %c0_i32_0 = arith.constant 0 : i32
    %c0_i32_1 = arith.constant 0 : i32
    return %c0_i32, %c0_i32_0 : i32, i32
  }
  func.func @transform_17(%arg0: i32) -> (i32, i32) {
    %c0_i32 = arith.constant 0 : i32
    %c0_i32_0 = arith.constant 0 : i32
    %c0_i32_1 = arith.constant 0 : i32
    return %c0_i32, %c0_i32_0 : i32, i32
  }
  func.func @transform_18(%arg0: i32) -> (i32, i32) {
    %c0_i32 = arith.constant 0 : i32
    %c0_i32_0 = arith.constant 0 : i32
    %c0_i32_1 = arith.constant 0 : i32
    return %c0_i32, %c0_i32_0 : i32, i32
  }
  func.func @transform_19(%arg0: i32) -> (i32, i32) {
    %c0_i32 = arith.constant 0 : i32
    %c0_i32_0 = arith.constant 0 : i32
    %c0_i32_1 = arith.constant 0 : i32
    return %c0_i32, %c0_i32_0 : i32, i32
  }
  func.func @transform_20(%arg0: i32) -> (i32, i32) {
    %c0_i32 = arith.constant 0 : i32
    %c0_i32_0 = arith.constant 0 : i32
    return %arg0, %c0_i32 : i32, i32
  }
}

</mosaic_0001>

<llo_original>
// kernel: cnn_forward.1
$region0: #{cnn_forward.1}
  #allocation0 [shape = 'u32[]', space=smem, size = 0x4, offset = 0x4, fixed_abs, tag = 'smem constant byte address 0x4 - core index']
  #allocation1 [shape = 'u32[72,128]{1,0:T(1,128)}', space=vmem, size = 0x9000, scoped, tag = 'internal scratch']
  #allocation2 [shape = 'f32[1,1]{1,0:T(1,128)S(1)}', space=vmem, size = 0x200, scoped, tag = 'scoped memory for cnn_forward.1']
  %s0 = inlined_call_operand.vmem [shape: bf16[16,128], index: 0, kind: input, shape index: {}]
  %s1 = inlined_call_operand.vmem [shape: f32[16,1], index: 1, kind: input, shape index: {}]
  %s2 = inlined_call_operand.vmem [shape: bf16[384,128], index: 2, kind: input, shape index: {}]
  %s3 = inlined_call_operand.vmem [shape: f32[2,128], index: 3, kind: input, shape index: {}]
  %s4 = inlined_call_operand.vmem [shape: bf16[384,128], index: 4, kind: input, shape index: {}]
  %s5 = inlined_call_operand.vmem [shape: f32[2,128], index: 5, kind: input, shape index: {}]
  %s6 = inlined_call_operand.vmem [shape: bf16[384,256], index: 6, kind: input, shape index: {}]
  %s7 = inlined_call_operand.vmem [shape: f32[2,256], index: 7, kind: input, shape index: {}]
  %s8 = inlined_call_operand.vmem [shape: bf16[768,256], index: 8, kind: input, shape index: {}]
  %s9 = inlined_call_operand.vmem [shape: f32[2,256], index: 9, kind: input, shape index: {}]
  %s10 = inlined_call_operand.vmem [shape: bf16[768,256], index: 10, kind: input, shape index: {}]
  %s11 = inlined_call_operand.vmem [shape: f32[2,256], index: 11, kind: input, shape index: {}]
  %s12 = inlined_call_operand.vmem [shape: bf16[768,512], index: 12, kind: input, shape index: {}]
  %s13 = inlined_call_operand.vmem [shape: f32[2,512], index: 13, kind: input, shape index: {}]
  %s14 = inlined_call_operand.vmem [shape: bf16[1536,512], index: 14, kind: input, shape index: {}]
  %s15 = inlined_call_operand.vmem [shape: f32[2,512], index: 15, kind: input, shape index: {}]
  %s16 = inlined_call_operand.vmem [shape: bf16[1536,512], index: 16, kind: input, shape index: {}]
  %s17 = inlined_call_operand.vmem [shape: f32[2,512], index: 17, kind: input, shape index: {}]
  %s18 = inlined_call_operand.vmem [shape: f32[1,512], index: 18, kind: input, shape index: {}]
  %s19 = inlined_call_operand.<no memory space> [shape: f32[1,1], index: 19, kind: input, shape index: {}]
  %s20 = inlined_call_operand.vmem [shape: f32[16,1], index: 20, kind: output, shape index: {}]
  %s21 = sld [smem:[#allocation0]]
  $region90: #{cnn_forward.1} parent=0
    _
  %s23 = ssub.s32 1, %s21
  %s24 = scalar_select 0, %s23, %s21
  %v25 = vstv %s19
  %26 = vst [vmem:[#allocation2] sm:$0x1] %v25
  // Predicated region
  $region2: #{cnn_forward.1} parent=0 // pred_check
    _
  $region3: #{cnn_forward.1} parent=0 // pred_check_branch
    %28 = sbr.rel (0) target = $region5
  $region4: #{cnn_forward.1} parent=0 // pred_region
    _
  $region5: #{cnn_forward.1} parent=0 // pred_fallthru
    _
  // Predicated region
  $region6: #{cnn_forward.1} parent=0 // pred_check
    _
  $region7: #{cnn_forward.1} parent=0 // pred_check_branch
    %30 = sbr.rel (0) target = $region9
  $region8: #{cnn_forward.1} parent=0 // pred_region
    _
  $region9: #{cnn_forward.1} parent=0 // pred_fallthru
    _
  // Predicated region
  $region10: #{cnn_forward.1} parent=0 // pred_check
    _
  $region11: #{cnn_forward.1} parent=0 // pred_check_branch
    %32 = sbr.rel (0) target = $region13
  $region12: #{cnn_forward.1} parent=0 // pred_region
    _
  $region13: #{cnn_forward.1} parent=0 // pred_fallthru
    _
  // Predicated region
  $region14: #{cnn_forward.1} parent=0 // pred_check
    _
  $region15: #{cnn_forward.1} parent=0 // pred_check_branch
    %34 = sbr.rel (0) target = $region17
  $region16: #{cnn_forward.1} parent=0 // pred_region
    _
  $region17: #{cnn_forward.1} parent=0 // pred_fallthru
    _
  // Predicated region
  $region18: #{cnn_forward.1} parent=0 // pred_check
    _
  $region19: #{cnn_forward.1} parent=0 // pred_check_branch
    %36 = sbr.rel (0) target = $region21
  $region20: #{cnn_forward.1} parent=0 // pred_region
    _
  $region21: #{cnn_forward.1} parent=0 // pred_fallthru
    _
  // Predicated region
  $region22: #{cnn_forward.1} parent=0 // pred_check
    _
  $region23: #{cnn_forward.1} parent=0 // pred_check_branch
    %38 = sbr.rel (0) target = $region25
  $region24: #{cnn_forward.1} parent=0 // pred_region
    _
  $region25: #{cnn_forward.1} parent=0 // pred_fallthru
    _
  // Predicated region
  $region26: #{cnn_forward.1} parent=0 // pred_check
    _
  $region27: #{cnn_forward.1} parent=0 // pred_check_branch
    %40 = sbr.rel (0) target = $region29
  $region28: #{cnn_forward.1} parent=0 // pred_region
    _
  $region29: #{cnn_forward.1} parent=0 // pred_fallthru
    _
  // Predicated region
  $region30: #{cnn_forward.1} parent=0 // pred_check
    _
  $region31: #{cnn_forward.1} parent=0 // pred_check_branch
    %42 = sbr.rel (0) target = $region33
  $region32: #{cnn_forward.1} parent=0 // pred_region
    _
  $region33: #{cnn_forward.1} parent=0 // pred_fallthru
    _
  // Predicated region
  $region34: #{cnn_forward.1} parent=0 // pred_check
    _
  $region35: #{cnn_forward.1} parent=0 // pred_check_branch
    %44 = sbr.rel (0) target = $region37
  $region36: #{cnn_forward.1} parent=0 // pred_region
    _
  $region37: #{cnn_forward.1} parent=0 // pred_fallthru
    _
  // Predicated region
  $region38: #{cnn_forward.1} parent=0 // pred_check
    _
  $region39: #{cnn_forward.1} parent=0 // pred_check_branch
    %46 = sbr.rel (0) target = $region41
  $region40: #{cnn_forward.1} parent=0 // pred_region
    _
  $region41: #{cnn_forward.1} parent=0 // pred_fallthru
    _
  // Predicated region
  $region42: #{cnn_forward.1} parent=0 // pred_check
    _
  $region43: #{cnn_forward.1} parent=0 // pred_check_branch
    %48 = sbr.rel (0) target = $region45
  $region44: #{cnn_forward.1} parent=0 // pred_region
    _
  $region45: #{cnn_forward.1} parent=0 // pred_fallthru
    _
  // Predicated region
  $region46: #{cnn_forward.1} parent=0 // pred_check
    _
  $region47: #{cnn_forward.1} parent=0 // pred_check_branch
    %50 = sbr.rel (0) target = $region49
  $region48: #{cnn_forward.1} parent=0 // pred_region
    _
  $region49: #{cnn_forward.1} parent=0 // pred_fallthru
    _
  // Predicated region
  $region50: #{cnn_forward.1} parent=0 // pred_check
    _
  $region51: #{cnn_forward.1} parent=0 // pred_check_branch
    %52 = sbr.rel (0) target = $region53
  $region52: #{cnn_forward.1} parent=0 // pred_region
    _
  $region53: #{cnn_forward.1} parent=0 // pred_fallthru
    _
  // Predicated region
  $region54: #{cnn_forward.1} parent=0 // pred_check
    _
  $region55: #{cnn_forward.1} parent=0 // pred_check_branch
    %54 = sbr.rel (0) target = $region57
  $region56: #{cnn_forward.1} parent=0 // pred_region
    _
  $region57: #{cnn_forward.1} parent=0 // pred_fallthru
    _
  // Predicated region
  $region58: #{cnn_forward.1} parent=0 // pred_check
    _
  $region59: #{cnn_forward.1} parent=0 // pred_check_branch
    %56 = sbr.rel (0) target = $region61
  $region60: #{cnn_forward.1} parent=0 // pred_region
    _
  $region61: #{cnn_forward.1} parent=0 // pred_fallthru
    _
  // Predicated region
  $region62: #{cnn_forward.1} parent=0 // pred_check
    _
  $region63: #{cnn_forward.1} parent=0 // pred_check_branch
    %58 = sbr.rel (0) target = $region65
  $region64: #{cnn_forward.1} parent=0 // pred_region
    _
  $region65: #{cnn_forward.1} parent=0 // pred_fallthru
    _
  // Predicated region
  $region66: #{cnn_forward.1} parent=0 // pred_check
    _
  $region67: #{cnn_forward.1} parent=0 // pred_check_branch
    %60 = sbr.rel (0) target = $region69
  $region68: #{cnn_forward.1} parent=0 // pred_region
    _
  $region69: #{cnn_forward.1} parent=0 // pred_fallthru
    _
  // Predicated region
  $region70: #{cnn_forward.1} parent=0 // pred_check
    _
  $region71: #{cnn_forward.1} parent=0 // pred_check_branch
    %62 = sbr.rel (0) target = $region73
  $region72: #{cnn_forward.1} parent=0 // pred_region
    _
  $region73: #{cnn_forward.1} parent=0 // pred_fallthru
    _
  // Predicated region
  $region74: #{cnn_forward.1} parent=0 // pred_check
    _
  $region75: #{cnn_forward.1} parent=0 // pred_check_branch
    %64 = sbr.rel (0) target = $region77
  $region76: #{cnn_forward.1} parent=0 // pred_region
    _
  $region77: #{cnn_forward.1} parent=0 // pred_fallthru
    _
  // Predicated region
  $region78: #{cnn_forward.1} parent=0 // pred_check
    _
  $region79: #{cnn_forward.1} parent=0 // pred_check_branch
    %66 = sbr.rel (0) target = $region81
  $region80: #{cnn_forward.1} parent=0 // pred_region
    _
  $region81: #{cnn_forward.1} parent=0 // pred_fallthru
    _
  %v68 = vld [vmem:[%s0] sm:$0xf]
  %v69 = vld [vmem:[%s0 + $0x4] sm:$0xf]
  %v70 = vlaneseq
  %v71 = vshrl.u32 %v70, 7
  %v72 = vadd.s32 %v71, 8
  %vm73 = vcmp.lt.s32.totalorder %v71, 0
  %v74 = vsub.s32 0, %v71
  %v75 = vsel %vm73, %v74, %v71
  %v76 = vshrl.u32 %v75, 3
  %v77 = vand.u32 %v75, 7
  %v78 = vsub.s32 0, %v77
  %v79 = vsel %vm73, %v78, %v77
  %vm80 = vcmp.lt.s32.totalorder %v72, 0
  %v81 = vsub.s32 0, %v72
  %v82 = vsel %vm80, %v81, %v72
  %v83 = vshrl.u32 %v82, 3
  %v84 = vand.u32 %v82, 7
  %v85 = vsub.s32 0, %v84
  %v86 = vsel %vm80, %v85, %v84
  %vm87 = vcmp.ne.s32.totalorder %v79, 0
  %vm88 = vcmp.ne.s32.totalorder %v86, 0
  %vm89 = vcmp.lt.s32.totalorder %v79, 0
  %vm90 = vcmp.lt.s32.totalorder %v86, 0
  %vm91 = vmand %vm89, %vm87
  %vm92 = vmand %vm90, %vm88
  %v93 = vadd.s32 %v79, 8
  %v94 = vadd.s32 %v86, 8
  %v95 = vsel %vm91, %v93, %v79
  %v96 = vsel %vm92, %v94, %v86
  %vm97 = vcmp.ne.s32.totalorder %v95, 0
  %vm98 = vcmp.ne.s32.totalorder %v96, 0
  %v99 = vsel %vm97, 1, 0
  %v100 = vsel %vm98, 1, 0
  %v101 = vcvt.s32.f32 %v99
  %v102 = vcvt.s32.f32 %v100
  %v103 = vpack.c.bf16 %v101, %v101
  %v104 = vpack.c.bf16 %v102, %v102
  %vm105 = vcmp.ne.s32.totalorder %v95, 7
  %vm106 = vcmp.ne.s32.totalorder %v96, 7
  %v107 = vsel %vm105, 1, 0
  %v108 = vsel %vm106, 1, 0
  %v109 = vcvt.s32.f32 %v107
  %v110 = vcvt.s32.f32 %v108
  %v111 = vpack.c.bf16 %v109, %v109
  %v112 = vpack.c.bf16 %v110, %v110
  %v115 = vunpack.c.l.b16 %v68
  %v116 = vunpack.c.l.b16 %v69
  %v117 = vpack.c.b16 %v116, %v115
  %v119 = vshrl.u32 %v117, 16
  %v121 = vrot.slane %v119, 7
  %v122 = vshll.u32 %v117, 16
  %v124 = vor.u32 %v121, %v122
  %vm126 = vcmask 1040384
  %vm127 = vsmask.f32 256
  %vm128 = vmand %vm126, %vm127
  %v129 = vsel %vm128, 0, %v124
  %v130 = vunpack.c.l.bf16 %v129
  %v131 = vunpack.c.h.bf16 %v129
  %v132 = vunpack.c.l.bf16 %v103
  %v133 = vunpack.c.l.bf16 %v104
  %v134 = vmul.f32 %v130, %v132
  %v135 = vmul.f32 %v131, %v133
  %v136 = vpack.c.bf16 %v134, %v134
  %v137 = vpack.c.bf16 %v135, %v135
  %v138 = vrot.slane %v122, 1
  %v139 = vor.u32 %v119, %v138
  %vm141 = vcmask 1047552
  %vm142 = vsmask.f32 7424
  %vm143 = vmand %vm141, %vm142
  %v144 = vsel %vm143, %v139, 0
  %v145 = vunpack.c.l.bf16 %v144
  %v146 = vunpack.c.h.bf16 %v144
  %v147 = vunpack.c.l.bf16 %v111
  %v148 = vunpack.c.l.bf16 %v112
  %v149 = vmul.f32 %v145, %v147
  %v150 = vmul.f32 %v146, %v148
  %v151 = vpack.c.bf16 %v149, %v149
  %v152 = vpack.c.bf16 %v150, %v150
  %v155 = vunpack.c.l.b16 %v136
  %v156 = vunpack.c.l.b16 %v137
  %v157 = vpack.c.b16 %v156, %v155
  %v162 = vunpack.c.l.b16 %v151
  %v163 = vunpack.c.l.b16 %v152
  %v164 = vpack.c.b16 %v163, %v162
  %v166 = vld [vmem:[%s2] sm:$0xf]
  %v167 = vld [vmem:[%s2 + $0x4] sm:$0xf]
  %v168 = vld [vmem:[%s2 + $0x8] sm:$0xf]
  %v169 = vld [vmem:[%s2 + $0xc] sm:$0xf]
  %v170 = vld [vmem:[%s2 + $0x10] sm:$0xf]
  %v171 = vld [vmem:[%s2 + $0x14] sm:$0xf]
  %v172 = vld [vmem:[%s2 + $0x18] sm:$0xf]
  %v173 = vld [vmem:[%s2 + $0x1c] sm:$0xf]
  %v174 = vld [vmem:[%s2 + $0x20] sm:$0xf]
  %v175 = vld [vmem:[%s2 + $0x24] sm:$0xf]
  %v176 = vld [vmem:[%s2 + $0x28] sm:$0xf]
  %v177 = vld [vmem:[%s2 + $0x2c] sm:$0xf]
  %v178 = vld [vmem:[%s2 + $0x30] sm:$0xf]
  %v179 = vld [vmem:[%s2 + $0x34] sm:$0xf]
  %v180 = vld [vmem:[%s2 + $0x38] sm:$0xf]
  %v181 = vld [vmem:[%s2 + $0x3c] sm:$0xf]
  %v182 = vld [vmem:[%s2 + $0x40] sm:$0xf]
  %v183 = vld [vmem:[%s2 + $0x44] sm:$0xf]
  %v184 = vld [vmem:[%s2 + $0x48] sm:$0xf]
  %v185 = vld [vmem:[%s2 + $0x4c] sm:$0xf]
  %v186 = vld [vmem:[%s2 + $0x50] sm:$0xf]
  %v187 = vld [vmem:[%s2 + $0x54] sm:$0xf]
  %v188 = vld [vmem:[%s2 + $0x58] sm:$0xf]
  %v189 = vld [vmem:[%s2 + $0x5c] sm:$0xf]
  %v190 = vld [vmem:[%s2 + $0x60] sm:$0xf]
  %v191 = vld [vmem:[%s2 + $0x64] sm:$0xf]
  %v192 = vld [vmem:[%s2 + $0x68] sm:$0xf]
  %v193 = vld [vmem:[%s2 + $0x6c] sm:$0xf]
  %v194 = vld [vmem:[%s2 + $0x70] sm:$0xf]
  %v195 = vld [vmem:[%s2 + $0x74] sm:$0xf]
  %v196 = vld [vmem:[%s2 + $0x78] sm:$0xf]
  %v197 = vld [vmem:[%s2 + $0x7c] sm:$0xf]
  %v198 = vld [vmem:[%s2 + $0x80] sm:$0xf]
  %v199 = vld [vmem:[%s2 + $0x84] sm:$0xf]
  %v200 = vld [vmem:[%s2 + $0x88] sm:$0xf]
  %v201 = vld [vmem:[%s2 + $0x8c] sm:$0xf]
  %v202 = vld [vmem:[%s2 + $0x90] sm:$0xf]
  %v203 = vld [vmem:[%s2 + $0x94] sm:$0xf]
  %v204 = vld [vmem:[%s2 + $0x98] sm:$0xf]
  %v205 = vld [vmem:[%s2 + $0x9c] sm:$0xf]
  %v206 = vld [vmem:[%s2 + $0xa0] sm:$0xf]
  %v207 = vld [vmem:[%s2 + $0xa4] sm:$0xf]
  %v208 = vld [vmem:[%s2 + $0xa8] sm:$0xf]
  %v209 = vld [vmem:[%s2 + $0xac] sm:$0xf]
  %v210 = vld [vmem:[%s2 + $0xb0] sm:$0xf]
  %v211 = vld [vmem:[%s2 + $0xb4] sm:$0xf]
  %v212 = vld [vmem:[%s2 + $0xb8] sm:$0xf]
  %v213 = vld [vmem:[%s2 + $0xbc] sm:$0xf]
  %v262 = vunpack.c.l.b16 %v166
  %v263 = vunpack.c.l.b16 %v167
  %v264 = vunpack.c.l.b16 %v168
  %v265 = vunpack.c.l.b16 %v169
  %v266 = vunpack.c.l.b16 %v170
  %v267 = vunpack.c.l.b16 %v171
  %v268 = vunpack.c.l.b16 %v172
  %v269 = vunpack.c.l.b16 %v173
  %v270 = vunpack.c.l.b16 %v174
  %v271 = vunpack.c.l.b16 %v175
  %v272 = vunpack.c.l.b16 %v176
  %v273 = vunpack.c.l.b16 %v177
  %v274 = vunpack.c.l.b16 %v178
  %v275 = vunpack.c.l.b16 %v179
  %v276 = vunpack.c.l.b16 %v180
  %v277 = vunpack.c.l.b16 %v181
  %v278 = vunpack.c.l.b16 %v182
  %v279 = vunpack.c.l.b16 %v183
  %v280 = vunpack.c.l.b16 %v184
  %v281 = vunpack.c.l.b16 %v185
  %v282 = vunpack.c.l.b16 %v186
  %v283 = vunpack.c.l.b16 %v187
  %v284 = vunpack.c.l.b16 %v188
  %v285 = vunpack.c.l.b16 %v189
  %v286 = vunpack.c.l.b16 %v190
  %v287 = vunpack.c.l.b16 %v191
  %v288 = vunpack.c.l.b16 %v192
  %v289 = vunpack.c.l.b16 %v193
  %v290 = vunpack.c.l.b16 %v194
  %v291 = vunpack.c.l.b16 %v195
  %v292 = vunpack.c.l.b16 %v196
  %v293 = vunpack.c.l.b16 %v197
  %v294 = vunpack.c.l.b16 %v198
  %v295 = vunpack.c.l.b16 %v199
  %v296 = vunpack.c.l.b16 %v200
  %v297 = vunpack.c.l.b16 %v201
  %v298 = vunpack.c.l.b16 %v202
  %v299 = vunpack.c.l.b16 %v203
  %v300 = vunpack.c.l.b16 %v204
  %v301 = vunpack.c.l.b16 %v205
  %v302 = vunpack.c.l.b16 %v206
  %v303 = vunpack.c.l.b16 %v207
  %v304 = vunpack.c.l.b16 %v208
  %v305 = vunpack.c.l.b16 %v209
  %v306 = vunpack.c.l.b16 %v210
  %v307 = vunpack.c.l.b16 %v211
  %v308 = vunpack.c.l.b16 %v212
  %v309 = vunpack.c.l.b16 %v213
  %v310 = vpack.c.b16 %v263, %v262
  %v311 = vpack.c.b16 %v265, %v264
  %v312 = vpack.c.b16 %v267, %v266
  %v313 = vpack.c.b16 %v269, %v268
  %v314 = vpack.c.b16 %v271, %v270
  %v315 = vpack.c.b16 %v273, %v272
  %v316 = vpack.c.b16 %v275, %v274
  %v317 = vpack.c.b16 %v277, %v276
  %v318 = vpack.c.b16 %v279, %v278
  %v319 = vpack.c.b16 %v281, %v280
  %v320 = vpack.c.b16 %v283, %v282
  %v321 = vpack.c.b16 %v285, %v284
  %v322 = vpack.c.b16 %v287, %v286
  %v323 = vpack.c.b16 %v289, %v288
  %v324 = vpack.c.b16 %v291, %v290
  %v325 = vpack.c.b16 %v293, %v292
  %v326 = vpack.c.b16 %v295, %v294
  %v327 = vpack.c.b16 %v297, %v296
  %v328 = vpack.c.b16 %v299, %v298
  %v329 = vpack.c.b16 %v301, %v300
  %v330 = vpack.c.b16 %v303, %v302
  %v331 = vpack.c.b16 %v305, %v304
  %v332 = vpack.c.b16 %v307, %v306
  %v333 = vpack.c.b16 %v309, %v308
  %358 = vmatpush.bf16.msra.mxu0 %v317
  %359 = vmatpush.bf16.msra.mxu0 %v316
  %360 = vmatpush.bf16.msra.mxu0 %v315
  %361 = vmatpush.bf16.msra.mxu0 %v314
  %362 = vmatpush.bf16.msra.mxu0 %v313
  %363 = vmatpush.bf16.msra.mxu0 %v312
  %364 = vmatpush.bf16.msra.mxu0 %v311
  %365 = vmatpush.bf16.msra.mxu0 %v310
  %366 = vmatmul.bf16.gmra.mxu0 %v157
  %v367 = vpop.f32.mrf.mxu0
  %v368 = vadd.f32 0.0, %v367
  %v369 = vpop.f32.mrf.mxu0
  %v370 = vadd.f32 0.0, %v369
  %371 = vdwg.mxu0
  %372 = vmatpush.bf16.msra.mxu0 %v325
  %373 = vmatpush.bf16.msra.mxu0 %v324
  %374 = vmatpush.bf16.msra.mxu0 %v323
  %375 = vmatpush.bf16.msra.mxu0 %v322
  %376 = vmatpush.bf16.msra.mxu0 %v321
  %377 = vmatpush.bf16.msra.mxu0 %v320
  %378 = vmatpush.bf16.msra.mxu0 %v319
  %379 = vmatpush.bf16.msra.mxu0 %v318
  %380 = vmatmul.bf16.gmra.mxu0 %v117
  %v381 = vpop.f32.mrf.mxu0
  %v382 = vadd.f32 %v368, %v381
  %v383 = vpop.f32.mrf.mxu0
  %v384 = vadd.f32 %v370, %v383
  %385 = vdwg.mxu0
  %386 = vmatpush.bf16.msra.mxu0 %v333
  %387 = vmatpush.bf16.msra.mxu0 %v332
  %388 = vmatpush.bf16.msra.mxu0 %v331
  %389 = vmatpush.bf16.msra.mxu0 %v330
  %390 = vmatpush.bf16.msra.mxu0 %v329
  %391 = vmatpush.bf16.msra.mxu0 %v328
  %392 = vmatpush.bf16.msra.mxu0 %v327
  %393 = vmatpush.bf16.msra.mxu0 %v326
  %394 = vmatmul.bf16.gmra.mxu0 %v164
  %v395 = vpop.f32.mrf.mxu0
  %v396 = vadd.f32 %v382, %v395
  %v397 = vpop.f32.mrf.mxu0
  %v398 = vadd.f32 %v384, %v397
  %399 = vdwg.mxu0
  %v400 = vld [vmem:[%s3] sm:$0x1]
  %v401 = vperm.slane %v400, 0
  %v402 = vmul.f32 %v396, %v401
  %v403 = vmul.f32 %v398, %v401
  %v404 = vld [vmem:[%s3 + $0x1] sm:$0x1]
  %v405 = vperm.slane %v404, 0
  %v406 = vadd.f32 %v402, %v405
  %v407 = vadd.f32 %v403, %v405
  %v408 = vmax.f32 %v406, 0.0
  %v409 = vmax.f32 %v407, 0.0
  %v410 = vpack.c.bf16 %v408, %v408
  %v411 = vpack.c.bf16 %v409, %v409
  %v414 = vunpack.c.l.b16 %v410
  %v415 = vunpack.c.l.b16 %v411
  %v416 = vpack.c.b16 %v415, %v414
  %v418 = vshrl.u32 %v416, 16
  %v420 = vrot.slane %v418, 7
  %v421 = vshll.u32 %v416, 16
  %v423 = vor.u32 %v420, %v421
  %v425 = vsel %vm128, 0, %v423
  %v426 = vunpack.c.l.bf16 %v425
  %v427 = vunpack.c.h.bf16 %v425
  %v428 = vmul.f32 %v426, %v132
  %v429 = vmul.f32 %v427, %v133
  %v430 = vpack.c.bf16 %v428, %v428
  %v431 = vpack.c.bf16 %v429, %v429
  %v432 = vrot.slane %v421, 1
  %v433 = vor.u32 %v418, %v432
  %v435 = vsel %vm143, %v433, 0
  %v436 = vunpack.c.l.bf16 %v435
  %v437 = vunpack.c.h.bf16 %v435
  %v438 = vmul.f32 %v436, %v147
  %v439 = vmul.f32 %v437, %v148
  %v440 = vpack.c.bf16 %v438, %v438
  %v441 = vpack.c.bf16 %v439, %v439
  %v444 = vunpack.c.l.b16 %v430
  %v445 = vunpack.c.l.b16 %v431
  %v446 = vpack.c.b16 %v445, %v444
  %v451 = vunpack.c.l.b16 %v440
  %v452 = vunpack.c.l.b16 %v441
  %v453 = vpack.c.b16 %v452, %v451
  %v455 = vld [vmem:[%s4] sm:$0xf]
  %v456 = vld [vmem:[%s4 + $0x4] sm:$0xf]
  %v457 = vld [vmem:[%s4 + $0x8] sm:$0xf]
  %v458 = vld [vmem:[%s4 + $0xc] sm:$0xf]
  %v459 = vld [vmem:[%s4 + $0x10] sm:$0xf]
  %v460 = vld [vmem:[%s4 + $0x14] sm:$0xf]
  %v461 = vld [vmem:[%s4 + $0x18] sm:$0xf]
  %v462 = vld [vmem:[%s4 + $0x1c] sm:$0xf]
  %v463 = vld [vmem:[%s4 + $0x20] sm:$0xf]
  %v464 = vld [vmem:[%s4 + $0x24] sm:$0xf]
  %v465 = vld [vmem:[%s4 + $0x28] sm:$0xf]
  %v466 = vld [vmem:[%s4 + $0x2c] sm:$0xf]
  %v467 = vld [vmem:[%s4 + $0x30] sm:$0xf]
  %v468 = vld [vmem:[%s4 + $0x34] sm:$0xf]
  %v469 = vld [vmem:[%s4 + $0x38] sm:$0xf]
  %v470 = vld [vmem:[%s4 + $0x3c] sm:$0xf]
  %v471 = vld [vmem:[%s4 + $0x40] sm:$0xf]
  %v472 = vld [vmem:[%s4 + $0x44] sm:$0xf]
  %v473 = vld [vmem:[%s4 + $0x48] sm:$0xf]
  %v474 = vld [vmem:[%s4 + $0x4c] sm:$0xf]
  %v475 = vld [vmem:[%s4 + $0x50] sm:$0xf]
  %v476 = vld [vmem:[%s4 + $0x54] sm:$0xf]
  %v477 = vld [vmem:[%s4 + $0x58] sm:$0xf]
  %v478 = vld [vmem:[%s4 + $0x5c] sm:$0xf]
  %v479 = vld [vmem:[%s4 + $0x60] sm:$0xf]
  %v480 = vld [vmem:[%s4 + $0x64] sm:$0xf]
  %v481 = vld [vmem:[%s4 + $0x68] sm:$0xf]
  %v482 = vld [vmem:[%s4 + $0x6c] sm:$0xf]
  %v483 = vld [vmem:[%s4 + $0x70] sm:$0xf]
  %v484 = vld [vmem:[%s4 + $0x74] sm:$0xf]
  %v485 = vld [vmem:[%s4 + $0x78] sm:$0xf]
  %v486 = vld [vmem:[%s4 + $0x7c] sm:$0xf]
  %v487 = vld [vmem:[%s4 + $0x80] sm:$0xf]
  %v488 = vld [vmem:[%s4 + $0x84] sm:$0xf]
  %v489 = vld [vmem:[%s4 + $0x88] sm:$0xf]
  %v490 = vld [vmem:[%s4 + $0x8c] sm:$0xf]
  %v491 = vld [vmem:[%s4 + $0x90] sm:$0xf]
  %v492 = vld [vmem:[%s4 + $0x94] sm:$0xf]
  %v493 = vld [vmem:[%s4 + $0x98] sm:$0xf]
  %v494 = vld [vmem:[%s4 + $0x9c] sm:$0xf]
  %v495 = vld [vmem:[%s4 + $0xa0] sm:$0xf]
  %v496 = vld [vmem:[%s4 + $0xa4] sm:$0xf]
  %v497 = vld [vmem:[%s4 + $0xa8] sm:$0xf]
  %v498 = vld [vmem:[%s4 + $0xac] sm:$0xf]
  %v499 = vld [vmem:[%s4 + $0xb0] sm:$0xf]
  %v500 = vld [vmem:[%s4 + $0xb4] sm:$0xf]
  %v501 = vld [vmem:[%s4 + $0xb8] sm:$0xf]
  %v502 = vld [vmem:[%s4 + $0xbc] sm:$0xf]
  %v551 = vunpack.c.l.b16 %v455
  %v552 = vunpack.c.l.b16 %v456
  %v553 = vunpack.c.l.b16 %v457
  %v554 = vunpack.c.l.b16 %v458
  %v555 = vunpack.c.l.b16 %v459
  %v556 = vunpack.c.l.b16 %v460
  %v557 = vunpack.c.l.b16 %v461
  %v558 = vunpack.c.l.b16 %v462
  %v559 = vunpack.c.l.b16 %v463
  %v560 = vunpack.c.l.b16 %v464
  %v561 = vunpack.c.l.b16 %v465
  %v562 = vunpack.c.l.b16 %v466
  %v563 = vunpack.c.l.b16 %v467
  %v564 = vunpack.c.l.b16 %v468
  %v565 = vunpack.c.l.b16 %v469
  %v566 = vunpack.c.l.b16 %v470
  %v567 = vunpack.c.l.b16 %v471
  %v568 = vunpack.c.l.b16 %v472
  %v569 = vunpack.c.l.b16 %v473
  %v570 = vunpack.c.l.b16 %v474
  %v571 = vunpack.c.l.b16 %v475
  %v572 = vunpack.c.l.b16 %v476
  %v573 = vunpack.c.l.b16 %v477
  %v574 = vunpack.c.l.b16 %v478
  %v575 = vunpack.c.l.b16 %v479
  %v576 = vunpack.c.l.b16 %v480
  %v577 = vunpack.c.l.b16 %v481
  %v578 = vunpack.c.l.b16 %v482
  %v579 = vunpack.c.l.b16 %v483
  %v580 = vunpack.c.l.b16 %v484
  %v581 = vunpack.c.l.b16 %v485
  %v582 = vunpack.c.l.b16 %v486
  %v583 = vunpack.c.l.b16 %v487
  %v584 = vunpack.c.l.b16 %v488
  %v585 = vunpack.c.l.b16 %v489
  %v586 = vunpack.c.l.b16 %v490
  %v587 = vunpack.c.l.b16 %v491
  %v588 = vunpack.c.l.b16 %v492
  %v589 = vunpack.c.l.b16 %v493
  %v590 = vunpack.c.l.b16 %v494
  %v591 = vunpack.c.l.b16 %v495
  %v592 = vunpack.c.l.b16 %v496
  %v593 = vunpack.c.l.b16 %v497
  %v594 = vunpack.c.l.b16 %v498
  %v595 = vunpack.c.l.b16 %v499
  %v596 = vunpack.c.l.b16 %v500
  %v597 = vunpack.c.l.b16 %v501
  %v598 = vunpack.c.l.b16 %v502
  %v599 = vpack.c.b16 %v552, %v551
  %v600 = vpack.c.b16 %v554, %v553
  %v601 = vpack.c.b16 %v556, %v555
  %v602 = vpack.c.b16 %v558, %v557
  %v603 = vpack.c.b16 %v560, %v559
  %v604 = vpack.c.b16 %v562, %v561
  %v605 = vpack.c.b16 %v564, %v563
  %v606 = vpack.c.b16 %v566, %v565
  %v607 = vpack.c.b16 %v568, %v567
  %v608 = vpack.c.b16 %v570, %v569
  %v609 = vpack.c.b16 %v572, %v571
  %v610 = vpack.c.b16 %v574, %v573
  %v611 = vpack.c.b16 %v576, %v575
  %v612 = vpack.c.b16 %v578, %v577
  %v613 = vpack.c.b16 %v580, %v579
  %v614 = vpack.c.b16 %v582, %v581
  %v615 = vpack.c.b16 %v584, %v583
  %v616 = vpack.c.b16 %v586, %v585
  %v617 = vpack.c.b16 %v588, %v587
  %v618 = vpack.c.b16 %v590, %v589
  %v619 = vpack.c.b16 %v592, %v591
  %v620 = vpack.c.b16 %v594, %v593
  %v621 = vpack.c.b16 %v596, %v595
  %v622 = vpack.c.b16 %v598, %v597
  %647 = vmatpush.bf16.msra.mxu0 %v606
  %648 = vmatpush.bf16.msra.mxu0 %v605
  %649 = vmatpush.bf16.msra.mxu0 %v604
  %650 = vmatpush.bf16.msra.mxu0 %v603
  %651 = vmatpush.bf16.msra.mxu0 %v602
  %652 = vmatpush.bf16.msra.mxu0 %v601
  %653 = vmatpush.bf16.msra.mxu0 %v600
  %654 = vmatpush.bf16.msra.mxu0 %v599
  %655 = vmatmul.bf16.gmra.mxu0 %v446
  %v656 = vpop.f32.mrf.mxu0
  %v657 = vadd.f32 0.0, %v656
  %v658 = vpop.f32.mrf.mxu0
  %v659 = vadd.f32 0.0, %v658
  %660 = vdwg.mxu0
  %661 = vmatpush.bf16.msra.mxu0 %v614
  %662 = vmatpush.bf16.msra.mxu0 %v613
  %663 = vmatpush.bf16.msra.mxu0 %v612
  %664 = vmatpush.bf16.msra.mxu0 %v611
  %665 = vmatpush.bf16.msra.mxu0 %v610
  %666 = vmatpush.bf16.msra.mxu0 %v609
  %667 = vmatpush.bf16.msra.mxu0 %v608
  %668 = vmatpush.bf16.msra.mxu0 %v607
  %669 = vmatmul.bf16.gmra.mxu0 %v416
  %v670 = vpop.f32.mrf.mxu0
  %v671 = vadd.f32 %v657, %v670
  %v672 = vpop.f32.mrf.mxu0
  %v673 = vadd.f32 %v659, %v672
  %674 = vdwg.mxu0
  %675 = vmatpush.bf16.msra.mxu0 %v622
  %676 = vmatpush.bf16.msra.mxu0 %v621
  %677 = vmatpush.bf16.msra.mxu0 %v620
  %678 = vmatpush.bf16.msra.mxu0 %v619
  %679 = vmatpush.bf16.msra.mxu0 %v618
  %680 = vmatpush.bf16.msra.mxu0 %v617
  %681 = vmatpush.bf16.msra.mxu0 %v616
  %682 = vmatpush.bf16.msra.mxu0 %v615
  %683 = vmatmul.bf16.gmra.mxu0 %v453
  %v684 = vpop.f32.mrf.mxu0
  %v685 = vadd.f32 %v671, %v684
  %v686 = vpop.f32.mrf.mxu0
  %v687 = vadd.f32 %v673, %v686
  %688 = vdwg.mxu0
  %v689 = vld [vmem:[%s5] sm:$0x1]
  %v690 = vperm.slane %v689, 0
  %v691 = vmul.f32 %v685, %v690
  %v692 = vmul.f32 %v687, %v690
  %v693 = vld [vmem:[%s5 + $0x1] sm:$0x1]
  %v694 = vperm.slane %v693, 0
  %v695 = vadd.f32 %v691, %v694
  %v696 = vadd.f32 %v692, %v694
  %v697 = vunpack.c.l.bf16 %v68
  %v698 = vunpack.c.l.bf16 %v69
  %v699 = vadd.f32 %v695, %v697
  %v700 = vadd.f32 %v696, %v698
  %v701 = vpack.c.bf16 %v699, %v699
  %v702 = vpack.c.bf16 %v700, %v700
  %v705 = vunpack.c.l.b16 %v701
  %v706 = vunpack.c.l.b16 %v702
  %v707 = vpack.c.b16 %v706, %v705
  %v709 = vshrl.u32 %v707, 16
  %v711 = vrot.slane %v709, 7
  %v712 = vshll.u32 %v707, 16
  %v714 = vor.u32 %v711, %v712
  %v716 = vsel %vm128, 0, %v714
  %v717 = vunpack.c.l.bf16 %v716
  %v718 = vunpack.c.h.bf16 %v716
  %v719 = vmul.f32 %v717, %v132
  %v720 = vmul.f32 %v718, %v133
  %v721 = vpack.c.bf16 %v719, %v719
  %v722 = vpack.c.bf16 %v720, %v720
  %v723 = vrot.slane %v712, 1
  %v724 = vor.u32 %v709, %v723
  %v726 = vsel %vm143, %v724, 0
  %v727 = vunpack.c.l.bf16 %v726
  %v728 = vunpack.c.h.bf16 %v726
  %v729 = vmul.f32 %v727, %v147
  %v730 = vmul.f32 %v728, %v148
  %v731 = vpack.c.bf16 %v729, %v729
  %v732 = vpack.c.bf16 %v730, %v730
  %v735 = vunpack.c.l.b16 %v721
  %v736 = vunpack.c.l.b16 %v722
  %v737 = vpack.c.b16 %v736, %v735
  %v742 = vunpack.c.l.b16 %v731
  %v743 = vunpack.c.l.b16 %v732
  %v744 = vpack.c.b16 %v743, %v742
  %v746 = vld [vmem:[%s6] sm:$0xff]
  %v747 = vld [vmem:[%s6 + $0x8] sm:$0xff]
  %v748 = vld [vmem:[%s6 + $0x10] sm:$0xff]
  %v749 = vld [vmem:[%s6 + $0x18] sm:$0xff]
  %v750 = vld [vmem:[%s6 + $0x20] sm:$0xff]
  %v751 = vld [vmem:[%s6 + $0x28] sm:$0xff]
  %v752 = vld [vmem:[%s6 + $0x30] sm:$0xff]
  %v753 = vld [vmem:[%s6 + $0x38] sm:$0xff]
  %v754 = vld [vmem:[%s6 + $0x40] sm:$0xff]
  %v755 = vld [vmem:[%s6 + $0x48] sm:$0xff]
  %v756 = vld [vmem:[%s6 + $0x50] sm:$0xff]
  %v757 = vld [vmem:[%s6 + $0x58] sm:$0xff]
  %v758 = vld [vmem:[%s6 + $0x60] sm:$0xff]
  %v759 = vld [vmem:[%s6 + $0x68] sm:$0xff]
  %v760 = vld [vmem:[%s6 + $0x70] sm:$0xff]
  %v761 = vld [vmem:[%s6 + $0x78] sm:$0xff]
  %v762 = vld [vmem:[%s6 + $0x80] sm:$0xff]
  %v763 = vld [vmem:[%s6 + $0x88] sm:$0xff]
  %v764 = vld [vmem:[%s6 + $0x90] sm:$0xff]
  %v765 = vld [vmem:[%s6 + $0x98] sm:$0xff]
  %v766 = vld [vmem:[%s6 + $0xa0] sm:$0xff]
  %v767 = vld [vmem:[%s6 + $0xa8] sm:$0xff]
  %v768 = vld [vmem:[%s6 + $0xb0] sm:$0xff]
  %v769 = vld [vmem:[%s6 + $0xb8] sm:$0xff]
  %v770 = vld [vmem:[%s6 + $0xc0] sm:$0xff]
  %v771 = vld [vmem:[%s6 + $0xc8] sm:$0xff]
  %v772 = vld [vmem:[%s6 + $0xd0] sm:$0xff]
  %v773 = vld [vmem:[%s6 + $0xd8] sm:$0xff]
  %v774 = vld [vmem:[%s6 + $0xe0] sm:$0xff]
  %v775 = vld [vmem:[%s6 + $0xe8] sm:$0xff]
  %v776 = vld [vmem:[%s6 + $0xf0] sm:$0xff]
  %v777 = vld [vmem:[%s6 + $0xf8] sm:$0xff]
  %v778 = vld [vmem:[%s6 + $0x100] sm:$0xff]
  %v779 = vld [vmem:[%s6 + $0x108] sm:$0xff]
  %v780 = vld [vmem:[%s6 + $0x110] sm:$0xff]
  %v781 = vld [vmem:[%s6 + $0x118] sm:$0xff]
  %v782 = vld [vmem:[%s6 + $0x120] sm:$0xff]
  %v783 = vld [vmem:[%s6 + $0x128] sm:$0xff]
  %v784 = vld [vmem:[%s6 + $0x130] sm:$0xff]
  %v785 = vld [vmem:[%s6 + $0x138] sm:$0xff]
  %v786 = vld [vmem:[%s6 + $0x140] sm:$0xff]
  %v787 = vld [vmem:[%s6 + $0x148] sm:$0xff]
  %v788 = vld [vmem:[%s6 + $0x150] sm:$0xff]
  %v789 = vld [vmem:[%s6 + $0x158] sm:$0xff]
  %v790 = vld [vmem:[%s6 + $0x160] sm:$0xff]
  %v791 = vld [vmem:[%s6 + $0x168] sm:$0xff]
  %v792 = vld [vmem:[%s6 + $0x170] sm:$0xff]
  %v793 = vld [vmem:[%s6 + $0x178] sm:$0xff]
  %v842 = vunpack.c.l.b16 %v746
  %v843 = vunpack.c.h.b16 %v746
  %v844 = vunpack.c.l.b16 %v747
  %v845 = vunpack.c.h.b16 %v747
  %v846 = vunpack.c.l.b16 %v748
  %v847 = vunpack.c.h.b16 %v748
  %v848 = vunpack.c.l.b16 %v749
  %v849 = vunpack.c.h.b16 %v749
  %v850 = vunpack.c.l.b16 %v750
  %v851 = vunpack.c.h.b16 %v750
  %v852 = vunpack.c.l.b16 %v751
  %v853 = vunpack.c.h.b16 %v751
  %v854 = vunpack.c.l.b16 %v752
  %v855 = vunpack.c.h.b16 %v752
  %v856 = vunpack.c.l.b16 %v753
  %v857 = vunpack.c.h.b16 %v753
  %v858 = vunpack.c.l.b16 %v754
  %v859 = vunpack.c.h.b16 %v754
  %v860 = vunpack.c.l.b16 %v755
  %v861 = vunpack.c.h.b16 %v755
  %v862 = vunpack.c.l.b16 %v756
  %v863 = vunpack.c.h.b16 %v756
  %v864 = vunpack.c.l.b16 %v757
  %v865 = vunpack.c.h.b16 %v757
  %v866 = vunpack.c.l.b16 %v758
  %v867 = vunpack.c.h.b16 %v758
  %v868 = vunpack.c.l.b16 %v759
  %v869 = vunpack.c.h.b16 %v759
  %v870 = vunpack.c.l.b16 %v760
  %v871 = vunpack.c.h.b16 %v760
  %v872 = vunpack.c.l.b16 %v761
  %v873 = vunpack.c.h.b16 %v761
  %v874 = vunpack.c.l.b16 %v762
  %v875 = vunpack.c.h.b16 %v762
  %v876 = vunpack.c.l.b16 %v763
  %v877 = vunpack.c.h.b16 %v763
  %v878 = vunpack.c.l.b16 %v764
  %v879 = vunpack.c.h.b16 %v764
  %v880 = vunpack.c.l.b16 %v765
  %v881 = vunpack.c.h.b16 %v765
  %v882 = vunpack.c.l.b16 %v766
  %v883 = vunpack.c.h.b16 %v766
  %v884 = vunpack.c.l.b16 %v767
  %v885 = vunpack.c.h.b16 %v767
  %v886 = vunpack.c.l.b16 %v768
  %v887 = vunpack.c.h.b16 %v768
  %v888 = vunpack.c.l.b16 %v769
  %v889 = vunpack.c.h.b16 %v769
  %v890 = vunpack.c.l.b16 %v770
  %v891 = vunpack.c.h.b16 %v770
  %v892 = vunpack.c.l.b16 %v771
  %v893 = vunpack.c.h.b16 %v771
  %v894 = vunpack.c.l.b16 %v772
  %v895 = vunpack.c.h.b16 %v772
  %v896 = vunpack.c.l.b16 %v773
  %v897 = vunpack.c.h.b16 %v773
  %v898 = vunpack.c.l.b16 %v774
  %v899 = vunpack.c.h.b16 %v774
  %v900 = vunpack.c.l.b16 %v775
  %v901 = vunpack.c.h.b16 %v775
  %v902 = vunpack.c.l.b16 %v776
  %v903 = vunpack.c.h.b16 %v776
  %v904 = vunpack.c.l.b16 %v777
  %v905 = vunpack.c.h.b16 %v777
  %v906 = vunpack.c.l.b16 %v778
  %v907 = vunpack.c.h.b16 %v778
  %v908 = vunpack.c.l.b16 %v779
  %v909 = vunpack.c.h.b16 %v779
  %v910 = vunpack.c.l.b16 %v780
  %v911 = vunpack.c.h.b16 %v780
  %v912 = vunpack.c.l.b16 %v781
  %v913 = vunpack.c.h.b16 %v781
  %v914 = vunpack.c.l.b16 %v782
  %v915 = vunpack.c.h.b16 %v782
  %v916 = vunpack.c.l.b16 %v783
  %v917 = vunpack.c.h.b16 %v783
  %v918 = vunpack.c.l.b16 %v784
  %v919 = vunpack.c.h.b16 %v784
  %v920 = vunpack.c.l.b16 %v785
  %v921 = vunpack.c.h.b16 %v785
  %v922 = vunpack.c.l.b16 %v786
  %v923 = vunpack.c.h.b16 %v786
  %v924 = vunpack.c.l.b16 %v787
  %v925 = vunpack.c.h.b16 %v787
  %v926 = vunpack.c.l.b16 %v788
  %v927 = vunpack.c.h.b16 %v788
  %v928 = vunpack.c.l.b16 %v789
  %v929 = vunpack.c.h.b16 %v789
  %v930 = vunpack.c.l.b16 %v790
  %v931 = vunpack.c.h.b16 %v790
  %v932 = vunpack.c.l.b16 %v791
  %v933 = vunpack.c.h.b16 %v791
  %v934 = vunpack.c.l.b16 %v792
  %v935 = vunpack.c.h.b16 %v792
  %v936 = vunpack.c.l.b16 %v793
  %v937 = vunpack.c.h.b16 %v793
  %v938 = vpack.c.b16 %v844, %v842
  %v939 = vpack.c.b16 %v845, %v843
  %v940 = vpack.c.b16 %v848, %v846
  %v941 = vpack.c.b16 %v849, %v847
  %v942 = vpack.c.b16 %v852, %v850
  %v943 = vpack.c.b16 %v853, %v851
  %v944 = vpack.c.b16 %v856, %v854
  %v945 = vpack.c.b16 %v857, %v855
  %v946 = vpack.c.b16 %v860, %v858
  %v947 = vpack.c.b16 %v861, %v859
  %v948 = vpack.c.b16 %v864, %v862
  %v949 = vpack.c.b16 %v865, %v863
  %v950 = vpack.c.b16 %v868, %v866
  %v951 = vpack.c.b16 %v869, %v867
  %v952 = vpack.c.b16 %v872, %v870
  %v953 = vpack.c.b16 %v873, %v871
  %v954 = vpack.c.b16 %v876, %v874
  %v955 = vpack.c.b16 %v877, %v875
  %v956 = vpack.c.b16 %v880, %v878
  %v957 = vpack.c.b16 %v881, %v879
  %v958 = vpack.c.b16 %v884, %v882
  %v959 = vpack.c.b16 %v885, %v883
  %v960 = vpack.c.b16 %v888, %v886
  %v961 = vpack.c.b16 %v889, %v887
  %v962 = vpack.c.b16 %v892, %v890
  %v963 = vpack.c.b16 %v893, %v891
  %v964 = vpack.c.b16 %v896, %v894
  %v965 = vpack.c.b16 %v897, %v895
  %v966 = vpack.c.b16 %v900, %v898
  %v967 = vpack.c.b16 %v901, %v899
  %v968 = vpack.c.b16 %v904, %v902
  %v969 = vpack.c.b16 %v905, %v903
  %v970 = vpack.c.b16 %v908, %v906
  %v971 = vpack.c.b16 %v909, %v907
  %v972 = vpack.c.b16 %v912, %v910
  %v973 = vpack.c.b16 %v913, %v911
  %v974 = vpack.c.b16 %v916, %v914
  %v975 = vpack.c.b16 %v917, %v915
  %v976 = vpack.c.b16 %v920, %v918
  %v977 = vpack.c.b16 %v921, %v919
  %v978 = vpack.c.b16 %v924, %v922
  %v979 = vpack.c.b16 %v925, %v923
  %v980 = vpack.c.b16 %v928, %v926
  %v981 = vpack.c.b16 %v929, %v927
  %v982 = vpack.c.b16 %v932, %v930
  %v983 = vpack.c.b16 %v933, %v931
  %v984 = vpack.c.b16 %v936, %v934
  %v985 = vpack.c.b16 %v937, %v935
  %1034 = vmatpush.bf16.msra.mxu0 %v952
  %1035 = vmatpush.bf16.msra.mxu0 %v950
  %1036 = vmatpush.bf16.msra.mxu0 %v948
  %1037 = vmatpush.bf16.msra.mxu0 %v946
  %1038 = vmatpush.bf16.msra.mxu0 %v944
  %1039 = vmatpush.bf16.msra.mxu0 %v942
  %1040 = vmatpush.bf16.msra.mxu0 %v940
  %1041 = vmatpush.bf16.msra.mxu0 %v938
  %1042 = vmatmul.bf16.gmra.mxu0 %v737
  %v1043 = vpop.f32.mrf.mxu0
  %v1044 = vadd.f32 0.0, %v1043
  %v1045 = vpop.f32.mrf.mxu0
  %v1046 = vadd.f32 0.0, %v1045
  %1047 = vdwg.mxu0
  %1048 = vmatpush.bf16.msra.mxu0 %v968
  %1049 = vmatpush.bf16.msra.mxu0 %v966
  %1050 = vmatpush.bf16.msra.mxu0 %v964
  %1051 = vmatpush.bf16.msra.mxu0 %v962
  %1052 = vmatpush.bf16.msra.mxu0 %v960
  %1053 = vmatpush.bf16.msra.mxu0 %v958
  %1054 = vmatpush.bf16.msra.mxu0 %v956
  %1055 = vmatpush.bf16.msra.mxu0 %v954
  %1056 = vmatmul.bf16.gmra.mxu0 %v707
  %v1057 = vpop.f32.mrf.mxu0
  %v1058 = vadd.f32 %v1044, %v1057
  %v1059 = vpop.f32.mrf.mxu0
  %v1060 = vadd.f32 %v1046, %v1059
  %1061 = vdwg.mxu0
  %1062 = vmatpush.bf16.msra.mxu0 %v984
  %1063 = vmatpush.bf16.msra.mxu0 %v982
  %1064 = vmatpush.bf16.msra.mxu0 %v980
  %1065 = vmatpush.bf16.msra.mxu0 %v978
  %1066 = vmatpush.bf16.msra.mxu0 %v976
  %1067 = vmatpush.bf16.msra.mxu0 %v974
  %1068 = vmatpush.bf16.msra.mxu0 %v972
  %1069 = vmatpush.bf16.msra.mxu0 %v970
  %1070 = vmatmul.bf16.gmra.mxu0 %v744
  %v1071 = vpop.f32.mrf.mxu0
  %v1072 = vadd.f32 %v1058, %v1071
  %v1073 = vpop.f32.mrf.mxu0
  %v1074 = vadd.f32 %v1060, %v1073
  %1075 = vdwg.mxu0
  %1076 = vmatpush.bf16.msra.mxu0 %v953
  %1077 = vmatpush.bf16.msra.mxu0 %v951
  %1078 = vmatpush.bf16.msra.mxu0 %v949
  %1079 = vmatpush.bf16.msra.mxu0 %v947
  %1080 = vmatpush.bf16.msra.mxu0 %v945
  %1081 = vmatpush.bf16.msra.mxu0 %v943
  %1082 = vmatpush.bf16.msra.mxu0 %v941
  %1083 = vmatpush.bf16.msra.mxu0 %v939
  %1084 = vmatmul.bf16.gmra.mxu0 %v737
  %v1085 = vpop.f32.mrf.mxu0
  %v1086 = vadd.f32 0.0, %v1085
  %v1087 = vpop.f32.mrf.mxu0
  %v1088 = vadd.f32 0.0, %v1087
  %1089 = vdwg.mxu0
  %1090 = vmatpush.bf16.msra.mxu0 %v969
  %1091 = vmatpush.bf16.msra.mxu0 %v967
  %1092 = vmatpush.bf16.msra.mxu0 %v965
  %1093 = vmatpush.bf16.msra.mxu0 %v963
  %1094 = vmatpush.bf16.msra.mxu0 %v961
  %1095 = vmatpush.bf16.msra.mxu0 %v959
  %1096 = vmatpush.bf16.msra.mxu0 %v957
  %1097 = vmatpush.bf16.msra.mxu0 %v955
  %1098 = vmatmul.bf16.gmra.mxu0 %v707
  %v1099 = vpop.f32.mrf.mxu0
  %v1100 = vadd.f32 %v1086, %v1099
  %v1101 = vpop.f32.mrf.mxu0
  %v1102 = vadd.f32 %v1088, %v1101
  %1103 = vdwg.mxu0
  %1104 = vmatpush.bf16.msra.mxu0 %v985
  %1105 = vmatpush.bf16.msra.mxu0 %v983
  %1106 = vmatpush.bf16.msra.mxu0 %v981
  %1107 = vmatpush.bf16.msra.mxu0 %v979
  %1108 = vmatpush.bf16.msra.mxu0 %v977
  %1109 = vmatpush.bf16.msra.mxu0 %v975
  %1110 = vmatpush.bf16.msra.mxu0 %v973
  %1111 = vmatpush.bf16.msra.mxu0 %v971
  %1112 = vmatmul.bf16.gmra.mxu0 %v744
  %v1113 = vpop.f32.mrf.mxu0
  %v1114 = vadd.f32 %v1100, %v1113
  %v1115 = vpop.f32.mrf.mxu0
  %v1116 = vadd.f32 %v1102, %v1115
  %1117 = vdwg.mxu0
  %v1118 = vld [vmem:[%s7] ss:$2 sm:$0x3]
  %v1120 = vperm.slane %v1118, 0
  %v1121 = vperm.slane %v1118, 1
  %v1124 = vmul.f32 %v1072, %v1120
  %v1125 = vmul.f32 %v1114, %v1121
  %v1126 = vmul.f32 %v1074, %v1120
  %v1127 = vmul.f32 %v1116, %v1121
  %s1128 = scalar_lea.vmem %s7, 1
  %v1129 = vld [vmem:[%s1128] ss:$2 sm:$0x3]
  %v1131 = vperm.slane %v1129, 0
  %v1132 = vperm.slane %v1129, 1
  %v1135 = vadd.f32 %v1124, %v1131
  %v1136 = vadd.f32 %v1125, %v1132
  %v1137 = vadd.f32 %v1126, %v1131
  %v1138 = vadd.f32 %v1127, %v1132
  %v1139 = vpack.c.bf16 %v1136, %v1135
  %v1140 = vpack.c.bf16 %v1138, %v1137
  %v1143 = vunpack.c.l.b16 %v1139
  %v1144 = vunpack.c.h.b16 %v1139
  %v1145 = vunpack.c.l.b16 %v1140
  %v1146 = vunpack.c.h.b16 %v1140
  %v1147 = vpack.c.b16 %v1145, %v1143
  %v1148 = vpack.c.b16 %v1146, %v1144
  %v1150 = vshrl.u32 %v1147, 16
  %v1152 = vrot.slane %v1150, 7
  %v1153 = vshll.u32 %v1147, 16
  %v1155 = vor.u32 %v1152, %v1153
  %v1157 = vshrl.u32 %v1148, 16
  %v1159 = vrot.slane %v1157, 7
  %v1160 = vshll.u32 %v1148, 16
  %v1162 = vor.u32 %v1159, %v1160
  %v1165 = vsel %vm128, 0, %v1155
  %v1166 = vsel %vm128, 0, %v1162
  %v1167 = vunpack.c.l.bf16 %v1165
  %v1168 = vunpack.c.l.bf16 %v1166
  %v1169 = vunpack.c.h.bf16 %v1165
  %v1170 = vunpack.c.h.bf16 %v1166
  %v1171 = vmul.f32 %v1167, %v132
  %v1172 = vmul.f32 %v1168, %v132
  %v1173 = vmul.f32 %v1169, %v133
  %v1174 = vmul.f32 %v1170, %v133
  %v1175 = vpack.c.bf16 %v1172, %v1171
  %v1176 = vpack.c.bf16 %v1174, %v1173
  %v1177 = vrot.slane %v1153, 1
  %v1178 = vor.u32 %v1150, %v1177
  %v1179 = vrot.slane %v1160, 1
  %v1180 = vor.u32 %v1157, %v1179
  %v1183 = vsel %vm143, %v1178, 0
  %v1184 = vsel %vm143, %v1180, 0
  %v1185 = vunpack.c.l.bf16 %v1183
  %v1186 = vunpack.c.l.bf16 %v1184
  %v1187 = vunpack.c.h.bf16 %v1183
  %v1188 = vunpack.c.h.bf16 %v1184
  %v1189 = vmul.f32 %v1185, %v147
  %v1190 = vmul.f32 %v1186, %v147
  %v1191 = vmul.f32 %v1187, %v148
  %v1192 = vmul.f32 %v1188, %v148
  %v1193 = vpack.c.bf16 %v1190, %v1189
  %v1194 = vpack.c.bf16 %v1192, %v1191
  %v1197 = vunpack.c.l.b16 %v1175
  %v1198 = vunpack.c.h.b16 %v1175
  %v1199 = vunpack.c.l.b16 %v1176
  %v1200 = vunpack.c.h.b16 %v1176
  %v1201 = vpack.c.b16 %v1199, %v1197
  %v1202 = vpack.c.b16 %v1200, %v1198
  %v1209 = vunpack.c.l.b16 %v1193
  %v1210 = vunpack.c.h.b16 %v1193
  %v1211 = vunpack.c.l.b16 %v1194
  %v1212 = vunpack.c.h.b16 %v1194
  %v1213 = vpack.c.b16 %v1211, %v1209
  %v1214 = vpack.c.b16 %v1212, %v1210
  %v1217 = vld [vmem:[%s8] sm:$0xff]
  %v1218 = vld [vmem:[%s8 + $0x8] sm:$0xff]
  %v1219 = vld [vmem:[%s8 + $0x10] sm:$0xff]
  %v1220 = vld [vmem:[%s8 + $0x18] sm:$0xff]
  %v1221 = vld [vmem:[%s8 + $0x20] sm:$0xff]
  %v1222 = vld [vmem:[%s8 + $0x28] sm:$0xff]
  %v1223 = vld [vmem:[%s8 + $0x30] sm:$0xff]
  %v1224 = vld [vmem:[%s8 + $0x38] sm:$0xff]
  %v1225 = vld [vmem:[%s8 + $0x40] sm:$0xff]
  %v1226 = vld [vmem:[%s8 + $0x48] sm:$0xff]
  %v1227 = vld [vmem:[%s8 + $0x50] sm:$0xff]
  %v1228 = vld [vmem:[%s8 + $0x58] sm:$0xff]
  %v1229 = vld [vmem:[%s8 + $0x60] sm:$0xff]
  %v1230 = vld [vmem:[%s8 + $0x68] sm:$0xff]
  %v1231 = vld [vmem:[%s8 + $0x70] sm:$0xff]
  %v1232 = vld [vmem:[%s8 + $0x78] sm:$0xff]
  %v1233 = vld [vmem:[%s8 + $0x80] sm:$0xff]
  %v1234 = vld [vmem:[%s8 + $0x88] sm:$0xff]
  %v1235 = vld [vmem:[%s8 + $0x90] sm:$0xff]
  %v1236 = vld [vmem:[%s8 + $0x98] sm:$0xff]
  %v1237 = vld [vmem:[%s8 + $0xa0] sm:$0xff]
  %v1238 = vld [vmem:[%s8 + $0xa8] sm:$0xff]
  %v1239 = vld [vmem:[%s8 + $0xb0] sm:$0xff]
  %v1240 = vld [vmem:[%s8 + $0xb8] sm:$0xff]
  %v1241 = vld [vmem:[%s8 + $0xc0] sm:$0xff]
  %v1242 = vld [vmem:[%s8 + $0xc8] sm:$0xff]
  %v1243 = vld [vmem:[%s8 + $0xd0] sm:$0xff]
  %v1244 = vld [vmem:[%s8 + $0xd8] sm:$0xff]
  %v1245 = vld [vmem:[%s8 + $0xe0] sm:$0xff]
  %v1246 = vld [vmem:[%s8 + $0xe8] sm:$0xff]
  %v1247 = vld [vmem:[%s8 + $0xf0] sm:$0xff]
  %v1248 = vld [vmem:[%s8 + $0xf8] sm:$0xff]
  %v1249 = vld [vmem:[%s8 + $0x100] sm:$0xff]
  %v1250 = vld [vmem:[%s8 + $0x108] sm:$0xff]
  %v1251 = vld [vmem:[%s8 + $0x110] sm:$0xff]
  %v1252 = vld [vmem:[%s8 + $0x118] sm:$0xff]
  %v1253 = vld [vmem:[%s8 + $0x120] sm:$0xff]
  %v1254 = vld [vmem:[%s8 + $0x128] sm:$0xff]
  %v1255 = vld [vmem:[%s8 + $0x130] sm:$0xff]
  %v1256 = vld [vmem:[%s8 + $0x138] sm:$0xff]
  %v1257 = vld [vmem:[%s8 + $0x140] sm:$0xff]
  %v1258 = vld [vmem:[%s8 + $0x148] sm:$0xff]
  %v1259 = vld [vmem:[%s8 + $0x150] sm:$0xff]
  %v1260 = vld [vmem:[%s8 + $0x158] sm:$0xff]
  %v1261 = vld [vmem:[%s8 + $0x160] sm:$0xff]
  %v1262 = vld [vmem:[%s8 + $0x168] sm:$0xff]
  %v1263 = vld [vmem:[%s8 + $0x170] sm:$0xff]
  %v1264 = vld [vmem:[%s8 + $0x178] sm:$0xff]
  %v1265 = vld [vmem:[%s8 + $0x180] sm:$0xff]
  %v1266 = vld [vmem:[%s8 + $0x188] sm:$0xff]
  %v1267 = vld [vmem:[%s8 + $0x190] sm:$0xff]
  %v1268 = vld [vmem:[%s8 + $0x198] sm:$0xff]
  %v1269 = vld [vmem:[%s8 + $0x1a0] sm:$0xff]
  %v1270 = vld [vmem:[%s8 + $0x1a8] sm:$0xff]
  %v1271 = vld [vmem:[%s8 + $0x1b0] sm:$0xff]
  %v1272 = vld [vmem:[%s8 + $0x1b8] sm:$0xff]
  %v1273 = vld [vmem:[%s8 + $0x1c0] sm:$0xff]
  %v1274 = vld [vmem:[%s8 + $0x1c8] sm:$0xff]
  %v1275 = vld [vmem:[%s8 + $0x1d0] sm:$0xff]
  %v1276 = vld [vmem:[%s8 + $0x1d8] sm:$0xff]
  %v1277 = vld [vmem:[%s8 + $0x1e0] sm:$0xff]
  %v1278 = vld [vmem:[%s8 + $0x1e8] sm:$0xff]
  %v1279 = vld [vmem:[%s8 + $0x1f0] sm:$0xff]
  %v1280 = vld [vmem:[%s8 + $0x1f8] sm:$0xff]
  %v1281 = vld [vmem:[%s8 + $0x200] sm:$0xff]
  %v1282 = vld [vmem:[%s8 + $0x208] sm:$0xff]
  %v1283 = vld [vmem:[%s8 + $0x210] sm:$0xff]
  %v1284 = vld [vmem:[%s8 + $0x218] sm:$0xff]
  %v1285 = vld [vmem:[%s8 + $0x220] sm:$0xff]
  %v1286 = vld [vmem:[%s8 + $0x228] sm:$0xff]
  %v1287 = vld [vmem:[%s8 + $0x230] sm:$0xff]
  %v1288 = vld [vmem:[%s8 + $0x238] sm:$0xff]
  %v1289 = vld [vmem:[%s8 + $0x240] sm:$0xff]
  %v1290 = vld [vmem:[%s8 + $0x248] sm:$0xff]
  %v1291 = vld [vmem:[%s8 + $0x250] sm:$0xff]
  %v1292 = vld [vmem:[%s8 + $0x258] sm:$0xff]
  %v1293 = vld [vmem:[%s8 + $0x260] sm:$0xff]
  %v1294 = vld [vmem:[%s8 + $0x268] sm:$0xff]
  %v1295 = vld [vmem:[%s8 + $0x270] sm:$0xff]
  %v1296 = vld [vmem:[%s8 + $0x278] sm:$0xff]
  %v1297 = vld [vmem:[%s8 + $0x280] sm:$0xff]
  %v1298 = vld [vmem:[%s8 + $0x288] sm:$0xff]
  %v1299 = vld [vmem:[%s8 + $0x290] sm:$0xff]
  %v1300 = vld [vmem:[%s8 + $0x298] sm:$0xff]
  %v1301 = vld [vmem:[%s8 + $0x2a0] sm:$0xff]
  %v1302 = vld [vmem:[%s8 + $0x2a8] sm:$0xff]
  %v1303 = vld [vmem:[%s8 + $0x2b0] sm:$0xff]
  %v1304 = vld [vmem:[%s8 + $0x2b8] sm:$0xff]
  %v1305 = vld [vmem:[%s8 + $0x2c0] sm:$0xff]
  %v1306 = vld [vmem:[%s8 + $0x2c8] sm:$0xff]
  %v1307 = vld [vmem:[%s8 + $0x2d0] sm:$0xff]
  %v1308 = vld [vmem:[%s8 + $0x2d8] sm:$0xff]
  %v1309 = vld [vmem:[%s8 + $0x2e0] sm:$0xff]
  %v1310 = vld [vmem:[%s8 + $0x2e8] sm:$0xff]
  %v1311 = vld [vmem:[%s8 + $0x2f0] sm:$0xff]
  %v1312 = vld [vmem:[%s8 + $0x2f8] sm:$0xff]
  %v1409 = vunpack.c.l.b16 %v1217
  %v1410 = vunpack.c.h.b16 %v1217
  %v1411 = vunpack.c.l.b16 %v1218
  %v1412 = vunpack.c.h.b16 %v1218
  %v1413 = vunpack.c.l.b16 %v1219
  %v1414 = vunpack.c.h.b16 %v1219
  %v1415 = vunpack.c.l.b16 %v1220
  %v1416 = vunpack.c.h.b16 %v1220
  %v1417 = vunpack.c.l.b16 %v1221
  %v1418 = vunpack.c.h.b16 %v1221
  %v1419 = vunpack.c.l.b16 %v1222
  %v1420 = vunpack.c.h.b16 %v1222
  %v1421 = vunpack.c.l.b16 %v1223
  %v1422 = vunpack.c.h.b16 %v1223
  %v1423 = vunpack.c.l.b16 %v1224
  %v1424 = vunpack.c.h.b16 %v1224
  %v1425 = vunpack.c.l.b16 %v1225
  %v1426 = vunpack.c.h.b16 %v1225
  %v1427 = vunpack.c.l.b16 %v1226
  %v1428 = vunpack.c.h.b16 %v1226
  %v1429 = vunpack.c.l.b16 %v1227
  %v1430 = vunpack.c.h.b16 %v1227
  %v1431 = vunpack.c.l.b16 %v1228
  %v1432 = vunpack.c.h.b16 %v1228
  %v1433 = vunpack.c.l.b16 %v1229
  %v1434 = vunpack.c.h.b16 %v1229
  %v1435 = vunpack.c.l.b16 %v1230
  %v1436 = vunpack.c.h.b16 %v1230
  %v1437 = vunpack.c.l.b16 %v1231
  %v1438 = vunpack.c.h.b16 %v1231
  %v1439 = vunpack.c.l.b16 %v1232
  %v1440 = vunpack.c.h.b16 %v1232
  %v1441 = vunpack.c.l.b16 %v1233
  %v1442 = vunpack.c.h.b16 %v1233
  %v1443 = vunpack.c.l.b16 %v1234
  %v1444 = vunpack.c.h.b16 %v1234
  %v1445 = vunpack.c.l.b16 %v1235
  %v1446 = vunpack.c.h.b16 %v1235
  %v1447 = vunpack.c.l.b16 %v1236
  %v1448 = vunpack.c.h.b16 %v1236
  %v1449 = vunpack.c.l.b16 %v1237
  %v1450 = vunpack.c.h.b16 %v1237
  %v1451 = vunpack.c.l.b16 %v1238
  %v1452 = vunpack.c.h.b16 %v1238
  %v1453 = vunpack.c.l.b16 %v1239
  %v1454 = vunpack.c.h.b16 %v1239
  %v1455 = vunpack.c.l.b16 %v1240
  %v1456 = vunpack.c.h.b16 %v1240
  %v1457 = vunpack.c.l.b16 %v1241
  %v1458 = vunpack.c.h.b16 %v1241
  %v1459 = vunpack.c.l.b16 %v1242
  %v1460 = vunpack.c.h.b16 %v1242
  %v1461 = vunpack.c.l.b16 %v1243
  %v1462 = vunpack.c.h.b16 %v1243
  %v1463 = vunpack.c.l.b16 %v1244
  %v1464 = vunpack.c.h.b16 %v1244
  %v1465 = vunpack.c.l.b16 %v1245
  %v1466 = vunpack.c.h.b16 %v1245
  %v1467 = vunpack.c.l.b16 %v1246
  %v1468 = vunpack.c.h.b16 %v1246
  %v1469 = vunpack.c.l.b16 %v1247
  %v1470 = vunpack.c.h.b16 %v1247
  %v1471 = vunpack.c.l.b16 %v1248
  %v1472 = vunpack.c.h.b16 %v1248
  %v1473 = vunpack.c.l.b16 %v1249
  %v1474 = vunpack.c.h.b16 %v1249
  %v1475 = vunpack.c.l.b16 %v1250
  %v1476 = vunpack.c.h.b16 %v1250
  %v1477 = vunpack.c.l.b16 %v1251
  %v1478 = vunpack.c.h.b16 %v1251
  %v1479 = vunpack.c.l.b16 %v1252
  %v1480 = vunpack.c.h.b16 %v1252
  %v1481 = vunpack.c.l.b16 %v1253
  %v1482 = vunpack.c.h.b16 %v1253
  %v1483 = vunpack.c.l.b16 %v1254
  %v1484 = vunpack.c.h.b16 %v1254
  %v1485 = vunpack.c.l.b16 %v1255
  %v1486 = vunpack.c.h.b16 %v1255
  %v1487 = vunpack.c.l.b16 %v1256
  %v1488 = vunpack.c.h.b16 %v1256
  %v1489 = vunpack.c.l.b16 %v1257
  %v1490 = vunpack.c.h.b16 %v1257
  %v1491 = vunpack.c.l.b16 %v1258
  %v1492 = vunpack.c.h.b16 %v1258
  %v1493 = vunpack.c.l.b16 %v1259
  %v1494 = vunpack.c.h.b16 %v1259
  %v1495 = vunpack.c.l.b16 %v1260
  %v1496 = vunpack.c.h.b16 %v1260
  %v1497 = vunpack.c.l.b16 %v1261
  %v1498 = vunpack.c.h.b16 %v1261
  %v1499 = vunpack.c.l.b16 %v1262
  %v1500 = vunpack.c.h.b16 %v1262
  %v1501 = vunpack.c.l.b16 %v1263
  %v1502 = vunpack.c.h.b16 %v1263
  %v1503 = vunpack.c.l.b16 %v1264
  %v1504 = vunpack.c.h.b16 %v1264
  %v1505 = vunpack.c.l.b16 %v1265
  %v1506 = vunpack.c.h.b16 %v1265
  %v1507 = vunpack.c.l.b16 %v1266
  %v1508 = vunpack.c.h.b16 %v1266
  %v1509 = vunpack.c.l.b16 %v1267
  %v1510 = vunpack.c.h.b16 %v1267
  %v1511 = vunpack.c.l.b16 %v1268
  %v1512 = vunpack.c.h.b16 %v1268
  %v1513 = vunpack.c.l.b16 %v1269
  %v1514 = vunpack.c.h.b16 %v1269
  %v1515 = vunpack.c.l.b16 %v1270
  %v1516 = vunpack.c.h.b16 %v1270
  %v1517 = vunpack.c.l.b16 %v1271
  %v1518 = vunpack.c.h.b16 %v1271
  %v1519 = vunpack.c.l.b16 %v1272
  %v1520 = vunpack.c.h.b16 %v1272
  %v1521 = vunpack.c.l.b16 %v1273
  %v1522 = vunpack.c.h.b16 %v1273
  %v1523 = vunpack.c.l.b16 %v1274
  %v1524 = vunpack.c.h.b16 %v1274
  %v1525 = vunpack.c.l.b16 %v1275
  %v1526 = vunpack.c.h.b16 %v1275
  %v1527 = vunpack.c.l.b16 %v1276
  %v1528 = vunpack.c.h.b16 %v1276
  %v1529 = vunpack.c.l.b16 %v1277
  %v1530 = vunpack.c.h.b16 %v1277
  %v1531 = vunpack.c.l.b16 %v1278
  %v1532 = vunpack.c.h.b16 %v1278
  %v1533 = vunpack.c.l.b16 %v1279
  %v1534 = vunpack.c.h.b16 %v1279
  %v1535 = vunpack.c.l.b16 %v1280
  %v1536 = vunpack.c.h.b16 %v1280
  %v1537 = vunpack.c.l.b16 %v1281
  %v1538 = vunpack.c.h.b16 %v1281
  %v1539 = vunpack.c.l.b16 %v1282
  %v1540 = vunpack.c.h.b16 %v1282
  %v1541 = vunpack.c.l.b16 %v1283
  %v1542 = vunpack.c.h.b16 %v1283
  %v1543 = vunpack.c.l.b16 %v1284
  %v1544 = vunpack.c.h.b16 %v1284
  %v1545 = vunpack.c.l.b16 %v1285
  %v1546 = vunpack.c.h.b16 %v1285
  %v1547 = vunpack.c.l.b16 %v1286
  %v1548 = vunpack.c.h.b16 %v1286
  %v1549 = vunpack.c.l.b16 %v1287
  %v1550 = vunpack.c.h.b16 %v1287
  %v1551 = vunpack.c.l.b16 %v1288
  %v1552 = vunpack.c.h.b16 %v1288
  %v1553 = vunpack.c.l.b16 %v1289
  %v1554 = vunpack.c.h.b16 %v1289
  %v1555 = vunpack.c.l.b16 %v1290
  %v1556 = vunpack.c.h.b16 %v1290
  %v1557 = vunpack.c.l.b16 %v1291
  %v1558 = vunpack.c.h.b16 %v1291
  %v1559 = vunpack.c.l.b16 %v1292
  %v1560 = vunpack.c.h.b16 %v1292
  %v1561 = vunpack.c.l.b16 %v1293
  %v1562 = vunpack.c.h.b16 %v1293
  %v1563 = vunpack.c.l.b16 %v1294
  %v1564 = vunpack.c.h.b16 %v1294
  %v1565 = vunpack.c.l.b16 %v1295
  %v1566 = vunpack.c.h.b16 %v1295
  %v1567 = vunpack.c.l.b16 %v1296
  %v1568 = vunpack.c.h.b16 %v1296
  %v1569 = vunpack.c.l.b16 %v1297
  %v1570 = vunpack.c.h.b16 %v1297
  %v1571 = vunpack.c.l.b16 %v1298
  %v1572 = vunpack.c.h.b16 %v1298
  %v1573 = vunpack.c.l.b16 %v1299
  %v1574 = vunpack.c.h.b16 %v1299
  %v1575 = vunpack.c.l.b16 %v1300
  %v1576 = vunpack.c.h.b16 %v1300
  %v1577 = vunpack.c.l.b16 %v1301
  %v1578 = vunpack.c.h.b16 %v1301
  %v1579 = vunpack.c.l.b16 %v1302
  %v1580 = vunpack.c.h.b16 %v1302
  %v1581 = vunpack.c.l.b16 %v1303
  %v1582 = vunpack.c.h.b16 %v1303
  %v1583 = vunpack.c.l.b16 %v1304
  %v1584 = vunpack.c.h.b16 %v1304
  %v1585 = vunpack.c.l.b16 %v1305
  %v1586 = vunpack.c.h.b16 %v1305
  %v1587 = vunpack.c.l.b16 %v1306
  %v1588 = vunpack.c.h.b16 %v1306
  %v1589 = vunpack.c.l.b16 %v1307
  %v1590 = vunpack.c.h.b16 %v1307
  %v1591 = vunpack.c.l.b16 %v1308
  %v1592 = vunpack.c.h.b16 %v1308
  %v1593 = vunpack.c.l.b16 %v1309
  %v1594 = vunpack.c.h.b16 %v1309
  %v1595 = vunpack.c.l.b16 %v1310
  %v1596 = vunpack.c.h.b16 %v1310
  %v1597 = vunpack.c.l.b16 %v1311
  %v1598 = vunpack.c.h.b16 %v1311
  %v1599 = vunpack.c.l.b16 %v1312
  %v1600 = vunpack.c.h.b16 %v1312
  %v1601 = vpack.c.b16 %v1411, %v1409
  %v1602 = vpack.c.b16 %v1412, %v1410
  %v1603 = vpack.c.b16 %v1415, %v1413
  %v1604 = vpack.c.b16 %v1416, %v1414
  %v1605 = vpack.c.b16 %v1419, %v1417
  %v1606 = vpack.c.b16 %v1420, %v1418
  %v1607 = vpack.c.b16 %v1423, %v1421
  %v1608 = vpack.c.b16 %v1424, %v1422
  %v1609 = vpack.c.b16 %v1427, %v1425
  %v1610 = vpack.c.b16 %v1428, %v1426
  %v1611 = vpack.c.b16 %v1431, %v1429
  %v1612 = vpack.c.b16 %v1432, %v1430
  %v1613 = vpack.c.b16 %v1435, %v1433
  %v1614 = vpack.c.b16 %v1436, %v1434
  %v1615 = vpack.c.b16 %v1439, %v1437
  %v1616 = vpack.c.b16 %v1440, %v1438
  %v1617 = vpack.c.b16 %v1443, %v1441
  %v1618 = vpack.c.b16 %v1444, %v1442
  %v1619 = vpack.c.b16 %v1447, %v1445
  %v1620 = vpack.c.b16 %v1448, %v1446
  %v1621 = vpack.c.b16 %v1451, %v1449
  %v1622 = vpack.c.b16 %v1452, %v1450
  %v1623 = vpack.c.b16 %v1455, %v1453
  %v1624 = vpack.c.b16 %v1456, %v1454
  %v1625 = vpack.c.b16 %v1459, %v1457
  %v1626 = vpack.c.b16 %v1460, %v1458
  %v1627 = vpack.c.b16 %v1463, %v1461
  %v1628 = vpack.c.b16 %v1464, %v1462
  %v1629 = vpack.c.b16 %v1467, %v1465
  %v1630 = vpack.c.b16 %v1468, %v1466
  %v1631 = vpack.c.b16 %v1471, %v1469
  %v1632 = vpack.c.b16 %v1472, %v1470
  %v1633 = vpack.c.b16 %v1475, %v1473
  %v1634 = vpack.c.b16 %v1476, %v1474
  %v1635 = vpack.c.b16 %v1479, %v1477
  %v1636 = vpack.c.b16 %v1480, %v1478
  %v1637 = vpack.c.b16 %v1483, %v1481
  %v1638 = vpack.c.b16 %v1484, %v1482
  %v1639 = vpack.c.b16 %v1487, %v1485
  %v1640 = vpack.c.b16 %v1488, %v1486
  %v1641 = vpack.c.b16 %v1491, %v1489
  %v1642 = vpack.c.b16 %v1492, %v1490
  %v1643 = vpack.c.b16 %v1495, %v1493
  %v1644 = vpack.c.b16 %v1496, %v1494
  %v1645 = vpack.c.b16 %v1499, %v1497
  %v1646 = vpack.c.b16 %v1500, %v1498
  %v1647 = vpack.c.b16 %v1503, %v1501
  %v1648 = vpack.c.b16 %v1504, %v1502
  %v1649 = vpack.c.b16 %v1507, %v1505
  %v1650 = vpack.c.b16 %v1508, %v1506
  %v1651 = vpack.c.b16 %v1511, %v1509
  %v1652 = vpack.c.b16 %v1512, %v1510
  %v1653 = vpack.c.b16 %v1515, %v1513
  %v1654 = vpack.c.b16 %v1516, %v1514
  %v1655 = vpack.c.b16 %v1519, %v1517
  %v1656 = vpack.c.b16 %v1520, %v1518
  %v1657 = vpack.c.b16 %v1523, %v1521
  %v1658 = vpack.c.b16 %v1524, %v1522
  %v1659 = vpack.c.b16 %v1527, %v1525
  %v1660 = vpack.c.b16 %v1528, %v1526
  %v1661 = vpack.c.b16 %v1531, %v1529
  %v1662 = vpack.c.b16 %v1532, %v1530
  %v1663 = vpack.c.b16 %v1535, %v1533
  %v1664 = vpack.c.b16 %v1536, %v1534
  %v1665 = vpack.c.b16 %v1539, %v1537
  %v1666 = vpack.c.b16 %v1540, %v1538
  %v1667 = vpack.c.b16 %v1543, %v1541
  %v1668 = vpack.c.b16 %v1544, %v1542
  %v1669 = vpack.c.b16 %v1547, %v1545
  %v1670 = vpack.c.b16 %v1548, %v1546
  %v1671 = vpack.c.b16 %v1551, %v1549
  %v1672 = vpack.c.b16 %v1552, %v1550
  %v1673 = vpack.c.b16 %v1555, %v1553
  %v1674 = vpack.c.b16 %v1556, %v1554
  %v1675 = vpack.c.b16 %v1559, %v1557
  %v1676 = vpack.c.b16 %v1560, %v1558
  %v1677 = vpack.c.b16 %v1563, %v1561
  %v1678 = vpack.c.b16 %v1564, %v1562
  %v1679 = vpack.c.b16 %v1567, %v1565
  %v1680 = vpack.c.b16 %v1568, %v1566
  %v1681 = vpack.c.b16 %v1571, %v1569
  %v1682 = vpack.c.b16 %v1572, %v1570
  %v1683 = vpack.c.b16 %v1575, %v1573
  %v1684 = vpack.c.b16 %v1576, %v1574
  %v1685 = vpack.c.b16 %v1579, %v1577
  %v1686 = vpack.c.b16 %v1580, %v1578
  %v1687 = vpack.c.b16 %v1583, %v1581
  %v1688 = vpack.c.b16 %v1584, %v1582
  %v1689 = vpack.c.b16 %v1587, %v1585
  %v1690 = vpack.c.b16 %v1588, %v1586
  %v1691 = vpack.c.b16 %v1591, %v1589
  %v1692 = vpack.c.b16 %v1592, %v1590
  %v1693 = vpack.c.b16 %v1595, %v1593
  %v1694 = vpack.c.b16 %v1596, %v1594
  %v1695 = vpack.c.b16 %v1599, %v1597
  %v1696 = vpack.c.b16 %v1600, %v1598
  %1793 = vmatpush.bf16.msra.mxu0 %v1615
  %1794 = vmatpush.bf16.msra.mxu0 %v1613
  %1795 = vmatpush.bf16.msra.mxu0 %v1611
  %1796 = vmatpush.bf16.msra.mxu0 %v1609
  %1797 = vmatpush.bf16.msra.mxu0 %v1607
  %1798 = vmatpush.bf16.msra.mxu0 %v1605
  %1799 = vmatpush.bf16.msra.mxu0 %v1603
  %1800 = vmatpush.bf16.msra.mxu0 %v1601
  %1801 = vmatmul.bf16.gmra.mxu0 %v1201
  %v1802 = vpop.f32.mrf.mxu0
  %v1803 = vadd.f32 0.0, %v1802
  %v1804 = vpop.f32.mrf.mxu0
  %v1805 = vadd.f32 0.0, %v1804
  %1806 = vdwg.mxu0
  %1807 = vmatpush.bf16.msra.mxu0 %v1631
  %1808 = vmatpush.bf16.msra.mxu0 %v1629
  %1809 = vmatpush.bf16.msra.mxu0 %v1627
  %1810 = vmatpush.bf16.msra.mxu0 %v1625
  %1811 = vmatpush.bf16.msra.mxu0 %v1623
  %1812 = vmatpush.bf16.msra.mxu0 %v1621
  %1813 = vmatpush.bf16.msra.mxu0 %v1619
  %1814 = vmatpush.bf16.msra.mxu0 %v1617
  %1815 = vmatmul.bf16.gmra.mxu0 %v1202
  %v1816 = vpop.f32.mrf.mxu0
  %v1817 = vadd.f32 %v1803, %v1816
  %v1818 = vpop.f32.mrf.mxu0
  %v1819 = vadd.f32 %v1805, %v1818
  %1820 = vdwg.mxu0
  %1821 = vmatpush.bf16.msra.mxu0 %v1647
  %1822 = vmatpush.bf16.msra.mxu0 %v1645
  %1823 = vmatpush.bf16.msra.mxu0 %v1643
  %1824 = vmatpush.bf16.msra.mxu0 %v1641
  %1825 = vmatpush.bf16.msra.mxu0 %v1639
  %1826 = vmatpush.bf16.msra.mxu0 %v1637
  %1827 = vmatpush.bf16.msra.mxu0 %v1635
  %1828 = vmatpush.bf16.msra.mxu0 %v1633
  %1829 = vmatmul.bf16.gmra.mxu0 %v1147
  %v1830 = vpop.f32.mrf.mxu0
  %v1831 = vadd.f32 %v1817, %v1830
  %v1832 = vpop.f32.mrf.mxu0
  %v1833 = vadd.f32 %v1819, %v1832
  %1834 = vdwg.mxu0
  %1835 = vmatpush.bf16.msra.mxu0 %v1663
  %1836 = vmatpush.bf16.msra.mxu0 %v1661
  %1837 = vmatpush.bf16.msra.mxu0 %v1659
  %1838 = vmatpush.bf16.msra.mxu0 %v1657
  %1839 = vmatpush.bf16.msra.mxu0 %v1655
  %1840 = vmatpush.bf16.msra.mxu0 %v1653
  %1841 = vmatpush.bf16.msra.mxu0 %v1651
  %1842 = vmatpush.bf16.msra.mxu0 %v1649
  %1843 = vmatmul.bf16.gmra.mxu0 %v1148
  %v1844 = vpop.f32.mrf.mxu0
  %v1845 = vadd.f32 %v1831, %v1844
  %v1846 = vpop.f32.mrf.mxu0
  %v1847 = vadd.f32 %v1833, %v1846
  %1848 = vdwg.mxu0
  %1849 = vmatpush.bf16.msra.mxu0 %v1679
  %1850 = vmatpush.bf16.msra.mxu0 %v1677
  %1851 = vmatpush.bf16.msra.mxu0 %v1675
  %1852 = vmatpush.bf16.msra.mxu0 %v1673
  %1853 = vmatpush.bf16.msra.mxu0 %v1671
  %1854 = vmatpush.bf16.msra.mxu0 %v1669
  %1855 = vmatpush.bf16.msra.mxu0 %v1667
  %1856 = vmatpush.bf16.msra.mxu0 %v1665
  %1857 = vmatmul.bf16.gmra.mxu0 %v1213
  %v1858 = vpop.f32.mrf.mxu0
  %v1859 = vadd.f32 %v1845, %v1858
  %v1860 = vpop.f32.mrf.mxu0
  %v1861 = vadd.f32 %v1847, %v1860
  %1862 = vdwg.mxu0
  %1863 = vmatpush.bf16.msra.mxu0 %v1695
  %1864 = vmatpush.bf16.msra.mxu0 %v1693
  %1865 = vmatpush.bf16.msra.mxu0 %v1691
  %1866 = vmatpush.bf16.msra.mxu0 %v1689
  %1867 = vmatpush.bf16.msra.mxu0 %v1687
  %1868 = vmatpush.bf16.msra.mxu0 %v1685
  %1869 = vmatpush.bf16.msra.mxu0 %v1683
  %1870 = vmatpush.bf16.msra.mxu0 %v1681
  %1871 = vmatmul.bf16.gmra.mxu0 %v1214
  %v1872 = vpop.f32.mrf.mxu0
  %v1873 = vadd.f32 %v1859, %v1872
  %v1874 = vpop.f32.mrf.mxu0
  %v1875 = vadd.f32 %v1861, %v1874
  %1876 = vdwg.mxu0
  %1877 = vmatpush.bf16.msra.mxu0 %v1616
  %1878 = vmatpush.bf16.msra.mxu0 %v1614
  %1879 = vmatpush.bf16.msra.mxu0 %v1612
  %1880 = vmatpush.bf16.msra.mxu0 %v1610
  %1881 = vmatpush.bf16.msra.mxu0 %v1608
  %1882 = vmatpush.bf16.msra.mxu0 %v1606
  %1883 = vmatpush.bf16.msra.mxu0 %v1604
  %1884 = vmatpush.bf16.msra.mxu0 %v1602
  %1885 = vmatmul.bf16.gmra.mxu0 %v1201
  %v1886 = vpop.f32.mrf.mxu0
  %v1887 = vadd.f32 0.0, %v1886
  %v1888 = vpop.f32.mrf.mxu0
  %v1889 = vadd.f32 0.0, %v1888
  %1890 = vdwg.mxu0
  %1891 = vmatpush.bf16.msra.mxu0 %v1632
  %1892 = vmatpush.bf16.msra.mxu0 %v1630
  %1893 = vmatpush.bf16.msra.mxu0 %v1628
  %1894 = vmatpush.bf16.msra.mxu0 %v1626
  %1895 = vmatpush.bf16.msra.mxu0 %v1624
  %1896 = vmatpush.bf16.msra.mxu0 %v1622
  %1897 = vmatpush.bf16.msra.mxu0 %v1620
  %1898 = vmatpush.bf16.msra.mxu0 %v1618
  %1899 = vmatmul.bf16.gmra.mxu0 %v1202
  %v1900 = vpop.f32.mrf.mxu0
  %v1901 = vadd.f32 %v1887, %v1900
  %v1902 = vpop.f32.mrf.mxu0
  %v1903 = vadd.f32 %v1889, %v1902
  %1904 = vdwg.mxu0
  %1905 = vmatpush.bf16.msra.mxu0 %v1648
  %1906 = vmatpush.bf16.msra.mxu0 %v1646
  %1907 = vmatpush.bf16.msra.mxu0 %v1644
  %1908 = vmatpush.bf16.msra.mxu0 %v1642
  %1909 = vmatpush.bf16.msra.mxu0 %v1640
  %1910 = vmatpush.bf16.msra.mxu0 %v1638
  %1911 = vmatpush.bf16.msra.mxu0 %v1636
  %1912 = vmatpush.bf16.msra.mxu0 %v1634
  %1913 = vmatmul.bf16.gmra.mxu0 %v1147
  %v1914 = vpop.f32.mrf.mxu0
  %v1915 = vadd.f32 %v1901, %v1914
  %v1916 = vpop.f32.mrf.mxu0
  %v1917 = vadd.f32 %v1903, %v1916
  %1918 = vdwg.mxu0
  %1919 = vmatpush.bf16.msra.mxu0 %v1664
  %1920 = vmatpush.bf16.msra.mxu0 %v1662
  %1921 = vmatpush.bf16.msra.mxu0 %v1660
  %1922 = vmatpush.bf16.msra.mxu0 %v1658
  %1923 = vmatpush.bf16.msra.mxu0 %v1656
  %1924 = vmatpush.bf16.msra.mxu0 %v1654
  %1925 = vmatpush.bf16.msra.mxu0 %v1652
  %1926 = vmatpush.bf16.msra.mxu0 %v1650
  %1927 = vmatmul.bf16.gmra.mxu0 %v1148
  %v1928 = vpop.f32.mrf.mxu0
  %v1929 = vadd.f32 %v1915, %v1928
  %v1930 = vpop.f32.mrf.mxu0
  %v1931 = vadd.f32 %v1917, %v1930
  %1932 = vdwg.mxu0
  %1933 = vmatpush.bf16.msra.mxu0 %v1680
  %1934 = vmatpush.bf16.msra.mxu0 %v1678
  %1935 = vmatpush.bf16.msra.mxu0 %v1676
  %1936 = vmatpush.bf16.msra.mxu0 %v1674
  %1937 = vmatpush.bf16.msra.mxu0 %v1672
  %1938 = vmatpush.bf16.msra.mxu0 %v1670
  %1939 = vmatpush.bf16.msra.mxu0 %v1668
  %1940 = vmatpush.bf16.msra.mxu0 %v1666
  %1941 = vmatmul.bf16.gmra.mxu0 %v1213
  %v1942 = vpop.f32.mrf.mxu0
  %v1943 = vadd.f32 %v1929, %v1942
  %v1944 = vpop.f32.mrf.mxu0
  %v1945 = vadd.f32 %v1931, %v1944
  %1946 = vdwg.mxu0
  %1947 = vmatpush.bf16.msra.mxu0 %v1696
  %1948 = vmatpush.bf16.msra.mxu0 %v1694
  %1949 = vmatpush.bf16.msra.mxu0 %v1692
  %1950 = vmatpush.bf16.msra.mxu0 %v1690
  %1951 = vmatpush.bf16.msra.mxu0 %v1688
  %1952 = vmatpush.bf16.msra.mxu0 %v1686
  %1953 = vmatpush.bf16.msra.mxu0 %v1684
  %1954 = vmatpush.bf16.msra.mxu0 %v1682
  %1955 = vmatmul.bf16.gmra.mxu0 %v1214
  %v1956 = vpop.f32.mrf.mxu0
  %v1957 = vadd.f32 %v1943, %v1956
  %v1958 = vpop.f32.mrf.mxu0
  %v1959 = vadd.f32 %v1945, %v1958
  %1960 = vdwg.mxu0
  %v1961 = vld [vmem:[%s9] ss:$2 sm:$0x3]
  %v1963 = vperm.slane %v1961, 0
  %v1964 = vperm.slane %v1961, 1
  %v1967 = vmul.f32 %v1873, %v1963
  %v1968 = vmul.f32 %v1957, %v1964
  %v1969 = vmul.f32 %v1875, %v1963
  %v1970 = vmul.f32 %v1959, %v1964
  %s1971 = scalar_lea.vmem %s9, 1
  %v1972 = vld [vmem:[%s1971] ss:$2 sm:$0x3]
  %v1974 = vperm.slane %v1972, 0
  %v1975 = vperm.slane %v1972, 1
  %v1978 = vadd.f32 %v1967, %v1974
  %v1979 = vadd.f32 %v1968, %v1975
  %v1980 = vadd.f32 %v1969, %v1974
  %v1981 = vadd.f32 %v1970, %v1975
  %v1982 = vmax.f32 %v1978, 0.0
  %v1983 = vmax.f32 %v1979, 0.0
  %v1984 = vmax.f32 %v1980, 0.0
  %v1985 = vmax.f32 %v1981, 0.0
  %v1986 = vpack.c.bf16 %v1983, %v1982
  %v1987 = vpack.c.bf16 %v1985, %v1984
  %v1990 = vunpack.c.l.b16 %v1986
  %v1991 = vunpack.c.h.b16 %v1986
  %v1992 = vunpack.c.l.b16 %v1987
  %v1993 = vunpack.c.h.b16 %v1987
  %v1994 = vpack.c.b16 %v1992, %v1990
  %v1995 = vpack.c.b16 %v1993, %v1991
  %v1997 = vshrl.u32 %v1994, 16
  %v1999 = vrot.slane %v1997, 7
  %v2000 = vshll.u32 %v1994, 16
  %v2002 = vor.u32 %v1999, %v2000
  %v2004 = vshrl.u32 %v1995, 16
  %v2006 = vrot.slane %v2004, 7
  %v2007 = vshll.u32 %v1995, 16
  %v2009 = vor.u32 %v2006, %v2007
  %v2012 = vsel %vm128, 0, %v2002
  %v2013 = vsel %vm128, 0, %v2009
  %v2014 = vunpack.c.l.bf16 %v2012
  %v2015 = vunpack.c.l.bf16 %v2013
  %v2016 = vunpack.c.h.bf16 %v2012
  %v2017 = vunpack.c.h.bf16 %v2013
  %v2018 = vmul.f32 %v2014, %v132
  %v2019 = vmul.f32 %v2015, %v132
  %v2020 = vmul.f32 %v2016, %v133
  %v2021 = vmul.f32 %v2017, %v133
  %v2022 = vpack.c.bf16 %v2019, %v2018
  %v2023 = vpack.c.bf16 %v2021, %v2020
  %v2024 = vrot.slane %v2000, 1
  %v2025 = vor.u32 %v1997, %v2024
  %v2026 = vrot.slane %v2007, 1
  %v2027 = vor.u32 %v2004, %v2026
  %v2030 = vsel %vm143, %v2025, 0
  %v2031 = vsel %vm143, %v2027, 0
  %v2032 = vunpack.c.l.bf16 %v2030
  %v2033 = vunpack.c.l.bf16 %v2031
  %v2034 = vunpack.c.h.bf16 %v2030
  %v2035 = vunpack.c.h.bf16 %v2031
  %v2036 = vmul.f32 %v2032, %v147
  %v2037 = vmul.f32 %v2033, %v147
  %v2038 = vmul.f32 %v2034, %v148
  %v2039 = vmul.f32 %v2035, %v148
  %v2040 = vpack.c.bf16 %v2037, %v2036
  %v2041 = vpack.c.bf16 %v2039, %v2038
  %v2044 = vunpack.c.l.b16 %v2022
  %v2045 = vunpack.c.h.b16 %v2022
  %v2046 = vunpack.c.l.b16 %v2023
  %v2047 = vunpack.c.h.b16 %v2023
  %v2048 = vpack.c.b16 %v2046, %v2044
  %v2049 = vpack.c.b16 %v2047, %v2045
  %v2056 = vunpack.c.l.b16 %v2040
  %v2057 = vunpack.c.h.b16 %v2040
  %v2058 = vunpack.c.l.b16 %v2041
  %v2059 = vunpack.c.h.b16 %v2041
  %v2060 = vpack.c.b16 %v2058, %v2056
  %v2061 = vpack.c.b16 %v2059, %v2057
  %v2064 = vld [vmem:[%s10] sm:$0xff]
  %v2065 = vld [vmem:[%s10 + $0x8] sm:$0xff]
  %v2066 = vld [vmem:[%s10 + $0x10] sm:$0xff]
  %v2067 = vld [vmem:[%s10 + $0x18] sm:$0xff]
  %v2068 = vld [vmem:[%s10 + $0x20] sm:$0xff]
  %v2069 = vld [vmem:[%s10 + $0x28] sm:$0xff]
  %v2070 = vld [vmem:[%s10 + $0x30] sm:$0xff]
  %v2071 = vld [vmem:[%s10 + $0x38] sm:$0xff]
  %v2072 = vld [vmem:[%s10 + $0x40] sm:$0xff]
  %v2073 = vld [vmem:[%s10 + $0x48] sm:$0xff]
  %v2074 = vld [vmem:[%s10 + $0x50] sm:$0xff]
  %v2075 = vld [vmem:[%s10 + $0x58] sm:$0xff]
  %v2076 = vld [vmem:[%s10 + $0x60] sm:$0xff]
  %v2077 = vld [vmem:[%s10 + $0x68] sm:$0xff]
  %v2078 = vld [vmem:[%s10 + $0x70] sm:$0xff]
  %v2079 = vld [vmem:[%s10 + $0x78] sm:$0xff]
  %v2080 = vld [vmem:[%s10 + $0x80] sm:$0xff]
  %v2081 = vld [vmem:[%s10 + $0x88] sm:$0xff]
  %v2082 = vld [vmem:[%s10 + $0x90] sm:$0xff]
  %v2083 = vld [vmem:[%s10 + $0x98] sm:$0xff]
  %v2084 = vld [vmem:[%s10 + $0xa0] sm:$0xff]
  %v2085 = vld [vmem:[%s10 + $0xa8] sm:$0xff]
  %v2086 = vld [vmem:[%s10 + $0xb0] sm:$0xff]
  %v2087 = vld [vmem:[%s10 + $0xb8] sm:$0xff]
  %v2088 = vld [vmem:[%s10 + $0xc0] sm:$0xff]
  %v2089 = vld [vmem:[%s10 + $0xc8] sm:$0xff]
  %v2090 = vld [vmem:[%s10 + $0xd0] sm:$0xff]
  %v2091 = vld [vmem:[%s10 + $0xd8] sm:$0xff]
  %v2092 = vld [vmem:[%s10 + $0xe0] sm:$0xff]
  %v2093 = vld [vmem:[%s10 + $0xe8] sm:$0xff]
  %v2094 = vld [vmem:[%s10 + $0xf0] sm:$0xff]
  %v2095 = vld [vmem:[%s10 + $0xf8] sm:$0xff]
  %v2096 = vld [vmem:[%s10 + $0x100] sm:$0xff]
  %v2097 = vld [vmem:[%s10 + $0x108] sm:$0xff]
  %v2098 = vld [vmem:[%s10 + $0x110] sm:$0xff]
  %v2099 = vld [vmem:[%s10 + $0x118] sm:$0xff]
  %v2100 = vld [vmem:[%s10 + $0x120] sm:$0xff]
  %v2101 = vld [vmem:[%s10 + $0x128] sm:$0xff]
  %v2102 = vld [vmem:[%s10 + $0x130] sm:$0xff]
  %v2103 = vld [vmem:[%s10 + $0x138] sm:$0xff]
  %v2104 = vld [vmem:[%s10 + $0x140] sm:$0xff]
  %v2105 = vld [vmem:[%s10 + $0x148] sm:$0xff]
  %v2106 = vld [vmem:[%s10 + $0x150] sm:$0xff]
  %v2107 = vld [vmem:[%s10 + $0x158] sm:$0xff]
  %v2108 = vld [vmem:[%s10 + $0x160] sm:$0xff]
  %v2109 = vld [vmem:[%s10 + $0x168] sm:$0xff]
  %v2110 = vld [vmem:[%s10 + $0x170] sm:$0xff]
  %v2111 = vld [vmem:[%s10 + $0x178] sm:$0xff]
  %v2112 = vld [vmem:[%s10 + $0x180] sm:$0xff]
  %v2113 = vld [vmem:[%s10 + $0x188] sm:$0xff]
  %v2114 = vld [vmem:[%s10 + $0x190] sm:$0xff]
  %v2115 = vld [vmem:[%s10 + $0x198] sm:$0xff]
  %v2116 = vld [vmem:[%s10 + $0x1a0] sm:$0xff]
  %v2117 = vld [vmem:[%s10 + $0x1a8] sm:$0xff]
  %v2118 = vld [vmem:[%s10 + $0x1b0] sm:$0xff]
  %v2119 = vld [vmem:[%s10 + $0x1b8] sm:$0xff]
  %v2120 = vld [vmem:[%s10 + $0x1c0] sm:$0xff]
  %v2121 = vld [vmem:[%s10 + $0x1c8] sm:$0xff]
  %v2122 = vld [vmem:[%s10 + $0x1d0] sm:$0xff]
  %v2123 = vld [vmem:[%s10 + $0x1d8] sm:$0xff]
  %v2124 = vld [vmem:[%s10 + $0x1e0] sm:$0xff]
  %v2125 = vld [vmem:[%s10 + $0x1e8] sm:$0xff]
  %v2126 = vld [vmem:[%s10 + $0x1f0] sm:$0xff]
  %v2127 = vld [vmem:[%s10 + $0x1f8] sm:$0xff]
  %v2128 = vld [vmem:[%s10 + $0x200] sm:$0xff]
  %v2129 = vld [vmem:[%s10 + $0x208] sm:$0xff]
  %v2130 = vld [vmem:[%s10 + $0x210] sm:$0xff]
  %v2131 = vld [vmem:[%s10 + $0x218] sm:$0xff]
  %v2132 = vld [vmem:[%s10 + $0x220] sm:$0xff]
  %v2133 = vld [vmem:[%s10 + $0x228] sm:$0xff]
  %v2134 = vld [vmem:[%s10 + $0x230] sm:$0xff]
  %v2135 = vld [vmem:[%s10 + $0x238] sm:$0xff]
  %v2136 = vld [vmem:[%s10 + $0x240] sm:$0xff]
  %v2137 = vld [vmem:[%s10 + $0x248] sm:$0xff]
  %v2138 = vld [vmem:[%s10 + $0x250] sm:$0xff]
  %v2139 = vld [vmem:[%s10 + $0x258] sm:$0xff]
  %v2140 = vld [vmem:[%s10 + $0x260] sm:$0xff]
  %v2141 = vld [vmem:[%s10 + $0x268] sm:$0xff]
  %v2142 = vld [vmem:[%s10 + $0x270] sm:$0xff]
  %v2143 = vld [vmem:[%s10 + $0x278] sm:$0xff]
  %v2144 = vld [vmem:[%s10 + $0x280] sm:$0xff]
  %v2145 = vld [vmem:[%s10 + $0x288] sm:$0xff]
  %v2146 = vld [vmem:[%s10 + $0x290] sm:$0xff]
  %v2147 = vld [vmem:[%s10 + $0x298] sm:$0xff]
  %v2148 = vld [vmem:[%s10 + $0x2a0] sm:$0xff]
  %v2149 = vld [vmem:[%s10 + $0x2a8] sm:$0xff]
  %v2150 = vld [vmem:[%s10 + $0x2b0] sm:$0xff]
  %v2151 = vld [vmem:[%s10 + $0x2b8] sm:$0xff]
  %v2152 = vld [vmem:[%s10 + $0x2c0] sm:$0xff]
  %v2153 = vld [vmem:[%s10 + $0x2c8] sm:$0xff]
  %v2154 = vld [vmem:[%s10 + $0x2d0] sm:$0xff]
  %v2155 = vld [vmem:[%s10 + $0x2d8] sm:$0xff]
  %v2156 = vld [vmem:[%s10 + $0x2e0] sm:$0xff]
  %v2157 = vld [vmem:[%s10 + $0x2e8] sm:$0xff]
  %v2158 = vld [vmem:[%s10 + $0x2f0] sm:$0xff]
  %v2159 = vld [vmem:[%s10 + $0x2f8] sm:$0xff]
  %v2256 = vunpack.c.l.b16 %v2064
  %v2257 = vunpack.c.h.b16 %v2064
  %v2258 = vunpack.c.l.b16 %v2065
  %v2259 = vunpack.c.h.b16 %v2065
  %v2260 = vunpack.c.l.b16 %v2066
  %v2261 = vunpack.c.h.b16 %v2066
  %v2262 = vunpack.c.l.b16 %v2067
  %v2263 = vunpack.c.h.b16 %v2067
  %v2264 = vunpack.c.l.b16 %v2068
  %v2265 = vunpack.c.h.b16 %v2068
  %v2266 = vunpack.c.l.b16 %v2069
  %v2267 = vunpack.c.h.b16 %v2069
  %v2268 = vunpack.c.l.b16 %v2070
  %v2269 = vunpack.c.h.b16 %v2070
  %v2270 = vunpack.c.l.b16 %v2071
  %v2271 = vunpack.c.h.b16 %v2071
  %v2272 = vunpack.c.l.b16 %v2072
  %v2273 = vunpack.c.h.b16 %v2072
  %v2274 = vunpack.c.l.b16 %v2073
  %v2275 = vunpack.c.h.b16 %v2073
  %v2276 = vunpack.c.l.b16 %v2074
  %v2277 = vunpack.c.h.b16 %v2074
  %v2278 = vunpack.c.l.b16 %v2075
  %v2279 = vunpack.c.h.b16 %v2075
  %v2280 = vunpack.c.l.b16 %v2076
  %v2281 = vunpack.c.h.b16 %v2076
  %v2282 = vunpack.c.l.b16 %v2077
  %v2283 = vunpack.c.h.b16 %v2077
  %v2284 = vunpack.c.l.b16 %v2078
  %v2285 = vunpack.c.h.b16 %v2078
  %v2286 = vunpack.c.l.b16 %v2079
  %v2287 = vunpack.c.h.b16 %v2079
  %v2288 = vunpack.c.l.b16 %v2080
  %v2289 = vunpack.c.h.b16 %v2080
  %v2290 = vunpack.c.l.b16 %v2081
  %v2291 = vunpack.c.h.b16 %v2081
  %v2292 = vunpack.c.l.b16 %v2082
  %v2293 = vunpack.c.h.b16 %v2082
  %v2294 = vunpack.c.l.b16 %v2083
  %v2295 = vunpack.c.h.b16 %v2083
  %v2296 = vunpack.c.l.b16 %v2084
  %v2297 = vunpack.c.h.b16 %v2084
  %v2298 = vunpack.c.l.b16 %v2085
  %v2299 = vunpack.c.h.b16 %v2085
  %v2300 = vunpack.c.l.b16 %v2086
  %v2301 = vunpack.c.h.b16 %v2086
  %v2302 = vunpack.c.l.b16 %v2087
  %v2303 = vunpack.c.h.b16 %v2087
  %v2304 = vunpack.c.l.b16 %v2088
  %v2305 = vunpack.c.h.b16 %v2088
  %v2306 = vunpack.c.l.b16 %v2089
  %v2307 = vunpack.c.h.b16 %v2089
  %v2308 = vunpack.c.l.b16 %v2090
  %v2309 = vunpack.c.h.b16 %v2090
  %v2310 = vunpack.c.l.b16 %v2091
  %v2311 = vunpack.c.h.b16 %v2091
  %v2312 = vunpack.c.l.b16 %v2092
  %v2313 = vunpack.c.h.b16 %v2092
  %v2314 = vunpack.c.l.b16 %v2093
  %v2315 = vunpack.c.h.b16 %v2093
  %v2316 = vunpack.c.l.b16 %v2094
  %v2317 = vunpack.c.h.b16 %v2094
  %v2318 = vunpack.c.l.b16 %v2095
  %v2319 = vunpack.c.h.b16 %v2095
  %v2320 = vunpack.c.l.b16 %v2096
  %v2321 = vunpack.c.h.b16 %v2096
  %v2322 = vunpack.c.l.b16 %v2097
  %v2323 = vunpack.c.h.b16 %v2097
  %v2324 = vunpack.c.l.b16 %v2098
  %v2325 = vunpack.c.h.b16 %v2098
  %v2326 = vunpack.c.l.b16 %v2099
  %v2327 = vunpack.c.h.b16 %v2099
  %v2328 = vunpack.c.l.b16 %v2100
  %v2329 = vunpack.c.h.b16 %v2100
  %v2330 = vunpack.c.l.b16 %v2101
  %v2331 = vunpack.c.h.b16 %v2101
  %v2332 = vunpack.c.l.b16 %v2102
  %v2333 = vunpack.c.h.b16 %v2102
  %v2334 = vunpack.c.l.b16 %v2103
  %v2335 = vunpack.c.h.b16 %v2103
  %v2336 = vunpack.c.l.b16 %v2104
  %v2337 = vunpack.c.h.b16 %v2104
  %v2338 = vunpack.c.l.b16 %v2105
  %v2339 = vunpack.c.h.b16 %v2105
  %v2340 = vunpack.c.l.b16 %v2106
  %v2341 = vunpack.c.h.b16 %v2106
  %v2342 = vunpack.c.l.b16 %v2107
  %v2343 = vunpack.c.h.b16 %v2107
  %v2344 = vunpack.c.l.b16 %v2108
  %v2345 = vunpack.c.h.b16 %v2108
  %v2346 = vunpack.c.l.b16 %v2109
  %v2347 = vunpack.c.h.b16 %v2109
  %v2348 = vunpack.c.l.b16 %v2110
  %v2349 = vunpack.c.h.b16 %v2110
  %v2350 = vunpack.c.l.b16 %v2111
  %v2351 = vunpack.c.h.b16 %v2111
  %v2352 = vunpack.c.l.b16 %v2112
  %v2353 = vunpack.c.h.b16 %v2112
  %v2354 = vunpack.c.l.b16 %v2113
  %v2355 = vunpack.c.h.b16 %v2113
  %v2356 = vunpack.c.l.b16 %v2114
  %v2357 = vunpack.c.h.b16 %v2114
  %v2358 = vunpack.c.l.b16 %v2115
  %v2359 = vunpack.c.h.b16 %v2115
  %v2360 = vunpack.c.l.b16 %v2116
  %v2361 = vunpack.c.h.b16 %v2116
  %v2362 = vunpack.c.l.b16 %v2117
  %v2363 = vunpack.c.h.b16 %v2117
  %v2364 = vunpack.c.l.b16 %v2118
  %v2365 = vunpack.c.h.b16 %v2118
  %v2366 = vunpack.c.l.b16 %v2119
  %v2367 = vunpack.c.h.b16 %v2119
  %v2368 = vunpack.c.l.b16 %v2120
  %v2369 = vunpack.c.h.b16 %v2120
  %v2370 = vunpack.c.l.b16 %v2121
  %v2371 = vunpack.c.h.b16 %v2121
  %v2372 = vunpack.c.l.b16 %v2122
  %v2373 = vunpack.c.h.b16 %v2122
  %v2374 = vunpack.c.l.b16 %v2123
  %v2375 = vunpack.c.h.b16 %v2123
  %v2376 = vunpack.c.l.b16 %v2124
  %v2377 = vunpack.c.h.b16 %v2124
  %v2378 = vunpack.c.l.b16 %v2125
  %v2379 = vunpack.c.h.b16 %v2125
  %v2380 = vunpack.c.l.b16 %v2126
  %v2381 = vunpack.c.h.b16 %v2126
  %v2382 = vunpack.c.l.b16 %v2127
  %v2383 = vunpack.c.h.b16 %v2127
  %v2384 = vunpack.c.l.b16 %v2128
  %v2385 = vunpack.c.h.b16 %v2128
  %v2386 = vunpack.c.l.b16 %v2129
  %v2387 = vunpack.c.h.b16 %v2129
  %v2388 = vunpack.c.l.b16 %v2130
  %v2389 = vunpack.c.h.b16 %v2130
  %v2390 = vunpack.c.l.b16 %v2131
  %v2391 = vunpack.c.h.b16 %v2131
  %v2392 = vunpack.c.l.b16 %v2132
  %v2393 = vunpack.c.h.b16 %v2132
  %v2394 = vunpack.c.l.b16 %v2133
  %v2395 = vunpack.c.h.b16 %v2133
  %v2396 = vunpack.c.l.b16 %v2134
  %v2397 = vunpack.c.h.b16 %v2134
  %v2398 = vunpack.c.l.b16 %v2135
  %v2399 = vunpack.c.h.b16 %v2135
  %v2400 = vunpack.c.l.b16 %v2136
  %v2401 = vunpack.c.h.b16 %v2136
  %v2402 = vunpack.c.l.b16 %v2137
  %v2403 = vunpack.c.h.b16 %v2137
  %v2404 = vunpack.c.l.b16 %v2138
  %v2405 = vunpack.c.h.b16 %v2138
  %v2406 = vunpack.c.l.b16 %v2139
  %v2407 = vunpack.c.h.b16 %v2139
  %v2408 = vunpack.c.l.b16 %v2140
  %v2409 = vunpack.c.h.b16 %v2140
  %v2410 = vunpack.c.l.b16 %v2141
  %v2411 = vunpack.c.h.b16 %v2141
  %v2412 = vunpack.c.l.b16 %v2142
  %v2413 = vunpack.c.h.b16 %v2142
  %v2414 = vunpack.c.l.b16 %v2143
  %v2415 = vunpack.c.h.b16 %v2143
  %v2416 = vunpack.c.l.b16 %v2144
  %v2417 = vunpack.c.h.b16 %v2144
  %v2418 = vunpack.c.l.b16 %v2145
  %v2419 = vunpack.c.h.b16 %v2145
  %v2420 = vunpack.c.l.b16 %v2146
  %v2421 = vunpack.c.h.b16 %v2146
  %v2422 = vunpack.c.l.b16 %v2147
  %v2423 = vunpack.c.h.b16 %v2147
  %v2424 = vunpack.c.l.b16 %v2148
  %v2425 = vunpack.c.h.b16 %v2148
  %v2426 = vunpack.c.l.b16 %v2149
  %v2427 = vunpack.c.h.b16 %v2149
  %v2428 = vunpack.c.l.b16 %v2150
  %v2429 = vunpack.c.h.b16 %v2150
  %v2430 = vunpack.c.l.b16 %v2151
  %v2431 = vunpack.c.h.b16 %v2151
  %v2432 = vunpack.c.l.b16 %v2152
  %v2433 = vunpack.c.h.b16 %v2152
  %v2434 = vunpack.c.l.b16 %v2153
  %v2435 = vunpack.c.h.b16 %v2153
  %v2436 = vunpack.c.l.b16 %v2154
  %v2437 = vunpack.c.h.b16 %v2154
  %v2438 = vunpack.c.l.b16 %v2155
  %v2439 = vunpack.c.h.b16 %v2155
  %v2440 = vunpack.c.l.b16 %v2156
  %v2441 = vunpack.c.h.b16 %v2156
  %v2442 = vunpack.c.l.b16 %v2157
  %v2443 = vunpack.c.h.b16 %v2157
  %v2444 = vunpack.c.l.b16 %v2158
  %v2445 = vunpack.c.h.b16 %v2158
  %v2446 = vunpack.c.l.b16 %v2159
  %v2447 = vunpack.c.h.b16 %v2159
  %v2448 = vpack.c.b16 %v2258, %v2256
  %v2449 = vpack.c.b16 %v2259, %v2257
  %v2450 = vpack.c.b16 %v2262, %v2260
  %v2451 = vpack.c.b16 %v2263, %v2261
  %v2452 = vpack.c.b16 %v2266, %v2264
  %v2453 = vpack.c.b16 %v2267, %v2265
  %v2454 = vpack.c.b16 %v2270, %v2268
  %v2455 = vpack.c.b16 %v2271, %v2269
  %v2456 = vpack.c.b16 %v2274, %v2272
  %v2457 = vpack.c.b16 %v2275, %v2273
  %v2458 = vpack.c.b16 %v2278, %v2276
  %v2459 = vpack.c.b16 %v2279, %v2277
  %v2460 = vpack.c.b16 %v2282, %v2280
  %v2461 = vpack.c.b16 %v2283, %v2281
  %v2462 = vpack.c.b16 %v2286, %v2284
  %v2463 = vpack.c.b16 %v2287, %v2285
  %v2464 = vpack.c.b16 %v2290, %v2288
  %v2465 = vpack.c.b16 %v2291, %v2289
  %v2466 = vpack.c.b16 %v2294, %v2292
  %v2467 = vpack.c.b16 %v2295, %v2293
  %v2468 = vpack.c.b16 %v2298, %v2296
  %v2469 = vpack.c.b16 %v2299, %v2297
  %v2470 = vpack.c.b16 %v2302, %v2300
  %v2471 = vpack.c.b16 %v2303, %v2301
  %v2472 = vpack.c.b16 %v2306, %v2304
  %v2473 = vpack.c.b16 %v2307, %v2305
  %v2474 = vpack.c.b16 %v2310, %v2308
  %v2475 = vpack.c.b16 %v2311, %v2309
  %v2476 = vpack.c.b16 %v2314, %v2312
  %v2477 = vpack.c.b16 %v2315, %v2313
  %v2478 = vpack.c.b16 %v2318, %v2316
  %v2479 = vpack.c.b16 %v2319, %v2317
  %v2480 = vpack.c.b16 %v2322, %v2320
  %v2481 = vpack.c.b16 %v2323, %v2321
  %v2482 = vpack.c.b16 %v2326, %v2324
  %v2483 = vpack.c.b16 %v2327, %v2325
  %v2484 = vpack.c.b16 %v2330, %v2328
  %v2485 = vpack.c.b16 %v2331, %v2329
  %v2486 = vpack.c.b16 %v2334, %v2332
  %v2487 = vpack.c.b16 %v2335, %v2333
  %v2488 = vpack.c.b16 %v2338, %v2336
  %v2489 = vpack.c.b16 %v2339, %v2337
  %v2490 = vpack.c.b16 %v2342, %v2340
  %v2491 = vpack.c.b16 %v2343, %v2341
  %v2492 = vpack.c.b16 %v2346, %v2344
  %v2493 = vpack.c.b16 %v2347, %v2345
  %v2494 = vpack.c.b16 %v2350, %v2348
  %v2495 = vpack.c.b16 %v2351, %v2349
  %v2496 = vpack.c.b16 %v2354, %v2352
  %v2497 = vpack.c.b16 %v2355, %v2353
  %v2498 = vpack.c.b16 %v2358, %v2356
  %v2499 = vpack.c.b16 %v2359, %v2357
  %v2500 = vpack.c.b16 %v2362, %v2360
  %v2501 = vpack.c.b16 %v2363, %v2361
  %v2502 = vpack.c.b16 %v2366, %v2364
  %v2503 = vpack.c.b16 %v2367, %v2365
  %v2504 = vpack.c.b16 %v2370, %v2368
  %v2505 = vpack.c.b16 %v2371, %v2369
  %v2506 = vpack.c.b16 %v2374, %v2372
  %v2507 = vpack.c.b16 %v2375, %v2373
  %v2508 = vpack.c.b16 %v2378, %v2376
  %v2509 = vpack.c.b16 %v2379, %v2377
  %v2510 = vpack.c.b16 %v2382, %v2380
  %v2511 = vpack.c.b16 %v2383, %v2381
  %v2512 = vpack.c.b16 %v2386, %v2384
  %v2513 = vpack.c.b16 %v2387, %v2385
  %v2514 = vpack.c.b16 %v2390, %v2388
  %v2515 = vpack.c.b16 %v2391, %v2389
  %v2516 = vpack.c.b16 %v2394, %v2392
  %v2517 = vpack.c.b16 %v2395, %v2393
  %v2518 = vpack.c.b16 %v2398, %v2396
  %v2519 = vpack.c.b16 %v2399, %v2397
  %v2520 = vpack.c.b16 %v2402, %v2400
  %v2521 = vpack.c.b16 %v2403, %v2401
  %v2522 = vpack.c.b16 %v2406, %v2404
  %v2523 = vpack.c.b16 %v2407, %v2405
  %v2524 = vpack.c.b16 %v2410, %v2408
  %v2525 = vpack.c.b16 %v2411, %v2409
  %v2526 = vpack.c.b16 %v2414, %v2412
  %v2527 = vpack.c.b16 %v2415, %v2413
  %v2528 = vpack.c.b16 %v2418, %v2416
  %v2529 = vpack.c.b16 %v2419, %v2417
  %v2530 = vpack.c.b16 %v2422, %v2420
  %v2531 = vpack.c.b16 %v2423, %v2421
  %v2532 = vpack.c.b16 %v2426, %v2424
  %v2533 = vpack.c.b16 %v2427, %v2425
  %v2534 = vpack.c.b16 %v2430, %v2428
  %v2535 = vpack.c.b16 %v2431, %v2429
  %v2536 = vpack.c.b16 %v2434, %v2432
  %v2537 = vpack.c.b16 %v2435, %v2433
  %v2538 = vpack.c.b16 %v2438, %v2436
  %v2539 = vpack.c.b16 %v2439, %v2437
  %v2540 = vpack.c.b16 %v2442, %v2440
  %v2541 = vpack.c.b16 %v2443, %v2441
  %v2542 = vpack.c.b16 %v2446, %v2444
  %v2543 = vpack.c.b16 %v2447, %v2445
  %2640 = vmatpush.bf16.msra.mxu0 %v2462
  %2641 = vmatpush.bf16.msra.mxu0 %v2460
  %2642 = vmatpush.bf16.msra.mxu0 %v2458
  %2643 = vmatpush.bf16.msra.mxu0 %v2456
  %2644 = vmatpush.bf16.msra.mxu0 %v2454
  %2645 = vmatpush.bf16.msra.mxu0 %v2452
  %2646 = vmatpush.bf16.msra.mxu0 %v2450
  %2647 = vmatpush.bf16.msra.mxu0 %v2448
  %2648 = vmatmul.bf16.gmra.mxu0 %v2048
  %v2649 = vpop.f32.mrf.mxu0
  %v2650 = vadd.f32 0.0, %v2649
  %v2651 = vpop.f32.mrf.mxu0
  %v2652 = vadd.f32 0.0, %v2651
  %2653 = vdwg.mxu0
  %2654 = vmatpush.bf16.msra.mxu0 %v2478
  %2655 = vmatpush.bf16.msra.mxu0 %v2476
  %2656 = vmatpush.bf16.msra.mxu0 %v2474
  %2657 = vmatpush.bf16.msra.mxu0 %v2472
  %2658 = vmatpush.bf16.msra.mxu0 %v2470
  %2659 = vmatpush.bf16.msra.mxu0 %v2468
  %2660 = vmatpush.bf16.msra.mxu0 %v2466
  %2661 = vmatpush.bf16.msra.mxu0 %v2464
  %2662 = vmatmul.bf16.gmra.mxu0 %v2049
  %v2663 = vpop.f32.mrf.mxu0
  %v2664 = vadd.f32 %v2650, %v2663
  %v2665 = vpop.f32.mrf.mxu0
  %v2666 = vadd.f32 %v2652, %v2665
  %2667 = vdwg.mxu0
  %2668 = vmatpush.bf16.msra.mxu0 %v2494
  %2669 = vmatpush.bf16.msra.mxu0 %v2492
  %2670 = vmatpush.bf16.msra.mxu0 %v2490
  %2671 = vmatpush.bf16.msra.mxu0 %v2488
  %2672 = vmatpush.bf16.msra.mxu0 %v2486
  %2673 = vmatpush.bf16.msra.mxu0 %v2484
  %2674 = vmatpush.bf16.msra.mxu0 %v2482
  %2675 = vmatpush.bf16.msra.mxu0 %v2480
  %2676 = vmatmul.bf16.gmra.mxu0 %v1994
  %v2677 = vpop.f32.mrf.mxu0
  %v2678 = vadd.f32 %v2664, %v2677
  %v2679 = vpop.f32.mrf.mxu0
  %v2680 = vadd.f32 %v2666, %v2679
  %2681 = vdwg.mxu0
  %2682 = vmatpush.bf16.msra.mxu0 %v2510
  %2683 = vmatpush.bf16.msra.mxu0 %v2508
  %2684 = vmatpush.bf16.msra.mxu0 %v2506
  %2685 = vmatpush.bf16.msra.mxu0 %v2504
  %2686 = vmatpush.bf16.msra.mxu0 %v2502
  %2687 = vmatpush.bf16.msra.mxu0 %v2500
  %2688 = vmatpush.bf16.msra.mxu0 %v2498
  %2689 = vmatpush.bf16.msra.mxu0 %v2496
  %2690 = vmatmul.bf16.gmra.mxu0 %v1995
  %v2691 = vpop.f32.mrf.mxu0
  %v2692 = vadd.f32 %v2678, %v2691
  %v2693 = vpop.f32.mrf.mxu0
  %v2694 = vadd.f32 %v2680, %v2693
  %2695 = vdwg.mxu0
  %2696 = vmatpush.bf16.msra.mxu0 %v2526
  %2697 = vmatpush.bf16.msra.mxu0 %v2524
  %2698 = vmatpush.bf16.msra.mxu0 %v2522
  %2699 = vmatpush.bf16.msra.mxu0 %v2520
  %2700 = vmatpush.bf16.msra.mxu0 %v2518
  %2701 = vmatpush.bf16.msra.mxu0 %v2516
  %2702 = vmatpush.bf16.msra.mxu0 %v2514
  %2703 = vmatpush.bf16.msra.mxu0 %v2512
  %2704 = vmatmul.bf16.gmra.mxu0 %v2060
  %v2705 = vpop.f32.mrf.mxu0
  %v2706 = vadd.f32 %v2692, %v2705
  %v2707 = vpop.f32.mrf.mxu0
  %v2708 = vadd.f32 %v2694, %v2707
  %2709 = vdwg.mxu0
  %2710 = vmatpush.bf16.msra.mxu0 %v2542
  %2711 = vmatpush.bf16.msra.mxu0 %v2540
  %2712 = vmatpush.bf16.msra.mxu0 %v2538
  %2713 = vmatpush.bf16.msra.mxu0 %v2536
  %2714 = vmatpush.bf16.msra.mxu0 %v2534
  %2715 = vmatpush.bf16.msra.mxu0 %v2532
  %2716 = vmatpush.bf16.msra.mxu0 %v2530
  %2717 = vmatpush.bf16.msra.mxu0 %v2528
  %2718 = vmatmul.bf16.gmra.mxu0 %v2061
  %v2719 = vpop.f32.mrf.mxu0
  %v2720 = vadd.f32 %v2706, %v2719
  %v2721 = vpop.f32.mrf.mxu0
  %v2722 = vadd.f32 %v2708, %v2721
  %2723 = vdwg.mxu0
  %2724 = vmatpush.bf16.msra.mxu0 %v2463
  %2725 = vmatpush.bf16.msra.mxu0 %v2461
  %2726 = vmatpush.bf16.msra.mxu0 %v2459
  %2727 = vmatpush.bf16.msra.mxu0 %v2457
  %2728 = vmatpush.bf16.msra.mxu0 %v2455
  %2729 = vmatpush.bf16.msra.mxu0 %v2453
  %2730 = vmatpush.bf16.msra.mxu0 %v2451
  %2731 = vmatpush.bf16.msra.mxu0 %v2449
  %2732 = vmatmul.bf16.gmra.mxu0 %v2048
  %v2733 = vpop.f32.mrf.mxu0
  %v2734 = vadd.f32 0.0, %v2733
  %v2735 = vpop.f32.mrf.mxu0
  %v2736 = vadd.f32 0.0, %v2735
  %2737 = vdwg.mxu0
  %2738 = vmatpush.bf16.msra.mxu0 %v2479
  %2739 = vmatpush.bf16.msra.mxu0 %v2477
  %2740 = vmatpush.bf16.msra.mxu0 %v2475
  %2741 = vmatpush.bf16.msra.mxu0 %v2473
  %2742 = vmatpush.bf16.msra.mxu0 %v2471
  %2743 = vmatpush.bf16.msra.mxu0 %v2469
  %2744 = vmatpush.bf16.msra.mxu0 %v2467
  %2745 = vmatpush.bf16.msra.mxu0 %v2465
  %2746 = vmatmul.bf16.gmra.mxu0 %v2049
  %v2747 = vpop.f32.mrf.mxu0
  %v2748 = vadd.f32 %v2734, %v2747
  %v2749 = vpop.f32.mrf.mxu0
  %v2750 = vadd.f32 %v2736, %v2749
  %2751 = vdwg.mxu0
  %2752 = vmatpush.bf16.msra.mxu0 %v2495
  %2753 = vmatpush.bf16.msra.mxu0 %v2493
  %2754 = vmatpush.bf16.msra.mxu0 %v2491
  %2755 = vmatpush.bf16.msra.mxu0 %v2489
  %2756 = vmatpush.bf16.msra.mxu0 %v2487
  %2757 = vmatpush.bf16.msra.mxu0 %v2485
  %2758 = vmatpush.bf16.msra.mxu0 %v2483
  %2759 = vmatpush.bf16.msra.mxu0 %v2481
  %2760 = vmatmul.bf16.gmra.mxu0 %v1994
  %v2761 = vpop.f32.mrf.mxu0
  %v2762 = vadd.f32 %v2748, %v2761
  %v2763 = vpop.f32.mrf.mxu0
  %v2764 = vadd.f32 %v2750, %v2763
  %2765 = vdwg.mxu0
  %2766 = vmatpush.bf16.msra.mxu0 %v2511
  %2767 = vmatpush.bf16.msra.mxu0 %v2509
  %2768 = vmatpush.bf16.msra.mxu0 %v2507
  %2769 = vmatpush.bf16.msra.mxu0 %v2505
  %2770 = vmatpush.bf16.msra.mxu0 %v2503
  %2771 = vmatpush.bf16.msra.mxu0 %v2501
  %2772 = vmatpush.bf16.msra.mxu0 %v2499
  %2773 = vmatpush.bf16.msra.mxu0 %v2497
  %2774 = vmatmul.bf16.gmra.mxu0 %v1995
  %v2775 = vpop.f32.mrf.mxu0
  %v2776 = vadd.f32 %v2762, %v2775
  %v2777 = vpop.f32.mrf.mxu0
  %v2778 = vadd.f32 %v2764, %v2777
  %2779 = vdwg.mxu0
  %2780 = vmatpush.bf16.msra.mxu0 %v2527
  %2781 = vmatpush.bf16.msra.mxu0 %v2525
  %2782 = vmatpush.bf16.msra.mxu0 %v2523
  %2783 = vmatpush.bf16.msra.mxu0 %v2521
  %2784 = vmatpush.bf16.msra.mxu0 %v2519
  %2785 = vmatpush.bf16.msra.mxu0 %v2517
  %2786 = vmatpush.bf16.msra.mxu0 %v2515
  %2787 = vmatpush.bf16.msra.mxu0 %v2513
  %2788 = vmatmul.bf16.gmra.mxu0 %v2060
  %v2789 = vpop.f32.mrf.mxu0
  %v2790 = vadd.f32 %v2776, %v2789
  %v2791 = vpop.f32.mrf.mxu0
  %v2792 = vadd.f32 %v2778, %v2791
  %2793 = vdwg.mxu0
  %2794 = vmatpush.bf16.msra.mxu0 %v2543
  %2795 = vmatpush.bf16.msra.mxu0 %v2541
  %2796 = vmatpush.bf16.msra.mxu0 %v2539
  %2797 = vmatpush.bf16.msra.mxu0 %v2537
  %2798 = vmatpush.bf16.msra.mxu0 %v2535
  %2799 = vmatpush.bf16.msra.mxu0 %v2533
  %2800 = vmatpush.bf16.msra.mxu0 %v2531
  %2801 = vmatpush.bf16.msra.mxu0 %v2529
  %2802 = vmatmul.bf16.gmra.mxu0 %v2061
  %v2803 = vpop.f32.mrf.mxu0
  %v2804 = vadd.f32 %v2790, %v2803
  %v2805 = vpop.f32.mrf.mxu0
  %v2806 = vadd.f32 %v2792, %v2805
  %2807 = vdwg.mxu0
  %v2808 = vld [vmem:[%s11] ss:$2 sm:$0x3]
  %v2810 = vperm.slane %v2808, 0
  %v2811 = vperm.slane %v2808, 1
  %v2814 = vmul.f32 %v2720, %v2810
  %v2815 = vmul.f32 %v2804, %v2811
  %v2816 = vmul.f32 %v2722, %v2810
  %v2817 = vmul.f32 %v2806, %v2811
  %s2818 = scalar_lea.vmem %s11, 1
  %v2819 = vld [vmem:[%s2818] ss:$2 sm:$0x3]
  %v2821 = vperm.slane %v2819, 0
  %v2822 = vperm.slane %v2819, 1
  %v2825 = vadd.f32 %v2814, %v2821
  %v2826 = vadd.f32 %v2815, %v2822
  %v2827 = vadd.f32 %v2816, %v2821
  %v2828 = vadd.f32 %v2817, %v2822
  %v2829 = vunpack.c.l.bf16 %v1139
  %v2830 = vunpack.c.h.bf16 %v1139
  %v2831 = vunpack.c.l.bf16 %v1140
  %v2832 = vunpack.c.h.bf16 %v1140
  %v2833 = vadd.f32 %v2825, %v2829
  %v2834 = vadd.f32 %v2826, %v2830
  %v2835 = vadd.f32 %v2827, %v2831
  %v2836 = vadd.f32 %v2828, %v2832
  %v2837 = vpack.c.bf16 %v2834, %v2833
  %v2838 = vpack.c.bf16 %v2836, %v2835
  %v2841 = vunpack.c.l.b16 %v2837
  %v2842 = vunpack.c.h.b16 %v2837
  %v2843 = vunpack.c.l.b16 %v2838
  %v2844 = vunpack.c.h.b16 %v2838
  %v2845 = vpack.c.b16 %v2843, %v2841
  %v2846 = vpack.c.b16 %v2844, %v2842
  %v2848 = vshrl.u32 %v2845, 16
  %v2850 = vrot.slane %v2848, 7
  %v2851 = vshll.u32 %v2845, 16
  %v2853 = vor.u32 %v2850, %v2851
  %v2855 = vshrl.u32 %v2846, 16
  %v2857 = vrot.slane %v2855, 7
  %v2858 = vshll.u32 %v2846, 16
  %v2860 = vor.u32 %v2857, %v2858
  %v2863 = vsel %vm128, 0, %v2853
  %v2864 = vsel %vm128, 0, %v2860
  %v2865 = vunpack.c.l.bf16 %v2863
  %v2866 = vunpack.c.l.bf16 %v2864
  %v2867 = vunpack.c.h.bf16 %v2863
  %v2868 = vunpack.c.h.bf16 %v2864
  %v2869 = vmul.f32 %v2865, %v132
  %v2870 = vmul.f32 %v2866, %v132
  %v2871 = vmul.f32 %v2867, %v133
  %v2872 = vmul.f32 %v2868, %v133
  %v2873 = vpack.c.bf16 %v2870, %v2869
  %v2874 = vpack.c.bf16 %v2872, %v2871
  %v2875 = vrot.slane %v2851, 1
  %v2876 = vor.u32 %v2848, %v2875
  %v2877 = vrot.slane %v2858, 1
  %v2878 = vor.u32 %v2855, %v2877
  %v2881 = vsel %vm143, %v2876, 0
  %v2882 = vsel %vm143, %v2878, 0
  %v2883 = vunpack.c.l.bf16 %v2881
  %v2884 = vunpack.c.l.bf16 %v2882
  %v2885 = vunpack.c.h.bf16 %v2881
  %v2886 = vunpack.c.h.bf16 %v2882
  %v2887 = vmul.f32 %v2883, %v147
  %v2888 = vmul.f32 %v2884, %v147
  %v2889 = vmul.f32 %v2885, %v148
  %v2890 = vmul.f32 %v2886, %v148
  %v2891 = vpack.c.bf16 %v2888, %v2887
  %v2892 = vpack.c.bf16 %v2890, %v2889
  %v2895 = vunpack.c.l.b16 %v2873
  %v2896 = vunpack.c.h.b16 %v2873
  %v2897 = vunpack.c.l.b16 %v2874
  %v2898 = vunpack.c.h.b16 %v2874
  %v2899 = vpack.c.b16 %v2897, %v2895
  %v2900 = vpack.c.b16 %v2898, %v2896
  %v2907 = vunpack.c.l.b16 %v2891
  %v2908 = vunpack.c.h.b16 %v2891
  %v2909 = vunpack.c.l.b16 %v2892
  %v2910 = vunpack.c.h.b16 %v2892
  %v2911 = vpack.c.b16 %v2909, %v2907
  %v2912 = vpack.c.b16 %v2910, %v2908
  %v2915 = vld [vmem:[%s12] sm:$0xff]
  %v2916 = vld [vmem:[%s12 + $0x8] sm:$0xff]
  %v2917 = vld [vmem:[%s12 + $0x10] sm:$0xff]
  %v2918 = vld [vmem:[%s12 + $0x18] sm:$0xff]
  %v2919 = vld [vmem:[%s12 + $0x20] sm:$0xff]
  %v2920 = vld [vmem:[%s12 + $0x28] sm:$0xff]
  %v2921 = vld [vmem:[%s12 + $0x30] sm:$0xff]
  %v2922 = vld [vmem:[%s12 + $0x38] sm:$0xff]
  %v2923 = vld [vmem:[%s12 + $0x40] sm:$0xff]
  %v2924 = vld [vmem:[%s12 + $0x48] sm:$0xff]
  %v2925 = vld [vmem:[%s12 + $0x50] sm:$0xff]
  %v2926 = vld [vmem:[%s12 + $0x58] sm:$0xff]
  %v2927 = vld [vmem:[%s12 + $0x60] sm:$0xff]
  %v2928 = vld [vmem:[%s12 + $0x68] sm:$0xff]
  %v2929 = vld [vmem:[%s12 + $0x70] sm:$0xff]
  %v2930 = vld [vmem:[%s12 + $0x78] sm:$0xff]
  %v2931 = vld [vmem:[%s12 + $0x80] sm:$0xff]
  %v2932 = vld [vmem:[%s12 + $0x88] sm:$0xff]
  %v2933 = vld [vmem:[%s12 + $0x90] sm:$0xff]
  %v2934 = vld [vmem:[%s12 + $0x98] sm:$0xff]
  %v2935 = vld [vmem:[%s12 + $0xa0] sm:$0xff]
  %v2936 = vld [vmem:[%s12 + $0xa8] sm:$0xff]
  %v2937 = vld [vmem:[%s12 + $0xb0] sm:$0xff]
  %v2938 = vld [vmem:[%s12 + $0xb8] sm:$0xff]
  %v2939 = vld [vmem:[%s12 + $0xc0] sm:$0xff]
  %v2940 = vld [vmem:[%s12 + $0xc8] sm:$0xff]
  %v2941 = vld [vmem:[%s12 + $0xd0] sm:$0xff]
  %v2942 = vld [vmem:[%s12 + $0xd8] sm:$0xff]
  %v2943 = vld [vmem:[%s12 + $0xe0] sm:$0xff]
  %v2944 = vld [vmem:[%s12 + $0xe8] sm:$0xff]
  %v2945 = vld [vmem:[%s12 + $0xf0] sm:$0xff]
  %v2946 = vld [vmem:[%s12 + $0xf8] sm:$0xff]
  %v2947 = vld [vmem:[%s12 + $0x100] sm:$0xff]
  %v2948 = vld [vmem:[%s12 + $0x108] sm:$0xff]
  %v2949 = vld [vmem:[%s12 + $0x110] sm:$0xff]
  %v2950 = vld [vmem:[%s12 + $0x118] sm:$0xff]
  %v2951 = vld [vmem:[%s12 + $0x120] sm:$0xff]
  %v2952 = vld [vmem:[%s12 + $0x128] sm:$0xff]
  %v2953 = vld [vmem:[%s12 + $0x130] sm:$0xff]
  %v2954 = vld [vmem:[%s12 + $0x138] sm:$0xff]
  %v2955 = vld [vmem:[%s12 + $0x140] sm:$0xff]
  %v2956 = vld [vmem:[%s12 + $0x148] sm:$0xff]
  %v2957 = vld [vmem:[%s12 + $0x150] sm:$0xff]
  %v2958 = vld [vmem:[%s12 + $0x158] sm:$0xff]
  %v2959 = vld [vmem:[%s12 + $0x160] sm:$0xff]
  %v2960 = vld [vmem:[%s12 + $0x168] sm:$0xff]
  %v2961 = vld [vmem:[%s12 + $0x170] sm:$0xff]
  %v2962 = vld [vmem:[%s12 + $0x178] sm:$0xff]
  %v2963 = vld [vmem:[%s12 + $0x180] sm:$0xff]
  %v2964 = vld [vmem:[%s12 + $0x188] sm:$0xff]
  %v2965 = vld [vmem:[%s12 + $0x190] sm:$0xff]
  %v2966 = vld [vmem:[%s12 + $0x198] sm:$0xff]
  %v2967 = vld [vmem:[%s12 + $0x1a0] sm:$0xff]
  %v2968 = vld [vmem:[%s12 + $0x1a8] sm:$0xff]
  %v2969 = vld [vmem:[%s12 + $0x1b0] sm:$0xff]
  %v2970 = vld [vmem:[%s12 + $0x1b8] sm:$0xff]
  %v2971 = vld [vmem:[%s12 + $0x1c0] sm:$0xff]
  %v2972 = vld [vmem:[%s12 + $0x1c8] sm:$0xff]
  %v2973 = vld [vmem:[%s12 + $0x1d0] sm:$0xff]
  %v2974 = vld [vmem:[%s12 + $0x1d8] sm:$0xff]
  %v2975 = vld [vmem:[%s12 + $0x1e0] sm:$0xff]
  %v2976 = vld [vmem:[%s12 + $0x1e8] sm:$0xff]
  %v2977 = vld [vmem:[%s12 + $0x1f0] sm:$0xff]
  %v2978 = vld [vmem:[%s12 + $0x1f8] sm:$0xff]
  %v2979 = vld [vmem:[%s12 + $0x200] sm:$0xff]
  %v2980 = vld [vmem:[%s12 + $0x208] sm:$0xff]
  %v2981 = vld [vmem:[%s12 + $0x210] sm:$0xff]
  %v2982 = vld [vmem:[%s12 + $0x218] sm:$0xff]
  %v2983 = vld [vmem:[%s12 + $0x220] sm:$0xff]
  %v2984 = vld [vmem:[%s12 + $0x228] sm:$0xff]
  %v2985 = vld [vmem:[%s12 + $0x230] sm:$0xff]
  %v2986 = vld [vmem:[%s12 + $0x238] sm:$0xff]
  %v2987 = vld [vmem:[%s12 + $0x240] sm:$0xff]
  %v2988 = vld [vmem:[%s12 + $0x248] sm:$0xff]
  %v2989 = vld [vmem:[%s12 + $0x250] sm:$0xff]
  %v2990 = vld [vmem:[%s12 + $0x258] sm:$0xff]
  %v2991 = vld [vmem:[%s12 + $0x260] sm:$0xff]
  %v2992 = vld [vmem:[%s12 + $0x268] sm:$0xff]
  %v2993 = vld [vmem:[%s12 + $0x270] sm:$0xff]
  %v2994 = vld [vmem:[%s12 + $0x278] sm:$0xff]
  %v2995 = vld [vmem:[%s12 + $0x280] sm:$0xff]
  %v2996 = vld [vmem:[%s12 + $0x288] sm:$0xff]
  %v2997 = vld [vmem:[%s12 + $0x290] sm:$0xff]
  %v2998 = vld [vmem:[%s12 + $0x298] sm:$0xff]
  %v2999 = vld [vmem:[%s12 + $0x2a0] sm:$0xff]
  %v3000 = vld [vmem:[%s12 + $0x2a8] sm:$0xff]
  %v3001 = vld [vmem:[%s12 + $0x2b0] sm:$0xff]
  %v3002 = vld [vmem:[%s12 + $0x2b8] sm:$0xff]
  %v3003 = vld [vmem:[%s12 + $0x2c0] sm:$0xff]
  %v3004 = vld [vmem:[%s12 + $0x2c8] sm:$0xff]
  %v3005 = vld [vmem:[%s12 + $0x2d0] sm:$0xff]
  %v3006 = vld [vmem:[%s12 + $0x2d8] sm:$0xff]
  %v3007 = vld [vmem:[%s12 + $0x2e0] sm:$0xff]
  %v3008 = vld [vmem:[%s12 + $0x2e8] sm:$0xff]
  %v3009 = vld [vmem:[%s12 + $0x2f0] sm:$0xff]
  %v3010 = vld [vmem:[%s12 + $0x2f8] sm:$0xff]
  %v3011 = vld [vmem:[%s12 + $0x300] sm:$0xff]
  %v3012 = vld [vmem:[%s12 + $0x308] sm:$0xff]
  %v3013 = vld [vmem:[%s12 + $0x310] sm:$0xff]
  %v3014 = vld [vmem:[%s12 + $0x318] sm:$0xff]
  %v3015 = vld [vmem:[%s12 + $0x320] sm:$0xff]
  %v3016 = vld [vmem:[%s12 + $0x328] sm:$0xff]
  %v3017 = vld [vmem:[%s12 + $0x330] sm:$0xff]
  %v3018 = vld [vmem:[%s12 + $0x338] sm:$0xff]
  %v3019 = vld [vmem:[%s12 + $0x340] sm:$0xff]
  %v3020 = vld [vmem:[%s12 + $0x348] sm:$0xff]
  %v3021 = vld [vmem:[%s12 + $0x350] sm:$0xff]
  %v3022 = vld [vmem:[%s12 + $0x358] sm:$0xff]
  %v3023 = vld [vmem:[%s12 + $0x360] sm:$0xff]
  %v3024 = vld [vmem:[%s12 + $0x368] sm:$0xff]
  %v3025 = vld [vmem:[%s12 + $0x370] sm:$0xff]
  %v3026 = vld [vmem:[%s12 + $0x378] sm:$0xff]
  %v3027 = vld [vmem:[%s12 + $0x380] sm:$0xff]
  %v3028 = vld [vmem:[%s12 + $0x388] sm:$0xff]
  %v3029 = vld [vmem:[%s12 + $0x390] sm:$0xff]
  %v3030 = vld [vmem:[%s12 + $0x398] sm:$0xff]
  %v3031 = vld [vmem:[%s12 + $0x3a0] sm:$0xff]
  %v3032 = vld [vmem:[%s12 + $0x3a8] sm:$0xff]
  %v3033 = vld [vmem:[%s12 + $0x3b0] sm:$0xff]
  %v3034 = vld [vmem:[%s12 + $0x3b8] sm:$0xff]
  %v3035 = vld [vmem:[%s12 + $0x3c0] sm:$0xff]
  %v3036 = vld [vmem:[%s12 + $0x3c8] sm:$0xff]
  %v3037 = vld [vmem:[%s12 + $0x3d0] sm:$0xff]
  %v3038 = vld [vmem:[%s12 + $0x3d8] sm:$0xff]
  %v3039 = vld [vmem:[%s12 + $0x3e0] sm:$0xff]
  %v3040 = vld [vmem:[%s12 + $0x3e8] sm:$0xff]
  %v3041 = vld [vmem:[%s12 + $0x3f0] sm:$0xff]
  %v3042 = vld [vmem:[%s12 + $0x3f8] sm:$0xff]
  %v3043 = vld [vmem:[%s12 + $0x400] sm:$0xff]
  %v3044 = vld [vmem:[%s12 + $0x408] sm:$0xff]
  %v3045 = vld [vmem:[%s12 + $0x410] sm:$0xff]
  %v3046 = vld [vmem:[%s12 + $0x418] sm:$0xff]
  %v3047 = vld [vmem:[%s12 + $0x420] sm:$0xff]
  %v3048 = vld [vmem:[%s12 + $0x428] sm:$0xff]
  %v3049 = vld [vmem:[%s12 + $0x430] sm:$0xff]
  %v3050 = vld [vmem:[%s12 + $0x438] sm:$0xff]
  %v3051 = vld [vmem:[%s12 + $0x440] sm:$0xff]
  %v3052 = vld [vmem:[%s12 + $0x448] sm:$0xff]
  %v3053 = vld [vmem:[%s12 + $0x450] sm:$0xff]
  %v3054 = vld [vmem:[%s12 + $0x458] sm:$0xff]
  %v3055 = vld [vmem:[%s12 + $0x460] sm:$0xff]
  %v3056 = vld [vmem:[%s12 + $0x468] sm:$0xff]
  %v3057 = vld [vmem:[%s12 + $0x470] sm:$0xff]
  %v3058 = vld [vmem:[%s12 + $0x478] sm:$0xff]
  %v3059 = vld [vmem:[%s12 + $0x480] sm:$0xff]
  %v3060 = vld [vmem:[%s12 + $0x488] sm:$0xff]
  %v3061 = vld [vmem:[%s12 + $0x490] sm:$0xff]
  %v3062 = vld [vmem:[%s12 + $0x498] sm:$0xff]
  %v3063 = vld [vmem:[%s12 + $0x4a0] sm:$0xff]
  %v3064 = vld [vmem:[%s12 + $0x4a8] sm:$0xff]
  %v3065 = vld [vmem:[%s12 + $0x4b0] sm:$0xff]
  %v3066 = vld [vmem:[%s12 + $0x4b8] sm:$0xff]
  %v3067 = vld [vmem:[%s12 + $0x4c0] sm:$0xff]
  %v3068 = vld [vmem:[%s12 + $0x4c8] sm:$0xff]
  %v3069 = vld [vmem:[%s12 + $0x4d0] sm:$0xff]
  %v3070 = vld [vmem:[%s12 + $0x4d8] sm:$0xff]
  %v3071 = vld [vmem:[%s12 + $0x4e0] sm:$0xff]
  %v3072 = vld [vmem:[%s12 + $0x4e8] sm:$0xff]
  %v3073 = vld [vmem:[%s12 + $0x4f0] sm:$0xff]
  %v3074 = vld [vmem:[%s12 + $0x4f8] sm:$0xff]
  %v3075 = vld [vmem:[%s12 + $0x500] sm:$0xff]
  %v3076 = vld [vmem:[%s12 + $0x508] sm:$0xff]
  %v3077 = vld [vmem:[%s12 + $0x510] sm:$0xff]
  %v3078 = vld [vmem:[%s12 + $0x518] sm:$0xff]
  %v3079 = vld [vmem:[%s12 + $0x520] sm:$0xff]
  %v3080 = vld [vmem:[%s12 + $0x528] sm:$0xff]
  %v3081 = vld [vmem:[%s12 + $0x530] sm:$0xff]
  %v3082 = vld [vmem:[%s12 + $0x538] sm:$0xff]
  %v3083 = vld [vmem:[%s12 + $0x540] sm:$0xff]
  %v3084 = vld [vmem:[%s12 + $0x548] sm:$0xff]
  %v3085 = vld [vmem:[%s12 + $0x550] sm:$0xff]
  %v3086 = vld [vmem:[%s12 + $0x558] sm:$0xff]
  %v3087 = vld [vmem:[%s12 + $0x560] sm:$0xff]
  %v3088 = vld [vmem:[%s12 + $0x568] sm:$0xff]
  %v3089 = vld [vmem:[%s12 + $0x570] sm:$0xff]
  %v3090 = vld [vmem:[%s12 + $0x578] sm:$0xff]
  %v3091 = vld [vmem:[%s12 + $0x580] sm:$0xff]
  %v3092 = vld [vmem:[%s12 + $0x588] sm:$0xff]
  %v3093 = vld [vmem:[%s12 + $0x590] sm:$0xff]
  %v3094 = vld [vmem:[%s12 + $0x598] sm:$0xff]
  %v3095 = vld [vmem:[%s12 + $0x5a0] sm:$0xff]
  %v3096 = vld [vmem:[%s12 + $0x5a8] sm:$0xff]
  %v3097 = vld [vmem:[%s12 + $0x5b0] sm:$0xff]
  %v3098 = vld [vmem:[%s12 + $0x5b8] sm:$0xff]
  %v3099 = vld [vmem:[%s12 + $0x5c0] sm:$0xff]
  %v3100 = vld [vmem:[%s12 + $0x5c8] sm:$0xff]
  %v3101 = vld [vmem:[%s12 + $0x5d0] sm:$0xff]
  %v3102 = vld [vmem:[%s12 + $0x5d8] sm:$0xff]
  %v3103 = vld [vmem:[%s12 + $0x5e0] sm:$0xff]
  %v3104 = vld [vmem:[%s12 + $0x5e8] sm:$0xff]
  %v3105 = vld [vmem:[%s12 + $0x5f0] sm:$0xff]
  %v3106 = vld [vmem:[%s12 + $0x5f8] sm:$0xff]
  %v3299 = vunpack.c.l.b16 %v2915
  %v3300 = vunpack.c.h.b16 %v2915
  %v3301 = vunpack.c.l.b16 %v2916
  %v3302 = vunpack.c.h.b16 %v2916
  %v3303 = vunpack.c.l.b16 %v2917
  %v3304 = vunpack.c.h.b16 %v2917
  %v3305 = vunpack.c.l.b16 %v2918
  %v3306 = vunpack.c.h.b16 %v2918
  %v3307 = vunpack.c.l.b16 %v2919
  %v3308 = vunpack.c.h.b16 %v2919
  %v3309 = vunpack.c.l.b16 %v2920
  %v3310 = vunpack.c.h.b16 %v2920
  %v3311 = vunpack.c.l.b16 %v2921
  %v3312 = vunpack.c.h.b16 %v2921
  %v3313 = vunpack.c.l.b16 %v2922
  %v3314 = vunpack.c.h.b16 %v2922
  %v3315 = vunpack.c.l.b16 %v2923
  %v3316 = vunpack.c.h.b16 %v2923
  %v3317 = vunpack.c.l.b16 %v2924
  %v3318 = vunpack.c.h.b16 %v2924
  %v3319 = vunpack.c.l.b16 %v2925
  %v3320 = vunpack.c.h.b16 %v2925
  %v3321 = vunpack.c.l.b16 %v2926
  %v3322 = vunpack.c.h.b16 %v2926
  %v3323 = vunpack.c.l.b16 %v2927
  %v3324 = vunpack.c.h.b16 %v2927
  %v3325 = vunpack.c.l.b16 %v2928
  %v3326 = vunpack.c.h.b16 %v2928
  %v3327 = vunpack.c.l.b16 %v2929
  %v3328 = vunpack.c.h.b16 %v2929
  %v3329 = vunpack.c.l.b16 %v2930
  %v3330 = vunpack.c.h.b16 %v2930
  %v3331 = vunpack.c.l.b16 %v2931
  %v3332 = vunpack.c.h.b16 %v2931
  %v3333 = vunpack.c.l.b16 %v2932
  %v3334 = vunpack.c.h.b16 %v2932
  %v3335 = vunpack.c.l.b16 %v2933
  %v3336 = vunpack.c.h.b16 %v2933
  %v3337 = vunpack.c.l.b16 %v2934
  %v3338 = vunpack.c.h.b16 %v2934
  %v3339 = vunpack.c.l.b16 %v2935
  %v3340 = vunpack.c.h.b16 %v2935
  %v3341 = vunpack.c.l.b16 %v2936
  %v3342 = vunpack.c.h.b16 %v2936
  %v3343 = vunpack.c.l.b16 %v2937
  %v3344 = vunpack.c.h.b16 %v2937
  %v3345 = vunpack.c.l.b16 %v2938
  %v3346 = vunpack.c.h.b16 %v2938
  %v3347 = vunpack.c.l.b16 %v2939
  %v3348 = vunpack.c.h.b16 %v2939
  %v3349 = vunpack.c.l.b16 %v2940
  %v3350 = vunpack.c.h.b16 %v2940
  %v3351 = vunpack.c.l.b16 %v2941
  %v3352 = vunpack.c.h.b16 %v2941
  %v3353 = vunpack.c.l.b16 %v2942
  %v3354 = vunpack.c.h.b16 %v2942
  %v3355 = vunpack.c.l.b16 %v2943
  %v3356 = vunpack.c.h.b16 %v2943
  %v3357 = vunpack.c.l.b16 %v2944
  %v3358 = vunpack.c.h.b16 %v2944
  %v3359 = vunpack.c.l.b16 %v2945
  %v3360 = vunpack.c.h.b16 %v2945
  %v3361 = vunpack.c.l.b16 %v2946
  %v3362 = vunpack.c.h.b16 %v2946
  %v3363 = vunpack.c.l.b16 %v2947
  %v3364 = vunpack.c.h.b16 %v2947
  %v3365 = vunpack.c.l.b16 %v2948
  %v3366 = vunpack.c.h.b16 %v2948
  %v3367 = vunpack.c.l.b16 %v2949
  %v3368 = vunpack.c.h.b16 %v2949
  %v3369 = vunpack.c.l.b16 %v2950
  %v3370 = vunpack.c.h.b16 %v2950
  %v3371 = vunpack.c.l.b16 %v2951
  %v3372 = vunpack.c.h.b16 %v2951
  %v3373 = vunpack.c.l.b16 %v2952
  %v3374 = vunpack.c.h.b16 %v2952
  %v3375 = vunpack.c.l.b16 %v2953
  %v3376 = vunpack.c.h.b16 %v2953
  %v3377 = vunpack.c.l.b16 %v2954
  %v3378 = vunpack.c.h.b16 %v2954
  %v3379 = vunpack.c.l.b16 %v2955
  %v3380 = vunpack.c.h.b16 %v2955
  %v3381 = vunpack.c.l.b16 %v2956
  %v3382 = vunpack.c.h.b16 %v2956
  %v3383 = vunpack.c.l.b16 %v2957
  %v3384 = vunpack.c.h.b16 %v2957
  %v3385 = vunpack.c.l.b16 %v2958
  %v3386 = vunpack.c.h.b16 %v2958
  %v3387 = vunpack.c.l.b16 %v2959
  %v3388 = vunpack.c.h.b16 %v2959
  %v3389 = vunpack.c.l.b16 %v2960
  %v3390 = vunpack.c.h.b16 %v2960
  %v3391 = vunpack.c.l.b16 %v2961
  %v3392 = vunpack.c.h.b16 %v2961
  %v3393 = vunpack.c.l.b16 %v2962
  %v3394 = vunpack.c.h.b16 %v2962
  %v3395 = vunpack.c.l.b16 %v2963
  %v3396 = vunpack.c.h.b16 %v2963
  %v3397 = vunpack.c.l.b16 %v2964
  %v3398 = vunpack.c.h.b16 %v2964
  %v3399 = vunpack.c.l.b16 %v2965
  %v3400 = vunpack.c.h.b16 %v2965
  %v3401 = vunpack.c.l.b16 %v2966
  %v3402 = vunpack.c.h.b16 %v2966
  %v3403 = vunpack.c.l.b16 %v2967
  %v3404 = vunpack.c.h.b16 %v2967
  %v3405 = vunpack.c.l.b16 %v2968
  %v3406 = vunpack.c.h.b16 %v2968
  %v3407 = vunpack.c.l.b16 %v2969
  %v3408 = vunpack.c.h.b16 %v2969
  %v3409 = vunpack.c.l.b16 %v2970
  %v3410 = vunpack.c.h.b16 %v2970
  %v3411 = vunpack.c.l.b16 %v2971
  %v3412 = vunpack.c.h.b16 %v2971
  %v3413 = vunpack.c.l.b16 %v2972
  %v3414 = vunpack.c.h.b16 %v2972
  %v3415 = vunpack.c.l.b16 %v2973
  %v3416 = vunpack.c.h.b16 %v2973
  %v3417 = vunpack.c.l.b16 %v2974
  %v3418 = vunpack.c.h.b16 %v2974
  %v3419 = vunpack.c.l.b16 %v2975
  %v3420 = vunpack.c.h.b16 %v2975
  %v3421 = vunpack.c.l.b16 %v2976
  %v3422 = vunpack.c.h.b16 %v2976
  %v3423 = vunpack.c.l.b16 %v2977
  %v3424 = vunpack.c.h.b16 %v2977
  %v3425 = vunpack.c.l.b16 %v2978
  %v3426 = vunpack.c.h.b16 %v2978
  %v3427 = vunpack.c.l.b16 %v2979
  %v3428 = vunpack.c.h.b16 %v2979
  %v3429 = vunpack.c.l.b16 %v2980
  %v3430 = vunpack.c.h.b16 %v2980
  %v3431 = vunpack.c.l.b16 %v2981
  %v3432 = vunpack.c.h.b16 %v2981
  %v3433 = vunpack.c.l.b16 %v2982
  %v3434 = vunpack.c.h.b16 %v2982
  %v3435 = vunpack.c.l.b16 %v2983
  %v3436 = vunpack.c.h.b16 %v2983
  %v3437 = vunpack.c.l.b16 %v2984
  %v3438 = vunpack.c.h.b16 %v2984
  %v3439 = vunpack.c.l.b16 %v2985
  %v3440 = vunpack.c.h.b16 %v2985
  %v3441 = vunpack.c.l.b16 %v2986
  %v3442 = vunpack.c.h.b16 %v2986
  %v3443 = vunpack.c.l.b16 %v2987
  %v3444 = vunpack.c.h.b16 %v2987
  %v3445 = vunpack.c.l.b16 %v2988
  %v3446 = vunpack.c.h.b16 %v2988
  %v3447 = vunpack.c.l.b16 %v2989
  %v3448 = vunpack.c.h.b16 %v2989
  %v3449 = vunpack.c.l.b16 %v2990
  %v3450 = vunpack.c.h.b16 %v2990
  %v3451 = vunpack.c.l.b16 %v2991
  %v3452 = vunpack.c.h.b16 %v2991
  %v3453 = vunpack.c.l.b16 %v2992
  %v3454 = vunpack.c.h.b16 %v2992
  %v3455 = vunpack.c.l.b16 %v2993
  %v3456 = vunpack.c.h.b16 %v2993
  %v3457 = vunpack.c.l.b16 %v2994
  %v3458 = vunpack.c.h.b16 %v2994
  %v3459 = vunpack.c.l.b16 %v2995
  %v3460 = vunpack.c.h.b16 %v2995
  %v3461 = vunpack.c.l.b16 %v2996
  %v3462 = vunpack.c.h.b16 %v2996
  %v3463 = vunpack.c.l.b16 %v2997
  %v3464 = vunpack.c.h.b16 %v2997
  %v3465 = vunpack.c.l.b16 %v2998
  %v3466 = vunpack.c.h.b16 %v2998
  %v3467 = vunpack.c.l.b16 %v2999
  %v3468 = vunpack.c.h.b16 %v2999
  %v3469 = vunpack.c.l.b16 %v3000
  %v3470 = vunpack.c.h.b16 %v3000
  %v3471 = vunpack.c.l.b16 %v3001
  %v3472 = vunpack.c.h.b16 %v3001
  %v3473 = vunpack.c.l.b16 %v3002
  %v3474 = vunpack.c.h.b16 %v3002
  %v3475 = vunpack.c.l.b16 %v3003
  %v3476 = vunpack.c.h.b16 %v3003
  %v3477 = vunpack.c.l.b16 %v3004
  %v3478 = vunpack.c.h.b16 %v3004
  %v3479 = vunpack.c.l.b16 %v3005
  %v3480 = vunpack.c.h.b16 %v3005
  %v3481 = vunpack.c.l.b16 %v3006
  %v3482 = vunpack.c.h.b16 %v3006
  %v3483 = vunpack.c.l.b16 %v3007
  %v3484 = vunpack.c.h.b16 %v3007
  %v3485 = vunpack.c.l.b16 %v3008
  %v3486 = vunpack.c.h.b16 %v3008
  %v3487 = vunpack.c.l.b16 %v3009
  %v3488 = vunpack.c.h.b16 %v3009
  %v3489 = vunpack.c.l.b16 %v3010
  %v3490 = vunpack.c.h.b16 %v3010
  %v3491 = vunpack.c.l.b16 %v3011
  %v3492 = vunpack.c.h.b16 %v3011
  %v3493 = vunpack.c.l.b16 %v3012
  %v3494 = vunpack.c.h.b16 %v3012
  %v3495 = vunpack.c.l.b16 %v3013
  %v3496 = vunpack.c.h.b16 %v3013
  %v3497 = vunpack.c.l.b16 %v3014
  %v3498 = vunpack.c.h.b16 %v3014
  %v3499 = vunpack.c.l.b16 %v3015
  %v3500 = vunpack.c.h.b16 %v3015
  %v3501 = vunpack.c.l.b16 %v3016
  %v3502 = vunpack.c.h.b16 %v3016
  %v3503 = vunpack.c.l.b16 %v3017
  %v3504 = vunpack.c.h.b16 %v3017
  %v3505 = vunpack.c.l.b16 %v3018
  %v3506 = vunpack.c.h.b16 %v3018
  %v3507 = vunpack.c.l.b16 %v3019
  %v3508 = vunpack.c.h.b16 %v3019
  %v3509 = vunpack.c.l.b16 %v3020
  %v3510 = vunpack.c.h.b16 %v3020
  %v3511 = vunpack.c.l.b16 %v3021
  %v3512 = vunpack.c.h.b16 %v3021
  %v3513 = vunpack.c.l.b16 %v3022
  %v3514 = vunpack.c.h.b16 %v3022
  %v3515 = vunpack.c.l.b16 %v3023
  %v3516 = vunpack.c.h.b16 %v3023
  %v3517 = vunpack.c.l.b16 %v3024
  %v3518 = vunpack.c.h.b16 %v3024
  %v3519 = vunpack.c.l.b16 %v3025
  %v3520 = vunpack.c.h.b16 %v3025
  %v3521 = vunpack.c.l.b16 %v3026
  %v3522 = vunpack.c.h.b16 %v3026
  %v3523 = vunpack.c.l.b16 %v3027
  %v3524 = vunpack.c.h.b16 %v3027
  %v3525 = vunpack.c.l.b16 %v3028
  %v3526 = vunpack.c.h.b16 %v3028
  %v3527 = vunpack.c.l.b16 %v3029
  %v3528 = vunpack.c.h.b16 %v3029
  %v3529 = vunpack.c.l.b16 %v3030
  %v3530 = vunpack.c.h.b16 %v3030
  %v3531 = vunpack.c.l.b16 %v3031
  %v3532 = vunpack.c.h.b16 %v3031
  %v3533 = vunpack.c.l.b16 %v3032
  %v3534 = vunpack.c.h.b16 %v3032
  %v3535 = vunpack.c.l.b16 %v3033
  %v3536 = vunpack.c.h.b16 %v3033
  %v3537 = vunpack.c.l.b16 %v3034
  %v3538 = vunpack.c.h.b16 %v3034
  %v3539 = vunpack.c.l.b16 %v3035
  %v3540 = vunpack.c.h.b16 %v3035
  %v3541 = vunpack.c.l.b16 %v3036
  %v3542 = vunpack.c.h.b16 %v3036
  %v3543 = vunpack.c.l.b16 %v3037
  %v3544 = vunpack.c.h.b16 %v3037
  %v3545 = vunpack.c.l.b16 %v3038
  %v3546 = vunpack.c.h.b16 %v3038
  %v3547 = vunpack.c.l.b16 %v3039
  %v3548 = vunpack.c.h.b16 %v3039
  %v3549 = vunpack.c.l.b16 %v3040
  %v3550 = vunpack.c.h.b16 %v3040
  %v3551 = vunpack.c.l.b16 %v3041
  %v3552 = vunpack.c.h.b16 %v3041
  %v3553 = vunpack.c.l.b16 %v3042
  %v3554 = vunpack.c.h.b16 %v3042
  %v3555 = vunpack.c.l.b16 %v3043
  %v3556 = vunpack.c.h.b16 %v3043
  %v3557 = vunpack.c.l.b16 %v3044
  %v3558 = vunpack.c.h.b16 %v3044
  %v3559 = vunpack.c.l.b16 %v3045
  %v3560 = vunpack.c.h.b16 %v3045
  %v3561 = vunpack.c.l.b16 %v3046
  %v3562 = vunpack.c.h.b16 %v3046
  %v3563 = vunpack.c.l.b16 %v3047
  %v3564 = vunpack.c.h.b16 %v3047
  %v3565 = vunpack.c.l.b16 %v3048
  %v3566 = vunpack.c.h.b16 %v3048
  %v3567 = vunpack.c.l.b16 %v3049
  %v3568 = vunpack.c.h.b16 %v3049
  %v3569 = vunpack.c.l.b16 %v3050
  %v3570 = vunpack.c.h.b16 %v3050
  %v3571 = vunpack.c.l.b16 %v3051
  %v3572 = vunpack.c.h.b16 %v3051
  %v3573 = vunpack.c.l.b16 %v3052
  %v3574 = vunpack.c.h.b16 %v3052
  %v3575 = vunpack.c.l.b16 %v3053
  %v3576 = vunpack.c.h.b16 %v3053
  %v3577 = vunpack.c.l.b16 %v3054
  %v3578 = vunpack.c.h.b16 %v3054
  %v3579 = vunpack.c.l.b16 %v3055
  %v3580 = vunpack.c.h.b16 %v3055
  %v3581 = vunpack.c.l.b16 %v3056
  %v3582 = vunpack.c.h.b16 %v3056
  %v3583 = vunpack.c.l.b16 %v3057
  %v3584 = vunpack.c.h.b16 %v3057
  %v3585 = vunpack.c.l.b16 %v3058
  %v3586 = vunpack.c.h.b16 %v3058
  %v3587 = vunpack.c.l.b16 %v3059
  %v3588 = vunpack.c.h.b16 %v3059
  %v3589 = vunpack.c.l.b16 %v3060
  %v3590 = vunpack.c.h.b16 %v3060
  %v3591 = vunpack.c.l.b16 %v3061
  %v3592 = vunpack.c.h.b16 %v3061
  %v3593 = vunpack.c.l.b16 %v3062
  %v3594 = vunpack.c.h.b16 %v3062
  %v3595 = vunpack.c.l.b16 %v3063
  %v3596 = vunpack.c.h.b16 %v3063
  %v3597 = vunpack.c.l.b16 %v3064
  %v3598 = vunpack.c.h.b16 %v3064
  %v3599 = vunpack.c.l.b16 %v3065
  %v3600 = vunpack.c.h.b16 %v3065
  %v3601 = vunpack.c.l.b16 %v3066
  %v3602 = vunpack.c.h.b16 %v3066
  %v3603 = vunpack.c.l.b16 %v3067
  %v3604 = vunpack.c.h.b16 %v3067
  %v3605 = vunpack.c.l.b16 %v3068
  %v3606 = vunpack.c.h.b16 %v3068
  %v3607 = vunpack.c.l.b16 %v3069
  %v3608 = vunpack.c.h.b16 %v3069
  %v3609 = vunpack.c.l.b16 %v3070
  %v3610 = vunpack.c.h.b16 %v3070
  %v3611 = vunpack.c.l.b16 %v3071
  %v3612 = vunpack.c.h.b16 %v3071
  %v3613 = vunpack.c.l.b16 %v3072
  %v3614 = vunpack.c.h.b16 %v3072
  %v3615 = vunpack.c.l.b16 %v3073
  %v3616 = vunpack.c.h.b16 %v3073
  %v3617 = vunpack.c.l.b16 %v3074
  %v3618 = vunpack.c.h.b16 %v3074
  %v3619 = vunpack.c.l.b16 %v3075
  %v3620 = vunpack.c.h.b16 %v3075
  %v3621 = vunpack.c.l.b16 %v3076
  %v3622 = vunpack.c.h.b16 %v3076
  %v3623 = vunpack.c.l.b16 %v3077
  %v3624 = vunpack.c.h.b16 %v3077
  %v3625 = vunpack.c.l.b16 %v3078
  %v3626 = vunpack.c.h.b16 %v3078
  %v3627 = vunpack.c.l.b16 %v3079
  %v3628 = vunpack.c.h.b16 %v3079
  %v3629 = vunpack.c.l.b16 %v3080
  %v3630 = vunpack.c.h.b16 %v3080
  %v3631 = vunpack.c.l.b16 %v3081
  %v3632 = vunpack.c.h.b16 %v3081
  %v3633 = vunpack.c.l.b16 %v3082
  %v3634 = vunpack.c.h.b16 %v3082
  %v3635 = vunpack.c.l.b16 %v3083
  %v3636 = vunpack.c.h.b16 %v3083
  %v3637 = vunpack.c.l.b16 %v3084
  %v3638 = vunpack.c.h.b16 %v3084
  %v3639 = vunpack.c.l.b16 %v3085
  %v3640 = vunpack.c.h.b16 %v3085
  %v3641 = vunpack.c.l.b16 %v3086
  %v3642 = vunpack.c.h.b16 %v3086
  %v3643 = vunpack.c.l.b16 %v3087
  %v3644 = vunpack.c.h.b16 %v3087
  %v3645 = vunpack.c.l.b16 %v3088
  %v3646 = vunpack.c.h.b16 %v3088
  %v3647 = vunpack.c.l.b16 %v3089
  %v3648 = vunpack.c.h.b16 %v3089
  %v3649 = vunpack.c.l.b16 %v3090
  %v3650 = vunpack.c.h.b16 %v3090
  %v3651 = vunpack.c.l.b16 %v3091
  %v3652 = vunpack.c.h.b16 %v3091
  %v3653 = vunpack.c.l.b16 %v3092
  %v3654 = vunpack.c.h.b16 %v3092
  %v3655 = vunpack.c.l.b16 %v3093
  %v3656 = vunpack.c.h.b16 %v3093
  %v3657 = vunpack.c.l.b16 %v3094
  %v3658 = vunpack.c.h.b16 %v3094
  %v3659 = vunpack.c.l.b16 %v3095
  %v3660 = vunpack.c.h.b16 %v3095
  %v3661 = vunpack.c.l.b16 %v3096
  %v3662 = vunpack.c.h.b16 %v3096
  %v3663 = vunpack.c.l.b16 %v3097
  %v3664 = vunpack.c.h.b16 %v3097
  %v3665 = vunpack.c.l.b16 %v3098
  %v3666 = vunpack.c.h.b16 %v3098
  %v3667 = vunpack.c.l.b16 %v3099
  %v3668 = vunpack.c.h.b16 %v3099
  %v3669 = vunpack.c.l.b16 %v3100
  %v3670 = vunpack.c.h.b16 %v3100
  %v3671 = vunpack.c.l.b16 %v3101
  %v3672 = vunpack.c.h.b16 %v3101
  %v3673 = vunpack.c.l.b16 %v3102
  %v3674 = vunpack.c.h.b16 %v3102
  %v3675 = vunpack.c.l.b16 %v3103
  %v3676 = vunpack.c.h.b16 %v3103
  %v3677 = vunpack.c.l.b16 %v3104
  %v3678 = vunpack.c.h.b16 %v3104
  %v3679 = vunpack.c.l.b16 %v3105
  %v3680 = vunpack.c.h.b16 %v3105
  %v3681 = vunpack.c.l.b16 %v3106
  %v3682 = vunpack.c.h.b16 %v3106
  %v3683 = vpack.c.b16 %v3303, %v3299
  %v3684 = vpack.c.b16 %v3304, %v3300
  %v3685 = vpack.c.b16 %v3305, %v3301
  %v3686 = vpack.c.b16 %v3306, %v3302
  %v3687 = vpack.c.b16 %v3311, %v3307
  %v3688 = vpack.c.b16 %v3312, %v3308
  %v3689 = vpack.c.b16 %v3313, %v3309
  %v3690 = vpack.c.b16 %v3314, %v3310
  %v3691 = vpack.c.b16 %v3319, %v3315
  %v3692 = vpack.c.b16 %v3320, %v3316
  %v3693 = vpack.c.b16 %v3321, %v3317
  %v3694 = vpack.c.b16 %v3322, %v3318
  %v3695 = vpack.c.b16 %v3327, %v3323
  %v3696 = vpack.c.b16 %v3328, %v3324
  %v3697 = vpack.c.b16 %v3329, %v3325
  %v3698 = vpack.c.b16 %v3330, %v3326
  %v3699 = vpack.c.b16 %v3335, %v3331
  %v3700 = vpack.c.b16 %v3336, %v3332
  %v3701 = vpack.c.b16 %v3337, %v3333
  %v3702 = vpack.c.b16 %v3338, %v3334
  %v3703 = vpack.c.b16 %v3343, %v3339
  %v3704 = vpack.c.b16 %v3344, %v3340
  %v3705 = vpack.c.b16 %v3345, %v3341
  %v3706 = vpack.c.b16 %v3346, %v3342
  %v3707 = vpack.c.b16 %v3351, %v3347
  %v3708 = vpack.c.b16 %v3352, %v3348
  %v3709 = vpack.c.b16 %v3353, %v3349
  %v3710 = vpack.c.b16 %v3354, %v3350
  %v3711 = vpack.c.b16 %v3359, %v3355
  %v3712 = vpack.c.b16 %v3360, %v3356
  %v3713 = vpack.c.b16 %v3361, %v3357
  %v3714 = vpack.c.b16 %v3362, %v3358
  %v3715 = vpack.c.b16 %v3367, %v3363
  %v3716 = vpack.c.b16 %v3368, %v3364
  %v3717 = vpack.c.b16 %v3369, %v3365
  %v3718 = vpack.c.b16 %v3370, %v3366
  %v3719 = vpack.c.b16 %v3375, %v3371
  %v3720 = vpack.c.b16 %v3376, %v3372
  %v3721 = vpack.c.b16 %v3377, %v3373
  %v3722 = vpack.c.b16 %v3378, %v3374
  %v3723 = vpack.c.b16 %v3383, %v3379
  %v3724 = vpack.c.b16 %v3384, %v3380
  %v3725 = vpack.c.b16 %v3385, %v3381
  %v3726 = vpack.c.b16 %v3386, %v3382
  %v3727 = vpack.c.b16 %v3391, %v3387
  %v3728 = vpack.c.b16 %v3392, %v3388
  %v3729 = vpack.c.b16 %v3393, %v3389
  %v3730 = vpack.c.b16 %v3394, %v3390
  %v3731 = vpack.c.b16 %v3399, %v3395
  %v3732 = vpack.c.b16 %v3400, %v3396
  %v3733 = vpack.c.b16 %v3401, %v3397
  %v3734 = vpack.c.b16 %v3402, %v3398
  %v3735 = vpack.c.b16 %v3407, %v3403
  %v3736 = vpack.c.b16 %v3408, %v3404
  %v3737 = vpack.c.b16 %v3409, %v3405
  %v3738 = vpack.c.b16 %v3410, %v3406
  %v3739 = vpack.c.b16 %v3415, %v3411
  %v3740 = vpack.c.b16 %v3416, %v3412
  %v3741 = vpack.c.b16 %v3417, %v3413
  %v3742 = vpack.c.b16 %v3418, %v3414
  %v3743 = vpack.c.b16 %v3423, %v3419
  %v3744 = vpack.c.b16 %v3424, %v3420
  %v3745 = vpack.c.b16 %v3425, %v3421
  %v3746 = vpack.c.b16 %v3426, %v3422
  %v3747 = vpack.c.b16 %v3431, %v3427
  %v3748 = vpack.c.b16 %v3432, %v3428
  %v3749 = vpack.c.b16 %v3433, %v3429
  %v3750 = vpack.c.b16 %v3434, %v3430
  %v3751 = vpack.c.b16 %v3439, %v3435
  %v3752 = vpack.c.b16 %v3440, %v3436
  %v3753 = vpack.c.b16 %v3441, %v3437
  %v3754 = vpack.c.b16 %v3442, %v3438
  %v3755 = vpack.c.b16 %v3447, %v3443
  %v3756 = vpack.c.b16 %v3448, %v3444
  %v3757 = vpack.c.b16 %v3449, %v3445
  %v3758 = vpack.c.b16 %v3450, %v3446
  %v3759 = vpack.c.b16 %v3455, %v3451
  %v3760 = vpack.c.b16 %v3456, %v3452
  %v3761 = vpack.c.b16 %v3457, %v3453
  %v3762 = vpack.c.b16 %v3458, %v3454
  %v3763 = vpack.c.b16 %v3463, %v3459
  %v3764 = vpack.c.b16 %v3464, %v3460
  %v3765 = vpack.c.b16 %v3465, %v3461
  %v3766 = vpack.c.b16 %v3466, %v3462
  %v3767 = vpack.c.b16 %v3471, %v3467
  %v3768 = vpack.c.b16 %v3472, %v3468
  %v3769 = vpack.c.b16 %v3473, %v3469
  %v3770 = vpack.c.b16 %v3474, %v3470
  %v3771 = vpack.c.b16 %v3479, %v3475
  %v3772 = vpack.c.b16 %v3480, %v3476
  %v3773 = vpack.c.b16 %v3481, %v3477
  %v3774 = vpack.c.b16 %v3482, %v3478
  %v3775 = vpack.c.b16 %v3487, %v3483
  %v3776 = vpack.c.b16 %v3488, %v3484
  %v3777 = vpack.c.b16 %v3489, %v3485
  %v3778 = vpack.c.b16 %v3490, %v3486
  %v3779 = vpack.c.b16 %v3495, %v3491
  %v3780 = vpack.c.b16 %v3496, %v3492
  %v3781 = vpack.c.b16 %v3497, %v3493
  %v3782 = vpack.c.b16 %v3498, %v3494
  %v3783 = vpack.c.b16 %v3503, %v3499
  %v3784 = vpack.c.b16 %v3504, %v3500
  %v3785 = vpack.c.b16 %v3505, %v3501
  %v3786 = vpack.c.b16 %v3506, %v3502
  %v3787 = vpack.c.b16 %v3511, %v3507
  %v3788 = vpack.c.b16 %v3512, %v3508
  %v3789 = vpack.c.b16 %v3513, %v3509
  %v3790 = vpack.c.b16 %v3514, %v3510
  %v3791 = vpack.c.b16 %v3519, %v3515
  %v3792 = vpack.c.b16 %v3520, %v3516
  %v3793 = vpack.c.b16 %v3521, %v3517
  %v3794 = vpack.c.b16 %v3522, %v3518
  %v3795 = vpack.c.b16 %v3527, %v3523
  %v3796 = vpack.c.b16 %v3528, %v3524
  %v3797 = vpack.c.b16 %v3529, %v3525
  %v3798 = vpack.c.b16 %v3530, %v3526
  %v3799 = vpack.c.b16 %v3535, %v3531
  %v3800 = vpack.c.b16 %v3536, %v3532
  %v3801 = vpack.c.b16 %v3537, %v3533
  %v3802 = vpack.c.b16 %v3538, %v3534
  %v3803 = vpack.c.b16 %v3543, %v3539
  %v3804 = vpack.c.b16 %v3544, %v3540
  %v3805 = vpack.c.b16 %v3545, %v3541
  %v3806 = vpack.c.b16 %v3546, %v3542
  %v3807 = vpack.c.b16 %v3551, %v3547
  %v3808 = vpack.c.b16 %v3552, %v3548
  %v3809 = vpack.c.b16 %v3553, %v3549
  %v3810 = vpack.c.b16 %v3554, %v3550
  %v3811 = vpack.c.b16 %v3559, %v3555
  %v3812 = vpack.c.b16 %v3560, %v3556
  %v3813 = vpack.c.b16 %v3561, %v3557
  %v3814 = vpack.c.b16 %v3562, %v3558
  %v3815 = vpack.c.b16 %v3567, %v3563
  %v3816 = vpack.c.b16 %v3568, %v3564
  %v3817 = vpack.c.b16 %v3569, %v3565
  %v3818 = vpack.c.b16 %v3570, %v3566
  %v3819 = vpack.c.b16 %v3575, %v3571
  %v3820 = vpack.c.b16 %v3576, %v3572
  %v3821 = vpack.c.b16 %v3577, %v3573
  %v3822 = vpack.c.b16 %v3578, %v3574
  %v3823 = vpack.c.b16 %v3583, %v3579
  %v3824 = vpack.c.b16 %v3584, %v3580
  %v3825 = vpack.c.b16 %v3585, %v3581
  %v3826 = vpack.c.b16 %v3586, %v3582
  %v3827 = vpack.c.b16 %v3591, %v3587
  %v3828 = vpack.c.b16 %v3592, %v3588
  %v3829 = vpack.c.b16 %v3593, %v3589
  %v3830 = vpack.c.b16 %v3594, %v3590
  %v3831 = vpack.c.b16 %v3599, %v3595
  %v3832 = vpack.c.b16 %v3600, %v3596
  %v3833 = vpack.c.b16 %v3601, %v3597
  %v3834 = vpack.c.b16 %v3602, %v3598
  %v3835 = vpack.c.b16 %v3607, %v3603
  %v3836 = vpack.c.b16 %v3608, %v3604
  %v3837 = vpack.c.b16 %v3609, %v3605
  %v3838 = vpack.c.b16 %v3610, %v3606
  %v3839 = vpack.c.b16 %v3615, %v3611
  %v3840 = vpack.c.b16 %v3616, %v3612
  %v3841 = vpack.c.b16 %v3617, %v3613
  %v3842 = vpack.c.b16 %v3618, %v3614
  %v3843 = vpack.c.b16 %v3623, %v3619
  %v3844 = vpack.c.b16 %v3624, %v3620
  %v3845 = vpack.c.b16 %v3625, %v3621
  %v3846 = vpack.c.b16 %v3626, %v3622
  %v3847 = vpack.c.b16 %v3631, %v3627
  %v3848 = vpack.c.b16 %v3632, %v3628
  %v3849 = vpack.c.b16 %v3633, %v3629
  %v3850 = vpack.c.b16 %v3634, %v3630
  %v3851 = vpack.c.b16 %v3639, %v3635
  %v3852 = vpack.c.b16 %v3640, %v3636
  %v3853 = vpack.c.b16 %v3641, %v3637
  %v3854 = vpack.c.b16 %v3642, %v3638
  %v3855 = vpack.c.b16 %v3647, %v3643
  %v3856 = vpack.c.b16 %v3648, %v3644
  %v3857 = vpack.c.b16 %v3649, %v3645
  %v3858 = vpack.c.b16 %v3650, %v3646
  %v3859 = vpack.c.b16 %v3655, %v3651
  %v3860 = vpack.c.b16 %v3656, %v3652
  %v3861 = vpack.c.b16 %v3657, %v3653
  %v3862 = vpack.c.b16 %v3658, %v3654
  %v3863 = vpack.c.b16 %v3663, %v3659
  %v3864 = vpack.c.b16 %v3664, %v3660
  %v3865 = vpack.c.b16 %v3665, %v3661
  %v3866 = vpack.c.b16 %v3666, %v3662
  %v3867 = vpack.c.b16 %v3671, %v3667
  %v3868 = vpack.c.b16 %v3672, %v3668
  %v3869 = vpack.c.b16 %v3673, %v3669
  %v3870 = vpack.c.b16 %v3674, %v3670
  %v3871 = vpack.c.b16 %v3679, %v3675
  %v3872 = vpack.c.b16 %v3680, %v3676
  %v3873 = vpack.c.b16 %v3681, %v3677
  %v3874 = vpack.c.b16 %v3682, %v3678
  %4067 = vmatpush.bf16.msra.mxu0 %v3711
  %4068 = vmatpush.bf16.msra.mxu0 %v3707
  %4069 = vmatpush.bf16.msra.mxu0 %v3703
  %4070 = vmatpush.bf16.msra.mxu0 %v3699
  %4071 = vmatpush.bf16.msra.mxu0 %v3695
  %4072 = vmatpush.bf16.msra.mxu0 %v3691
  %4073 = vmatpush.bf16.msra.mxu0 %v3687
  %4074 = vmatpush.bf16.msra.mxu0 %v3683
  %4075 = vmatmul.bf16.gmra.mxu0 %v2899
  %v4076 = vpop.f32.mrf.mxu0
  %v4077 = vadd.f32 0.0, %v4076
  %v4078 = vpop.f32.mrf.mxu0
  %v4079 = vadd.f32 0.0, %v4078
  %4080 = vdwg.mxu0
  %4081 = vmatpush.bf16.msra.mxu0 %v3743
  %4082 = vmatpush.bf16.msra.mxu0 %v3739
  %4083 = vmatpush.bf16.msra.mxu0 %v3735
  %4084 = vmatpush.bf16.msra.mxu0 %v3731
  %4085 = vmatpush.bf16.msra.mxu0 %v3727
  %4086 = vmatpush.bf16.msra.mxu0 %v3723
  %4087 = vmatpush.bf16.msra.mxu0 %v3719
  %4088 = vmatpush.bf16.msra.mxu0 %v3715
  %4089 = vmatmul.bf16.gmra.mxu0 %v2900
  %v4090 = vpop.f32.mrf.mxu0
  %v4091 = vadd.f32 %v4077, %v4090
  %v4092 = vpop.f32.mrf.mxu0
  %v4093 = vadd.f32 %v4079, %v4092
  %4094 = vdwg.mxu0
  %4095 = vmatpush.bf16.msra.mxu0 %v3775
  %4096 = vmatpush.bf16.msra.mxu0 %v3771
  %4097 = vmatpush.bf16.msra.mxu0 %v3767
  %4098 = vmatpush.bf16.msra.mxu0 %v3763
  %4099 = vmatpush.bf16.msra.mxu0 %v3759
  %4100 = vmatpush.bf16.msra.mxu0 %v3755
  %4101 = vmatpush.bf16.msra.mxu0 %v3751
  %4102 = vmatpush.bf16.msra.mxu0 %v3747
  %4103 = vmatmul.bf16.gmra.mxu0 %v2845
  %v4104 = vpop.f32.mrf.mxu0
  %v4105 = vadd.f32 %v4091, %v4104
  %v4106 = vpop.f32.mrf.mxu0
  %v4107 = vadd.f32 %v4093, %v4106
  %4108 = vdwg.mxu0
  %4109 = vmatpush.bf16.msra.mxu0 %v3807
  %4110 = vmatpush.bf16.msra.mxu0 %v3803
  %4111 = vmatpush.bf16.msra.mxu0 %v3799
  %4112 = vmatpush.bf16.msra.mxu0 %v3795
  %4113 = vmatpush.bf16.msra.mxu0 %v3791
  %4114 = vmatpush.bf16.msra.mxu0 %v3787
  %4115 = vmatpush.bf16.msra.mxu0 %v3783
  %4116 = vmatpush.bf16.msra.mxu0 %v3779
  %4117 = vmatmul.bf16.gmra.mxu0 %v2846
  %v4118 = vpop.f32.mrf.mxu0
  %v4119 = vadd.f32 %v4105, %v4118
  %v4120 = vpop.f32.mrf.mxu0
  %v4121 = vadd.f32 %v4107, %v4120
  %4122 = vdwg.mxu0
  %4123 = vmatpush.bf16.msra.mxu0 %v3839
  %4124 = vmatpush.bf16.msra.mxu0 %v3835
  %4125 = vmatpush.bf16.msra.mxu0 %v3831
  %4126 = vmatpush.bf16.msra.mxu0 %v3827
  %4127 = vmatpush.bf16.msra.mxu0 %v3823
  %4128 = vmatpush.bf16.msra.mxu0 %v3819
  %4129 = vmatpush.bf16.msra.mxu0 %v3815
  %4130 = vmatpush.bf16.msra.mxu0 %v3811
  %4131 = vmatmul.bf16.gmra.mxu0 %v2911
  %v4132 = vpop.f32.mrf.mxu0
  %v4133 = vadd.f32 %v4119, %v4132
  %v4134 = vpop.f32.mrf.mxu0
  %v4135 = vadd.f32 %v4121, %v4134
  %4136 = vdwg.mxu0
  %4137 = vmatpush.bf16.msra.mxu0 %v3871
  %4138 = vmatpush.bf16.msra.mxu0 %v3867
  %4139 = vmatpush.bf16.msra.mxu0 %v3863
  %4140 = vmatpush.bf16.msra.mxu0 %v3859
  %4141 = vmatpush.bf16.msra.mxu0 %v3855
  %4142 = vmatpush.bf16.msra.mxu0 %v3851
  %4143 = vmatpush.bf16.msra.mxu0 %v3847
  %4144 = vmatpush.bf16.msra.mxu0 %v3843
  %4145 = vmatmul.bf16.gmra.mxu0 %v2912
  %v4146 = vpop.f32.mrf.mxu0
  %v4147 = vadd.f32 %v4133, %v4146
  %v4148 = vpop.f32.mrf.mxu0
  %v4149 = vadd.f32 %v4135, %v4148
  %4150 = vdwg.mxu0
  %4151 = vmatpush.bf16.msra.mxu0 %v3712
  %4152 = vmatpush.bf16.msra.mxu0 %v3708
  %4153 = vmatpush.bf16.msra.mxu0 %v3704
  %4154 = vmatpush.bf16.msra.mxu0 %v3700
  %4155 = vmatpush.bf16.msra.mxu0 %v3696
  %4156 = vmatpush.bf16.msra.mxu0 %v3692
  %4157 = vmatpush.bf16.msra.mxu0 %v3688
  %4158 = vmatpush.bf16.msra.mxu0 %v3684
  %4159 = vmatmul.bf16.gmra.mxu0 %v2899
  %v4160 = vpop.f32.mrf.mxu0
  %v4161 = vadd.f32 0.0, %v4160
  %v4162 = vpop.f32.mrf.mxu0
  %v4163 = vadd.f32 0.0, %v4162
  %4164 = vdwg.mxu0
  %4165 = vmatpush.bf16.msra.mxu0 %v3744
  %4166 = vmatpush.bf16.msra.mxu0 %v3740
  %4167 = vmatpush.bf16.msra.mxu0 %v3736
  %4168 = vmatpush.bf16.msra.mxu0 %v3732
  %4169 = vmatpush.bf16.msra.mxu0 %v3728
  %4170 = vmatpush.bf16.msra.mxu0 %v3724
  %4171 = vmatpush.bf16.msra.mxu0 %v3720
  %4172 = vmatpush.bf16.msra.mxu0 %v3716
  %4173 = vmatmul.bf16.gmra.mxu0 %v2900
  %v4174 = vpop.f32.mrf.mxu0
  %v4175 = vadd.f32 %v4161, %v4174
  %v4176 = vpop.f32.mrf.mxu0
  %v4177 = vadd.f32 %v4163, %v4176
  %4178 = vdwg.mxu0
  %4179 = vmatpush.bf16.msra.mxu0 %v3776
  %4180 = vmatpush.bf16.msra.mxu0 %v3772
  %4181 = vmatpush.bf16.msra.mxu0 %v3768
  %4182 = vmatpush.bf16.msra.mxu0 %v3764
  %4183 = vmatpush.bf16.msra.mxu0 %v3760
  %4184 = vmatpush.bf16.msra.mxu0 %v3756
  %4185 = vmatpush.bf16.msra.mxu0 %v3752
  %4186 = vmatpush.bf16.msra.mxu0 %v3748
  %4187 = vmatmul.bf16.gmra.mxu0 %v2845
  %v4188 = vpop.f32.mrf.mxu0
  %v4189 = vadd.f32 %v4175, %v4188
  %v4190 = vpop.f32.mrf.mxu0
  %v4191 = vadd.f32 %v4177, %v4190
  %4192 = vdwg.mxu0
  %4193 = vmatpush.bf16.msra.mxu0 %v3808
  %4194 = vmatpush.bf16.msra.mxu0 %v3804
  %4195 = vmatpush.bf16.msra.mxu0 %v3800
  %4196 = vmatpush.bf16.msra.mxu0 %v3796
  %4197 = vmatpush.bf16.msra.mxu0 %v3792
  %4198 = vmatpush.bf16.msra.mxu0 %v3788
  %4199 = vmatpush.bf16.msra.mxu0 %v3784
  %4200 = vmatpush.bf16.msra.mxu0 %v3780
  %4201 = vmatmul.bf16.gmra.mxu0 %v2846
  %v4202 = vpop.f32.mrf.mxu0
  %v4203 = vadd.f32 %v4189, %v4202
  %v4204 = vpop.f32.mrf.mxu0
  %v4205 = vadd.f32 %v4191, %v4204
  %4206 = vdwg.mxu0
  %4207 = vmatpush.bf16.msra.mxu0 %v3840
  %4208 = vmatpush.bf16.msra.mxu0 %v3836
  %4209 = vmatpush.bf16.msra.mxu0 %v3832
  %4210 = vmatpush.bf16.msra.mxu0 %v3828
  %4211 = vmatpush.bf16.msra.mxu0 %v3824
  %4212 = vmatpush.bf16.msra.mxu0 %v3820
  %4213 = vmatpush.bf16.msra.mxu0 %v3816
  %4214 = vmatpush.bf16.msra.mxu0 %v3812
  %4215 = vmatmul.bf16.gmra.mxu0 %v2911
  %v4216 = vpop.f32.mrf.mxu0
  %v4217 = vadd.f32 %v4203, %v4216
  %v4218 = vpop.f32.mrf.mxu0
  %v4219 = vadd.f32 %v4205, %v4218
  %4220 = vdwg.mxu0
  %4221 = vmatpush.bf16.msra.mxu0 %v3872
  %4222 = vmatpush.bf16.msra.mxu0 %v3868
  %4223 = vmatpush.bf16.msra.mxu0 %v3864
  %4224 = vmatpush.bf16.msra.mxu0 %v3860
  %4225 = vmatpush.bf16.msra.mxu0 %v3856
  %4226 = vmatpush.bf16.msra.mxu0 %v3852
  %4227 = vmatpush.bf16.msra.mxu0 %v3848
  %4228 = vmatpush.bf16.msra.mxu0 %v3844
  %4229 = vmatmul.bf16.gmra.mxu0 %v2912
  %v4230 = vpop.f32.mrf.mxu0
  %v4231 = vadd.f32 %v4217, %v4230
  %v4232 = vpop.f32.mrf.mxu0
  %v4233 = vadd.f32 %v4219, %v4232
  %4234 = vdwg.mxu0
  %4235 = vmatpush.bf16.msra.mxu0 %v3713
  %4236 = vmatpush.bf16.msra.mxu0 %v3709
  %4237 = vmatpush.bf16.msra.mxu0 %v3705
  %4238 = vmatpush.bf16.msra.mxu0 %v3701
  %4239 = vmatpush.bf16.msra.mxu0 %v3697
  %4240 = vmatpush.bf16.msra.mxu0 %v3693
  %4241 = vmatpush.bf16.msra.mxu0 %v3689
  %4242 = vmatpush.bf16.msra.mxu0 %v3685
  %4243 = vmatmul.bf16.gmra.mxu0 %v2899
  %v4244 = vpop.f32.mrf.mxu0
  %v4245 = vadd.f32 0.0, %v4244
  %v4246 = vpop.f32.mrf.mxu0
  %v4247 = vadd.f32 0.0, %v4246
  %4248 = vdwg.mxu0
  %4249 = vmatpush.bf16.msra.mxu0 %v3745
  %4250 = vmatpush.bf16.msra.mxu0 %v3741
  %4251 = vmatpush.bf16.msra.mxu0 %v3737
  %4252 = vmatpush.bf16.msra.mxu0 %v3733
  %4253 = vmatpush.bf16.msra.mxu0 %v3729
  %4254 = vmatpush.bf16.msra.mxu0 %v3725
  %4255 = vmatpush.bf16.msra.mxu0 %v3721
  %4256 = vmatpush.bf16.msra.mxu0 %v3717
  %4257 = vmatmul.bf16.gmra.mxu0 %v2900
  %v4258 = vpop.f32.mrf.mxu0
  %v4259 = vadd.f32 %v4245, %v4258
  %v4260 = vpop.f32.mrf.mxu0
  %v4261 = vadd.f32 %v4247, %v4260
  %4262 = vdwg.mxu0
  %4263 = vmatpush.bf16.msra.mxu0 %v3777
  %4264 = vmatpush.bf16.msra.mxu0 %v3773
  %4265 = vmatpush.bf16.msra.mxu0 %v3769
  %4266 = vmatpush.bf16.msra.mxu0 %v3765
  %4267 = vmatpush.bf16.msra.mxu0 %v3761
  %4268 = vmatpush.bf16.msra.mxu0 %v3757
  %4269 = vmatpush.bf16.msra.mxu0 %v3753
  %4270 = vmatpush.bf16.msra.mxu0 %v3749
  %4271 = vmatmul.bf16.gmra.mxu0 %v2845
  %v4272 = vpop.f32.mrf.mxu0
  %v4273 = vadd.f32 %v4259, %v4272
  %v4274 = vpop.f32.mrf.mxu0
  %v4275 = vadd.f32 %v4261, %v4274
  %4276 = vdwg.mxu0
  %4277 = vmatpush.bf16.msra.mxu0 %v3809
  %4278 = vmatpush.bf16.msra.mxu0 %v3805
  %4279 = vmatpush.bf16.msra.mxu0 %v3801
  %4280 = vmatpush.bf16.msra.mxu0 %v3797
  %4281 = vmatpush.bf16.msra.mxu0 %v3793
  %4282 = vmatpush.bf16.msra.mxu0 %v3789
  %4283 = vmatpush.bf16.msra.mxu0 %v3785
  %4284 = vmatpush.bf16.msra.mxu0 %v3781
  %4285 = vmatmul.bf16.gmra.mxu0 %v2846
  %v4286 = vpop.f32.mrf.mxu0
  %v4287 = vadd.f32 %v4273, %v4286
  %v4288 = vpop.f32.mrf.mxu0
  %v4289 = vadd.f32 %v4275, %v4288
  %4290 = vdwg.mxu0
  %4291 = vmatpush.bf16.msra.mxu0 %v3841
  %4292 = vmatpush.bf16.msra.mxu0 %v3837
  %4293 = vmatpush.bf16.msra.mxu0 %v3833
  %4294 = vmatpush.bf16.msra.mxu0 %v3829
  %4295 = vmatpush.bf16.msra.mxu0 %v3825
  %4296 = vmatpush.bf16.msra.mxu0 %v3821
  %4297 = vmatpush.bf16.msra.mxu0 %v3817
  %4298 = vmatpush.bf16.msra.mxu0 %v3813
  %4299 = vmatmul.bf16.gmra.mxu0 %v2911
  %v4300 = vpop.f32.mrf.mxu0
  %v4301 = vadd.f32 %v4287, %v4300
  %v4302 = vpop.f32.mrf.mxu0
  %v4303 = vadd.f32 %v4289, %v4302
  %4304 = vdwg.mxu0
  %4305 = vmatpush.bf16.msra.mxu0 %v3873
  %4306 = vmatpush.bf16.msra.mxu0 %v3869
  %4307 = vmatpush.bf16.msra.mxu0 %v3865
  %4308 = vmatpush.bf16.msra.mxu0 %v3861
  %4309 = vmatpush.bf16.msra.mxu0 %v3857
  %4310 = vmatpush.bf16.msra.mxu0 %v3853
  %4311 = vmatpush.bf16.msra.mxu0 %v3849
  %4312 = vmatpush.bf16.msra.mxu0 %v3845
  %4313 = vmatmul.bf16.gmra.mxu0 %v2912
  %v4314 = vpop.f32.mrf.mxu0
  %v4315 = vadd.f32 %v4301, %v4314
  %v4316 = vpop.f32.mrf.mxu0
  %v4317 = vadd.f32 %v4303, %v4316
  %4318 = vdwg.mxu0
  %4319 = vmatpush.bf16.msra.mxu0 %v3714
  %4320 = vmatpush.bf16.msra.mxu0 %v3710
  %4321 = vmatpush.bf16.msra.mxu0 %v3706
  %4322 = vmatpush.bf16.msra.mxu0 %v3702
  %4323 = vmatpush.bf16.msra.mxu0 %v3698
  %4324 = vmatpush.bf16.msra.mxu0 %v3694
  %4325 = vmatpush.bf16.msra.mxu0 %v3690
  %4326 = vmatpush.bf16.msra.mxu0 %v3686
  %4327 = vmatmul.bf16.gmra.mxu0 %v2899
  %v4328 = vpop.f32.mrf.mxu0
  %v4329 = vadd.f32 0.0, %v4328
  %v4330 = vpop.f32.mrf.mxu0
  %v4331 = vadd.f32 0.0, %v4330
  %4332 = vdwg.mxu0
  %4333 = vmatpush.bf16.msra.mxu0 %v3746
  %4334 = vmatpush.bf16.msra.mxu0 %v3742
  %4335 = vmatpush.bf16.msra.mxu0 %v3738
  %4336 = vmatpush.bf16.msra.mxu0 %v3734
  %4337 = vmatpush.bf16.msra.mxu0 %v3730
  %4338 = vmatpush.bf16.msra.mxu0 %v3726
  %4339 = vmatpush.bf16.msra.mxu0 %v3722
  %4340 = vmatpush.bf16.msra.mxu0 %v3718
  %4341 = vmatmul.bf16.gmra.mxu0 %v2900
  %v4342 = vpop.f32.mrf.mxu0
  %v4343 = vadd.f32 %v4329, %v4342
  %v4344 = vpop.f32.mrf.mxu0
  %v4345 = vadd.f32 %v4331, %v4344
  %4346 = vdwg.mxu0
  %4347 = vmatpush.bf16.msra.mxu0 %v3778
  %4348 = vmatpush.bf16.msra.mxu0 %v3774
  %4349 = vmatpush.bf16.msra.mxu0 %v3770
  %4350 = vmatpush.bf16.msra.mxu0 %v3766
  %4351 = vmatpush.bf16.msra.mxu0 %v3762
  %4352 = vmatpush.bf16.msra.mxu0 %v3758
  %4353 = vmatpush.bf16.msra.mxu0 %v3754
  %4354 = vmatpush.bf16.msra.mxu0 %v3750
  %4355 = vmatmul.bf16.gmra.mxu0 %v2845
  %v4356 = vpop.f32.mrf.mxu0
  %v4357 = vadd.f32 %v4343, %v4356
  %v4358 = vpop.f32.mrf.mxu0
  %v4359 = vadd.f32 %v4345, %v4358
  %4360 = vdwg.mxu0
  %4361 = vmatpush.bf16.msra.mxu0 %v3810
  %4362 = vmatpush.bf16.msra.mxu0 %v3806
  %4363 = vmatpush.bf16.msra.mxu0 %v3802
  %4364 = vmatpush.bf16.msra.mxu0 %v3798
  %4365 = vmatpush.bf16.msra.mxu0 %v3794
  %4366 = vmatpush.bf16.msra.mxu0 %v3790
  %4367 = vmatpush.bf16.msra.mxu0 %v3786
  %4368 = vmatpush.bf16.msra.mxu0 %v3782
  %4369 = vmatmul.bf16.gmra.mxu0 %v2846
  %v4370 = vpop.f32.mrf.mxu0
  %v4371 = vadd.f32 %v4357, %v4370
  %v4372 = vpop.f32.mrf.mxu0
  %v4373 = vadd.f32 %v4359, %v4372
  %4374 = vdwg.mxu0
  %4375 = vmatpush.bf16.msra.mxu0 %v3842
  %4376 = vmatpush.bf16.msra.mxu0 %v3838
  %4377 = vmatpush.bf16.msra.mxu0 %v3834
  %4378 = vmatpush.bf16.msra.mxu0 %v3830
  %4379 = vmatpush.bf16.msra.mxu0 %v3826
  %4380 = vmatpush.bf16.msra.mxu0 %v3822
  %4381 = vmatpush.bf16.msra.mxu0 %v3818
  %4382 = vmatpush.bf16.msra.mxu0 %v3814
  %4383 = vmatmul.bf16.gmra.mxu0 %v2911
  %v4384 = vpop.f32.mrf.mxu0
  %v4385 = vadd.f32 %v4371, %v4384
  %v4386 = vpop.f32.mrf.mxu0
  %v4387 = vadd.f32 %v4373, %v4386
  %4388 = vdwg.mxu0
  %4389 = vmatpush.bf16.msra.mxu0 %v3874
  %4390 = vmatpush.bf16.msra.mxu0 %v3870
  %4391 = vmatpush.bf16.msra.mxu0 %v3866
  %4392 = vmatpush.bf16.msra.mxu0 %v3862
  %4393 = vmatpush.bf16.msra.mxu0 %v3858
  %4394 = vmatpush.bf16.msra.mxu0 %v3854
  %4395 = vmatpush.bf16.msra.mxu0 %v3850
  %4396 = vmatpush.bf16.msra.mxu0 %v3846
  %4397 = vmatmul.bf16.gmra.mxu0 %v2912
  %v4398 = vpop.f32.mrf.mxu0
  %v4399 = vadd.f32 %v4385, %v4398
  %v4400 = vpop.f32.mrf.mxu0
  %v4401 = vadd.f32 %v4387, %v4400
  %4402 = vdwg.mxu0
  %v4403 = vld [vmem:[%s13] ss:$2 sm:$0xf]
  %v4405 = vperm.slane %v4403, 0
  %v4406 = vperm.slane %v4403, 1
  %v4407 = vperm.slane %v4403, 2
  %v4408 = vperm.slane %v4403, 3
  %v4413 = vmul.f32 %v4147, %v4405
  %v4414 = vmul.f32 %v4231, %v4406
  %v4415 = vmul.f32 %v4315, %v4407
  %v4416 = vmul.f32 %v4399, %v4408
  %v4417 = vmul.f32 %v4149, %v4405
  %v4418 = vmul.f32 %v4233, %v4406
  %v4419 = vmul.f32 %v4317, %v4407
  %v4420 = vmul.f32 %v4401, %v4408
  %s4421 = scalar_lea.vmem %s13, 1
  %v4422 = vld [vmem:[%s4421] ss:$2 sm:$0xf]
  %v4424 = vperm.slane %v4422, 0
  %v4425 = vperm.slane %v4422, 1
  %v4426 = vperm.slane %v4422, 2
  %v4427 = vperm.slane %v4422, 3
  %v4432 = vadd.f32 %v4413, %v4424
  %v4433 = vadd.f32 %v4414, %v4425
  %v4434 = vadd.f32 %v4415, %v4426
  %v4435 = vadd.f32 %v4416, %v4427
  %v4436 = vadd.f32 %v4417, %v4424
  %v4437 = vadd.f32 %v4418, %v4425
  %v4438 = vadd.f32 %v4419, %v4426
  %v4439 = vadd.f32 %v4420, %v4427
  %v4440 = vpack.c.bf16 %v4433, %v4432
  %v4441 = vpack.c.bf16 %v4435, %v4434
  %v4442 = vpack.c.bf16 %v4437, %v4436
  %v4443 = vpack.c.bf16 %v4439, %v4438
  %v4448 = vunpack.c.l.b16 %v4440
  %v4449 = vunpack.c.h.b16 %v4440
  %v4450 = vunpack.c.l.b16 %v4441
  %v4451 = vunpack.c.h.b16 %v4441
  %v4452 = vunpack.c.l.b16 %v4442
  %v4453 = vunpack.c.h.b16 %v4442
  %v4454 = vunpack.c.l.b16 %v4443
  %v4455 = vunpack.c.h.b16 %v4443
  %v4456 = vpack.c.b16 %v4452, %v4448
  %v4457 = vpack.c.b16 %v4453, %v4449
  %v4458 = vpack.c.b16 %v4454, %v4450
  %v4459 = vpack.c.b16 %v4455, %v4451
  %v4461 = vshrl.u32 %v4456, 16
  %v4463 = vrot.slane %v4461, 7
  %v4464 = vshll.u32 %v4456, 16
  %v4466 = vor.u32 %v4463, %v4464
  %v4468 = vshrl.u32 %v4457, 16
  %v4470 = vrot.slane %v4468, 7
  %v4471 = vshll.u32 %v4457, 16
  %v4473 = vor.u32 %v4470, %v4471
  %v4475 = vshrl.u32 %v4458, 16
  %v4477 = vrot.slane %v4475, 7
  %v4478 = vshll.u32 %v4458, 16
  %v4480 = vor.u32 %v4477, %v4478
  %v4482 = vshrl.u32 %v4459, 16
  %v4484 = vrot.slane %v4482, 7
  %v4485 = vshll.u32 %v4459, 16
  %v4487 = vor.u32 %v4484, %v4485
  %v4492 = vsel %vm128, 0, %v4466
  %v4493 = vsel %vm128, 0, %v4473
  %v4494 = vsel %vm128, 0, %v4480
  %v4495 = vsel %vm128, 0, %v4487
  %v4496 = vunpack.c.l.bf16 %v4492
  %v4497 = vunpack.c.l.bf16 %v4493
  %v4498 = vunpack.c.l.bf16 %v4494
  %v4499 = vunpack.c.l.bf16 %v4495
  %v4500 = vunpack.c.h.bf16 %v4492
  %v4501 = vunpack.c.h.bf16 %v4493
  %v4502 = vunpack.c.h.bf16 %v4494
  %v4503 = vunpack.c.h.bf16 %v4495
  %v4504 = vmul.f32 %v4496, %v132
  %v4505 = vmul.f32 %v4497, %v132
  %v4506 = vmul.f32 %v4498, %v132
  %v4507 = vmul.f32 %v4499, %v132
  %v4508 = vmul.f32 %v4500, %v133
  %v4509 = vmul.f32 %v4501, %v133
  %v4510 = vmul.f32 %v4502, %v133
  %v4511 = vmul.f32 %v4503, %v133
  %v4512 = vpack.c.bf16 %v4505, %v4504
  %v4513 = vpack.c.bf16 %v4507, %v4506
  %v4514 = vpack.c.bf16 %v4509, %v4508
  %v4515 = vpack.c.bf16 %v4511, %v4510
  %v4516 = vrot.slane %v4464, 1
  %v4517 = vor.u32 %v4461, %v4516
  %v4518 = vrot.slane %v4471, 1
  %v4519 = vor.u32 %v4468, %v4518
  %v4520 = vrot.slane %v4478, 1
  %v4521 = vor.u32 %v4475, %v4520
  %v4522 = vrot.slane %v4485, 1
  %v4523 = vor.u32 %v4482, %v4522
  %v4528 = vsel %vm143, %v4517, 0
  %v4529 = vsel %vm143, %v4519, 0
  %v4530 = vsel %vm143, %v4521, 0
  %v4531 = vsel %vm143, %v4523, 0
  %v4532 = vunpack.c.l.bf16 %v4528
  %v4533 = vunpack.c.l.bf16 %v4529
  %v4534 = vunpack.c.l.bf16 %v4530
  %v4535 = vunpack.c.l.bf16 %v4531
  %v4536 = vunpack.c.h.bf16 %v4528
  %v4537 = vunpack.c.h.bf16 %v4529
  %v4538 = vunpack.c.h.bf16 %v4530
  %v4539 = vunpack.c.h.bf16 %v4531
  %v4540 = vmul.f32 %v4532, %v147
  %v4541 = vmul.f32 %v4533, %v147
  %v4542 = vmul.f32 %v4534, %v147
  %v4543 = vmul.f32 %v4535, %v147
  %v4544 = vmul.f32 %v4536, %v148
  %v4545 = vmul.f32 %v4537, %v148
  %v4546 = vmul.f32 %v4538, %v148
  %v4547 = vmul.f32 %v4539, %v148
  %v4548 = vpack.c.bf16 %v4541, %v4540
  %v4549 = vpack.c.bf16 %v4543, %v4542
  %v4550 = vpack.c.bf16 %v4545, %v4544
  %v4551 = vpack.c.bf16 %v4547, %v4546
  %v4556 = vunpack.c.l.b16 %v4512
  %v4557 = vunpack.c.h.b16 %v4512
  %v4558 = vunpack.c.l.b16 %v4513
  %v4559 = vunpack.c.h.b16 %v4513
  %v4560 = vunpack.c.l.b16 %v4514
  %v4561 = vunpack.c.h.b16 %v4514
  %v4562 = vunpack.c.l.b16 %v4515
  %v4563 = vunpack.c.h.b16 %v4515
  %v4564 = vpack.c.b16 %v4560, %v4556
  %v4565 = vpack.c.b16 %v4561, %v4557
  %v4566 = vpack.c.b16 %v4562, %v4558
  %v4567 = vpack.c.b16 %v4563, %v4559
  %v4580 = vunpack.c.l.b16 %v4548
  %v4581 = vunpack.c.h.b16 %v4548
  %v4582 = vunpack.c.l.b16 %v4549
  %v4583 = vunpack.c.h.b16 %v4549
  %v4584 = vunpack.c.l.b16 %v4550
  %v4585 = vunpack.c.h.b16 %v4550
  %v4586 = vunpack.c.l.b16 %v4551
  %v4587 = vunpack.c.h.b16 %v4551
  %v4588 = vpack.c.b16 %v4584, %v4580
  %v4589 = vpack.c.b16 %v4585, %v4581
  %v4590 = vpack.c.b16 %v4586, %v4582
  %v4591 = vpack.c.b16 %v4587, %v4583
  %v4596 = vld [vmem:[%s14] sm:$0xff]
  %v4597 = vld [vmem:[%s14 + $0x8] sm:$0xff]
  %v4598 = vld [vmem:[%s14 + $0x10] sm:$0xff]
  %v4599 = vld [vmem:[%s14 + $0x18] sm:$0xff]
  %v4600 = vld [vmem:[%s14 + $0x20] sm:$0xff]
  %v4601 = vld [vmem:[%s14 + $0x28] sm:$0xff]
  %v4602 = vld [vmem:[%s14 + $0x30] sm:$0xff]
  %v4603 = vld [vmem:[%s14 + $0x38] sm:$0xff]
  %v4604 = vld [vmem:[%s14 + $0x40] sm:$0xff]
  %v4605 = vld [vmem:[%s14 + $0x48] sm:$0xff]
  %v4606 = vld [vmem:[%s14 + $0x50] sm:$0xff]
  %v4607 = vld [vmem:[%s14 + $0x58] sm:$0xff]
  %v4608 = vld [vmem:[%s14 + $0x60] sm:$0xff]
  %v4609 = vld [vmem:[%s14 + $0x68] sm:$0xff]
  %v4610 = vld [vmem:[%s14 + $0x70] sm:$0xff]
  %v4611 = vld [vmem:[%s14 + $0x78] sm:$0xff]
  %v4612 = vld [vmem:[%s14 + $0x80] sm:$0xff]
  %v4613 = vld [vmem:[%s14 + $0x88] sm:$0xff]
  %v4614 = vld [vmem:[%s14 + $0x90] sm:$0xff]
  %v4615 = vld [vmem:[%s14 + $0x98] sm:$0xff]
  %v4616 = vld [vmem:[%s14 + $0xa0] sm:$0xff]
  %v4617 = vld [vmem:[%s14 + $0xa8] sm:$0xff]
  %v4618 = vld [vmem:[%s14 + $0xb0] sm:$0xff]
  %v4619 = vld [vmem:[%s14 + $0xb8] sm:$0xff]
  %v4620 = vld [vmem:[%s14 + $0xc0] sm:$0xff]
  %v4621 = vld [vmem:[%s14 + $0xc8] sm:$0xff]
  %v4622 = vld [vmem:[%s14 + $0xd0] sm:$0xff]
  %v4623 = vld [vmem:[%s14 + $0xd8] sm:$0xff]
  %v4624 = vld [vmem:[%s14 + $0xe0] sm:$0xff]
  %v4625 = vld [vmem:[%s14 + $0xe8] sm:$0xff]
  %v4626 = vld [vmem:[%s14 + $0xf0] sm:$0xff]
  %v4627 = vld [vmem:[%s14 + $0xf8] sm:$0xff]
  %v4628 = vld [vmem:[%s14 + $0x100] sm:$0xff]
  %v4629 = vld [vmem:[%s14 + $0x108] sm:$0xff]
  %v4630 = vld [vmem:[%s14 + $0x110] sm:$0xff]
  %v4631 = vld [vmem:[%s14 + $0x118] sm:$0xff]
  %v4632 = vld [vmem:[%s14 + $0x120] sm:$0xff]
  %v4633 = vld [vmem:[%s14 + $0x128] sm:$0xff]
  %v4634 = vld [vmem:[%s14 + $0x130] sm:$0xff]
  %v4635 = vld [vmem:[%s14 + $0x138] sm:$0xff]
  %v4636 = vld [vmem:[%s14 + $0x140] sm:$0xff]
  %v4637 = vld [vmem:[%s14 + $0x148] sm:$0xff]
  %v4638 = vld [vmem:[%s14 + $0x150] sm:$0xff]
  %v4639 = vld [vmem:[%s14 + $0x158] sm:$0xff]
  %v4640 = vld [vmem:[%s14 + $0x160] sm:$0xff]
  %v4641 = vld [vmem:[%s14 + $0x168] sm:$0xff]
  %v4642 = vld [vmem:[%s14 + $0x170] sm:$0xff]
  %v4643 = vld [vmem:[%s14 + $0x178] sm:$0xff]
  %v4644 = vld [vmem:[%s14 + $0x180] sm:$0xff]
  %v4645 = vld [vmem:[%s14 + $0x188] sm:$0xff]
  %v4646 = vld [vmem:[%s14 + $0x190] sm:$0xff]
  %v4647 = vld [vmem:[%s14 + $0x198] sm:$0xff]
  %v4648 = vld [vmem:[%s14 + $0x1a0] sm:$0xff]
  %v4649 = vld [vmem:[%s14 + $0x1a8] sm:$0xff]
  %v4650 = vld [vmem:[%s14 + $0x1b0] sm:$0xff]
  %v4651 = vld [vmem:[%s14 + $0x1b8] sm:$0xff]
  %v4652 = vld [vmem:[%s14 + $0x1c0] sm:$0xff]
  %v4653 = vld [vmem:[%s14 + $0x1c8] sm:$0xff]
  %v4654 = vld [vmem:[%s14 + $0x1d0] sm:$0xff]
  %v4655 = vld [vmem:[%s14 + $0x1d8] sm:$0xff]
  %v4656 = vld [vmem:[%s14 + $0x1e0] sm:$0xff]
  %v4657 = vld [vmem:[%s14 + $0x1e8] sm:$0xff]
  %v4658 = vld [vmem:[%s14 + $0x1f0] sm:$0xff]
  %v4659 = vld [vmem:[%s14 + $0x1f8] sm:$0xff]
  %v4660 = vld [vmem:[%s14 + $0x200] sm:$0xff]
  %v4661 = vld [vmem:[%s14 + $0x208] sm:$0xff]
  %v4662 = vld [vmem:[%s14 + $0x210] sm:$0xff]
  %v4663 = vld [vmem:[%s14 + $0x218] sm:$0xff]
  %v4664 = vld [vmem:[%s14 + $0x220] sm:$0xff]
  %v4665 = vld [vmem:[%s14 + $0x228] sm:$0xff]
  %v4666 = vld [vmem:[%s14 + $0x230] sm:$0xff]
  %v4667 = vld [vmem:[%s14 + $0x238] sm:$0xff]
  %v4668 = vld [vmem:[%s14 + $0x240] sm:$0xff]
  %v4669 = vld [vmem:[%s14 + $0x248] sm:$0xff]
  %v4670 = vld [vmem:[%s14 + $0x250] sm:$0xff]
  %v4671 = vld [vmem:[%s14 + $0x258] sm:$0xff]
  %v4672 = vld [vmem:[%s14 + $0x260] sm:$0xff]
  %v4673 = vld [vmem:[%s14 + $0x268] sm:$0xff]
  %v4674 = vld [vmem:[%s14 + $0x270] sm:$0xff]
  %v4675 = vld [vmem:[%s14 + $0x278] sm:$0xff]
  %v4676 = vld [vmem:[%s14 + $0x280] sm:$0xff]
  %v4677 = vld [vmem:[%s14 + $0x288] sm:$0xff]
  %v4678 = vld [vmem:[%s14 + $0x290] sm:$0xff]
  %v4679 = vld [vmem:[%s14 + $0x298] sm:$0xff]
  %v4680 = vld [vmem:[%s14 + $0x2a0] sm:$0xff]
  %v4681 = vld [vmem:[%s14 + $0x2a8] sm:$0xff]
  %v4682 = vld [vmem:[%s14 + $0x2b0] sm:$0xff]
  %v4683 = vld [vmem:[%s14 + $0x2b8] sm:$0xff]
  %v4684 = vld [vmem:[%s14 + $0x2c0] sm:$0xff]
  %v4685 = vld [vmem:[%s14 + $0x2c8] sm:$0xff]
  %v4686 = vld [vmem:[%s14 + $0x2d0] sm:$0xff]
  %v4687 = vld [vmem:[%s14 + $0x2d8] sm:$0xff]
  %v4688 = vld [vmem:[%s14 + $0x2e0] sm:$0xff]
  %v4689 = vld [vmem:[%s14 + $0x2e8] sm:$0xff]
  %v4690 = vld [vmem:[%s14 + $0x2f0] sm:$0xff]
  %v4691 = vld [vmem:[%s14 + $0x2f8] sm:$0xff]
  %v4692 = vld [vmem:[%s14 + $0x300] sm:$0xff]
  %v4693 = vld [vmem:[%s14 + $0x308] sm:$0xff]
  %v4694 = vld [vmem:[%s14 + $0x310] sm:$0xff]
  %v4695 = vld [vmem:[%s14 + $0x318] sm:$0xff]
  %v4696 = vld [vmem:[%s14 + $0x320] sm:$0xff]
  %v4697 = vld [vmem:[%s14 + $0x328] sm:$0xff]
  %v4698 = vld [vmem:[%s14 + $0x330] sm:$0xff]
  %v4699 = vld [vmem:[%s14 + $0x338] sm:$0xff]
  %v4700 = vld [vmem:[%s14 + $0x340] sm:$0xff]
  %v4701 = vld [vmem:[%s14 + $0x348] sm:$0xff]
  %v4702 = vld [vmem:[%s14 + $0x350] sm:$0xff]
  %v4703 = vld [vmem:[%s14 + $0x358] sm:$0xff]
  %v4704 = vld [vmem:[%s14 + $0x360] sm:$0xff]
  %v4705 = vld [vmem:[%s14 + $0x368] sm:$0xff]
  %v4706 = vld [vmem:[%s14 + $0x370] sm:$0xff]
  %v4707 = vld [vmem:[%s14 + $0x378] sm:$0xff]
  %v4708 = vld [vmem:[%s14 + $0x380] sm:$0xff]
  %v4709 = vld [vmem:[%s14 + $0x388] sm:$0xff]
  %v4710 = vld [vmem:[%s14 + $0x390] sm:$0xff]
  %v4711 = vld [vmem:[%s14 + $0x398] sm:$0xff]
  %v4712 = vld [vmem:[%s14 + $0x3a0] sm:$0xff]
  %v4713 = vld [vmem:[%s14 + $0x3a8] sm:$0xff]
  %v4714 = vld [vmem:[%s14 + $0x3b0] sm:$0xff]
  %v4715 = vld [vmem:[%s14 + $0x3b8] sm:$0xff]
  %v4716 = vld [vmem:[%s14 + $0x3c0] sm:$0xff]
  %v4717 = vld [vmem:[%s14 + $0x3c8] sm:$0xff]
  %v4718 = vld [vmem:[%s14 + $0x3d0] sm:$0xff]
  %v4719 = vld [vmem:[%s14 + $0x3d8] sm:$0xff]
  %v4720 = vld [vmem:[%s14 + $0x3e0] sm:$0xff]
  %v4721 = vld [vmem:[%s14 + $0x3e8] sm:$0xff]
  %v4722 = vld [vmem:[%s14 + $0x3f0] sm:$0xff]
  %v4723 = vld [vmem:[%s14 + $0x3f8] sm:$0xff]
  %v4724 = vld [vmem:[%s14 + $0x400] sm:$0xff]
  %v4725 = vld [vmem:[%s14 + $0x408] sm:$0xff]
  %v4726 = vld [vmem:[%s14 + $0x410] sm:$0xff]
  %v4727 = vld [vmem:[%s14 + $0x418] sm:$0xff]
  %v4728 = vld [vmem:[%s14 + $0x420] sm:$0xff]
  %v4729 = vld [vmem:[%s14 + $0x428] sm:$0xff]
  %v4730 = vld [vmem:[%s14 + $0x430] sm:$0xff]
  %v4731 = vld [vmem:[%s14 + $0x438] sm:$0xff]
  %v4732 = vld [vmem:[%s14 + $0x440] sm:$0xff]
  %v4733 = vld [vmem:[%s14 + $0x448] sm:$0xff]
  %v4734 = vld [vmem:[%s14 + $0x450] sm:$0xff]
  %v4735 = vld [vmem:[%s14 + $0x458] sm:$0xff]
  %v4736 = vld [vmem:[%s14 + $0x460] sm:$0xff]
  %v4737 = vld [vmem:[%s14 + $0x468] sm:$0xff]
  %v4738 = vld [vmem:[%s14 + $0x470] sm:$0xff]
  %v4739 = vld [vmem:[%s14 + $0x478] sm:$0xff]
  %v4740 = vld [vmem:[%s14 + $0x480] sm:$0xff]
  %v4741 = vld [vmem:[%s14 + $0x488] sm:$0xff]
  %v4742 = vld [vmem:[%s14 + $0x490] sm:$0xff]
  %v4743 = vld [vmem:[%s14 + $0x498] sm:$0xff]
  %v4744 = vld [vmem:[%s14 + $0x4a0] sm:$0xff]
  %v4745 = vld [vmem:[%s14 + $0x4a8] sm:$0xff]
  %v4746 = vld [vmem:[%s14 + $0x4b0] sm:$0xff]
  %v4747 = vld [vmem:[%s14 + $0x4b8] sm:$0xff]
  %v4748 = vld [vmem:[%s14 + $0x4c0] sm:$0xff]
  %v4749 = vld [vmem:[%s14 + $0x4c8] sm:$0xff]
  %v4750 = vld [vmem:[%s14 + $0x4d0] sm:$0xff]
  %v4751 = vld [vmem:[%s14 + $0x4d8] sm:$0xff]
  %v4752 = vld [vmem:[%s14 + $0x4e0] sm:$0xff]
  %v4753 = vld [vmem:[%s14 + $0x4e8] sm:$0xff]
  %v4754 = vld [vmem:[%s14 + $0x4f0] sm:$0xff]
  %v4755 = vld [vmem:[%s14 + $0x4f8] sm:$0xff]
  %v4756 = vld [vmem:[%s14 + $0x500] sm:$0xff]
  %v4757 = vld [vmem:[%s14 + $0x508] sm:$0xff]
  %v4758 = vld [vmem:[%s14 + $0x510] sm:$0xff]
  %v4759 = vld [vmem:[%s14 + $0x518] sm:$0xff]
  %v4760 = vld [vmem:[%s14 + $0x520] sm:$0xff]
  %v4761 = vld [vmem:[%s14 + $0x528] sm:$0xff]
  %v4762 = vld [vmem:[%s14 + $0x530] sm:$0xff]
  %v4763 = vld [vmem:[%s14 + $0x538] sm:$0xff]
  %v4764 = vld [vmem:[%s14 + $0x540] sm:$0xff]
  %v4765 = vld [vmem:[%s14 + $0x548] sm:$0xff]
  %v4766 = vld [vmem:[%s14 + $0x550] sm:$0xff]
  %v4767 = vld [vmem:[%s14 + $0x558] sm:$0xff]
  %v4768 = vld [vmem:[%s14 + $0x560] sm:$0xff]
  %v4769 = vld [vmem:[%s14 + $0x568] sm:$0xff]
  %v4770 = vld [vmem:[%s14 + $0x570] sm:$0xff]
  %v4771 = vld [vmem:[%s14 + $0x578] sm:$0xff]
  %v4772 = vld [vmem:[%s14 + $0x580] sm:$0xff]
  %v4773 = vld [vmem:[%s14 + $0x588] sm:$0xff]
  %v4774 = vld [vmem:[%s14 + $0x590] sm:$0xff]
  %v4775 = vld [vmem:[%s14 + $0x598] sm:$0xff]
  %v4776 = vld [vmem:[%s14 + $0x5a0] sm:$0xff]
  %v4777 = vld [vmem:[%s14 + $0x5a8] sm:$0xff]
  %v4778 = vld [vmem:[%s14 + $0x5b0] sm:$0xff]
  %v4779 = vld [vmem:[%s14 + $0x5b8] sm:$0xff]
  %v4780 = vld [vmem:[%s14 + $0x5c0] sm:$0xff]
  %v4781 = vld [vmem:[%s14 + $0x5c8] sm:$0xff]
  %v4782 = vld [vmem:[%s14 + $0x5d0] sm:$0xff]
  %v4783 = vld [vmem:[%s14 + $0x5d8] sm:$0xff]
  %v4784 = vld [vmem:[%s14 + $0x5e0] sm:$0xff]
  %v4785 = vld [vmem:[%s14 + $0x5e8] sm:$0xff]
  %v4786 = vld [vmem:[%s14 + $0x5f0] sm:$0xff]
  %v4787 = vld [vmem:[%s14 + $0x5f8] sm:$0xff]
  %v4788 = vld [vmem:[%s14 + $0x600] sm:$0xff]
  %v4789 = vld [vmem:[%s14 + $0x608] sm:$0xff]
  %v4790 = vld [vmem:[%s14 + $0x610] sm:$0xff]
  %v4791 = vld [vmem:[%s14 + $0x618] sm:$0xff]
  %v4792 = vld [vmem:[%s14 + $0x620] sm:$0xff]
  %v4793 = vld [vmem:[%s14 + $0x628] sm:$0xff]
  %v4794 = vld [vmem:[%s14 + $0x630] sm:$0xff]
  %v4795 = vld [vmem:[%s14 + $0x638] sm:$0xff]
  %v4796 = vld [vmem:[%s14 + $0x640] sm:$0xff]
  %v4797 = vld [vmem:[%s14 + $0x648] sm:$0xff]
  %v4798 = vld [vmem:[%s14 + $0x650] sm:$0xff]
  %v4799 = vld [vmem:[%s14 + $0x658] sm:$0xff]
  %v4800 = vld [vmem:[%s14 + $0x660] sm:$0xff]
  %v4801 = vld [vmem:[%s14 + $0x668] sm:$0xff]
  %v4802 = vld [vmem:[%s14 + $0x670] sm:$0xff]
  %v4803 = vld [vmem:[%s14 + $0x678] sm:$0xff]
  %v4804 = vld [vmem:[%s14 + $0x680] sm:$0xff]
  %v4805 = vld [vmem:[%s14 + $0x688] sm:$0xff]
  %v4806 = vld [vmem:[%s14 + $0x690] sm:$0xff]
  %v4807 = vld [vmem:[%s14 + $0x698] sm:$0xff]
  %v4808 = vld [vmem:[%s14 + $0x6a0] sm:$0xff]
  %v4809 = vld [vmem:[%s14 + $0x6a8] sm:$0xff]
  %v4810 = vld [vmem:[%s14 + $0x6b0] sm:$0xff]
  %v4811 = vld [vmem:[%s14 + $0x6b8] sm:$0xff]
  %v4812 = vld [vmem:[%s14 + $0x6c0] sm:$0xff]
  %v4813 = vld [vmem:[%s14 + $0x6c8] sm:$0xff]
  %v4814 = vld [vmem:[%s14 + $0x6d0] sm:$0xff]
  %v4815 = vld [vmem:[%s14 + $0x6d8] sm:$0xff]
  %v4816 = vld [vmem:[%s14 + $0x6e0] sm:$0xff]
  %v4817 = vld [vmem:[%s14 + $0x6e8] sm:$0xff]
  %v4818 = vld [vmem:[%s14 + $0x6f0] sm:$0xff]
  %v4819 = vld [vmem:[%s14 + $0x6f8] sm:$0xff]
  %v4820 = vld [vmem:[%s14 + $0x700] sm:$0xff]
  %v4821 = vld [vmem:[%s14 + $0x708] sm:$0xff]
  %v4822 = vld [vmem:[%s14 + $0x710] sm:$0xff]
  %v4823 = vld [vmem:[%s14 + $0x718] sm:$0xff]
  %v4824 = vld [vmem:[%s14 + $0x720] sm:$0xff]
  %v4825 = vld [vmem:[%s14 + $0x728] sm:$0xff]
  %v4826 = vld [vmem:[%s14 + $0x730] sm:$0xff]
  %v4827 = vld [vmem:[%s14 + $0x738] sm:$0xff]
  %v4828 = vld [vmem:[%s14 + $0x740] sm:$0xff]
  %v4829 = vld [vmem:[%s14 + $0x748] sm:$0xff]
  %v4830 = vld [vmem:[%s14 + $0x750] sm:$0xff]
  %v4831 = vld [vmem:[%s14 + $0x758] sm:$0xff]
  %v4832 = vld [vmem:[%s14 + $0x760] sm:$0xff]
  %v4833 = vld [vmem:[%s14 + $0x768] sm:$0xff]
  %v4834 = vld [vmem:[%s14 + $0x770] sm:$0xff]
  %v4835 = vld [vmem:[%s14 + $0x778] sm:$0xff]
  %v4836 = vld [vmem:[%s14 + $0x780] sm:$0xff]
  %v4837 = vld [vmem:[%s14 + $0x788] sm:$0xff]
  %v4838 = vld [vmem:[%s14 + $0x790] sm:$0xff]
  %v4839 = vld [vmem:[%s14 + $0x798] sm:$0xff]
  %v4840 = vld [vmem:[%s14 + $0x7a0] sm:$0xff]
  %v4841 = vld [vmem:[%s14 + $0x7a8] sm:$0xff]
  %v4842 = vld [vmem:[%s14 + $0x7b0] sm:$0xff]
  %v4843 = vld [vmem:[%s14 + $0x7b8] sm:$0xff]
  %v4844 = vld [vmem:[%s14 + $0x7c0] sm:$0xff]
  %v4845 = vld [vmem:[%s14 + $0x7c8] sm:$0xff]
  %v4846 = vld [vmem:[%s14 + $0x7d0] sm:$0xff]
  %v4847 = vld [vmem:[%s14 + $0x7d8] sm:$0xff]
  %v4848 = vld [vmem:[%s14 + $0x7e0] sm:$0xff]
  %v4849 = vld [vmem:[%s14 + $0x7e8] sm:$0xff]
  %v4850 = vld [vmem:[%s14 + $0x7f0] sm:$0xff]
  %v4851 = vld [vmem:[%s14 + $0x7f8] sm:$0xff]
  %v4852 = vld [vmem:[%s14 + $0x800] sm:$0xff]
  %v4853 = vld [vmem:[%s14 + $0x808] sm:$0xff]
  %v4854 = vld [vmem:[%s14 + $0x810] sm:$0xff]
  %v4855 = vld [vmem:[%s14 + $0x818] sm:$0xff]
  %v4856 = vld [vmem:[%s14 + $0x820] sm:$0xff]
  %v4857 = vld [vmem:[%s14 + $0x828] sm:$0xff]
  %v4858 = vld [vmem:[%s14 + $0x830] sm:$0xff]
  %v4859 = vld [vmem:[%s14 + $0x838] sm:$0xff]
  %v4860 = vld [vmem:[%s14 + $0x840] sm:$0xff]
  %v4861 = vld [vmem:[%s14 + $0x848] sm:$0xff]
  %v4862 = vld [vmem:[%s14 + $0x850] sm:$0xff]
  %v4863 = vld [vmem:[%s14 + $0x858] sm:$0xff]
  %v4864 = vld [vmem:[%s14 + $0x860] sm:$0xff]
  %v4865 = vld [vmem:[%s14 + $0x868] sm:$0xff]
  %v4866 = vld [vmem:[%s14 + $0x870] sm:$0xff]
  %v4867 = vld [vmem:[%s14 + $0x878] sm:$0xff]
  %v4868 = vld [vmem:[%s14 + $0x880] sm:$0xff]
  %v4869 = vld [vmem:[%s14 + $0x888] sm:$0xff]
  %v4870 = vld [vmem:[%s14 + $0x890] sm:$0xff]
  %v4871 = vld [vmem:[%s14 + $0x898] sm:$0xff]
  %v4872 = vld [vmem:[%s14 + $0x8a0] sm:$0xff]
  %v4873 = vld [vmem:[%s14 + $0x8a8] sm:$0xff]
  %v4874 = vld [vmem:[%s14 + $0x8b0] sm:$0xff]
  %v4875 = vld [vmem:[%s14 + $0x8b8] sm:$0xff]
  %v4876 = vld [vmem:[%s14 + $0x8c0] sm:$0xff]
  %v4877 = vld [vmem:[%s14 + $0x8c8] sm:$0xff]
  %v4878 = vld [vmem:[%s14 + $0x8d0] sm:$0xff]
  %v4879 = vld [vmem:[%s14 + $0x8d8] sm:$0xff]
  %v4880 = vld [vmem:[%s14 + $0x8e0] sm:$0xff]
  %v4881 = vld [vmem:[%s14 + $0x8e8] sm:$0xff]
  %v4882 = vld [vmem:[%s14 + $0x8f0] sm:$0xff]
  %v4883 = vld [vmem:[%s14 + $0x8f8] sm:$0xff]
  %v4884 = vld [vmem:[%s14 + $0x900] sm:$0xff]
  %v4885 = vld [vmem:[%s14 + $0x908] sm:$0xff]
  %v4886 = vld [vmem:[%s14 + $0x910] sm:$0xff]
  %v4887 = vld [vmem:[%s14 + $0x918] sm:$0xff]
  %v4888 = vld [vmem:[%s14 + $0x920] sm:$0xff]
  %v4889 = vld [vmem:[%s14 + $0x928] sm:$0xff]
  %v4890 = vld [vmem:[%s14 + $0x930] sm:$0xff]
  %v4891 = vld [vmem:[%s14 + $0x938] sm:$0xff]
  %v4892 = vld [vmem:[%s14 + $0x940] sm:$0xff]
  %v4893 = vld [vmem:[%s14 + $0x948] sm:$0xff]
  %v4894 = vld [vmem:[%s14 + $0x950] sm:$0xff]
  %v4895 = vld [vmem:[%s14 + $0x958] sm:$0xff]
  %v4896 = vld [vmem:[%s14 + $0x960] sm:$0xff]
  %v4897 = vld [vmem:[%s14 + $0x968] sm:$0xff]
  %v4898 = vld [vmem:[%s14 + $0x970] sm:$0xff]
  %v4899 = vld [vmem:[%s14 + $0x978] sm:$0xff]
  %v4900 = vld [vmem:[%s14 + $0x980] sm:$0xff]
  %v4901 = vld [vmem:[%s14 + $0x988] sm:$0xff]
  %v4902 = vld [vmem:[%s14 + $0x990] sm:$0xff]
  %v4903 = vld [vmem:[%s14 + $0x998] sm:$0xff]
  %v4904 = vld [vmem:[%s14 + $0x9a0] sm:$0xff]
  %v4905 = vld [vmem:[%s14 + $0x9a8] sm:$0xff]
  %v4906 = vld [vmem:[%s14 + $0x9b0] sm:$0xff]
  %v4907 = vld [vmem:[%s14 + $0x9b8] sm:$0xff]
  %v4908 = vld [vmem:[%s14 + $0x9c0] sm:$0xff]
  %v4909 = vld [vmem:[%s14 + $0x9c8] sm:$0xff]
  %v4910 = vld [vmem:[%s14 + $0x9d0] sm:$0xff]
  %v4911 = vld [vmem:[%s14 + $0x9d8] sm:$0xff]
  %v4912 = vld [vmem:[%s14 + $0x9e0] sm:$0xff]
  %v4913 = vld [vmem:[%s14 + $0x9e8] sm:$0xff]
  %v4914 = vld [vmem:[%s14 + $0x9f0] sm:$0xff]
  %v4915 = vld [vmem:[%s14 + $0x9f8] sm:$0xff]
  %v4916 = vld [vmem:[%s14 + $0xa00] sm:$0xff]
  %v4917 = vld [vmem:[%s14 + $0xa08] sm:$0xff]
  %v4918 = vld [vmem:[%s14 + $0xa10] sm:$0xff]
  %v4919 = vld [vmem:[%s14 + $0xa18] sm:$0xff]
  %v4920 = vld [vmem:[%s14 + $0xa20] sm:$0xff]
  %v4921 = vld [vmem:[%s14 + $0xa28] sm:$0xff]
  %v4922 = vld [vmem:[%s14 + $0xa30] sm:$0xff]
  %v4923 = vld [vmem:[%s14 + $0xa38] sm:$0xff]
  %v4924 = vld [vmem:[%s14 + $0xa40] sm:$0xff]
  %v4925 = vld [vmem:[%s14 + $0xa48] sm:$0xff]
  %v4926 = vld [vmem:[%s14 + $0xa50] sm:$0xff]
  %v4927 = vld [vmem:[%s14 + $0xa58] sm:$0xff]
  %v4928 = vld [vmem:[%s14 + $0xa60] sm:$0xff]
  %v4929 = vld [vmem:[%s14 + $0xa68] sm:$0xff]
  %v4930 = vld [vmem:[%s14 + $0xa70] sm:$0xff]
  %v4931 = vld [vmem:[%s14 + $0xa78] sm:$0xff]
  %v4932 = vld [vmem:[%s14 + $0xa80] sm:$0xff]
  %v4933 = vld [vmem:[%s14 + $0xa88] sm:$0xff]
  %v4934 = vld [vmem:[%s14 + $0xa90] sm:$0xff]
  %v4935 = vld [vmem:[%s14 + $0xa98] sm:$0xff]
  %v4936 = vld [vmem:[%s14 + $0xaa0] sm:$0xff]
  %v4937 = vld [vmem:[%s14 + $0xaa8] sm:$0xff]
  %v4938 = vld [vmem:[%s14 + $0xab0] sm:$0xff]
  %v4939 = vld [vmem:[%s14 + $0xab8] sm:$0xff]
  %v4940 = vld [vmem:[%s14 + $0xac0] sm:$0xff]
  %v4941 = vld [vmem:[%s14 + $0xac8] sm:$0xff]
  %v4942 = vld [vmem:[%s14 + $0xad0] sm:$0xff]
  %v4943 = vld [vmem:[%s14 + $0xad8] sm:$0xff]
  %v4944 = vld [vmem:[%s14 + $0xae0] sm:$0xff]
  %v4945 = vld [vmem:[%s14 + $0xae8] sm:$0xff]
  %v4946 = vld [vmem:[%s14 + $0xaf0] sm:$0xff]
  %v4947 = vld [vmem:[%s14 + $0xaf8] sm:$0xff]
  %v4948 = vld [vmem:[%s14 + $0xb00] sm:$0xff]
  %v4949 = vld [vmem:[%s14 + $0xb08] sm:$0xff]
  %v4950 = vld [vmem:[%s14 + $0xb10] sm:$0xff]
  %v4951 = vld [vmem:[%s14 + $0xb18] sm:$0xff]
  %v4952 = vld [vmem:[%s14 + $0xb20] sm:$0xff]
  %v4953 = vld [vmem:[%s14 + $0xb28] sm:$0xff]
  %v4954 = vld [vmem:[%s14 + $0xb30] sm:$0xff]
  %v4955 = vld [vmem:[%s14 + $0xb38] sm:$0xff]
  %v4956 = vld [vmem:[%s14 + $0xb40] sm:$0xff]
  %v4957 = vld [vmem:[%s14 + $0xb48] sm:$0xff]
  %v4958 = vld [vmem:[%s14 + $0xb50] sm:$0xff]
  %v4959 = vld [vmem:[%s14 + $0xb58] sm:$0xff]
  %v4960 = vld [vmem:[%s14 + $0xb60] sm:$0xff]
  %v4961 = vld [vmem:[%s14 + $0xb68] sm:$0xff]
  %v4962 = vld [vmem:[%s14 + $0xb70] sm:$0xff]
  %v4963 = vld [vmem:[%s14 + $0xb78] sm:$0xff]
  %v4964 = vld [vmem:[%s14 + $0xb80] sm:$0xff]
  %v4965 = vld [vmem:[%s14 + $0xb88] sm:$0xff]
  %v4966 = vld [vmem:[%s14 + $0xb90] sm:$0xff]
  %v4967 = vld [vmem:[%s14 + $0xb98] sm:$0xff]
  %v4968 = vld [vmem:[%s14 + $0xba0] sm:$0xff]
  %v4969 = vld [vmem:[%s14 + $0xba8] sm:$0xff]
  %v4970 = vld [vmem:[%s14 + $0xbb0] sm:$0xff]
  %v4971 = vld [vmem:[%s14 + $0xbb8] sm:$0xff]
  %v4972 = vld [vmem:[%s14 + $0xbc0] sm:$0xff]
  %v4973 = vld [vmem:[%s14 + $0xbc8] sm:$0xff]
  %v4974 = vld [vmem:[%s14 + $0xbd0] sm:$0xff]
  %v4975 = vld [vmem:[%s14 + $0xbd8] sm:$0xff]
  %v4976 = vld [vmem:[%s14 + $0xbe0] sm:$0xff]
  %v4977 = vld [vmem:[%s14 + $0xbe8] sm:$0xff]
  %v4978 = vld [vmem:[%s14 + $0xbf0] sm:$0xff]
  %v4979 = vld [vmem:[%s14 + $0xbf8] sm:$0xff]
  %v5364 = vunpack.c.l.b16 %v4596
  %v5365 = vunpack.c.h.b16 %v4596
  %v5366 = vunpack.c.l.b16 %v4597
  %v5367 = vunpack.c.h.b16 %v4597
  %v5368 = vunpack.c.l.b16 %v4598
  %v5369 = vunpack.c.h.b16 %v4598
  %v5370 = vunpack.c.l.b16 %v4599
  %v5371 = vunpack.c.h.b16 %v4599
  %v5372 = vunpack.c.l.b16 %v4600
  %v5373 = vunpack.c.h.b16 %v4600
  %v5374 = vunpack.c.l.b16 %v4601
  %v5375 = vunpack.c.h.b16 %v4601
  %v5376 = vunpack.c.l.b16 %v4602
  %v5377 = vunpack.c.h.b16 %v4602
  %v5378 = vunpack.c.l.b16 %v4603
  %v5379 = vunpack.c.h.b16 %v4603
  %v5380 = vunpack.c.l.b16 %v4604
  %v5381 = vunpack.c.h.b16 %v4604
  %v5382 = vunpack.c.l.b16 %v4605
  %v5383 = vunpack.c.h.b16 %v4605
  %v5384 = vunpack.c.l.b16 %v4606
  %v5385 = vunpack.c.h.b16 %v4606
  %v5386 = vunpack.c.l.b16 %v4607
  %v5387 = vunpack.c.h.b16 %v4607
  %v5388 = vunpack.c.l.b16 %v4608
  %v5389 = vunpack.c.h.b16 %v4608
  %v5390 = vunpack.c.l.b16 %v4609
  %v5391 = vunpack.c.h.b16 %v4609
  %v5392 = vunpack.c.l.b16 %v4610
  %v5393 = vunpack.c.h.b16 %v4610
  %v5394 = vunpack.c.l.b16 %v4611
  %v5395 = vunpack.c.h.b16 %v4611
  %v5396 = vunpack.c.l.b16 %v4612
  %v5397 = vunpack.c.h.b16 %v4612
  %v5398 = vunpack.c.l.b16 %v4613
  %v5399 = vunpack.c.h.b16 %v4613
  %v5400 = vunpack.c.l.b16 %v4614
  %v5401 = vunpack.c.h.b16 %v4614
  %v5402 = vunpack.c.l.b16 %v4615
  %v5403 = vunpack.c.h.b16 %v4615
  %v5404 = vunpack.c.l.b16 %v4616
  %v5405 = vunpack.c.h.b16 %v4616
  %v5406 = vunpack.c.l.b16 %v4617
  %v5407 = vunpack.c.h.b16 %v4617
  %v5408 = vunpack.c.l.b16 %v4618
  %v5409 = vunpack.c.h.b16 %v4618
  %v5410 = vunpack.c.l.b16 %v4619
  %v5411 = vunpack.c.h.b16 %v4619
  %v5412 = vunpack.c.l.b16 %v4620
  %v5413 = vunpack.c.h.b16 %v4620
  %v5414 = vunpack.c.l.b16 %v4621
  %v5415 = vunpack.c.h.b16 %v4621
  %v5416 = vunpack.c.l.b16 %v4622
  %v5417 = vunpack.c.h.b16 %v4622
  %v5418 = vunpack.c.l.b16 %v4623
  %v5419 = vunpack.c.h.b16 %v4623
  %v5420 = vunpack.c.l.b16 %v4624
  %v5421 = vunpack.c.h.b16 %v4624
  %v5422 = vunpack.c.l.b16 %v4625
  %v5423 = vunpack.c.h.b16 %v4625
  %v5424 = vunpack.c.l.b16 %v4626
  %v5425 = vunpack.c.h.b16 %v4626
  %v5426 = vunpack.c.l.b16 %v4627
  %v5427 = vunpack.c.h.b16 %v4627
  %v5428 = vunpack.c.l.b16 %v4628
  %v5429 = vunpack.c.h.b16 %v4628
  %v5430 = vunpack.c.l.b16 %v4629
  %v5431 = vunpack.c.h.b16 %v4629
  %v5432 = vunpack.c.l.b16 %v4630
  %v5433 = vunpack.c.h.b16 %v4630
  %v5434 = vunpack.c.l.b16 %v4631
  %v5435 = vunpack.c.h.b16 %v4631
  %v5436 = vunpack.c.l.b16 %v4632
  %v5437 = vunpack.c.h.b16 %v4632
  %v5438 = vunpack.c.l.b16 %v4633
  %v5439 = vunpack.c.h.b16 %v4633
  %v5440 = vunpack.c.l.b16 %v4634
  %v5441 = vunpack.c.h.b16 %v4634
  %v5442 = vunpack.c.l.b16 %v4635
  %v5443 = vunpack.c.h.b16 %v4635
  %v5444 = vunpack.c.l.b16 %v4636
  %v5445 = vunpack.c.h.b16 %v4636
  %v5446 = vunpack.c.l.b16 %v4637
  %v5447 = vunpack.c.h.b16 %v4637
  %v5448 = vunpack.c.l.b16 %v4638
  %v5449 = vunpack.c.h.b16 %v4638
  %v5450 = vunpack.c.l.b16 %v4639
  %v5451 = vunpack.c.h.b16 %v4639
  %v5452 = vunpack.c.l.b16 %v4640
  %v5453 = vunpack.c.h.b16 %v4640
  %v5454 = vunpack.c.l.b16 %v4641
  %v5455 = vunpack.c.h.b16 %v4641
  %v5456 = vunpack.c.l.b16 %v4642
  %v5457 = vunpack.c.h.b16 %v4642
  %v5458 = vunpack.c.l.b16 %v4643
  %v5459 = vunpack.c.h.b16 %v4643
  %v5460 = vunpack.c.l.b16 %v4644
  %v5461 = vunpack.c.h.b16 %v4644
  %v5462 = vunpack.c.l.b16 %v4645
  %v5463 = vunpack.c.h.b16 %v4645
  %v5464 = vunpack.c.l.b16 %v4646
  %v5465 = vunpack.c.h.b16 %v4646
  %v5466 = vunpack.c.l.b16 %v4647
  %v5467 = vunpack.c.h.b16 %v4647
  %v5468 = vunpack.c.l.b16 %v4648
  %v5469 = vunpack.c.h.b16 %v4648
  %v5470 = vunpack.c.l.b16 %v4649
  %v5471 = vunpack.c.h.b16 %v4649
  %v5472 = vunpack.c.l.b16 %v4650
  %v5473 = vunpack.c.h.b16 %v4650
  %v5474 = vunpack.c.l.b16 %v4651
  %v5475 = vunpack.c.h.b16 %v4651
  %v5476 = vunpack.c.l.b16 %v4652
  %v5477 = vunpack.c.h.b16 %v4652
  %v5478 = vunpack.c.l.b16 %v4653
  %v5479 = vunpack.c.h.b16 %v4653
  %v5480 = vunpack.c.l.b16 %v4654
  %v5481 = vunpack.c.h.b16 %v4654
  %v5482 = vunpack.c.l.b16 %v4655
  %v5483 = vunpack.c.h.b16 %v4655
  %v5484 = vunpack.c.l.b16 %v4656
  %v5485 = vunpack.c.h.b16 %v4656
  %v5486 = vunpack.c.l.b16 %v4657
  %v5487 = vunpack.c.h.b16 %v4657
  %v5488 = vunpack.c.l.b16 %v4658
  %v5489 = vunpack.c.h.b16 %v4658
  %v5490 = vunpack.c.l.b16 %v4659
  %v5491 = vunpack.c.h.b16 %v4659
  %v5492 = vunpack.c.l.b16 %v4660
  %v5493 = vunpack.c.h.b16 %v4660
  %v5494 = vunpack.c.l.b16 %v4661
  %v5495 = vunpack.c.h.b16 %v4661
  %v5496 = vunpack.c.l.b16 %v4662
  %v5497 = vunpack.c.h.b16 %v4662
  %v5498 = vunpack.c.l.b16 %v4663
  %v5499 = vunpack.c.h.b16 %v4663
  %v5500 = vunpack.c.l.b16 %v4664
  %v5501 = vunpack.c.h.b16 %v4664
  %v5502 = vunpack.c.l.b16 %v4665
  %v5503 = vunpack.c.h.b16 %v4665
  %v5504 = vunpack.c.l.b16 %v4666
  %v5505 = vunpack.c.h.b16 %v4666
  %v5506 = vunpack.c.l.b16 %v4667
  %v5507 = vunpack.c.h.b16 %v4667
  %v5508 = vunpack.c.l.b16 %v4668
  %v5509 = vunpack.c.h.b16 %v4668
  %v5510 = vunpack.c.l.b16 %v4669
  %v5511 = vunpack.c.h.b16 %v4669
  %v5512 = vunpack.c.l.b16 %v4670
  %v5513 = vunpack.c.h.b16 %v4670
  %v5514 = vunpack.c.l.b16 %v4671
  %v5515 = vunpack.c.h.b16 %v4671
  %v5516 = vunpack.c.l.b16 %v4672
  %v5517 = vunpack.c.h.b16 %v4672
  %v5518 = vunpack.c.l.b16 %v4673
  %v5519 = vunpack.c.h.b16 %v4673
  %v5520 = vunpack.c.l.b16 %v4674
  %v5521 = vunpack.c.h.b16 %v4674
  %v5522 = vunpack.c.l.b16 %v4675
  %v5523 = vunpack.c.h.b16 %v4675
  %v5524 = vunpack.c.l.b16 %v4676
  %v5525 = vunpack.c.h.b16 %v4676
  %v5526 = vunpack.c.l.b16 %v4677
  %v5527 = vunpack.c.h.b16 %v4677
  %v5528 = vunpack.c.l.b16 %v4678
  %v5529 = vunpack.c.h.b16 %v4678
  %v5530 = vunpack.c.l.b16 %v4679
  %v5531 = vunpack.c.h.b16 %v4679
  %v5532 = vunpack.c.l.b16 %v4680
  %v5533 = vunpack.c.h.b16 %v4680
  %v5534 = vunpack.c.l.b16 %v4681
  %v5535 = vunpack.c.h.b16 %v4681
  %v5536 = vunpack.c.l.b16 %v4682
  %v5537 = vunpack.c.h.b16 %v4682
  %v5538 = vunpack.c.l.b16 %v4683
  %v5539 = vunpack.c.h.b16 %v4683
  %v5540 = vunpack.c.l.b16 %v4684
  %v5541 = vunpack.c.h.b16 %v4684
  %v5542 = vunpack.c.l.b16 %v4685
  %v5543 = vunpack.c.h.b16 %v4685
  %v5544 = vunpack.c.l.b16 %v4686
  %v5545 = vunpack.c.h.b16 %v4686
  %v5546 = vunpack.c.l.b16 %v4687
  %v5547 = vunpack.c.h.b16 %v4687
  %v5548 = vunpack.c.l.b16 %v4688
  %v5549 = vunpack.c.h.b16 %v4688
  %v5550 = vunpack.c.l.b16 %v4689
  %v5551 = vunpack.c.h.b16 %v4689
  %v5552 = vunpack.c.l.b16 %v4690
  %v5553 = vunpack.c.h.b16 %v4690
  %v5554 = vunpack.c.l.b16 %v4691
  %v5555 = vunpack.c.h.b16 %v4691
  %v5556 = vunpack.c.l.b16 %v4692
  %v5557 = vunpack.c.h.b16 %v4692
  %v5558 = vunpack.c.l.b16 %v4693
  %v5559 = vunpack.c.h.b16 %v4693
  %v5560 = vunpack.c.l.b16 %v4694
  %v5561 = vunpack.c.h.b16 %v4694
  %v5562 = vunpack.c.l.b16 %v4695
  %v5563 = vunpack.c.h.b16 %v4695
  %v5564 = vunpack.c.l.b16 %v4696
  %v5565 = vunpack.c.h.b16 %v4696
  %v5566 = vunpack.c.l.b16 %v4697
  %v5567 = vunpack.c.h.b16 %v4697
  %v5568 = vunpack.c.l.b16 %v4698
  %v5569 = vunpack.c.h.b16 %v4698
  %v5570 = vunpack.c.l.b16 %v4699
  %v5571 = vunpack.c.h.b16 %v4699
  %v5572 = vunpack.c.l.b16 %v4700
  %v5573 = vunpack.c.h.b16 %v4700
  %v5574 = vunpack.c.l.b16 %v4701
  %v5575 = vunpack.c.h.b16 %v4701
  %v5576 = vunpack.c.l.b16 %v4702
  %v5577 = vunpack.c.h.b16 %v4702
  %v5578 = vunpack.c.l.b16 %v4703
  %v5579 = vunpack.c.h.b16 %v4703
  %v5580 = vunpack.c.l.b16 %v4704
  %v5581 = vunpack.c.h.b16 %v4704
  %v5582 = vunpack.c.l.b16 %v4705
  %v5583 = vunpack.c.h.b16 %v4705
  %v5584 = vunpack.c.l.b16 %v4706
  %v5585 = vunpack.c.h.b16 %v4706
  %v5586 = vunpack.c.l.b16 %v4707
  %v5587 = vunpack.c.h.b16 %v4707
  %v5588 = vunpack.c.l.b16 %v4708
  %v5589 = vunpack.c.h.b16 %v4708
  %v5590 = vunpack.c.l.b16 %v4709
  %v5591 = vunpack.c.h.b16 %v4709
  %v5592 = vunpack.c.l.b16 %v4710
  %v5593 = vunpack.c.h.b16 %v4710
  %v5594 = vunpack.c.l.b16 %v4711
  %v5595 = vunpack.c.h.b16 %v4711
  %v5596 = vunpack.c.l.b16 %v4712
  %v5597 = vunpack.c.h.b16 %v4712
  %v5598 = vunpack.c.l.b16 %v4713
  %v5599 = vunpack.c.h.b16 %v4713
  %v5600 = vunpack.c.l.b16 %v4714
  %v5601 = vunpack.c.h.b16 %v4714
  %v5602 = vunpack.c.l.b16 %v4715
  %v5603 = vunpack.c.h.b16 %v4715
  %v5604 = vunpack.c.l.b16 %v4716
  %v5605 = vunpack.c.h.b16 %v4716
  %v5606 = vunpack.c.l.b16 %v4717
  %v5607 = vunpack.c.h.b16 %v4717
  %v5608 = vunpack.c.l.b16 %v4718
  %v5609 = vunpack.c.h.b16 %v4718
  %v5610 = vunpack.c.l.b16 %v4719
  %v5611 = vunpack.c.h.b16 %v4719
  %v5612 = vunpack.c.l.b16 %v4720
  %v5613 = vunpack.c.h.b16 %v4720
  %v5614 = vunpack.c.l.b16 %v4721
  %v5615 = vunpack.c.h.b16 %v4721
  %v5616 = vunpack.c.l.b16 %v4722
  %v5617 = vunpack.c.h.b16 %v4722
  %v5618 = vunpack.c.l.b16 %v4723
  %v5619 = vunpack.c.h.b16 %v4723
  %v5620 = vunpack.c.l.b16 %v4724
  %v5621 = vunpack.c.h.b16 %v4724
  %v5622 = vunpack.c.l.b16 %v4725
  %v5623 = vunpack.c.h.b16 %v4725
  %v5624 = vunpack.c.l.b16 %v4726
  %v5625 = vunpack.c.h.b16 %v4726
  %v5626 = vunpack.c.l.b16 %v4727
  %v5627 = vunpack.c.h.b16 %v4727
  %v5628 = vunpack.c.l.b16 %v4728
  %v5629 = vunpack.c.h.b16 %v4728
  %v5630 = vunpack.c.l.b16 %v4729
  %v5631 = vunpack.c.h.b16 %v4729
  %v5632 = vunpack.c.l.b16 %v4730
  %v5633 = vunpack.c.h.b16 %v4730
  %v5634 = vunpack.c.l.b16 %v4731
  %v5635 = vunpack.c.h.b16 %v4731
  %v5636 = vunpack.c.l.b16 %v4732
  %v5637 = vunpack.c.h.b16 %v4732
  %v5638 = vunpack.c.l.b16 %v4733
  %v5639 = vunpack.c.h.b16 %v4733
  %v5640 = vunpack.c.l.b16 %v4734
  %v5641 = vunpack.c.h.b16 %v4734
  %v5642 = vunpack.c.l.b16 %v4735
  %v5643 = vunpack.c.h.b16 %v4735
  %v5644 = vunpack.c.l.b16 %v4736
  %v5645 = vunpack.c.h.b16 %v4736
  %v5646 = vunpack.c.l.b16 %v4737
  %v5647 = vunpack.c.h.b16 %v4737
  %v5648 = vunpack.c.l.b16 %v4738
  %v5649 = vunpack.c.h.b16 %v4738
  %v5650 = vunpack.c.l.b16 %v4739
  %v5651 = vunpack.c.h.b16 %v4739
  %v5652 = vunpack.c.l.b16 %v4740
  %v5653 = vunpack.c.h.b16 %v4740
  %v5654 = vunpack.c.l.b16 %v4741
  %v5655 = vunpack.c.h.b16 %v4741
  %v5656 = vunpack.c.l.b16 %v4742
  %v5657 = vunpack.c.h.b16 %v4742
  %v5658 = vunpack.c.l.b16 %v4743
  %v5659 = vunpack.c.h.b16 %v4743
  %v5660 = vunpack.c.l.b16 %v4744
  %v5661 = vunpack.c.h.b16 %v4744
  %v5662 = vunpack.c.l.b16 %v4745
  %v5663 = vunpack.c.h.b16 %v4745
  %v5664 = vunpack.c.l.b16 %v4746
  %v5665 = vunpack.c.h.b16 %v4746
  %v5666 = vunpack.c.l.b16 %v4747
  %v5667 = vunpack.c.h.b16 %v4747
  %v5668 = vunpack.c.l.b16 %v4748
  %v5669 = vunpack.c.h.b16 %v4748
  %v5670 = vunpack.c.l.b16 %v4749
  %v5671 = vunpack.c.h.b16 %v4749
  %v5672 = vunpack.c.l.b16 %v4750
  %v5673 = vunpack.c.h.b16 %v4750
  %v5674 = vunpack.c.l.b16 %v4751
  %v5675 = vunpack.c.h.b16 %v4751
  %v5676 = vunpack.c.l.b16 %v4752
  %v5677 = vunpack.c.h.b16 %v4752
  %v5678 = vunpack.c.l.b16 %v4753
  %v5679 = vunpack.c.h.b16 %v4753
  %v5680 = vunpack.c.l.b16 %v4754
  %v5681 = vunpack.c.h.b16 %v4754
  %v5682 = vunpack.c.l.b16 %v4755
  %v5683 = vunpack.c.h.b16 %v4755
  %v5684 = vunpack.c.l.b16 %v4756
  %v5685 = vunpack.c.h.b16 %v4756
  %v5686 = vunpack.c.l.b16 %v4757
  %v5687 = vunpack.c.h.b16 %v4757
  %v5688 = vunpack.c.l.b16 %v4758
  %v5689 = vunpack.c.h.b16 %v4758
  %v5690 = vunpack.c.l.b16 %v4759
  %v5691 = vunpack.c.h.b16 %v4759
  %v5692 = vunpack.c.l.b16 %v4760
  %v5693 = vunpack.c.h.b16 %v4760
  %v5694 = vunpack.c.l.b16 %v4761
  %v5695 = vunpack.c.h.b16 %v4761
  %v5696 = vunpack.c.l.b16 %v4762
  %v5697 = vunpack.c.h.b16 %v4762
  %v5698 = vunpack.c.l.b16 %v4763
  %v5699 = vunpack.c.h.b16 %v4763
  %v5700 = vunpack.c.l.b16 %v4764
  %v5701 = vunpack.c.h.b16 %v4764
  %v5702 = vunpack.c.l.b16 %v4765
  %v5703 = vunpack.c.h.b16 %v4765
  %v5704 = vunpack.c.l.b16 %v4766
  %v5705 = vunpack.c.h.b16 %v4766
  %v5706 = vunpack.c.l.b16 %v4767
  %v5707 = vunpack.c.h.b16 %v4767
  %v5708 = vunpack.c.l.b16 %v4768
  %v5709 = vunpack.c.h.b16 %v4768
  %v5710 = vunpack.c.l.b16 %v4769
  %v5711 = vunpack.c.h.b16 %v4769
  %v5712 = vunpack.c.l.b16 %v4770
  %v5713 = vunpack.c.h.b16 %v4770
  %v5714 = vunpack.c.l.b16 %v4771
  %v5715 = vunpack.c.h.b16 %v4771
  %v5716 = vunpack.c.l.b16 %v4772
  %v5717 = vunpack.c.h.b16 %v4772
  %v5718 = vunpack.c.l.b16 %v4773
  %v5719 = vunpack.c.h.b16 %v4773
  %v5720 = vunpack.c.l.b16 %v4774
  %v5721 = vunpack.c.h.b16 %v4774
  %v5722 = vunpack.c.l.b16 %v4775
  %v5723 = vunpack.c.h.b16 %v4775
  %v5724 = vunpack.c.l.b16 %v4776
  %v5725 = vunpack.c.h.b16 %v4776
  %v5726 = vunpack.c.l.b16 %v4777
  %v5727 = vunpack.c.h.b16 %v4777
  %v5728 = vunpack.c.l.b16 %v4778
  %v5729 = vunpack.c.h.b16 %v4778
  %v5730 = vunpack.c.l.b16 %v4779
  %v5731 = vunpack.c.h.b16 %v4779
  %v5732 = vunpack.c.l.b16 %v4780
  %v5733 = vunpack.c.h.b16 %v4780
  %v5734 = vunpack.c.l.b16 %v4781
  %v5735 = vunpack.c.h.b16 %v4781
  %v5736 = vunpack.c.l.b16 %v4782
  %v5737 = vunpack.c.h.b16 %v4782
  %v5738 = vunpack.c.l.b16 %v4783
  %v5739 = vunpack.c.h.b16 %v4783
  %v5740 = vunpack.c.l.b16 %v4784
  %v5741 = vunpack.c.h.b16 %v4784
  %v5742 = vunpack.c.l.b16 %v4785
  %v5743 = vunpack.c.h.b16 %v4785
  %v5744 = vunpack.c.l.b16 %v4786
  %v5745 = vunpack.c.h.b16 %v4786
  %v5746 = vunpack.c.l.b16 %v4787
  %v5747 = vunpack.c.h.b16 %v4787
  %v5748 = vunpack.c.l.b16 %v4788
  %v5749 = vunpack.c.h.b16 %v4788
  %v5750 = vunpack.c.l.b16 %v4789
  %v5751 = vunpack.c.h.b16 %v4789
  %v5752 = vunpack.c.l.b16 %v4790
  %v5753 = vunpack.c.h.b16 %v4790
  %v5754 = vunpack.c.l.b16 %v4791
  %v5755 = vunpack.c.h.b16 %v4791
  %v5756 = vunpack.c.l.b16 %v4792
  %v5757 = vunpack.c.h.b16 %v4792
  %v5758 = vunpack.c.l.b16 %v4793
  %v5759 = vunpack.c.h.b16 %v4793
  %v5760 = vunpack.c.l.b16 %v4794
  %v5761 = vunpack.c.h.b16 %v4794
  %v5762 = vunpack.c.l.b16 %v4795
  %v5763 = vunpack.c.h.b16 %v4795
  %v5764 = vunpack.c.l.b16 %v4796
  %v5765 = vunpack.c.h.b16 %v4796
  %v5766 = vunpack.c.l.b16 %v4797
  %v5767 = vunpack.c.h.b16 %v4797
  %v5768 = vunpack.c.l.b16 %v4798
  %v5769 = vunpack.c.h.b16 %v4798
  %v5770 = vunpack.c.l.b16 %v4799
  %v5771 = vunpack.c.h.b16 %v4799
  %v5772 = vunpack.c.l.b16 %v4800
  %v5773 = vunpack.c.h.b16 %v4800
  %v5774 = vunpack.c.l.b16 %v4801
  %v5775 = vunpack.c.h.b16 %v4801
  %v5776 = vunpack.c.l.b16 %v4802
  %v5777 = vunpack.c.h.b16 %v4802
  %v5778 = vunpack.c.l.b16 %v4803
  %v5779 = vunpack.c.h.b16 %v4803
  %v5780 = vunpack.c.l.b16 %v4804
  %v5781 = vunpack.c.h.b16 %v4804
  %v5782 = vunpack.c.l.b16 %v4805
  %v5783 = vunpack.c.h.b16 %v4805
  %v5784 = vunpack.c.l.b16 %v4806
  %v5785 = vunpack.c.h.b16 %v4806
  %v5786 = vunpack.c.l.b16 %v4807
  %v5787 = vunpack.c.h.b16 %v4807
  %v5788 = vunpack.c.l.b16 %v4808
  %v5789 = vunpack.c.h.b16 %v4808
  %v5790 = vunpack.c.l.b16 %v4809
  %v5791 = vunpack.c.h.b16 %v4809
  %v5792 = vunpack.c.l.b16 %v4810
  %v5793 = vunpack.c.h.b16 %v4810
  %v5794 = vunpack.c.l.b16 %v4811
  %v5795 = vunpack.c.h.b16 %v4811
  %v5796 = vunpack.c.l.b16 %v4812
  %v5797 = vunpack.c.h.b16 %v4812
  %v5798 = vunpack.c.l.b16 %v4813
  %v5799 = vunpack.c.h.b16 %v4813
  %v5800 = vunpack.c.l.b16 %v4814
  %v5801 = vunpack.c.h.b16 %v4814
  %v5802 = vunpack.c.l.b16 %v4815
  %v5803 = vunpack.c.h.b16 %v4815
  %v5804 = vunpack.c.l.b16 %v4816
  %v5805 = vunpack.c.h.b16 %v4816
  %v5806 = vunpack.c.l.b16 %v4817
  %v5807 = vunpack.c.h.b16 %v4817
  %v5808 = vunpack.c.l.b16 %v4818
  %v5809 = vunpack.c.h.b16 %v4818
  %v5810 = vunpack.c.l.b16 %v4819
  %v5811 = vunpack.c.h.b16 %v4819
  %v5812 = vunpack.c.l.b16 %v4820
  %v5813 = vunpack.c.h.b16 %v4820
  %v5814 = vunpack.c.l.b16 %v4821
  %v5815 = vunpack.c.h.b16 %v4821
  %v5816 = vunpack.c.l.b16 %v4822
  %v5817 = vunpack.c.h.b16 %v4822
  %v5818 = vunpack.c.l.b16 %v4823
  %v5819 = vunpack.c.h.b16 %v4823
  %v5820 = vunpack.c.l.b16 %v4824
  %v5821 = vunpack.c.h.b16 %v4824
  %v5822 = vunpack.c.l.b16 %v4825
  %v5823 = vunpack.c.h.b16 %v4825
  %v5824 = vunpack.c.l.b16 %v4826
  %v5825 = vunpack.c.h.b16 %v4826
  %v5826 = vunpack.c.l.b16 %v4827
  %v5827 = vunpack.c.h.b16 %v4827
  %v5828 = vunpack.c.l.b16 %v4828
  %v5829 = vunpack.c.h.b16 %v4828
  %v5830 = vunpack.c.l.b16 %v4829
  %v5831 = vunpack.c.h.b16 %v4829
  %v5832 = vunpack.c.l.b16 %v4830
  %v5833 = vunpack.c.h.b16 %v4830
  %v5834 = vunpack.c.l.b16 %v4831
  %v5835 = vunpack.c.h.b16 %v4831
  %v5836 = vunpack.c.l.b16 %v4832
  %v5837 = vunpack.c.h.b16 %v4832
  %v5838 = vunpack.c.l.b16 %v4833
  %v5839 = vunpack.c.h.b16 %v4833
  %v5840 = vunpack.c.l.b16 %v4834
  %v5841 = vunpack.c.h.b16 %v4834
  %v5842 = vunpack.c.l.b16 %v4835
  %v5843 = vunpack.c.h.b16 %v4835
  %v5844 = vunpack.c.l.b16 %v4836
  %v5845 = vunpack.c.h.b16 %v4836
  %v5846 = vunpack.c.l.b16 %v4837
  %v5847 = vunpack.c.h.b16 %v4837
  %v5848 = vunpack.c.l.b16 %v4838
  %v5849 = vunpack.c.h.b16 %v4838
  %v5850 = vunpack.c.l.b16 %v4839
  %v5851 = vunpack.c.h.b16 %v4839
  %v5852 = vunpack.c.l.b16 %v4840
  %v5853 = vunpack.c.h.b16 %v4840
  %v5854 = vunpack.c.l.b16 %v4841
  %v5855 = vunpack.c.h.b16 %v4841
  %v5856 = vunpack.c.l.b16 %v4842
  %v5857 = vunpack.c.h.b16 %v4842
  %v5858 = vunpack.c.l.b16 %v4843
  %v5859 = vunpack.c.h.b16 %v4843
  %v5860 = vunpack.c.l.b16 %v4844
  %v5861 = vunpack.c.h.b16 %v4844
  %v5862 = vunpack.c.l.b16 %v4845
  %v5863 = vunpack.c.h.b16 %v4845
  %v5864 = vunpack.c.l.b16 %v4846
  %v5865 = vunpack.c.h.b16 %v4846
  %v5866 = vunpack.c.l.b16 %v4847
  %v5867 = vunpack.c.h.b16 %v4847
  %v5868 = vunpack.c.l.b16 %v4848
  %v5869 = vunpack.c.h.b16 %v4848
  %v5870 = vunpack.c.l.b16 %v4849
  %v5871 = vunpack.c.h.b16 %v4849
  %v5872 = vunpack.c.l.b16 %v4850
  %v5873 = vunpack.c.h.b16 %v4850
  %v5874 = vunpack.c.l.b16 %v4851
  %v5875 = vunpack.c.h.b16 %v4851
  %v5876 = vunpack.c.l.b16 %v4852
  %v5877 = vunpack.c.h.b16 %v4852
  %v5878 = vunpack.c.l.b16 %v4853
  %v5879 = vunpack.c.h.b16 %v4853
  %v5880 = vunpack.c.l.b16 %v4854
  %v5881 = vunpack.c.h.b16 %v4854
  %v5882 = vunpack.c.l.b16 %v4855
  %v5883 = vunpack.c.h.b16 %v4855
  %v5884 = vunpack.c.l.b16 %v4856
  %v5885 = vunpack.c.h.b16 %v4856
  %v5886 = vunpack.c.l.b16 %v4857
  %v5887 = vunpack.c.h.b16 %v4857
  %v5888 = vunpack.c.l.b16 %v4858
  %v5889 = vunpack.c.h.b16 %v4858
  %v5890 = vunpack.c.l.b16 %v4859
  %v5891 = vunpack.c.h.b16 %v4859
  %v5892 = vunpack.c.l.b16 %v4860
  %v5893 = vunpack.c.h.b16 %v4860
  %v5894 = vunpack.c.l.b16 %v4861
  %v5895 = vunpack.c.h.b16 %v4861
  %v5896 = vunpack.c.l.b16 %v4862
  %v5897 = vunpack.c.h.b16 %v4862
  %v5898 = vunpack.c.l.b16 %v4863
  %v5899 = vunpack.c.h.b16 %v4863
  %v5900 = vunpack.c.l.b16 %v4864
  %v5901 = vunpack.c.h.b16 %v4864
  %v5902 = vunpack.c.l.b16 %v4865
  %v5903 = vunpack.c.h.b16 %v4865
  %v5904 = vunpack.c.l.b16 %v4866
  %v5905 = vunpack.c.h.b16 %v4866
  %v5906 = vunpack.c.l.b16 %v4867
  %v5907 = vunpack.c.h.b16 %v4867
  %v5908 = vunpack.c.l.b16 %v4868
  %v5909 = vunpack.c.h.b16 %v4868
  %v5910 = vunpack.c.l.b16 %v4869
  %v5911 = vunpack.c.h.b16 %v4869
  %v5912 = vunpack.c.l.b16 %v4870
  %v5913 = vunpack.c.h.b16 %v4870
  %v5914 = vunpack.c.l.b16 %v4871
  %v5915 = vunpack.c.h.b16 %v4871
  %v5916 = vunpack.c.l.b16 %v4872
  %v5917 = vunpack.c.h.b16 %v4872
  %v5918 = vunpack.c.l.b16 %v4873
  %v5919 = vunpack.c.h.b16 %v4873
  %v5920 = vunpack.c.l.b16 %v4874
  %v5921 = vunpack.c.h.b16 %v4874
  %v5922 = vunpack.c.l.b16 %v4875
  %v5923 = vunpack.c.h.b16 %v4875
  %v5924 = vunpack.c.l.b16 %v4876
  %v5925 = vunpack.c.h.b16 %v4876
  %v5926 = vunpack.c.l.b16 %v4877
  %v5927 = vunpack.c.h.b16 %v4877
  %v5928 = vunpack.c.l.b16 %v4878
  %v5929 = vunpack.c.h.b16 %v4878
  %v5930 = vunpack.c.l.b16 %v4879
  %v5931 = vunpack.c.h.b16 %v4879
  %v5932 = vunpack.c.l.b16 %v4880
  %v5933 = vunpack.c.h.b16 %v4880
  %v5934 = vunpack.c.l.b16 %v4881
  %v5935 = vunpack.c.h.b16 %v4881
  %v5936 = vunpack.c.l.b16 %v4882
  %v5937 = vunpack.c.h.b16 %v4882
  %v5938 = vunpack.c.l.b16 %v4883
  %v5939 = vunpack.c.h.b16 %v4883
  %v5940 = vunpack.c.l.b16 %v4884
  %v5941 = vunpack.c.h.b16 %v4884
  %v5942 = vunpack.c.l.b16 %v4885
  %v5943 = vunpack.c.h.b16 %v4885
  %v5944 = vunpack.c.l.b16 %v4886
  %v5945 = vunpack.c.h.b16 %v4886
  %v5946 = vunpack.c.l.b16 %v4887
  %v5947 = vunpack.c.h.b16 %v4887
  %v5948 = vunpack.c.l.b16 %v4888
  %v5949 = vunpack.c.h.b16 %v4888
  %v5950 = vunpack.c.l.b16 %v4889
  %v5951 = vunpack.c.h.b16 %v4889
  %v5952 = vunpack.c.l.b16 %v4890
  %v5953 = vunpack.c.h.b16 %v4890
  %v5954 = vunpack.c.l.b16 %v4891
  %v5955 = vunpack.c.h.b16 %v4891
  %v5956 = vunpack.c.l.b16 %v4892
  %v5957 = vunpack.c.h.b16 %v4892
  %v5958 = vunpack.c.l.b16 %v4893
  %v5959 = vunpack.c.h.b16 %v4893
  %v5960 = vunpack.c.l.b16 %v4894
  %v5961 = vunpack.c.h.b16 %v4894
  %v5962 = vunpack.c.l.b16 %v4895
  %v5963 = vunpack.c.h.b16 %v4895
  %v5964 = vunpack.c.l.b16 %v4896
  %v5965 = vunpack.c.h.b16 %v4896
  %v5966 = vunpack.c.l.b16 %v4897
  %v5967 = vunpack.c.h.b16 %v4897
  %v5968 = vunpack.c.l.b16 %v4898
  %v5969 = vunpack.c.h.b16 %v4898
  %v5970 = vunpack.c.l.b16 %v4899
  %v5971 = vunpack.c.h.b16 %v4899
  %v5972 = vunpack.c.l.b16 %v4900
  %v5973 = vunpack.c.h.b16 %v4900
  %v5974 = vunpack.c.l.b16 %v4901
  %v5975 = vunpack.c.h.b16 %v4901
  %v5976 = vunpack.c.l.b16 %v4902
  %v5977 = vunpack.c.h.b16 %v4902
  %v5978 = vunpack.c.l.b16 %v4903
  %v5979 = vunpack.c.h.b16 %v4903
  %v5980 = vunpack.c.l.b16 %v4904
  %v5981 = vunpack.c.h.b16 %v4904
  %v5982 = vunpack.c.l.b16 %v4905
  %v5983 = vunpack.c.h.b16 %v4905
  %v5984 = vunpack.c.l.b16 %v4906
  %v5985 = vunpack.c.h.b16 %v4906
  %v5986 = vunpack.c.l.b16 %v4907
  %v5987 = vunpack.c.h.b16 %v4907
  %v5988 = vunpack.c.l.b16 %v4908
  %v5989 = vunpack.c.h.b16 %v4908
  %v5990 = vunpack.c.l.b16 %v4909
  %v5991 = vunpack.c.h.b16 %v4909
  %v5992 = vunpack.c.l.b16 %v4910
  %v5993 = vunpack.c.h.b16 %v4910
  %v5994 = vunpack.c.l.b16 %v4911
  %v5995 = vunpack.c.h.b16 %v4911
  %v5996 = vunpack.c.l.b16 %v4912
  %v5997 = vunpack.c.h.b16 %v4912
  %v5998 = vunpack.c.l.b16 %v4913
  %v5999 = vunpack.c.h.b16 %v4913
  %v6000 = vunpack.c.l.b16 %v4914
  %v6001 = vunpack.c.h.b16 %v4914
  %v6002 = vunpack.c.l.b16 %v4915
  %v6003 = vunpack.c.h.b16 %v4915
  %v6004 = vunpack.c.l.b16 %v4916
  %v6005 = vunpack.c.h.b16 %v4916
  %v6006 = vunpack.c.l.b16 %v4917
  %v6007 = vunpack.c.h.b16 %v4917
  %v6008 = vunpack.c.l.b16 %v4918
  %v6009 = vunpack.c.h.b16 %v4918
  %v6010 = vunpack.c.l.b16 %v4919
  %v6011 = vunpack.c.h.b16 %v4919
  %v6012 = vunpack.c.l.b16 %v4920
  %v6013 = vunpack.c.h.b16 %v4920
  %v6014 = vunpack.c.l.b16 %v4921
  %v6015 = vunpack.c.h.b16 %v4921
  %v6016 = vunpack.c.l.b16 %v4922
  %v6017 = vunpack.c.h.b16 %v4922
  %v6018 = vunpack.c.l.b16 %v4923
  %v6019 = vunpack.c.h.b16 %v4923
  %v6020 = vunpack.c.l.b16 %v4924
  %v6021 = vunpack.c.h.b16 %v4924
  %v6022 = vunpack.c.l.b16 %v4925
  %v6023 = vunpack.c.h.b16 %v4925
  %v6024 = vunpack.c.l.b16 %v4926
  %v6025 = vunpack.c.h.b16 %v4926
  %v6026 = vunpack.c.l.b16 %v4927
  %v6027 = vunpack.c.h.b16 %v4927
  %v6028 = vunpack.c.l.b16 %v4928
  %v6029 = vunpack.c.h.b16 %v4928
  %v6030 = vunpack.c.l.b16 %v4929
  %v6031 = vunpack.c.h.b16 %v4929
  %v6032 = vunpack.c.l.b16 %v4930
  %v6033 = vunpack.c.h.b16 %v4930
  %v6034 = vunpack.c.l.b16 %v4931
  %v6035 = vunpack.c.h.b16 %v4931
  %v6036 = vunpack.c.l.b16 %v4932
  %v6037 = vunpack.c.h.b16 %v4932
  %v6038 = vunpack.c.l.b16 %v4933
  %v6039 = vunpack.c.h.b16 %v4933
  %v6040 = vunpack.c.l.b16 %v4934
  %v6041 = vunpack.c.h.b16 %v4934
  %v6042 = vunpack.c.l.b16 %v4935
  %v6043 = vunpack.c.h.b16 %v4935
  %v6044 = vunpack.c.l.b16 %v4936
  %v6045 = vunpack.c.h.b16 %v4936
  %v6046 = vunpack.c.l.b16 %v4937
  %v6047 = vunpack.c.h.b16 %v4937
  %v6048 = vunpack.c.l.b16 %v4938
  %v6049 = vunpack.c.h.b16 %v4938
  %v6050 = vunpack.c.l.b16 %v4939
  %v6051 = vunpack.c.h.b16 %v4939
  %v6052 = vunpack.c.l.b16 %v4940
  %v6053 = vunpack.c.h.b16 %v4940
  %v6054 = vunpack.c.l.b16 %v4941
  %v6055 = vunpack.c.h.b16 %v4941
  %v6056 = vunpack.c.l.b16 %v4942
  %v6057 = vunpack.c.h.b16 %v4942
  %v6058 = vunpack.c.l.b16 %v4943
  %v6059 = vunpack.c.h.b16 %v4943
  %v6060 = vunpack.c.l.b16 %v4944
  %v6061 = vunpack.c.h.b16 %v4944
  %v6062 = vunpack.c.l.b16 %v4945
  %v6063 = vunpack.c.h.b16 %v4945
  %v6064 = vunpack.c.l.b16 %v4946
  %v6065 = vunpack.c.h.b16 %v4946
  %v6066 = vunpack.c.l.b16 %v4947
  %v6067 = vunpack.c.h.b16 %v4947
  %v6068 = vunpack.c.l.b16 %v4948
  %v6069 = vunpack.c.h.b16 %v4948
  %v6070 = vunpack.c.l.b16 %v4949
  %v6071 = vunpack.c.h.b16 %v4949
  %v6072 = vunpack.c.l.b16 %v4950
  %v6073 = vunpack.c.h.b16 %v4950
  %v6074 = vunpack.c.l.b16 %v4951
  %v6075 = vunpack.c.h.b16 %v4951
  %v6076 = vunpack.c.l.b16 %v4952
  %v6077 = vunpack.c.h.b16 %v4952
  %v6078 = vunpack.c.l.b16 %v4953
  %v6079 = vunpack.c.h.b16 %v4953
  %v6080 = vunpack.c.l.b16 %v4954
  %v6081 = vunpack.c.h.b16 %v4954
  %v6082 = vunpack.c.l.b16 %v4955
  %v6083 = vunpack.c.h.b16 %v4955
  %v6084 = vunpack.c.l.b16 %v4956
  %v6085 = vunpack.c.h.b16 %v4956
  %v6086 = vunpack.c.l.b16 %v4957
  %v6087 = vunpack.c.h.b16 %v4957
  %v6088 = vunpack.c.l.b16 %v4958
  %v6089 = vunpack.c.h.b16 %v4958
  %v6090 = vunpack.c.l.b16 %v4959
  %v6091 = vunpack.c.h.b16 %v4959
  %v6092 = vunpack.c.l.b16 %v4960
  %v6093 = vunpack.c.h.b16 %v4960
  %v6094 = vunpack.c.l.b16 %v4961
  %v6095 = vunpack.c.h.b16 %v4961
  %v6096 = vunpack.c.l.b16 %v4962
  %v6097 = vunpack.c.h.b16 %v4962
  %v6098 = vunpack.c.l.b16 %v4963
  %v6099 = vunpack.c.h.b16 %v4963
  %v6100 = vunpack.c.l.b16 %v4964
  %v6101 = vunpack.c.h.b16 %v4964
  %v6102 = vunpack.c.l.b16 %v4965
  %v6103 = vunpack.c.h.b16 %v4965
  %v6104 = vunpack.c.l.b16 %v4966
  %v6105 = vunpack.c.h.b16 %v4966
  %v6106 = vunpack.c.l.b16 %v4967
  %v6107 = vunpack.c.h.b16 %v4967
  %v6108 = vunpack.c.l.b16 %v4968
  %v6109 = vunpack.c.h.b16 %v4968
  %v6110 = vunpack.c.l.b16 %v4969
  %v6111 = vunpack.c.h.b16 %v4969
  %v6112 = vunpack.c.l.b16 %v4970
  %v6113 = vunpack.c.h.b16 %v4970
  %v6114 = vunpack.c.l.b16 %v4971
  %v6115 = vunpack.c.h.b16 %v4971
  %v6116 = vunpack.c.l.b16 %v4972
  %v6117 = vunpack.c.h.b16 %v4972
  %v6118 = vunpack.c.l.b16 %v4973
  %v6119 = vunpack.c.h.b16 %v4973
  %v6120 = vunpack.c.l.b16 %v4974
  %v6121 = vunpack.c.h.b16 %v4974
  %v6122 = vunpack.c.l.b16 %v4975
  %v6123 = vunpack.c.h.b16 %v4975
  %v6124 = vunpack.c.l.b16 %v4976
  %v6125 = vunpack.c.h.b16 %v4976
  %v6126 = vunpack.c.l.b16 %v4977
  %v6127 = vunpack.c.h.b16 %v4977
  %v6128 = vunpack.c.l.b16 %v4978
  %v6129 = vunpack.c.h.b16 %v4978
  %v6130 = vunpack.c.l.b16 %v4979
  %v6131 = vunpack.c.h.b16 %v4979
  %v6132 = vpack.c.b16 %v5368, %v5364
  %v6133 = vpack.c.b16 %v5369, %v5365
  %v6134 = vpack.c.b16 %v5370, %v5366
  %v6135 = vpack.c.b16 %v5371, %v5367
  %v6136 = vpack.c.b16 %v5376, %v5372
  %v6137 = vpack.c.b16 %v5377, %v5373
  %v6138 = vpack.c.b16 %v5378, %v5374
  %v6139 = vpack.c.b16 %v5379, %v5375
  %v6140 = vpack.c.b16 %v5384, %v5380
  %v6141 = vpack.c.b16 %v5385, %v5381
  %v6142 = vpack.c.b16 %v5386, %v5382
  %v6143 = vpack.c.b16 %v5387, %v5383
  %v6144 = vpack.c.b16 %v5392, %v5388
  %v6145 = vpack.c.b16 %v5393, %v5389
  %v6146 = vpack.c.b16 %v5394, %v5390
  %v6147 = vpack.c.b16 %v5395, %v5391
  %v6148 = vpack.c.b16 %v5400, %v5396
  %v6149 = vpack.c.b16 %v5401, %v5397
  %v6150 = vpack.c.b16 %v5402, %v5398
  %v6151 = vpack.c.b16 %v5403, %v5399
  %v6152 = vpack.c.b16 %v5408, %v5404
  %v6153 = vpack.c.b16 %v5409, %v5405
  %v6154 = vpack.c.b16 %v5410, %v5406
  %v6155 = vpack.c.b16 %v5411, %v5407
  %v6156 = vpack.c.b16 %v5416, %v5412
  %v6157 = vpack.c.b16 %v5417, %v5413
  %v6158 = vpack.c.b16 %v5418, %v5414
  %v6159 = vpack.c.b16 %v5419, %v5415
  %v6160 = vpack.c.b16 %v5424, %v5420
  %v6161 = vpack.c.b16 %v5425, %v5421
  %v6162 = vpack.c.b16 %v5426, %v5422
  %v6163 = vpack.c.b16 %v5427, %v5423
  %v6164 = vpack.c.b16 %v5432, %v5428
  %v6165 = vpack.c.b16 %v5433, %v5429
  %v6166 = vpack.c.b16 %v5434, %v5430
  %v6167 = vpack.c.b16 %v5435, %v5431
  %v6168 = vpack.c.b16 %v5440, %v5436
  %v6169 = vpack.c.b16 %v5441, %v5437
  %v6170 = vpack.c.b16 %v5442, %v5438
  %v6171 = vpack.c.b16 %v5443, %v5439
  %v6172 = vpack.c.b16 %v5448, %v5444
  %v6173 = vpack.c.b16 %v5449, %v5445
  %v6174 = vpack.c.b16 %v5450, %v5446
  %v6175 = vpack.c.b16 %v5451, %v5447
  %v6176 = vpack.c.b16 %v5456, %v5452
  %v6177 = vpack.c.b16 %v5457, %v5453
  %v6178 = vpack.c.b16 %v5458, %v5454
  %v6179 = vpack.c.b16 %v5459, %v5455
  %v6180 = vpack.c.b16 %v5464, %v5460
  %v6181 = vpack.c.b16 %v5465, %v5461
  %v6182 = vpack.c.b16 %v5466, %v5462
  %v6183 = vpack.c.b16 %v5467, %v5463
  %v6184 = vpack.c.b16 %v5472, %v5468
  %v6185 = vpack.c.b16 %v5473, %v5469
  %v6186 = vpack.c.b16 %v5474, %v5470
  %v6187 = vpack.c.b16 %v5475, %v5471
  %v6188 = vpack.c.b16 %v5480, %v5476
  %v6189 = vpack.c.b16 %v5481, %v5477
  %v6190 = vpack.c.b16 %v5482, %v5478
  %v6191 = vpack.c.b16 %v5483, %v5479
  %v6192 = vpack.c.b16 %v5488, %v5484
  %v6193 = vpack.c.b16 %v5489, %v5485
  %v6194 = vpack.c.b16 %v5490, %v5486
  %v6195 = vpack.c.b16 %v5491, %v5487
  %v6196 = vpack.c.b16 %v5496, %v5492
  %v6197 = vpack.c.b16 %v5497, %v5493
  %v6198 = vpack.c.b16 %v5498, %v5494
  %v6199 = vpack.c.b16 %v5499, %v5495
  %v6200 = vpack.c.b16 %v5504, %v5500
  %v6201 = vpack.c.b16 %v5505, %v5501
  %v6202 = vpack.c.b16 %v5506, %v5502
  %v6203 = vpack.c.b16 %v5507, %v5503
  %v6204 = vpack.c.b16 %v5512, %v5508
  %v6205 = vpack.c.b16 %v5513, %v5509
  %v6206 = vpack.c.b16 %v5514, %v5510
  %v6207 = vpack.c.b16 %v5515, %v5511
  %v6208 = vpack.c.b16 %v5520, %v5516
  %v6209 = vpack.c.b16 %v5521, %v5517
  %v6210 = vpack.c.b16 %v5522, %v5518
  %v6211 = vpack.c.b16 %v5523, %v5519
  %v6212 = vpack.c.b16 %v5528, %v5524
  %v6213 = vpack.c.b16 %v5529, %v5525
  %v6214 = vpack.c.b16 %v5530, %v5526
  %v6215 = vpack.c.b16 %v5531, %v5527
  %v6216 = vpack.c.b16 %v5536, %v5532
  %v6217 = vpack.c.b16 %v5537, %v5533
  %v6218 = vpack.c.b16 %v5538, %v5534
  %v6219 = vpack.c.b16 %v5539, %v5535
  %v6220 = vpack.c.b16 %v5544, %v5540
  %v6221 = vpack.c.b16 %v5545, %v5541
  %v6222 = vpack.c.b16 %v5546, %v5542
  %v6223 = vpack.c.b16 %v5547, %v5543
  %v6224 = vpack.c.b16 %v5552, %v5548
  %v6225 = vpack.c.b16 %v5553, %v5549
  %v6226 = vpack.c.b16 %v5554, %v5550
  %v6227 = vpack.c.b16 %v5555, %v5551
  %v6228 = vpack.c.b16 %v5560, %v5556
  %v6229 = vpack.c.b16 %v5561, %v5557
  %v6230 = vpack.c.b16 %v5562, %v5558
  %v6231 = vpack.c.b16 %v5563, %v5559
  %v6232 = vpack.c.b16 %v5568, %v5564
  %v6233 = vpack.c.b16 %v5569, %v5565
  %v6234 = vpack.c.b16 %v5570, %v5566
  %v6235 = vpack.c.b16 %v5571, %v5567
  %v6236 = vpack.c.b16 %v5576, %v5572
  %v6237 = vpack.c.b16 %v5577, %v5573
  %v6238 = vpack.c.b16 %v5578, %v5574
  %v6239 = vpack.c.b16 %v5579, %v5575
  %v6240 = vpack.c.b16 %v5584, %v5580
  %v6241 = vpack.c.b16 %v5585, %v5581
  %v6242 = vpack.c.b16 %v5586, %v5582
  %v6243 = vpack.c.b16 %v5587, %v5583
  %v6244 = vpack.c.b16 %v5592, %v5588
  %v6245 = vpack.c.b16 %v5593, %v5589
  %v6246 = vpack.c.b16 %v5594, %v5590
  %v6247 = vpack.c.b16 %v5595, %v5591
  %v6248 = vpack.c.b16 %v5600, %v5596
  %v6249 = vpack.c.b16 %v5601, %v5597
  %v6250 = vpack.c.b16 %v5602, %v5598
  %v6251 = vpack.c.b16 %v5603, %v5599
  %v6252 = vpack.c.b16 %v5608, %v5604
  %v6253 = vpack.c.b16 %v5609, %v5605
  %v6254 = vpack.c.b16 %v5610, %v5606
  %v6255 = vpack.c.b16 %v5611, %v5607
  %v6256 = vpack.c.b16 %v5616, %v5612
  %v6257 = vpack.c.b16 %v5617, %v5613
  %v6258 = vpack.c.b16 %v5618, %v5614
  %v6259 = vpack.c.b16 %v5619, %v5615
  %v6260 = vpack.c.b16 %v5624, %v5620
  %v6261 = vpack.c.b16 %v5625, %v5621
  %v6262 = vpack.c.b16 %v5626, %v5622
  %v6263 = vpack.c.b16 %v5627, %v5623
  %v6264 = vpack.c.b16 %v5632, %v5628
  %v6265 = vpack.c.b16 %v5633, %v5629
  %v6266 = vpack.c.b16 %v5634, %v5630
  %v6267 = vpack.c.b16 %v5635, %v5631
  %v6268 = vpack.c.b16 %v5640, %v5636
  %v6269 = vpack.c.b16 %v5641, %v5637
  %v6270 = vpack.c.b16 %v5642, %v5638
  %v6271 = vpack.c.b16 %v5643, %v5639
  %v6272 = vpack.c.b16 %v5648, %v5644
  %v6273 = vpack.c.b16 %v5649, %v5645
  %v6274 = vpack.c.b16 %v5650, %v5646
  %v6275 = vpack.c.b16 %v5651, %v5647
  %v6276 = vpack.c.b16 %v5656, %v5652
  %v6277 = vpack.c.b16 %v5657, %v5653
  %v6278 = vpack.c.b16 %v5658, %v5654
  %v6279 = vpack.c.b16 %v5659, %v5655
  %v6280 = vpack.c.b16 %v5664, %v5660
  %v6281 = vpack.c.b16 %v5665, %v5661
  %v6282 = vpack.c.b16 %v5666, %v5662
  %v6283 = vpack.c.b16 %v5667, %v5663
  %v6284 = vpack.c.b16 %v5672, %v5668
  %v6285 = vpack.c.b16 %v5673, %v5669
  %v6286 = vpack.c.b16 %v5674, %v5670
  %v6287 = vpack.c.b16 %v5675, %v5671
  %v6288 = vpack.c.b16 %v5680, %v5676
  %v6289 = vpack.c.b16 %v5681, %v5677
  %v6290 = vpack.c.b16 %v5682, %v5678
  %v6291 = vpack.c.b16 %v5683, %v5679
  %v6292 = vpack.c.b16 %v5688, %v5684
  %v6293 = vpack.c.b16 %v5689, %v5685
  %v6294 = vpack.c.b16 %v5690, %v5686
  %v6295 = vpack.c.b16 %v5691, %v5687
  %v6296 = vpack.c.b16 %v5696, %v5692
  %v6297 = vpack.c.b16 %v5697, %v5693
  %v6298 = vpack.c.b16 %v5698, %v5694
  %v6299 = vpack.c.b16 %v5699, %v5695
  %v6300 = vpack.c.b16 %v5704, %v5700
  %v6301 = vpack.c.b16 %v5705, %v5701
  %v6302 = vpack.c.b16 %v5706, %v5702
  %v6303 = vpack.c.b16 %v5707, %v5703
  %v6304 = vpack.c.b16 %v5712, %v5708
  %v6305 = vpack.c.b16 %v5713, %v5709
  %v6306 = vpack.c.b16 %v5714, %v5710
  %v6307 = vpack.c.b16 %v5715, %v5711
  %v6308 = vpack.c.b16 %v5720, %v5716
  %v6309 = vpack.c.b16 %v5721, %v5717
  %v6310 = vpack.c.b16 %v5722, %v5718
  %v6311 = vpack.c.b16 %v5723, %v5719
  %v6312 = vpack.c.b16 %v5728, %v5724
  %v6313 = vpack.c.b16 %v5729, %v5725
  %v6314 = vpack.c.b16 %v5730, %v5726
  %v6315 = vpack.c.b16 %v5731, %v5727
  %v6316 = vpack.c.b16 %v5736, %v5732
  %v6317 = vpack.c.b16 %v5737, %v5733
  %v6318 = vpack.c.b16 %v5738, %v5734
  %v6319 = vpack.c.b16 %v5739, %v5735
  %v6320 = vpack.c.b16 %v5744, %v5740
  %v6321 = vpack.c.b16 %v5745, %v5741
  %v6322 = vpack.c.b16 %v5746, %v5742
  %v6323 = vpack.c.b16 %v5747, %v5743
  %v6324 = vpack.c.b16 %v5752, %v5748
  %v6325 = vpack.c.b16 %v5753, %v5749
  %v6326 = vpack.c.b16 %v5754, %v5750
  %v6327 = vpack.c.b16 %v5755, %v5751
  %v6328 = vpack.c.b16 %v5760, %v5756
  %v6329 = vpack.c.b16 %v5761, %v5757
  %v6330 = vpack.c.b16 %v5762, %v5758
  %v6331 = vpack.c.b16 %v5763, %v5759
  %v6332 = vpack.c.b16 %v5768, %v5764
  %v6333 = vpack.c.b16 %v5769, %v5765
  %v6334 = vpack.c.b16 %v5770, %v5766
  %v6335 = vpack.c.b16 %v5771, %v5767
  %v6336 = vpack.c.b16 %v5776, %v5772
  %v6337 = vpack.c.b16 %v5777, %v5773
  %v6338 = vpack.c.b16 %v5778, %v5774
  %v6339 = vpack.c.b16 %v5779, %v5775
  %v6340 = vpack.c.b16 %v5784, %v5780
  %v6341 = vpack.c.b16 %v5785, %v5781
  %v6342 = vpack.c.b16 %v5786, %v5782
  %v6343 = vpack.c.b16 %v5787, %v5783
  %v6344 = vpack.c.b16 %v5792, %v5788
  %v6345 = vpack.c.b16 %v5793, %v5789
  %v6346 = vpack.c.b16 %v5794, %v5790
  %v6347 = vpack.c.b16 %v5795, %v5791
  %v6348 = vpack.c.b16 %v5800, %v5796
  %v6349 = vpack.c.b16 %v5801, %v5797
  %v6350 = vpack.c.b16 %v5802, %v5798
  %v6351 = vpack.c.b16 %v5803, %v5799
  %v6352 = vpack.c.b16 %v5808, %v5804
  %v6353 = vpack.c.b16 %v5809, %v5805
  %v6354 = vpack.c.b16 %v5810, %v5806
  %v6355 = vpack.c.b16 %v5811, %v5807
  %v6356 = vpack.c.b16 %v5816, %v5812
  %v6357 = vpack.c.b16 %v5817, %v5813
  %v6358 = vpack.c.b16 %v5818, %v5814
  %v6359 = vpack.c.b16 %v5819, %v5815
  %v6360 = vpack.c.b16 %v5824, %v5820
  %v6361 = vpack.c.b16 %v5825, %v5821
  %v6362 = vpack.c.b16 %v5826, %v5822
  %v6363 = vpack.c.b16 %v5827, %v5823
  %v6364 = vpack.c.b16 %v5832, %v5828
  %v6365 = vpack.c.b16 %v5833, %v5829
  %v6366 = vpack.c.b16 %v5834, %v5830
  %v6367 = vpack.c.b16 %v5835, %v5831
  %v6368 = vpack.c.b16 %v5840, %v5836
  %v6369 = vpack.c.b16 %v5841, %v5837
  %v6370 = vpack.c.b16 %v5842, %v5838
  %v6371 = vpack.c.b16 %v5843, %v5839
  %v6372 = vpack.c.b16 %v5848, %v5844
  %v6373 = vpack.c.b16 %v5849, %v5845
  %v6374 = vpack.c.b16 %v5850, %v5846
  %v6375 = vpack.c.b16 %v5851, %v5847
  %v6376 = vpack.c.b16 %v5856, %v5852
  %v6377 = vpack.c.b16 %v5857, %v5853
  %v6378 = vpack.c.b16 %v5858, %v5854
  %v6379 = vpack.c.b16 %v5859, %v5855
  %v6380 = vpack.c.b16 %v5864, %v5860
  %v6381 = vpack.c.b16 %v5865, %v5861
  %v6382 = vpack.c.b16 %v5866, %v5862
  %v6383 = vpack.c.b16 %v5867, %v5863
  %v6384 = vpack.c.b16 %v5872, %v5868
  %v6385 = vpack.c.b16 %v5873, %v5869
  %v6386 = vpack.c.b16 %v5874, %v5870
  %v6387 = vpack.c.b16 %v5875, %v5871
  %v6388 = vpack.c.b16 %v5880, %v5876
  %v6389 = vpack.c.b16 %v5881, %v5877
  %v6390 = vpack.c.b16 %v5882, %v5878
  %v6391 = vpack.c.b16 %v5883, %v5879
  %v6392 = vpack.c.b16 %v5888, %v5884
  %v6393 = vpack.c.b16 %v5889, %v5885
  %v6394 = vpack.c.b16 %v5890, %v5886
  %v6395 = vpack.c.b16 %v5891, %v5887
  %v6396 = vpack.c.b16 %v5896, %v5892
  %v6397 = vpack.c.b16 %v5897, %v5893
  %v6398 = vpack.c.b16 %v5898, %v5894
  %v6399 = vpack.c.b16 %v5899, %v5895
  %v6400 = vpack.c.b16 %v5904, %v5900
  %v6401 = vpack.c.b16 %v5905, %v5901
  %v6402 = vpack.c.b16 %v5906, %v5902
  %v6403 = vpack.c.b16 %v5907, %v5903
  %v6404 = vpack.c.b16 %v5912, %v5908
  %v6405 = vpack.c.b16 %v5913, %v5909
  %v6406 = vpack.c.b16 %v5914, %v5910
  %v6407 = vpack.c.b16 %v5915, %v5911
  %v6408 = vpack.c.b16 %v5920, %v5916
  %v6409 = vpack.c.b16 %v5921, %v5917
  %v6410 = vpack.c.b16 %v5922, %v5918
  %v6411 = vpack.c.b16 %v5923, %v5919
  %v6412 = vpack.c.b16 %v5928, %v5924
  %v6413 = vpack.c.b16 %v5929, %v5925
  %v6414 = vpack.c.b16 %v5930, %v5926
  %v6415 = vpack.c.b16 %v5931, %v5927
  %v6416 = vpack.c.b16 %v5936, %v5932
  %v6417 = vpack.c.b16 %v5937, %v5933
  %v6418 = vpack.c.b16 %v5938, %v5934
  %v6419 = vpack.c.b16 %v5939, %v5935
  %v6420 = vpack.c.b16 %v5944, %v5940
  %v6421 = vpack.c.b16 %v5945, %v5941
  %v6422 = vpack.c.b16 %v5946, %v5942
  %v6423 = vpack.c.b16 %v5947, %v5943
  %v6424 = vpack.c.b16 %v5952, %v5948
  %v6425 = vpack.c.b16 %v5953, %v5949
  %v6426 = vpack.c.b16 %v5954, %v5950
  %v6427 = vpack.c.b16 %v5955, %v5951
  %v6428 = vpack.c.b16 %v5960, %v5956
  %v6429 = vpack.c.b16 %v5961, %v5957
  %v6430 = vpack.c.b16 %v5962, %v5958
  %v6431 = vpack.c.b16 %v5963, %v5959
  %v6432 = vpack.c.b16 %v5968, %v5964
  %v6433 = vpack.c.b16 %v5969, %v5965
  %v6434 = vpack.c.b16 %v5970, %v5966
  %v6435 = vpack.c.b16 %v5971, %v5967
  %v6436 = vpack.c.b16 %v5976, %v5972
  %v6437 = vpack.c.b16 %v5977, %v5973
  %v6438 = vpack.c.b16 %v5978, %v5974
  %v6439 = vpack.c.b16 %v5979, %v5975
  %v6440 = vpack.c.b16 %v5984, %v5980
  %v6441 = vpack.c.b16 %v5985, %v5981
  %v6442 = vpack.c.b16 %v5986, %v5982
  %v6443 = vpack.c.b16 %v5987, %v5983
  %v6444 = vpack.c.b16 %v5992, %v5988
  %v6445 = vpack.c.b16 %v5993, %v5989
  %v6446 = vpack.c.b16 %v5994, %v5990
  %v6447 = vpack.c.b16 %v5995, %v5991
  %v6448 = vpack.c.b16 %v6000, %v5996
  %v6449 = vpack.c.b16 %v6001, %v5997
  %v6450 = vpack.c.b16 %v6002, %v5998
  %v6451 = vpack.c.b16 %v6003, %v5999
  %v6452 = vpack.c.b16 %v6008, %v6004
  %v6453 = vpack.c.b16 %v6009, %v6005
  %v6454 = vpack.c.b16 %v6010, %v6006
  %v6455 = vpack.c.b16 %v6011, %v6007
  %v6456 = vpack.c.b16 %v6016, %v6012
  %v6457 = vpack.c.b16 %v6017, %v6013
  %v6458 = vpack.c.b16 %v6018, %v6014
  %v6459 = vpack.c.b16 %v6019, %v6015
  %v6460 = vpack.c.b16 %v6024, %v6020
  %v6461 = vpack.c.b16 %v6025, %v6021
  %v6462 = vpack.c.b16 %v6026, %v6022
  %v6463 = vpack.c.b16 %v6027, %v6023
  %v6464 = vpack.c.b16 %v6032, %v6028
  %v6465 = vpack.c.b16 %v6033, %v6029
  %v6466 = vpack.c.b16 %v6034, %v6030
  %v6467 = vpack.c.b16 %v6035, %v6031
  %v6468 = vpack.c.b16 %v6040, %v6036
  %v6469 = vpack.c.b16 %v6041, %v6037
  %v6470 = vpack.c.b16 %v6042, %v6038
  %v6471 = vpack.c.b16 %v6043, %v6039
  %v6472 = vpack.c.b16 %v6048, %v6044
  %v6473 = vpack.c.b16 %v6049, %v6045
  %v6474 = vpack.c.b16 %v6050, %v6046
  %v6475 = vpack.c.b16 %v6051, %v6047
  %v6476 = vpack.c.b16 %v6056, %v6052
  %v6477 = vpack.c.b16 %v6057, %v6053
  %v6478 = vpack.c.b16 %v6058, %v6054
  %v6479 = vpack.c.b16 %v6059, %v6055
  %v6480 = vpack.c.b16 %v6064, %v6060
  %v6481 = vpack.c.b16 %v6065, %v6061
  %v6482 = vpack.c.b16 %v6066, %v6062
  %v6483 = vpack.c.b16 %v6067, %v6063
  %v6484 = vpack.c.b16 %v6072, %v6068
  %v6485 = vpack.c.b16 %v6073, %v6069
  %v6486 = vpack.c.b16 %v6074, %v6070
  %v6487 = vpack.c.b16 %v6075, %v6071
  %v6488 = vpack.c.b16 %v6080, %v6076
  %v6489 = vpack.c.b16 %v6081, %v6077
  %v6490 = vpack.c.b16 %v6082, %v6078
  %v6491 = vpack.c.b16 %v6083, %v6079
  %v6492 = vpack.c.b16 %v6088, %v6084
  %v6493 = vpack.c.b16 %v6089, %v6085
  %v6494 = vpack.c.b16 %v6090, %v6086
  %v6495 = vpack.c.b16 %v6091, %v6087
  %v6496 = vpack.c.b16 %v6096, %v6092
  %v6497 = vpack.c.b16 %v6097, %v6093
  %v6498 = vpack.c.b16 %v6098, %v6094
  %v6499 = vpack.c.b16 %v6099, %v6095
  %v6500 = vpack.c.b16 %v6104, %v6100
  %v6501 = vpack.c.b16 %v6105, %v6101
  %v6502 = vpack.c.b16 %v6106, %v6102
  %v6503 = vpack.c.b16 %v6107, %v6103
  %v6504 = vpack.c.b16 %v6112, %v6108
  %v6505 = vpack.c.b16 %v6113, %v6109
  %v6506 = vpack.c.b16 %v6114, %v6110
  %v6507 = vpack.c.b16 %v6115, %v6111
  %v6508 = vpack.c.b16 %v6120, %v6116
  %v6509 = vpack.c.b16 %v6121, %v6117
  %v6510 = vpack.c.b16 %v6122, %v6118
  %v6511 = vpack.c.b16 %v6123, %v6119
  %v6512 = vpack.c.b16 %v6128, %v6124
  %v6513 = vpack.c.b16 %v6129, %v6125
  %v6514 = vpack.c.b16 %v6130, %v6126
  %v6515 = vpack.c.b16 %v6131, %v6127
  %6900 = vmatpush.bf16.msra.mxu0 %v6160
  %6901 = vmatpush.bf16.msra.mxu0 %v6156
  %6902 = vmatpush.bf16.msra.mxu0 %v6152
  %6903 = vmatpush.bf16.msra.mxu0 %v6148
  %6904 = vmatpush.bf16.msra.mxu0 %v6144
  %6905 = vmatpush.bf16.msra.mxu0 %v6140
  %6906 = vmatpush.bf16.msra.mxu0 %v6136
  %6907 = vmatpush.bf16.msra.mxu0 %v6132
  %6908 = vmatmul.bf16.gmra.mxu0 %v4564
  %v6909 = vpop.f32.mrf.mxu0
  %v6910 = vadd.f32 0.0, %v6909
  %v6911 = vpop.f32.mrf.mxu0
  %v6912 = vadd.f32 0.0, %v6911
  %6913 = vdwg.mxu0
  %6914 = vmatpush.bf16.msra.mxu0 %v6192
  %6915 = vmatpush.bf16.msra.mxu0 %v6188
  %6916 = vmatpush.bf16.msra.mxu0 %v6184
  %6917 = vmatpush.bf16.msra.mxu0 %v6180
  %6918 = vmatpush.bf16.msra.mxu0 %v6176
  %6919 = vmatpush.bf16.msra.mxu0 %v6172
  %6920 = vmatpush.bf16.msra.mxu0 %v6168
  %6921 = vmatpush.bf16.msra.mxu0 %v6164
  %6922 = vmatmul.bf16.gmra.mxu0 %v4565
  %v6923 = vpop.f32.mrf.mxu0
  %v6924 = vadd.f32 %v6910, %v6923
  %v6925 = vpop.f32.mrf.mxu0
  %v6926 = vadd.f32 %v6912, %v6925
  %6927 = vdwg.mxu0
  %6928 = vmatpush.bf16.msra.mxu0 %v6224
  %6929 = vmatpush.bf16.msra.mxu0 %v6220
  %6930 = vmatpush.bf16.msra.mxu0 %v6216
  %6931 = vmatpush.bf16.msra.mxu0 %v6212
  %6932 = vmatpush.bf16.msra.mxu0 %v6208
  %6933 = vmatpush.bf16.msra.mxu0 %v6204
  %6934 = vmatpush.bf16.msra.mxu0 %v6200
  %6935 = vmatpush.bf16.msra.mxu0 %v6196
  %6936 = vmatmul.bf16.gmra.mxu0 %v4566
  %v6937 = vpop.f32.mrf.mxu0
  %v6938 = vadd.f32 %v6924, %v6937
  %v6939 = vpop.f32.mrf.mxu0
  %v6940 = vadd.f32 %v6926, %v6939
  %6941 = vdwg.mxu0
  %6942 = vmatpush.bf16.msra.mxu0 %v6256
  %6943 = vmatpush.bf16.msra.mxu0 %v6252
  %6944 = vmatpush.bf16.msra.mxu0 %v6248
  %6945 = vmatpush.bf16.msra.mxu0 %v6244
  %6946 = vmatpush.bf16.msra.mxu0 %v6240
  %6947 = vmatpush.bf16.msra.mxu0 %v6236
  %6948 = vmatpush.bf16.msra.mxu0 %v6232
  %6949 = vmatpush.bf16.msra.mxu0 %v6228
  %6950 = vmatmul.bf16.gmra.mxu0 %v4567
  %v6951 = vpop.f32.mrf.mxu0
  %v6952 = vadd.f32 %v6938, %v6951
  %v6953 = vpop.f32.mrf.mxu0
  %v6954 = vadd.f32 %v6940, %v6953
  %6955 = vdwg.mxu0
  %6956 = vmatpush.bf16.msra.mxu0 %v6288
  %6957 = vmatpush.bf16.msra.mxu0 %v6284
  %6958 = vmatpush.bf16.msra.mxu0 %v6280
  %6959 = vmatpush.bf16.msra.mxu0 %v6276
  %6960 = vmatpush.bf16.msra.mxu0 %v6272
  %6961 = vmatpush.bf16.msra.mxu0 %v6268
  %6962 = vmatpush.bf16.msra.mxu0 %v6264
  %6963 = vmatpush.bf16.msra.mxu0 %v6260
  %6964 = vmatmul.bf16.gmra.mxu0 %v4456
  %v6965 = vpop.f32.mrf.mxu0
  %v6966 = vadd.f32 %v6952, %v6965
  %v6967 = vpop.f32.mrf.mxu0
  %v6968 = vadd.f32 %v6954, %v6967
  %6969 = vdwg.mxu0
  %6970 = vmatpush.bf16.msra.mxu0 %v6320
  %6971 = vmatpush.bf16.msra.mxu0 %v6316
  %6972 = vmatpush.bf16.msra.mxu0 %v6312
  %6973 = vmatpush.bf16.msra.mxu0 %v6308
  %6974 = vmatpush.bf16.msra.mxu0 %v6304
  %6975 = vmatpush.bf16.msra.mxu0 %v6300
  %6976 = vmatpush.bf16.msra.mxu0 %v6296
  %6977 = vmatpush.bf16.msra.mxu0 %v6292
  %6978 = vmatmul.bf16.gmra.mxu0 %v4457
  %v6979 = vpop.f32.mrf.mxu0
  %v6980 = vadd.f32 %v6966, %v6979
  %v6981 = vpop.f32.mrf.mxu0
  %v6982 = vadd.f32 %v6968, %v6981
  %6983 = vdwg.mxu0
  %6984 = vmatpush.bf16.msra.mxu0 %v6352
  %6985 = vmatpush.bf16.msra.mxu0 %v6348
  %6986 = vmatpush.bf16.msra.mxu0 %v6344
  %6987 = vmatpush.bf16.msra.mxu0 %v6340
  %6988 = vmatpush.bf16.msra.mxu0 %v6336
  %6989 = vmatpush.bf16.msra.mxu0 %v6332
  %6990 = vmatpush.bf16.msra.mxu0 %v6328
  %6991 = vmatpush.bf16.msra.mxu0 %v6324
  %6992 = vmatmul.bf16.gmra.mxu0 %v4458
  %v6993 = vpop.f32.mrf.mxu0
  %v6994 = vadd.f32 %v6980, %v6993
  %v6995 = vpop.f32.mrf.mxu0
  %v6996 = vadd.f32 %v6982, %v6995
  %6997 = vdwg.mxu0
  %6998 = vmatpush.bf16.msra.mxu0 %v6384
  %6999 = vmatpush.bf16.msra.mxu0 %v6380
  %7000 = vmatpush.bf16.msra.mxu0 %v6376
  %7001 = vmatpush.bf16.msra.mxu0 %v6372
  %7002 = vmatpush.bf16.msra.mxu0 %v6368
  %7003 = vmatpush.bf16.msra.mxu0 %v6364
  %7004 = vmatpush.bf16.msra.mxu0 %v6360
  %7005 = vmatpush.bf16.msra.mxu0 %v6356
  %7006 = vmatmul.bf16.gmra.mxu0 %v4459
  %v7007 = vpop.f32.mrf.mxu0
  %v7008 = vadd.f32 %v6994, %v7007
  %v7009 = vpop.f32.mrf.mxu0
  %v7010 = vadd.f32 %v6996, %v7009
  %7011 = vdwg.mxu0
  %7012 = vmatpush.bf16.msra.mxu0 %v6416
  %7013 = vmatpush.bf16.msra.mxu0 %v6412
  %7014 = vmatpush.bf16.msra.mxu0 %v6408
  %7015 = vmatpush.bf16.msra.mxu0 %v6404
  %7016 = vmatpush.bf16.msra.mxu0 %v6400
  %7017 = vmatpush.bf16.msra.mxu0 %v6396
  %7018 = vmatpush.bf16.msra.mxu0 %v6392
  %7019 = vmatpush.bf16.msra.mxu0 %v6388
  %7020 = vmatmul.bf16.gmra.mxu0 %v4588
  %v7021 = vpop.f32.mrf.mxu0
  %v7022 = vadd.f32 %v7008, %v7021
  %v7023 = vpop.f32.mrf.mxu0
  %v7024 = vadd.f32 %v7010, %v7023
  %7025 = vdwg.mxu0
  %7026 = vmatpush.bf16.msra.mxu0 %v6448
  %7027 = vmatpush.bf16.msra.mxu0 %v6444
  %7028 = vmatpush.bf16.msra.mxu0 %v6440
  %7029 = vmatpush.bf16.msra.mxu0 %v6436
  %7030 = vmatpush.bf16.msra.mxu0 %v6432
  %7031 = vmatpush.bf16.msra.mxu0 %v6428
  %7032 = vmatpush.bf16.msra.mxu0 %v6424
  %7033 = vmatpush.bf16.msra.mxu0 %v6420
  %7034 = vmatmul.bf16.gmra.mxu0 %v4589
  %v7035 = vpop.f32.mrf.mxu0
  %v7036 = vadd.f32 %v7022, %v7035
  %v7037 = vpop.f32.mrf.mxu0
  %v7038 = vadd.f32 %v7024, %v7037
  %7039 = vdwg.mxu0
  %7040 = vmatpush.bf16.msra.mxu0 %v6480
  %7041 = vmatpush.bf16.msra.mxu0 %v6476
  %7042 = vmatpush.bf16.msra.mxu0 %v6472
  %7043 = vmatpush.bf16.msra.mxu0 %v6468
  %7044 = vmatpush.bf16.msra.mxu0 %v6464
  %7045 = vmatpush.bf16.msra.mxu0 %v6460
  %7046 = vmatpush.bf16.msra.mxu0 %v6456
  %7047 = vmatpush.bf16.msra.mxu0 %v6452
  %7048 = vmatmul.bf16.gmra.mxu0 %v4590
  %v7049 = vpop.f32.mrf.mxu0
  %v7050 = vadd.f32 %v7036, %v7049
  %v7051 = vpop.f32.mrf.mxu0
  %v7052 = vadd.f32 %v7038, %v7051
  %7053 = vdwg.mxu0
  %7054 = vmatpush.bf16.msra.mxu0 %v6512
  %7055 = vmatpush.bf16.msra.mxu0 %v6508
  %7056 = vmatpush.bf16.msra.mxu0 %v6504
  %7057 = vmatpush.bf16.msra.mxu0 %v6500
  %7058 = vmatpush.bf16.msra.mxu0 %v6496
  %7059 = vmatpush.bf16.msra.mxu0 %v6492
  %7060 = vmatpush.bf16.msra.mxu0 %v6488
  %7061 = vmatpush.bf16.msra.mxu0 %v6484
  %7062 = vmatmul.bf16.gmra.mxu0 %v4591
  %v7063 = vpop.f32.mrf.mxu0
  %v7064 = vadd.f32 %v7050, %v7063
  %v7065 = vpop.f32.mrf.mxu0
  %v7066 = vadd.f32 %v7052, %v7065
  %7067 = vdwg.mxu0
  %7068 = vmatpush.bf16.msra.mxu0 %v6161
  %7069 = vmatpush.bf16.msra.mxu0 %v6157
  %7070 = vmatpush.bf16.msra.mxu0 %v6153
  %7071 = vmatpush.bf16.msra.mxu0 %v6149
  %7072 = vmatpush.bf16.msra.mxu0 %v6145
  %7073 = vmatpush.bf16.msra.mxu0 %v6141
  %7074 = vmatpush.bf16.msra.mxu0 %v6137
  %7075 = vmatpush.bf16.msra.mxu0 %v6133
  %7076 = vmatmul.bf16.gmra.mxu0 %v4564
  %v7077 = vpop.f32.mrf.mxu0
  %v7078 = vadd.f32 0.0, %v7077
  %v7079 = vpop.f32.mrf.mxu0
  %v7080 = vadd.f32 0.0, %v7079
  %7081 = vdwg.mxu0
  %7082 = vmatpush.bf16.msra.mxu0 %v6193
  %7083 = vmatpush.bf16.msra.mxu0 %v6189
  %7084 = vmatpush.bf16.msra.mxu0 %v6185
  %7085 = vmatpush.bf16.msra.mxu0 %v6181
  %7086 = vmatpush.bf16.msra.mxu0 %v6177
  %7087 = vmatpush.bf16.msra.mxu0 %v6173
  %7088 = vmatpush.bf16.msra.mxu0 %v6169
  %7089 = vmatpush.bf16.msra.mxu0 %v6165
  %7090 = vmatmul.bf16.gmra.mxu0 %v4565
  %v7091 = vpop.f32.mrf.mxu0
  %v7092 = vadd.f32 %v7078, %v7091
  %v7093 = vpop.f32.mrf.mxu0
  %v7094 = vadd.f32 %v7080, %v7093
  %7095 = vdwg.mxu0
  %7096 = vmatpush.bf16.msra.mxu0 %v6225
  %7097 = vmatpush.bf16.msra.mxu0 %v6221
  %7098 = vmatpush.bf16.msra.mxu0 %v6217
  %7099 = vmatpush.bf16.msra.mxu0 %v6213
  %7100 = vmatpush.bf16.msra.mxu0 %v6209
  %7101 = vmatpush.bf16.msra.mxu0 %v6205
  %7102 = vmatpush.bf16.msra.mxu0 %v6201
  %7103 = vmatpush.bf16.msra.mxu0 %v6197
  %7104 = vmatmul.bf16.gmra.mxu0 %v4566
  %v7105 = vpop.f32.mrf.mxu0
  %v7106 = vadd.f32 %v7092, %v7105
  %v7107 = vpop.f32.mrf.mxu0
  %v7108 = vadd.f32 %v7094, %v7107
  %7109 = vdwg.mxu0
  %7110 = vmatpush.bf16.msra.mxu0 %v6257
  %7111 = vmatpush.bf16.msra.mxu0 %v6253
  %7112 = vmatpush.bf16.msra.mxu0 %v6249
  %7113 = vmatpush.bf16.msra.mxu0 %v6245
  %7114 = vmatpush.bf16.msra.mxu0 %v6241
  %7115 = vmatpush.bf16.msra.mxu0 %v6237
  %7116 = vmatpush.bf16.msra.mxu0 %v6233
  %7117 = vmatpush.bf16.msra.mxu0 %v6229
  %7118 = vmatmul.bf16.gmra.mxu0 %v4567
  %v7119 = vpop.f32.mrf.mxu0
  %v7120 = vadd.f32 %v7106, %v7119
  %v7121 = vpop.f32.mrf.mxu0
  %v7122 = vadd.f32 %v7108, %v7121
  %7123 = vdwg.mxu0
  %7124 = vmatpush.bf16.msra.mxu0 %v6289
  %7125 = vmatpush.bf16.msra.mxu0 %v6285
  %7126 = vmatpush.bf16.msra.mxu0 %v6281
  %7127 = vmatpush.bf16.msra.mxu0 %v6277
  %7128 = vmatpush.bf16.msra.mxu0 %v6273
  %7129 = vmatpush.bf16.msra.mxu0 %v6269
  %7130 = vmatpush.bf16.msra.mxu0 %v6265
  %7131 = vmatpush.bf16.msra.mxu0 %v6261
  %7132 = vmatmul.bf16.gmra.mxu0 %v4456
  %v7133 = vpop.f32.mrf.mxu0
  %v7134 = vadd.f32 %v7120, %v7133
  %v7135 = vpop.f32.mrf.mxu0
  %v7136 = vadd.f32 %v7122, %v7135
  %7137 = vdwg.mxu0
  %7138 = vmatpush.bf16.msra.mxu0 %v6321
  %7139 = vmatpush.bf16.msra.mxu0 %v6317
  %7140 = vmatpush.bf16.msra.mxu0 %v6313
  %7141 = vmatpush.bf16.msra.mxu0 %v6309
  %7142 = vmatpush.bf16.msra.mxu0 %v6305
  %7143 = vmatpush.bf16.msra.mxu0 %v6301
  %7144 = vmatpush.bf16.msra.mxu0 %v6297
  %7145 = vmatpush.bf16.msra.mxu0 %v6293
  %7146 = vmatmul.bf16.gmra.mxu0 %v4457
  %v7147 = vpop.f32.mrf.mxu0
  %v7148 = vadd.f32 %v7134, %v7147
  %v7149 = vpop.f32.mrf.mxu0
  %v7150 = vadd.f32 %v7136, %v7149
  %7151 = vdwg.mxu0
  %7152 = vmatpush.bf16.msra.mxu0 %v6353
  %7153 = vmatpush.bf16.msra.mxu0 %v6349
  %7154 = vmatpush.bf16.msra.mxu0 %v6345
  %7155 = vmatpush.bf16.msra.mxu0 %v6341
  %7156 = vmatpush.bf16.msra.mxu0 %v6337
  %7157 = vmatpush.bf16.msra.mxu0 %v6333
  %7158 = vmatpush.bf16.msra.mxu0 %v6329
  %7159 = vmatpush.bf16.msra.mxu0 %v6325
  %7160 = vmatmul.bf16.gmra.mxu0 %v4458
  %v7161 = vpop.f32.mrf.mxu0
  %v7162 = vadd.f32 %v7148, %v7161
  %v7163 = vpop.f32.mrf.mxu0
  %v7164 = vadd.f32 %v7150, %v7163
  %7165 = vdwg.mxu0
  %7166 = vmatpush.bf16.msra.mxu0 %v6385
  %7167 = vmatpush.bf16.msra.mxu0 %v6381
  %7168 = vmatpush.bf16.msra.mxu0 %v6377
  %7169 = vmatpush.bf16.msra.mxu0 %v6373
  %7170 = vmatpush.bf16.msra.mxu0 %v6369
  %7171 = vmatpush.bf16.msra.mxu0 %v6365
  %7172 = vmatpush.bf16.msra.mxu0 %v6361
  %7173 = vmatpush.bf16.msra.mxu0 %v6357
  %7174 = vmatmul.bf16.gmra.mxu0 %v4459
  %v7175 = vpop.f32.mrf.mxu0
  %v7176 = vadd.f32 %v7162, %v7175
  %v7177 = vpop.f32.mrf.mxu0
  %v7178 = vadd.f32 %v7164, %v7177
  %7179 = vdwg.mxu0
  %7180 = vmatpush.bf16.msra.mxu0 %v6417
  %7181 = vmatpush.bf16.msra.mxu0 %v6413
  %7182 = vmatpush.bf16.msra.mxu0 %v6409
  %7183 = vmatpush.bf16.msra.mxu0 %v6405
  %7184 = vmatpush.bf16.msra.mxu0 %v6401
  %7185 = vmatpush.bf16.msra.mxu0 %v6397
  %7186 = vmatpush.bf16.msra.mxu0 %v6393
  %7187 = vmatpush.bf16.msra.mxu0 %v6389
  %7188 = vmatmul.bf16.gmra.mxu0 %v4588
  %v7189 = vpop.f32.mrf.mxu0
  %v7190 = vadd.f32 %v7176, %v7189
  %v7191 = vpop.f32.mrf.mxu0
  %v7192 = vadd.f32 %v7178, %v7191
  %7193 = vdwg.mxu0
  %7194 = vmatpush.bf16.msra.mxu0 %v6449
  %7195 = vmatpush.bf16.msra.mxu0 %v6445
  %7196 = vmatpush.bf16.msra.mxu0 %v6441
  %7197 = vmatpush.bf16.msra.mxu0 %v6437
  %7198 = vmatpush.bf16.msra.mxu0 %v6433
  %7199 = vmatpush.bf16.msra.mxu0 %v6429
  %7200 = vmatpush.bf16.msra.mxu0 %v6425
  %7201 = vmatpush.bf16.msra.mxu0 %v6421
  %7202 = vmatmul.bf16.gmra.mxu0 %v4589
  %v7203 = vpop.f32.mrf.mxu0
  %v7204 = vadd.f32 %v7190, %v7203
  %v7205 = vpop.f32.mrf.mxu0
  %v7206 = vadd.f32 %v7192, %v7205
  %7207 = vdwg.mxu0
  %7208 = vmatpush.bf16.msra.mxu0 %v6481
  %7209 = vmatpush.bf16.msra.mxu0 %v6477
  %7210 = vmatpush.bf16.msra.mxu0 %v6473
  %7211 = vmatpush.bf16.msra.mxu0 %v6469
  %7212 = vmatpush.bf16.msra.mxu0 %v6465
  %7213 = vmatpush.bf16.msra.mxu0 %v6461
  %7214 = vmatpush.bf16.msra.mxu0 %v6457
  %7215 = vmatpush.bf16.msra.mxu0 %v6453
  %7216 = vmatmul.bf16.gmra.mxu0 %v4590
  %v7217 = vpop.f32.mrf.mxu0
  %v7218 = vadd.f32 %v7204, %v7217
  %v7219 = vpop.f32.mrf.mxu0
  %v7220 = vadd.f32 %v7206, %v7219
  %7221 = vdwg.mxu0
  %7222 = vmatpush.bf16.msra.mxu0 %v6513
  %7223 = vmatpush.bf16.msra.mxu0 %v6509
  %7224 = vmatpush.bf16.msra.mxu0 %v6505
  %7225 = vmatpush.bf16.msra.mxu0 %v6501
  %7226 = vmatpush.bf16.msra.mxu0 %v6497
  %7227 = vmatpush.bf16.msra.mxu0 %v6493
  %7228 = vmatpush.bf16.msra.mxu0 %v6489
  %7229 = vmatpush.bf16.msra.mxu0 %v6485
  %7230 = vmatmul.bf16.gmra.mxu0 %v4591
  %v7231 = vpop.f32.mrf.mxu0
  %v7232 = vadd.f32 %v7218, %v7231
  %v7233 = vpop.f32.mrf.mxu0
  %v7234 = vadd.f32 %v7220, %v7233
  %7235 = vdwg.mxu0
  %7236 = vmatpush.bf16.msra.mxu0 %v6162
  %7237 = vmatpush.bf16.msra.mxu0 %v6158
  %7238 = vmatpush.bf16.msra.mxu0 %v6154
  %7239 = vmatpush.bf16.msra.mxu0 %v6150
  %7240 = vmatpush.bf16.msra.mxu0 %v6146
  %7241 = vmatpush.bf16.msra.mxu0 %v6142
  %7242 = vmatpush.bf16.msra.mxu0 %v6138
  %7243 = vmatpush.bf16.msra.mxu0 %v6134
  %7244 = vmatmul.bf16.gmra.mxu0 %v4564
  %v7245 = vpop.f32.mrf.mxu0
  %v7246 = vadd.f32 0.0, %v7245
  %v7247 = vpop.f32.mrf.mxu0
  %v7248 = vadd.f32 0.0, %v7247
  %7249 = vdwg.mxu0
  %7250 = vmatpush.bf16.msra.mxu0 %v6194
  %7251 = vmatpush.bf16.msra.mxu0 %v6190
  %7252 = vmatpush.bf16.msra.mxu0 %v6186
  %7253 = vmatpush.bf16.msra.mxu0 %v6182
  %7254 = vmatpush.bf16.msra.mxu0 %v6178
  %7255 = vmatpush.bf16.msra.mxu0 %v6174
  %7256 = vmatpush.bf16.msra.mxu0 %v6170
  %7257 = vmatpush.bf16.msra.mxu0 %v6166
  %7258 = vmatmul.bf16.gmra.mxu0 %v4565
  %v7259 = vpop.f32.mrf.mxu0
  %v7260 = vadd.f32 %v7246, %v7259
  %v7261 = vpop.f32.mrf.mxu0
  %v7262 = vadd.f32 %v7248, %v7261
  %7263 = vdwg.mxu0
  %7264 = vmatpush.bf16.msra.mxu0 %v6226
  %7265 = vmatpush.bf16.msra.mxu0 %v6222
  %7266 = vmatpush.bf16.msra.mxu0 %v6218
  %7267 = vmatpush.bf16.msra.mxu0 %v6214
  %7268 = vmatpush.bf16.msra.mxu0 %v6210
  %7269 = vmatpush.bf16.msra.mxu0 %v6206
  %7270 = vmatpush.bf16.msra.mxu0 %v6202
  %7271 = vmatpush.bf16.msra.mxu0 %v6198
  %7272 = vmatmul.bf16.gmra.mxu0 %v4566
  %v7273 = vpop.f32.mrf.mxu0
  %v7274 = vadd.f32 %v7260, %v7273
  %v7275 = vpop.f32.mrf.mxu0
  %v7276 = vadd.f32 %v7262, %v7275
  %7277 = vdwg.mxu0
  %7278 = vmatpush.bf16.msra.mxu0 %v6258
  %7279 = vmatpush.bf16.msra.mxu0 %v6254
  %7280 = vmatpush.bf16.msra.mxu0 %v6250
  %7281 = vmatpush.bf16.msra.mxu0 %v6246
  %7282 = vmatpush.bf16.msra.mxu0 %v6242
  %7283 = vmatpush.bf16.msra.mxu0 %v6238
  %7284 = vmatpush.bf16.msra.mxu0 %v6234
  %7285 = vmatpush.bf16.msra.mxu0 %v6230
  %7286 = vmatmul.bf16.gmra.mxu0 %v4567
  %v7287 = vpop.f32.mrf.mxu0
  %v7288 = vadd.f32 %v7274, %v7287
  %v7289 = vpop.f32.mrf.mxu0
  %v7290 = vadd.f32 %v7276, %v7289
  %7291 = vdwg.mxu0
  %7292 = vmatpush.bf16.msra.mxu0 %v6290
  %7293 = vmatpush.bf16.msra.mxu0 %v6286
  %7294 = vmatpush.bf16.msra.mxu0 %v6282
  %7295 = vmatpush.bf16.msra.mxu0 %v6278
  %7296 = vmatpush.bf16.msra.mxu0 %v6274
  %7297 = vmatpush.bf16.msra.mxu0 %v6270
  %7298 = vmatpush.bf16.msra.mxu0 %v6266
  %7299 = vmatpush.bf16.msra.mxu0 %v6262
  %7300 = vmatmul.bf16.gmra.mxu0 %v4456
  %v7301 = vpop.f32.mrf.mxu0
  %v7302 = vadd.f32 %v7288, %v7301
  %v7303 = vpop.f32.mrf.mxu0
  %v7304 = vadd.f32 %v7290, %v7303
  %7305 = vdwg.mxu0
  %7306 = vmatpush.bf16.msra.mxu0 %v6322
  %7307 = vmatpush.bf16.msra.mxu0 %v6318
  %7308 = vmatpush.bf16.msra.mxu0 %v6314
  %7309 = vmatpush.bf16.msra.mxu0 %v6310
  %7310 = vmatpush.bf16.msra.mxu0 %v6306
  %7311 = vmatpush.bf16.msra.mxu0 %v6302
  %7312 = vmatpush.bf16.msra.mxu0 %v6298
  %7313 = vmatpush.bf16.msra.mxu0 %v6294
  %7314 = vmatmul.bf16.gmra.mxu0 %v4457
  %v7315 = vpop.f32.mrf.mxu0
  %v7316 = vadd.f32 %v7302, %v7315
  %v7317 = vpop.f32.mrf.mxu0
  %v7318 = vadd.f32 %v7304, %v7317
  %7319 = vdwg.mxu0
  %7320 = vmatpush.bf16.msra.mxu0 %v6354
  %7321 = vmatpush.bf16.msra.mxu0 %v6350
  %7322 = vmatpush.bf16.msra.mxu0 %v6346
  %7323 = vmatpush.bf16.msra.mxu0 %v6342
  %7324 = vmatpush.bf16.msra.mxu0 %v6338
  %7325 = vmatpush.bf16.msra.mxu0 %v6334
  %7326 = vmatpush.bf16.msra.mxu0 %v6330
  %7327 = vmatpush.bf16.msra.mxu0 %v6326
  %7328 = vmatmul.bf16.gmra.mxu0 %v4458
  %v7329 = vpop.f32.mrf.mxu0
  %v7330 = vadd.f32 %v7316, %v7329
  %v7331 = vpop.f32.mrf.mxu0
  %v7332 = vadd.f32 %v7318, %v7331
  %7333 = vdwg.mxu0
  %7334 = vmatpush.bf16.msra.mxu0 %v6386
  %7335 = vmatpush.bf16.msra.mxu0 %v6382
  %7336 = vmatpush.bf16.msra.mxu0 %v6378
  %7337 = vmatpush.bf16.msra.mxu0 %v6374
  %7338 = vmatpush.bf16.msra.mxu0 %v6370
  %7339 = vmatpush.bf16.msra.mxu0 %v6366
  %7340 = vmatpush.bf16.msra.mxu0 %v6362
  %7341 = vmatpush.bf16.msra.mxu0 %v6358
  %7342 = vmatmul.bf16.gmra.mxu0 %v4459
  %v7343 = vpop.f32.mrf.mxu0
  %v7344 = vadd.f32 %v7330, %v7343
  %v7345 = vpop.f32.mrf.mxu0
  %v7346 = vadd.f32 %v7332, %v7345
  %7347 = vdwg.mxu0
  %7348 = vmatpush.bf16.msra.mxu0 %v6418
  %7349 = vmatpush.bf16.msra.mxu0 %v6414
  %7350 = vmatpush.bf16.msra.mxu0 %v6410
  %7351 = vmatpush.bf16.msra.mxu0 %v6406
  %7352 = vmatpush.bf16.msra.mxu0 %v6402
  %7353 = vmatpush.bf16.msra.mxu0 %v6398
  %7354 = vmatpush.bf16.msra.mxu0 %v6394
  %7355 = vmatpush.bf16.msra.mxu0 %v6390
  %7356 = vmatmul.bf16.gmra.mxu0 %v4588
  %v7357 = vpop.f32.mrf.mxu0
  %v7358 = vadd.f32 %v7344, %v7357
  %v7359 = vpop.f32.mrf.mxu0
  %v7360 = vadd.f32 %v7346, %v7359
  %7361 = vdwg.mxu0
  %7362 = vmatpush.bf16.msra.mxu0 %v6450
  %7363 = vmatpush.bf16.msra.mxu0 %v6446
  %7364 = vmatpush.bf16.msra.mxu0 %v6442
  %7365 = vmatpush.bf16.msra.mxu0 %v6438
  %7366 = vmatpush.bf16.msra.mxu0 %v6434
  %7367 = vmatpush.bf16.msra.mxu0 %v6430
  %7368 = vmatpush.bf16.msra.mxu0 %v6426
  %7369 = vmatpush.bf16.msra.mxu0 %v6422
  %7370 = vmatmul.bf16.gmra.mxu0 %v4589
  %v7371 = vpop.f32.mrf.mxu0
  %v7372 = vadd.f32 %v7358, %v7371
  %v7373 = vpop.f32.mrf.mxu0
  %v7374 = vadd.f32 %v7360, %v7373
  %7375 = vdwg.mxu0
  %7376 = vmatpush.bf16.msra.mxu0 %v6482
  %7377 = vmatpush.bf16.msra.mxu0 %v6478
  %7378 = vmatpush.bf16.msra.mxu0 %v6474
  %7379 = vmatpush.bf16.msra.mxu0 %v6470
  %7380 = vmatpush.bf16.msra.mxu0 %v6466
  %7381 = vmatpush.bf16.msra.mxu0 %v6462
  %7382 = vmatpush.bf16.msra.mxu0 %v6458
  %7383 = vmatpush.bf16.msra.mxu0 %v6454
  %7384 = vmatmul.bf16.gmra.mxu0 %v4590
  %v7385 = vpop.f32.mrf.mxu0
  %v7386 = vadd.f32 %v7372, %v7385
  %v7387 = vpop.f32.mrf.mxu0
  %v7388 = vadd.f32 %v7374, %v7387
  %7389 = vdwg.mxu0
  %7390 = vmatpush.bf16.msra.mxu0 %v6514
  %7391 = vmatpush.bf16.msra.mxu0 %v6510
  %7392 = vmatpush.bf16.msra.mxu0 %v6506
  %7393 = vmatpush.bf16.msra.mxu0 %v6502
  %7394 = vmatpush.bf16.msra.mxu0 %v6498
  %7395 = vmatpush.bf16.msra.mxu0 %v6494
  %7396 = vmatpush.bf16.msra.mxu0 %v6490
  %7397 = vmatpush.bf16.msra.mxu0 %v6486
  %7398 = vmatmul.bf16.gmra.mxu0 %v4591
  %v7399 = vpop.f32.mrf.mxu0
  %v7400 = vadd.f32 %v7386, %v7399
  %v7401 = vpop.f32.mrf.mxu0
  %v7402 = vadd.f32 %v7388, %v7401
  %7403 = vdwg.mxu0
  %7404 = vmatpush.bf16.msra.mxu0 %v6163
  %7405 = vmatpush.bf16.msra.mxu0 %v6159
  %7406 = vmatpush.bf16.msra.mxu0 %v6155
  %7407 = vmatpush.bf16.msra.mxu0 %v6151
  %7408 = vmatpush.bf16.msra.mxu0 %v6147
  %7409 = vmatpush.bf16.msra.mxu0 %v6143
  %7410 = vmatpush.bf16.msra.mxu0 %v6139
  %7411 = vmatpush.bf16.msra.mxu0 %v6135
  %7412 = vmatmul.bf16.gmra.mxu0 %v4564
  %v7413 = vpop.f32.mrf.mxu0
  %v7414 = vadd.f32 0.0, %v7413
  %v7415 = vpop.f32.mrf.mxu0
  %v7416 = vadd.f32 0.0, %v7415
  %7417 = vdwg.mxu0
  %7418 = vmatpush.bf16.msra.mxu0 %v6195
  %7419 = vmatpush.bf16.msra.mxu0 %v6191
  %7420 = vmatpush.bf16.msra.mxu0 %v6187
  %7421 = vmatpush.bf16.msra.mxu0 %v6183
  %7422 = vmatpush.bf16.msra.mxu0 %v6179
  %7423 = vmatpush.bf16.msra.mxu0 %v6175
  %7424 = vmatpush.bf16.msra.mxu0 %v6171
  %7425 = vmatpush.bf16.msra.mxu0 %v6167
  %7426 = vmatmul.bf16.gmra.mxu0 %v4565
  %v7427 = vpop.f32.mrf.mxu0
  %v7428 = vadd.f32 %v7414, %v7427
  %v7429 = vpop.f32.mrf.mxu0
  %v7430 = vadd.f32 %v7416, %v7429
  %7431 = vdwg.mxu0
  %7432 = vmatpush.bf16.msra.mxu0 %v6227
  %7433 = vmatpush.bf16.msra.mxu0 %v6223
  %7434 = vmatpush.bf16.msra.mxu0 %v6219
  %7435 = vmatpush.bf16.msra.mxu0 %v6215
  %7436 = vmatpush.bf16.msra.mxu0 %v6211
  %7437 = vmatpush.bf16.msra.mxu0 %v6207
  %7438 = vmatpush.bf16.msra.mxu0 %v6203
  %7439 = vmatpush.bf16.msra.mxu0 %v6199
  %7440 = vmatmul.bf16.gmra.mxu0 %v4566
  %v7441 = vpop.f32.mrf.mxu0
  %v7442 = vadd.f32 %v7428, %v7441
  %v7443 = vpop.f32.mrf.mxu0
  %v7444 = vadd.f32 %v7430, %v7443
  %7445 = vdwg.mxu0
  %7446 = vmatpush.bf16.msra.mxu0 %v6259
  %7447 = vmatpush.bf16.msra.mxu0 %v6255
  %7448 = vmatpush.bf16.msra.mxu0 %v6251
  %7449 = vmatpush.bf16.msra.mxu0 %v6247
  %7450 = vmatpush.bf16.msra.mxu0 %v6243
  %7451 = vmatpush.bf16.msra.mxu0 %v6239
  %7452 = vmatpush.bf16.msra.mxu0 %v6235
  %7453 = vmatpush.bf16.msra.mxu0 %v6231
  %7454 = vmatmul.bf16.gmra.mxu0 %v4567
  %v7455 = vpop.f32.mrf.mxu0
  %v7456 = vadd.f32 %v7442, %v7455
  %v7457 = vpop.f32.mrf.mxu0
  %v7458 = vadd.f32 %v7444, %v7457
  %7459 = vdwg.mxu0
  %7460 = vmatpush.bf16.msra.mxu0 %v6291
  %7461 = vmatpush.bf16.msra.mxu0 %v6287
  %7462 = vmatpush.bf16.msra.mxu0 %v6283
  %7463 = vmatpush.bf16.msra.mxu0 %v6279
  %7464 = vmatpush.bf16.msra.mxu0 %v6275
  %7465 = vmatpush.bf16.msra.mxu0 %v6271
  %7466 = vmatpush.bf16.msra.mxu0 %v6267
  %7467 = vmatpush.bf16.msra.mxu0 %v6263
  %7468 = vmatmul.bf16.gmra.mxu0 %v4456
  %v7469 = vpop.f32.mrf.mxu0
  %v7470 = vadd.f32 %v7456, %v7469
  %v7471 = vpop.f32.mrf.mxu0
  %v7472 = vadd.f32 %v7458, %v7471
  %7473 = vdwg.mxu0
  %7474 = vmatpush.bf16.msra.mxu0 %v6323
  %7475 = vmatpush.bf16.msra.mxu0 %v6319
  %7476 = vmatpush.bf16.msra.mxu0 %v6315
  %7477 = vmatpush.bf16.msra.mxu0 %v6311
  %7478 = vmatpush.bf16.msra.mxu0 %v6307
  %7479 = vmatpush.bf16.msra.mxu0 %v6303
  %7480 = vmatpush.bf16.msra.mxu0 %v6299
  %7481 = vmatpush.bf16.msra.mxu0 %v6295
  %7482 = vmatmul.bf16.gmra.mxu0 %v4457
  %v7483 = vpop.f32.mrf.mxu0
  %v7484 = vadd.f32 %v7470, %v7483
  %v7485 = vpop.f32.mrf.mxu0
  %v7486 = vadd.f32 %v7472, %v7485
  %7487 = vdwg.mxu0
  %7488 = vmatpush.bf16.msra.mxu0 %v6355
  %7489 = vmatpush.bf16.msra.mxu0 %v6351
  %7490 = vmatpush.bf16.msra.mxu0 %v6347
  %7491 = vmatpush.bf16.msra.mxu0 %v6343
  %7492 = vmatpush.bf16.msra.mxu0 %v6339
  %7493 = vmatpush.bf16.msra.mxu0 %v6335
  %7494 = vmatpush.bf16.msra.mxu0 %v6331
  %7495 = vmatpush.bf16.msra.mxu0 %v6327
  %7496 = vmatmul.bf16.gmra.mxu0 %v4458
  %v7497 = vpop.f32.mrf.mxu0
  %v7498 = vadd.f32 %v7484, %v7497
  %v7499 = vpop.f32.mrf.mxu0
  %v7500 = vadd.f32 %v7486, %v7499
  %7501 = vdwg.mxu0
  %7502 = vmatpush.bf16.msra.mxu0 %v6387
  %7503 = vmatpush.bf16.msra.mxu0 %v6383
  %7504 = vmatpush.bf16.msra.mxu0 %v6379
  %7505 = vmatpush.bf16.msra.mxu0 %v6375
  %7506 = vmatpush.bf16.msra.mxu0 %v6371
  %7507 = vmatpush.bf16.msra.mxu0 %v6367
  %7508 = vmatpush.bf16.msra.mxu0 %v6363
  %7509 = vmatpush.bf16.msra.mxu0 %v6359
  %7510 = vmatmul.bf16.gmra.mxu0 %v4459
  %v7511 = vpop.f32.mrf.mxu0
  %v7512 = vadd.f32 %v7498, %v7511
  %v7513 = vpop.f32.mrf.mxu0
  %v7514 = vadd.f32 %v7500, %v7513
  %7515 = vdwg.mxu0
  %7516 = vmatpush.bf16.msra.mxu0 %v6419
  %7517 = vmatpush.bf16.msra.mxu0 %v6415
  %7518 = vmatpush.bf16.msra.mxu0 %v6411
  %7519 = vmatpush.bf16.msra.mxu0 %v6407
  %7520 = vmatpush.bf16.msra.mxu0 %v6403
  %7521 = vmatpush.bf16.msra.mxu0 %v6399
  %7522 = vmatpush.bf16.msra.mxu0 %v6395
  %7523 = vmatpush.bf16.msra.mxu0 %v6391
  %7524 = vmatmul.bf16.gmra.mxu0 %v4588
  %v7525 = vpop.f32.mrf.mxu0
  %v7526 = vadd.f32 %v7512, %v7525
  %v7527 = vpop.f32.mrf.mxu0
  %v7528 = vadd.f32 %v7514, %v7527
  %7529 = vdwg.mxu0
  %7530 = vmatpush.bf16.msra.mxu0 %v6451
  %7531 = vmatpush.bf16.msra.mxu0 %v6447
  %7532 = vmatpush.bf16.msra.mxu0 %v6443
  %7533 = vmatpush.bf16.msra.mxu0 %v6439
  %7534 = vmatpush.bf16.msra.mxu0 %v6435
  %7535 = vmatpush.bf16.msra.mxu0 %v6431
  %7536 = vmatpush.bf16.msra.mxu0 %v6427
  %7537 = vmatpush.bf16.msra.mxu0 %v6423
  %7538 = vmatmul.bf16.gmra.mxu0 %v4589
  %v7539 = vpop.f32.mrf.mxu0
  %v7540 = vadd.f32 %v7526, %v7539
  %v7541 = vpop.f32.mrf.mxu0
  %v7542 = vadd.f32 %v7528, %v7541
  %7543 = vdwg.mxu0
  %7544 = vmatpush.bf16.msra.mxu0 %v6483
  %7545 = vmatpush.bf16.msra.mxu0 %v6479
  %7546 = vmatpush.bf16.msra.mxu0 %v6475
  %7547 = vmatpush.bf16.msra.mxu0 %v6471
  %7548 = vmatpush.bf16.msra.mxu0 %v6467
  %7549 = vmatpush.bf16.msra.mxu0 %v6463
  %7550 = vmatpush.bf16.msra.mxu0 %v6459
  %7551 = vmatpush.bf16.msra.mxu0 %v6455
  %7552 = vmatmul.bf16.gmra.mxu0 %v4590
  %v7553 = vpop.f32.mrf.mxu0
  %v7554 = vadd.f32 %v7540, %v7553
  %v7555 = vpop.f32.mrf.mxu0
  %v7556 = vadd.f32 %v7542, %v7555
  %7557 = vdwg.mxu0
  %7558 = vmatpush.bf16.msra.mxu0 %v6515
  %7559 = vmatpush.bf16.msra.mxu0 %v6511
  %7560 = vmatpush.bf16.msra.mxu0 %v6507
  %7561 = vmatpush.bf16.msra.mxu0 %v6503
  %7562 = vmatpush.bf16.msra.mxu0 %v6499
  %7563 = vmatpush.bf16.msra.mxu0 %v6495
  %7564 = vmatpush.bf16.msra.mxu0 %v6491
  %7565 = vmatpush.bf16.msra.mxu0 %v6487
  %7566 = vmatmul.bf16.gmra.mxu0 %v4591
  %v7567 = vpop.f32.mrf.mxu0
  %v7568 = vadd.f32 %v7554, %v7567
  %v7569 = vpop.f32.mrf.mxu0
  %v7570 = vadd.f32 %v7556, %v7569
  %7571 = vdwg.mxu0
  %v7572 = vld [vmem:[%s15] ss:$2 sm:$0xf]
  %v7574 = vperm.slane %v7572, 0
  %v7575 = vperm.slane %v7572, 1
  %v7576 = vperm.slane %v7572, 2
  %v7577 = vperm.slane %v7572, 3
  %v7582 = vmul.f32 %v7064, %v7574
  %v7583 = vmul.f32 %v7232, %v7575
  %v7584 = vmul.f32 %v7400, %v7576
  %v7585 = vmul.f32 %v7568, %v7577
  %v7586 = vmul.f32 %v7066, %v7574
  %v7587 = vmul.f32 %v7234, %v7575
  %v7588 = vmul.f32 %v7402, %v7576
  %v7589 = vmul.f32 %v7570, %v7577
  %s7590 = scalar_lea.vmem %s15, 1
  %v7591 = vld [vmem:[%s7590] ss:$2 sm:$0xf]
  %v7593 = vperm.slane %v7591, 0
  %v7594 = vperm.slane %v7591, 1
  %v7595 = vperm.slane %v7591, 2
  %v7596 = vperm.slane %v7591, 3
  %v7601 = vadd.f32 %v7582, %v7593
  %v7602 = vadd.f32 %v7583, %v7594
  %v7603 = vadd.f32 %v7584, %v7595
  %v7604 = vadd.f32 %v7585, %v7596
  %v7605 = vadd.f32 %v7586, %v7593
  %v7606 = vadd.f32 %v7587, %v7594
  %v7607 = vadd.f32 %v7588, %v7595
  %v7608 = vadd.f32 %v7589, %v7596
  %v7609 = vmax.f32 %v7601, 0.0
  %v7610 = vmax.f32 %v7602, 0.0
  %v7611 = vmax.f32 %v7603, 0.0
  %v7612 = vmax.f32 %v7604, 0.0
  %v7613 = vmax.f32 %v7605, 0.0
  %v7614 = vmax.f32 %v7606, 0.0
  %v7615 = vmax.f32 %v7607, 0.0
  %v7616 = vmax.f32 %v7608, 0.0
  %v7617 = vpack.c.bf16 %v7610, %v7609
  %v7618 = vpack.c.bf16 %v7612, %v7611
  %v7619 = vpack.c.bf16 %v7614, %v7613
  %v7620 = vpack.c.bf16 %v7616, %v7615
  %v7625 = vunpack.c.l.b16 %v7617
  %v7626 = vunpack.c.h.b16 %v7617
  %v7627 = vunpack.c.l.b16 %v7618
  %v7628 = vunpack.c.h.b16 %v7618
  %v7629 = vunpack.c.l.b16 %v7619
  %v7630 = vunpack.c.h.b16 %v7619
  %v7631 = vunpack.c.l.b16 %v7620
  %v7632 = vunpack.c.h.b16 %v7620
  %v7633 = vpack.c.b16 %v7629, %v7625
  %v7634 = vpack.c.b16 %v7630, %v7626
  %v7635 = vpack.c.b16 %v7631, %v7627
  %v7636 = vpack.c.b16 %v7632, %v7628
  %v7638 = vshrl.u32 %v7633, 16
  %v7640 = vrot.slane %v7638, 7
  %v7641 = vshll.u32 %v7633, 16
  %v7643 = vor.u32 %v7640, %v7641
  %v7645 = vshrl.u32 %v7634, 16
  %v7647 = vrot.slane %v7645, 7
  %v7648 = vshll.u32 %v7634, 16
  %v7650 = vor.u32 %v7647, %v7648
  %v7652 = vshrl.u32 %v7635, 16
  %v7654 = vrot.slane %v7652, 7
  %v7655 = vshll.u32 %v7635, 16
  %v7657 = vor.u32 %v7654, %v7655
  %v7659 = vshrl.u32 %v7636, 16
  %v7661 = vrot.slane %v7659, 7
  %v7662 = vshll.u32 %v7636, 16
  %v7664 = vor.u32 %v7661, %v7662
  %v7669 = vsel %vm128, 0, %v7643
  %v7670 = vsel %vm128, 0, %v7650
  %v7671 = vsel %vm128, 0, %v7657
  %v7672 = vsel %vm128, 0, %v7664
  %v7673 = vunpack.c.l.bf16 %v7669
  %v7674 = vunpack.c.l.bf16 %v7670
  %v7675 = vunpack.c.l.bf16 %v7671
  %v7676 = vunpack.c.l.bf16 %v7672
  %v7677 = vunpack.c.h.bf16 %v7669
  %v7678 = vunpack.c.h.bf16 %v7670
  %v7679 = vunpack.c.h.bf16 %v7671
  %v7680 = vunpack.c.h.bf16 %v7672
  %v7681 = vmul.f32 %v7673, %v132
  %v7682 = vmul.f32 %v7674, %v132
  %v7683 = vmul.f32 %v7675, %v132
  %v7684 = vmul.f32 %v7676, %v132
  %v7685 = vmul.f32 %v7677, %v133
  %v7686 = vmul.f32 %v7678, %v133
  %v7687 = vmul.f32 %v7679, %v133
  %v7688 = vmul.f32 %v7680, %v133
  %v7689 = vpack.c.bf16 %v7682, %v7681
  %v7690 = vpack.c.bf16 %v7684, %v7683
  %v7691 = vpack.c.bf16 %v7686, %v7685
  %v7692 = vpack.c.bf16 %v7688, %v7687
  %v7693 = vrot.slane %v7641, 1
  %v7694 = vor.u32 %v7638, %v7693
  %v7695 = vrot.slane %v7648, 1
  %v7696 = vor.u32 %v7645, %v7695
  %v7697 = vrot.slane %v7655, 1
  %v7698 = vor.u32 %v7652, %v7697
  %v7699 = vrot.slane %v7662, 1
  %v7700 = vor.u32 %v7659, %v7699
  %v7705 = vsel %vm143, %v7694, 0
  %v7706 = vsel %vm143, %v7696, 0
  %v7707 = vsel %vm143, %v7698, 0
  %v7708 = vsel %vm143, %v7700, 0
  %v7709 = vunpack.c.l.bf16 %v7705
  %v7710 = vunpack.c.l.bf16 %v7706
  %v7711 = vunpack.c.l.bf16 %v7707
  %v7712 = vunpack.c.l.bf16 %v7708
  %v7713 = vunpack.c.h.bf16 %v7705
  %v7714 = vunpack.c.h.bf16 %v7706
  %v7715 = vunpack.c.h.bf16 %v7707
  %v7716 = vunpack.c.h.bf16 %v7708
  %v7717 = vmul.f32 %v7709, %v147
  %v7718 = vmul.f32 %v7710, %v147
  %v7719 = vmul.f32 %v7711, %v147
  %v7720 = vmul.f32 %v7712, %v147
  %v7721 = vmul.f32 %v7713, %v148
  %v7722 = vmul.f32 %v7714, %v148
  %v7723 = vmul.f32 %v7715, %v148
  %v7724 = vmul.f32 %v7716, %v148
  %v7725 = vpack.c.bf16 %v7718, %v7717
  %v7726 = vpack.c.bf16 %v7720, %v7719
  %v7727 = vpack.c.bf16 %v7722, %v7721
  %v7728 = vpack.c.bf16 %v7724, %v7723
  %v7733 = vunpack.c.l.b16 %v7689
  %v7734 = vunpack.c.h.b16 %v7689
  %v7735 = vunpack.c.l.b16 %v7690
  %v7736 = vunpack.c.h.b16 %v7690
  %v7737 = vunpack.c.l.b16 %v7691
  %v7738 = vunpack.c.h.b16 %v7691
  %v7739 = vunpack.c.l.b16 %v7692
  %v7740 = vunpack.c.h.b16 %v7692
  %v7741 = vpack.c.b16 %v7737, %v7733
  %v7742 = vpack.c.b16 %v7738, %v7734
  %v7743 = vpack.c.b16 %v7739, %v7735
  %v7744 = vpack.c.b16 %v7740, %v7736
  %v7757 = vunpack.c.l.b16 %v7725
  %v7758 = vunpack.c.h.b16 %v7725
  %v7759 = vunpack.c.l.b16 %v7726
  %v7760 = vunpack.c.h.b16 %v7726
  %v7761 = vunpack.c.l.b16 %v7727
  %v7762 = vunpack.c.h.b16 %v7727
  %v7763 = vunpack.c.l.b16 %v7728
  %v7764 = vunpack.c.h.b16 %v7728
  %v7765 = vpack.c.b16 %v7761, %v7757
  %v7766 = vpack.c.b16 %v7762, %v7758
  %v7767 = vpack.c.b16 %v7763, %v7759
  %v7768 = vpack.c.b16 %v7764, %v7760
  %v7773 = vld [vmem:[%s16] sm:$0xff]
  %v7774 = vld [vmem:[%s16 + $0x8] sm:$0xff]
  %v7775 = vld [vmem:[%s16 + $0x10] sm:$0xff]
  %v7776 = vld [vmem:[%s16 + $0x18] sm:$0xff]
  %v7777 = vld [vmem:[%s16 + $0x20] sm:$0xff]
  %v7778 = vld [vmem:[%s16 + $0x28] sm:$0xff]
  %v7779 = vld [vmem:[%s16 + $0x30] sm:$0xff]
  %v7780 = vld [vmem:[%s16 + $0x38] sm:$0xff]
  %v7781 = vld [vmem:[%s16 + $0x40] sm:$0xff]
  %v7782 = vld [vmem:[%s16 + $0x48] sm:$0xff]
  %v7783 = vld [vmem:[%s16 + $0x50] sm:$0xff]
  %v7784 = vld [vmem:[%s16 + $0x58] sm:$0xff]
  %v7785 = vld [vmem:[%s16 + $0x60] sm:$0xff]
  %v7786 = vld [vmem:[%s16 + $0x68] sm:$0xff]
  %v7787 = vld [vmem:[%s16 + $0x70] sm:$0xff]
  %v7788 = vld [vmem:[%s16 + $0x78] sm:$0xff]
  %v7789 = vld [vmem:[%s16 + $0x80] sm:$0xff]
  %v7790 = vld [vmem:[%s16 + $0x88] sm:$0xff]
  %v7791 = vld [vmem:[%s16 + $0x90] sm:$0xff]
  %v7792 = vld [vmem:[%s16 + $0x98] sm:$0xff]
  %v7793 = vld [vmem:[%s16 + $0xa0] sm:$0xff]
  %v7794 = vld [vmem:[%s16 + $0xa8] sm:$0xff]
  %v7795 = vld [vmem:[%s16 + $0xb0] sm:$0xff]
  %v7796 = vld [vmem:[%s16 + $0xb8] sm:$0xff]
  %v7797 = vld [vmem:[%s16 + $0xc0] sm:$0xff]
  %v7798 = vld [vmem:[%s16 + $0xc8] sm:$0xff]
  %v7799 = vld [vmem:[%s16 + $0xd0] sm:$0xff]
  %v7800 = vld [vmem:[%s16 + $0xd8] sm:$0xff]
  %v7801 = vld [vmem:[%s16 + $0xe0] sm:$0xff]
  %v7802 = vld [vmem:[%s16 + $0xe8] sm:$0xff]
  %v7803 = vld [vmem:[%s16 + $0xf0] sm:$0xff]
  %v7804 = vld [vmem:[%s16 + $0xf8] sm:$0xff]
  %v7805 = vld [vmem:[%s16 + $0x100] sm:$0xff]
  %v7806 = vld [vmem:[%s16 + $0x108] sm:$0xff]
  %v7807 = vld [vmem:[%s16 + $0x110] sm:$0xff]
  %v7808 = vld [vmem:[%s16 + $0x118] sm:$0xff]
  %v7809 = vld [vmem:[%s16 + $0x120] sm:$0xff]
  %v7810 = vld [vmem:[%s16 + $0x128] sm:$0xff]
  %v7811 = vld [vmem:[%s16 + $0x130] sm:$0xff]
  %v7812 = vld [vmem:[%s16 + $0x138] sm:$0xff]
  %v7813 = vld [vmem:[%s16 + $0x140] sm:$0xff]
  %v7814 = vld [vmem:[%s16 + $0x148] sm:$0xff]
  %v7815 = vld [vmem:[%s16 + $0x150] sm:$0xff]
  %v7816 = vld [vmem:[%s16 + $0x158] sm:$0xff]
  %v7817 = vld [vmem:[%s16 + $0x160] sm:$0xff]
  %v7818 = vld [vmem:[%s16 + $0x168] sm:$0xff]
  %v7819 = vld [vmem:[%s16 + $0x170] sm:$0xff]
  %v7820 = vld [vmem:[%s16 + $0x178] sm:$0xff]
  %v7821 = vld [vmem:[%s16 + $0x180] sm:$0xff]
  %v7822 = vld [vmem:[%s16 + $0x188] sm:$0xff]
  %v7823 = vld [vmem:[%s16 + $0x190] sm:$0xff]
  %v7824 = vld [vmem:[%s16 + $0x198] sm:$0xff]
  %v7825 = vld [vmem:[%s16 + $0x1a0] sm:$0xff]
  %v7826 = vld [vmem:[%s16 + $0x1a8] sm:$0xff]
  %v7827 = vld [vmem:[%s16 + $0x1b0] sm:$0xff]
  %v7828 = vld [vmem:[%s16 + $0x1b8] sm:$0xff]
  %v7829 = vld [vmem:[%s16 + $0x1c0] sm:$0xff]
  %v7830 = vld [vmem:[%s16 + $0x1c8] sm:$0xff]
  %v7831 = vld [vmem:[%s16 + $0x1d0] sm:$0xff]
  %v7832 = vld [vmem:[%s16 + $0x1d8] sm:$0xff]
  %v7833 = vld [vmem:[%s16 + $0x1e0] sm:$0xff]
  %v7834 = vld [vmem:[%s16 + $0x1e8] sm:$0xff]
  %v7835 = vld [vmem:[%s16 + $0x1f0] sm:$0xff]
  %v7836 = vld [vmem:[%s16 + $0x1f8] sm:$0xff]
  %v7837 = vld [vmem:[%s16 + $0x200] sm:$0xff]
  %v7838 = vld [vmem:[%s16 + $0x208] sm:$0xff]
  %v7839 = vld [vmem:[%s16 + $0x210] sm:$0xff]
  %v7840 = vld [vmem:[%s16 + $0x218] sm:$0xff]
  %v7841 = vld [vmem:[%s16 + $0x220] sm:$0xff]
  %v7842 = vld [vmem:[%s16 + $0x228] sm:$0xff]
  %v7843 = vld [vmem:[%s16 + $0x230] sm:$0xff]
  %v7844 = vld [vmem:[%s16 + $0x238] sm:$0xff]
  %v7845 = vld [vmem:[%s16 + $0x240] sm:$0xff]
  %v7846 = vld [vmem:[%s16 + $0x248] sm:$0xff]
  %v7847 = vld [vmem:[%s16 + $0x250] sm:$0xff]
  %v7848 = vld [vmem:[%s16 + $0x258] sm:$0xff]
  %v7849 = vld [vmem:[%s16 + $0x260] sm:$0xff]
  %v7850 = vld [vmem:[%s16 + $0x268] sm:$0xff]
  %v7851 = vld [vmem:[%s16 + $0x270] sm:$0xff]
  %v7852 = vld [vmem:[%s16 + $0x278] sm:$0xff]
  %v7853 = vld [vmem:[%s16 + $0x280] sm:$0xff]
  %v7854 = vld [vmem:[%s16 + $0x288] sm:$0xff]
  %v7855 = vld [vmem:[%s16 + $0x290] sm:$0xff]
  %v7856 = vld [vmem:[%s16 + $0x298] sm:$0xff]
  %v7857 = vld [vmem:[%s16 + $0x2a0] sm:$0xff]
  %v7858 = vld [vmem:[%s16 + $0x2a8] sm:$0xff]
  %v7859 = vld [vmem:[%s16 + $0x2b0] sm:$0xff]
  %v7860 = vld [vmem:[%s16 + $0x2b8] sm:$0xff]
  %v7861 = vld [vmem:[%s16 + $0x2c0] sm:$0xff]
  %v7862 = vld [vmem:[%s16 + $0x2c8] sm:$0xff]
  %v7863 = vld [vmem:[%s16 + $0x2d0] sm:$0xff]
  %v7864 = vld [vmem:[%s16 + $0x2d8] sm:$0xff]
  %v7865 = vld [vmem:[%s16 + $0x2e0] sm:$0xff]
  %v7866 = vld [vmem:[%s16 + $0x2e8] sm:$0xff]
  %v7867 = vld [vmem:[%s16 + $0x2f0] sm:$0xff]
  %v7868 = vld [vmem:[%s16 + $0x2f8] sm:$0xff]
  %v7869 = vld [vmem:[%s16 + $0x300] sm:$0xff]
  %v7870 = vld [vmem:[%s16 + $0x308] sm:$0xff]
  %v7871 = vld [vmem:[%s16 + $0x310] sm:$0xff]
  %v7872 = vld [vmem:[%s16 + $0x318] sm:$0xff]
  %v7873 = vld [vmem:[%s16 + $0x320] sm:$0xff]
  %v7874 = vld [vmem:[%s16 + $0x328] sm:$0xff]
  %v7875 = vld [vmem:[%s16 + $0x330] sm:$0xff]
  %v7876 = vld [vmem:[%s16 + $0x338] sm:$0xff]
  %v7877 = vld [vmem:[%s16 + $0x340] sm:$0xff]
  %v7878 = vld [vmem:[%s16 + $0x348] sm:$0xff]
  %v7879 = vld [vmem:[%s16 + $0x350] sm:$0xff]
  %v7880 = vld [vmem:[%s16 + $0x358] sm:$0xff]
  %v7881 = vld [vmem:[%s16 + $0x360] sm:$0xff]
  %v7882 = vld [vmem:[%s16 + $0x368] sm:$0xff]
  %v7883 = vld [vmem:[%s16 + $0x370] sm:$0xff]
  %v7884 = vld [vmem:[%s16 + $0x378] sm:$0xff]
  %v7885 = vld [vmem:[%s16 + $0x380] sm:$0xff]
  %v7886 = vld [vmem:[%s16 + $0x388] sm:$0xff]
  %v7887 = vld [vmem:[%s16 + $0x390] sm:$0xff]
  %v7888 = vld [vmem:[%s16 + $0x398] sm:$0xff]
  %v7889 = vld [vmem:[%s16 + $0x3a0] sm:$0xff]
  %v7890 = vld [vmem:[%s16 + $0x3a8] sm:$0xff]
  %v7891 = vld [vmem:[%s16 + $0x3b0] sm:$0xff]
  %v7892 = vld [vmem:[%s16 + $0x3b8] sm:$0xff]
  %v7893 = vld [vmem:[%s16 + $0x3c0] sm:$0xff]
  %v7894 = vld [vmem:[%s16 + $0x3c8] sm:$0xff]
  %v7895 = vld [vmem:[%s16 + $0x3d0] sm:$0xff]
  %v7896 = vld [vmem:[%s16 + $0x3d8] sm:$0xff]
  %v7897 = vld [vmem:[%s16 + $0x3e0] sm:$0xff]
  %v7898 = vld [vmem:[%s16 + $0x3e8] sm:$0xff]
  %v7899 = vld [vmem:[%s16 + $0x3f0] sm:$0xff]
  %v7900 = vld [vmem:[%s16 + $0x3f8] sm:$0xff]
  %v7901 = vld [vmem:[%s16 + $0x400] sm:$0xff]
  %v7902 = vld [vmem:[%s16 + $0x408] sm:$0xff]
  %v7903 = vld [vmem:[%s16 + $0x410] sm:$0xff]
  %v7904 = vld [vmem:[%s16 + $0x418] sm:$0xff]
  %v7905 = vld [vmem:[%s16 + $0x420] sm:$0xff]
  %v7906 = vld [vmem:[%s16 + $0x428] sm:$0xff]
  %v7907 = vld [vmem:[%s16 + $0x430] sm:$0xff]
  %v7908 = vld [vmem:[%s16 + $0x438] sm:$0xff]
  %v7909 = vld [vmem:[%s16 + $0x440] sm:$0xff]
  %v7910 = vld [vmem:[%s16 + $0x448] sm:$0xff]
  %v7911 = vld [vmem:[%s16 + $0x450] sm:$0xff]
  %v7912 = vld [vmem:[%s16 + $0x458] sm:$0xff]
  %v7913 = vld [vmem:[%s16 + $0x460] sm:$0xff]
  %v7914 = vld [vmem:[%s16 + $0x468] sm:$0xff]
  %v7915 = vld [vmem:[%s16 + $0x470] sm:$0xff]
  %v7916 = vld [vmem:[%s16 + $0x478] sm:$0xff]
  %v7917 = vld [vmem:[%s16 + $0x480] sm:$0xff]
  %v7918 = vld [vmem:[%s16 + $0x488] sm:$0xff]
  %v7919 = vld [vmem:[%s16 + $0x490] sm:$0xff]
  %v7920 = vld [vmem:[%s16 + $0x498] sm:$0xff]
  %v7921 = vld [vmem:[%s16 + $0x4a0] sm:$0xff]
  %v7922 = vld [vmem:[%s16 + $0x4a8] sm:$0xff]
  %v7923 = vld [vmem:[%s16 + $0x4b0] sm:$0xff]
  %v7924 = vld [vmem:[%s16 + $0x4b8] sm:$0xff]
  %v7925 = vld [vmem:[%s16 + $0x4c0] sm:$0xff]
  %v7926 = vld [vmem:[%s16 + $0x4c8] sm:$0xff]
  %v7927 = vld [vmem:[%s16 + $0x4d0] sm:$0xff]
  %v7928 = vld [vmem:[%s16 + $0x4d8] sm:$0xff]
  %v7929 = vld [vmem:[%s16 + $0x4e0] sm:$0xff]
  %v7930 = vld [vmem:[%s16 + $0x4e8] sm:$0xff]
  %v7931 = vld [vmem:[%s16 + $0x4f0] sm:$0xff]
  %v7932 = vld [vmem:[%s16 + $0x4f8] sm:$0xff]
  %v7933 = vld [vmem:[%s16 + $0x500] sm:$0xff]
  %v7934 = vld [vmem:[%s16 + $0x508] sm:$0xff]
  %v7935 = vld [vmem:[%s16 + $0x510] sm:$0xff]
  %v7936 = vld [vmem:[%s16 + $0x518] sm:$0xff]
  %v7937 = vld [vmem:[%s16 + $0x520] sm:$0xff]
  %v7938 = vld [vmem:[%s16 + $0x528] sm:$0xff]
  %v7939 = vld [vmem:[%s16 + $0x530] sm:$0xff]
  %v7940 = vld [vmem:[%s16 + $0x538] sm:$0xff]
  %v7941 = vld [vmem:[%s16 + $0x540] sm:$0xff]
  %v7942 = vld [vmem:[%s16 + $0x548] sm:$0xff]
  %v7943 = vld [vmem:[%s16 + $0x550] sm:$0xff]
  %v7944 = vld [vmem:[%s16 + $0x558] sm:$0xff]
  %v7945 = vld [vmem:[%s16 + $0x560] sm:$0xff]
  %v7946 = vld [vmem:[%s16 + $0x568] sm:$0xff]
  %v7947 = vld [vmem:[%s16 + $0x570] sm:$0xff]
  %v7948 = vld [vmem:[%s16 + $0x578] sm:$0xff]
  %v7949 = vld [vmem:[%s16 + $0x580] sm:$0xff]
  %v7950 = vld [vmem:[%s16 + $0x588] sm:$0xff]
  %v7951 = vld [vmem:[%s16 + $0x590] sm:$0xff]
  %v7952 = vld [vmem:[%s16 + $0x598] sm:$0xff]
  %v7953 = vld [vmem:[%s16 + $0x5a0] sm:$0xff]
  %v7954 = vld [vmem:[%s16 + $0x5a8] sm:$0xff]
  %v7955 = vld [vmem:[%s16 + $0x5b0] sm:$0xff]
  %v7956 = vld [vmem:[%s16 + $0x5b8] sm:$0xff]
  %v7957 = vld [vmem:[%s16 + $0x5c0] sm:$0xff]
  %v7958 = vld [vmem:[%s16 + $0x5c8] sm:$0xff]
  %v7959 = vld [vmem:[%s16 + $0x5d0] sm:$0xff]
  %v7960 = vld [vmem:[%s16 + $0x5d8] sm:$0xff]
  %v7961 = vld [vmem:[%s16 + $0x5e0] sm:$0xff]
  %v7962 = vld [vmem:[%s16 + $0x5e8] sm:$0xff]
  %v7963 = vld [vmem:[%s16 + $0x5f0] sm:$0xff]
  %v7964 = vld [vmem:[%s16 + $0x5f8] sm:$0xff]
  %v7965 = vld [vmem:[%s16 + $0x600] sm:$0xff]
  %v7966 = vld [vmem:[%s16 + $0x608] sm:$0xff]
  %v7967 = vld [vmem:[%s16 + $0x610] sm:$0xff]
  %v7968 = vld [vmem:[%s16 + $0x618] sm:$0xff]
  %v7969 = vld [vmem:[%s16 + $0x620] sm:$0xff]
  %v7970 = vld [vmem:[%s16 + $0x628] sm:$0xff]
  %v7971 = vld [vmem:[%s16 + $0x630] sm:$0xff]
  %v7972 = vld [vmem:[%s16 + $0x638] sm:$0xff]
  %v7973 = vld [vmem:[%s16 + $0x640] sm:$0xff]
  %v7974 = vld [vmem:[%s16 + $0x648] sm:$0xff]
  %v7975 = vld [vmem:[%s16 + $0x650] sm:$0xff]
  %v7976 = vld [vmem:[%s16 + $0x658] sm:$0xff]
  %v7977 = vld [vmem:[%s16 + $0x660] sm:$0xff]
  %v7978 = vld [vmem:[%s16 + $0x668] sm:$0xff]
  %v7979 = vld [vmem:[%s16 + $0x670] sm:$0xff]
  %v7980 = vld [vmem:[%s16 + $0x678] sm:$0xff]
  %v7981 = vld [vmem:[%s16 + $0x680] sm:$0xff]
  %v7982 = vld [vmem:[%s16 + $0x688] sm:$0xff]
  %v7983 = vld [vmem:[%s16 + $0x690] sm:$0xff]
  %v7984 = vld [vmem:[%s16 + $0x698] sm:$0xff]
  %v7985 = vld [vmem:[%s16 + $0x6a0] sm:$0xff]
  %v7986 = vld [vmem:[%s16 + $0x6a8] sm:$0xff]
  %v7987 = vld [vmem:[%s16 + $0x6b0] sm:$0xff]
  %v7988 = vld [vmem:[%s16 + $0x6b8] sm:$0xff]
  %v7989 = vld [vmem:[%s16 + $0x6c0] sm:$0xff]
  %v7990 = vld [vmem:[%s16 + $0x6c8] sm:$0xff]
  %v7991 = vld [vmem:[%s16 + $0x6d0] sm:$0xff]
  %v7992 = vld [vmem:[%s16 + $0x6d8] sm:$0xff]
  %v7993 = vld [vmem:[%s16 + $0x6e0] sm:$0xff]
  %v7994 = vld [vmem:[%s16 + $0x6e8] sm:$0xff]
  %v7995 = vld [vmem:[%s16 + $0x6f0] sm:$0xff]
  %v7996 = vld [vmem:[%s16 + $0x6f8] sm:$0xff]
  %v7997 = vld [vmem:[%s16 + $0x700] sm:$0xff]
  %v7998 = vld [vmem:[%s16 + $0x708] sm:$0xff]
  %v7999 = vld [vmem:[%s16 + $0x710] sm:$0xff]
  %v8000 = vld [vmem:[%s16 + $0x718] sm:$0xff]
  %v8001 = vld [vmem:[%s16 + $0x720] sm:$0xff]
  %v8002 = vld [vmem:[%s16 + $0x728] sm:$0xff]
  %v8003 = vld [vmem:[%s16 + $0x730] sm:$0xff]
  %v8004 = vld [vmem:[%s16 + $0x738] sm:$0xff]
  %v8005 = vld [vmem:[%s16 + $0x740] sm:$0xff]
  %v8006 = vld [vmem:[%s16 + $0x748] sm:$0xff]
  %v8007 = vld [vmem:[%s16 + $0x750] sm:$0xff]
  %v8008 = vld [vmem:[%s16 + $0x758] sm:$0xff]
  %v8009 = vld [vmem:[%s16 + $0x760] sm:$0xff]
  %v8010 = vld [vmem:[%s16 + $0x768] sm:$0xff]
  %v8011 = vld [vmem:[%s16 + $0x770] sm:$0xff]
  %v8012 = vld [vmem:[%s16 + $0x778] sm:$0xff]
  %v8013 = vld [vmem:[%s16 + $0x780] sm:$0xff]
  %v8014 = vld [vmem:[%s16 + $0x788] sm:$0xff]
  %v8015 = vld [vmem:[%s16 + $0x790] sm:$0xff]
  %v8016 = vld [vmem:[%s16 + $0x798] sm:$0xff]
  %v8017 = vld [vmem:[%s16 + $0x7a0] sm:$0xff]
  %v8018 = vld [vmem:[%s16 + $0x7a8] sm:$0xff]
  %v8019 = vld [vmem:[%s16 + $0x7b0] sm:$0xff]
  %v8020 = vld [vmem:[%s16 + $0x7b8] sm:$0xff]
  %v8021 = vld [vmem:[%s16 + $0x7c0] sm:$0xff]
  %v8022 = vld [vmem:[%s16 + $0x7c8] sm:$0xff]
  %v8023 = vld [vmem:[%s16 + $0x7d0] sm:$0xff]
  %v8024 = vld [vmem:[%s16 + $0x7d8] sm:$0xff]
  %v8025 = vld [vmem:[%s16 + $0x7e0] sm:$0xff]
  %v8026 = vld [vmem:[%s16 + $0x7e8] sm:$0xff]
  %v8027 = vld [vmem:[%s16 + $0x7f0] sm:$0xff]
  %v8028 = vld [vmem:[%s16 + $0x7f8] sm:$0xff]
  %v8029 = vld [vmem:[%s16 + $0x800] sm:$0xff]
  %v8030 = vld [vmem:[%s16 + $0x808] sm:$0xff]
  %v8031 = vld [vmem:[%s16 + $0x810] sm:$0xff]
  %v8032 = vld [vmem:[%s16 + $0x818] sm:$0xff]
  %v8033 = vld [vmem:[%s16 + $0x820] sm:$0xff]
  %v8034 = vld [vmem:[%s16 + $0x828] sm:$0xff]
  %v8035 = vld [vmem:[%s16 + $0x830] sm:$0xff]
  %v8036 = vld [vmem:[%s16 + $0x838] sm:$0xff]
  %v8037 = vld [vmem:[%s16 + $0x840] sm:$0xff]
  %v8038 = vld [vmem:[%s16 + $0x848] sm:$0xff]
  %v8039 = vld [vmem:[%s16 + $0x850] sm:$0xff]
  %v8040 = vld [vmem:[%s16 + $0x858] sm:$0xff]
  %v8041 = vld [vmem:[%s16 + $0x860] sm:$0xff]
  %v8042 = vld [vmem:[%s16 + $0x868] sm:$0xff]
  %v8043 = vld [vmem:[%s16 + $0x870] sm:$0xff]
  %v8044 = vld [vmem:[%s16 + $0x878] sm:$0xff]
  %v8045 = vld [vmem:[%s16 + $0x880] sm:$0xff]
  %v8046 = vld [vmem:[%s16 + $0x888] sm:$0xff]
  %v8047 = vld [vmem:[%s16 + $0x890] sm:$0xff]
  %v8048 = vld [vmem:[%s16 + $0x898] sm:$0xff]
  %v8049 = vld [vmem:[%s16 + $0x8a0] sm:$0xff]
  %v8050 = vld [vmem:[%s16 + $0x8a8] sm:$0xff]
  %v8051 = vld [vmem:[%s16 + $0x8b0] sm:$0xff]
  %v8052 = vld [vmem:[%s16 + $0x8b8] sm:$0xff]
  %v8053 = vld [vmem:[%s16 + $0x8c0] sm:$0xff]
  %v8054 = vld [vmem:[%s16 + $0x8c8] sm:$0xff]
  %v8055 = vld [vmem:[%s16 + $0x8d0] sm:$0xff]
  %v8056 = vld [vmem:[%s16 + $0x8d8] sm:$0xff]
  %v8057 = vld [vmem:[%s16 + $0x8e0] sm:$0xff]
  %v8058 = vld [vmem:[%s16 + $0x8e8] sm:$0xff]
  %v8059 = vld [vmem:[%s16 + $0x8f0] sm:$0xff]
  %v8060 = vld [vmem:[%s16 + $0x8f8] sm:$0xff]
  %v8061 = vld [vmem:[%s16 + $0x900] sm:$0xff]
  %v8062 = vld [vmem:[%s16 + $0x908] sm:$0xff]
  %v8063 = vld [vmem:[%s16 + $0x910] sm:$0xff]
  %v8064 = vld [vmem:[%s16 + $0x918] sm:$0xff]
  %v8065 = vld [vmem:[%s16 + $0x920] sm:$0xff]
  %v8066 = vld [vmem:[%s16 + $0x928] sm:$0xff]
  %v8067 = vld [vmem:[%s16 + $0x930] sm:$0xff]
  %v8068 = vld [vmem:[%s16 + $0x938] sm:$0xff]
  %v8069 = vld [vmem:[%s16 + $0x940] sm:$0xff]
  %v8070 = vld [vmem:[%s16 + $0x948] sm:$0xff]
  %v8071 = vld [vmem:[%s16 + $0x950] sm:$0xff]
  %v8072 = vld [vmem:[%s16 + $0x958] sm:$0xff]
  %v8073 = vld [vmem:[%s16 + $0x960] sm:$0xff]
  %v8074 = vld [vmem:[%s16 + $0x968] sm:$0xff]
  %v8075 = vld [vmem:[%s16 + $0x970] sm:$0xff]
  %v8076 = vld [vmem:[%s16 + $0x978] sm:$0xff]
  %v8077 = vld [vmem:[%s16 + $0x980] sm:$0xff]
  %v8078 = vld [vmem:[%s16 + $0x988] sm:$0xff]
  %v8079 = vld [vmem:[%s16 + $0x990] sm:$0xff]
  %v8080 = vld [vmem:[%s16 + $0x998] sm:$0xff]
  %v8081 = vld [vmem:[%s16 + $0x9a0] sm:$0xff]
  %v8082 = vld [vmem:[%s16 + $0x9a8] sm:$0xff]
  %v8083 = vld [vmem:[%s16 + $0x9b0] sm:$0xff]
  %v8084 = vld [vmem:[%s16 + $0x9b8] sm:$0xff]
  %v8085 = vld [vmem:[%s16 + $0x9c0] sm:$0xff]
  %v8086 = vld [vmem:[%s16 + $0x9c8] sm:$0xff]
  %v8087 = vld [vmem:[%s16 + $0x9d0] sm:$0xff]
  %v8088 = vld [vmem:[%s16 + $0x9d8] sm:$0xff]
  %v8089 = vld [vmem:[%s16 + $0x9e0] sm:$0xff]
  %v8090 = vld [vmem:[%s16 + $0x9e8] sm:$0xff]
  %v8091 = vld [vmem:[%s16 + $0x9f0] sm:$0xff]
  %v8092 = vld [vmem:[%s16 + $0x9f8] sm:$0xff]
  %v8093 = vld [vmem:[%s16 + $0xa00] sm:$0xff]
  %v8094 = vld [vmem:[%s16 + $0xa08] sm:$0xff]
  %v8095 = vld [vmem:[%s16 + $0xa10] sm:$0xff]
  %v8096 = vld [vmem:[%s16 + $0xa18] sm:$0xff]
  %v8097 = vld [vmem:[%s16 + $0xa20] sm:$0xff]
  %v8098 = vld [vmem:[%s16 + $0xa28] sm:$0xff]
  %v8099 = vld [vmem:[%s16 + $0xa30] sm:$0xff]
  %v8100 = vld [vmem:[%s16 + $0xa38] sm:$0xff]
  %v8101 = vld [vmem:[%s16 + $0xa40] sm:$0xff]
  %v8102 = vld [vmem:[%s16 + $0xa48] sm:$0xff]
  %v8103 = vld [vmem:[%s16 + $0xa50] sm:$0xff]
  %v8104 = vld [vmem:[%s16 + $0xa58] sm:$0xff]
  %v8105 = vld [vmem:[%s16 + $0xa60] sm:$0xff]
  %v8106 = vld [vmem:[%s16 + $0xa68] sm:$0xff]
  %v8107 = vld [vmem:[%s16 + $0xa70] sm:$0xff]
  %v8108 = vld [vmem:[%s16 + $0xa78] sm:$0xff]
  %v8109 = vld [vmem:[%s16 + $0xa80] sm:$0xff]
  %v8110 = vld [vmem:[%s16 + $0xa88] sm:$0xff]
  %v8111 = vld [vmem:[%s16 + $0xa90] sm:$0xff]
  %v8112 = vld [vmem:[%s16 + $0xa98] sm:$0xff]
  %v8113 = vld [vmem:[%s16 + $0xaa0] sm:$0xff]
  %v8114 = vld [vmem:[%s16 + $0xaa8] sm:$0xff]
  %v8115 = vld [vmem:[%s16 + $0xab0] sm:$0xff]
  %v8116 = vld [vmem:[%s16 + $0xab8] sm:$0xff]
  %v8117 = vld [vmem:[%s16 + $0xac0] sm:$0xff]
  %v8118 = vld [vmem:[%s16 + $0xac8] sm:$0xff]
  %v8119 = vld [vmem:[%s16 + $0xad0] sm:$0xff]
  %v8120 = vld [vmem:[%s16 + $0xad8] sm:$0xff]
  %v8121 = vld [vmem:[%s16 + $0xae0] sm:$0xff]
  %v8122 = vld [vmem:[%s16 + $0xae8] sm:$0xff]
  %v8123 = vld [vmem:[%s16 + $0xaf0] sm:$0xff]
  %v8124 = vld [vmem:[%s16 + $0xaf8] sm:$0xff]
  %v8125 = vld [vmem:[%s16 + $0xb00] sm:$0xff]
  %v8126 = vld [vmem:[%s16 + $0xb08] sm:$0xff]
  %v8127 = vld [vmem:[%s16 + $0xb10] sm:$0xff]
  %v8128 = vld [vmem:[%s16 + $0xb18] sm:$0xff]
  %v8129 = vld [vmem:[%s16 + $0xb20] sm:$0xff]
  %v8130 = vld [vmem:[%s16 + $0xb28] sm:$0xff]
  %v8131 = vld [vmem:[%s16 + $0xb30] sm:$0xff]
  %v8132 = vld [vmem:[%s16 + $0xb38] sm:$0xff]
  %v8133 = vld [vmem:[%s16 + $0xb40] sm:$0xff]
  %v8134 = vld [vmem:[%s16 + $0xb48] sm:$0xff]
  %v8135 = vld [vmem:[%s16 + $0xb50] sm:$0xff]
  %v8136 = vld [vmem:[%s16 + $0xb58] sm:$0xff]
  %v8137 = vld [vmem:[%s16 + $0xb60] sm:$0xff]
  %v8138 = vld [vmem:[%s16 + $0xb68] sm:$0xff]
  %v8139 = vld [vmem:[%s16 + $0xb70] sm:$0xff]
  %v8140 = vld [vmem:[%s16 + $0xb78] sm:$0xff]
  %v8141 = vld [vmem:[%s16 + $0xb80] sm:$0xff]
  %v8142 = vld [vmem:[%s16 + $0xb88] sm:$0xff]
  %v8143 = vld [vmem:[%s16 + $0xb90] sm:$0xff]
  %v8144 = vld [vmem:[%s16 + $0xb98] sm:$0xff]
  %v8145 = vld [vmem:[%s16 + $0xba0] sm:$0xff]
  %v8146 = vld [vmem:[%s16 + $0xba8] sm:$0xff]
  %v8147 = vld [vmem:[%s16 + $0xbb0] sm:$0xff]
  %v8148 = vld [vmem:[%s16 + $0xbb8] sm:$0xff]
  %v8149 = vld [vmem:[%s16 + $0xbc0] sm:$0xff]
  %v8150 = vld [vmem:[%s16 + $0xbc8] sm:$0xff]
  %v8151 = vld [vmem:[%s16 + $0xbd0] sm:$0xff]
  %v8152 = vld [vmem:[%s16 + $0xbd8] sm:$0xff]
  %v8153 = vld [vmem:[%s16 + $0xbe0] sm:$0xff]
  %v8154 = vld [vmem:[%s16 + $0xbe8] sm:$0xff]
  %v8155 = vld [vmem:[%s16 + $0xbf0] sm:$0xff]
  %v8156 = vld [vmem:[%s16 + $0xbf8] sm:$0xff]
  %v8541 = vunpack.c.l.b16 %v7773
  %v8542 = vunpack.c.h.b16 %v7773
  %v8543 = vunpack.c.l.b16 %v7774
  %v8544 = vunpack.c.h.b16 %v7774
  %v8545 = vunpack.c.l.b16 %v7775
  %v8546 = vunpack.c.h.b16 %v7775
  %v8547 = vunpack.c.l.b16 %v7776
  %v8548 = vunpack.c.h.b16 %v7776
  %v8549 = vunpack.c.l.b16 %v7777
  %v8550 = vunpack.c.h.b16 %v7777
  %v8551 = vunpack.c.l.b16 %v7778
  %v8552 = vunpack.c.h.b16 %v7778
  %v8553 = vunpack.c.l.b16 %v7779
  %v8554 = vunpack.c.h.b16 %v7779
  %v8555 = vunpack.c.l.b16 %v7780
  %v8556 = vunpack.c.h.b16 %v7780
  %v8557 = vunpack.c.l.b16 %v7781
  %v8558 = vunpack.c.h.b16 %v7781
  %v8559 = vunpack.c.l.b16 %v7782
  %v8560 = vunpack.c.h.b16 %v7782
  %v8561 = vunpack.c.l.b16 %v7783
  %v8562 = vunpack.c.h.b16 %v7783
  %v8563 = vunpack.c.l.b16 %v7784
  %v8564 = vunpack.c.h.b16 %v7784
  %v8565 = vunpack.c.l.b16 %v7785
  %v8566 = vunpack.c.h.b16 %v7785
  %v8567 = vunpack.c.l.b16 %v7786
  %v8568 = vunpack.c.h.b16 %v7786
  %v8569 = vunpack.c.l.b16 %v7787
  %v8570 = vunpack.c.h.b16 %v7787
  %v8571 = vunpack.c.l.b16 %v7788
  %v8572 = vunpack.c.h.b16 %v7788
  %v8573 = vunpack.c.l.b16 %v7789
  %v8574 = vunpack.c.h.b16 %v7789
  %v8575 = vunpack.c.l.b16 %v7790
  %v8576 = vunpack.c.h.b16 %v7790
  %v8577 = vunpack.c.l.b16 %v7791
  %v8578 = vunpack.c.h.b16 %v7791
  %v8579 = vunpack.c.l.b16 %v7792
  %v8580 = vunpack.c.h.b16 %v7792
  %v8581 = vunpack.c.l.b16 %v7793
  %v8582 = vunpack.c.h.b16 %v7793
  %v8583 = vunpack.c.l.b16 %v7794
  %v8584 = vunpack.c.h.b16 %v7794
  %v8585 = vunpack.c.l.b16 %v7795
  %v8586 = vunpack.c.h.b16 %v7795
  %v8587 = vunpack.c.l.b16 %v7796
  %v8588 = vunpack.c.h.b16 %v7796
  %v8589 = vunpack.c.l.b16 %v7797
  %v8590 = vunpack.c.h.b16 %v7797
  %v8591 = vunpack.c.l.b16 %v7798
  %v8592 = vunpack.c.h.b16 %v7798
  %v8593 = vunpack.c.l.b16 %v7799
  %v8594 = vunpack.c.h.b16 %v7799
  %v8595 = vunpack.c.l.b16 %v7800
  %v8596 = vunpack.c.h.b16 %v7800
  %v8597 = vunpack.c.l.b16 %v7801
  %v8598 = vunpack.c.h.b16 %v7801
  %v8599 = vunpack.c.l.b16 %v7802
  %v8600 = vunpack.c.h.b16 %v7802
  %v8601 = vunpack.c.l.b16 %v7803
  %v8602 = vunpack.c.h.b16 %v7803
  %v8603 = vunpack.c.l.b16 %v7804
  %v8604 = vunpack.c.h.b16 %v7804
  %v8605 = vunpack.c.l.b16 %v7805
  %v8606 = vunpack.c.h.b16 %v7805
  %v8607 = vunpack.c.l.b16 %v7806
  %v8608 = vunpack.c.h.b16 %v7806
  %v8609 = vunpack.c.l.b16 %v7807
  %v8610 = vunpack.c.h.b16 %v7807
  %v8611 = vunpack.c.l.b16 %v7808
  %v8612 = vunpack.c.h.b16 %v7808
  %v8613 = vunpack.c.l.b16 %v7809
  %v8614 = vunpack.c.h.b16 %v7809
  %v8615 = vunpack.c.l.b16 %v7810
  %v8616 = vunpack.c.h.b16 %v7810
  %v8617 = vunpack.c.l.b16 %v7811
  %v8618 = vunpack.c.h.b16 %v7811
  %v8619 = vunpack.c.l.b16 %v7812
  %v8620 = vunpack.c.h.b16 %v7812
  %v8621 = vunpack.c.l.b16 %v7813
  %v8622 = vunpack.c.h.b16 %v7813
  %v8623 = vunpack.c.l.b16 %v7814
  %v8624 = vunpack.c.h.b16 %v7814
  %v8625 = vunpack.c.l.b16 %v7815
  %v8626 = vunpack.c.h.b16 %v7815
  %v8627 = vunpack.c.l.b16 %v7816
  %v8628 = vunpack.c.h.b16 %v7816
  %v8629 = vunpack.c.l.b16 %v7817
  %v8630 = vunpack.c.h.b16 %v7817
  %v8631 = vunpack.c.l.b16 %v7818
  %v8632 = vunpack.c.h.b16 %v7818
  %v8633 = vunpack.c.l.b16 %v7819
  %v8634 = vunpack.c.h.b16 %v7819
  %v8635 = vunpack.c.l.b16 %v7820
  %v8636 = vunpack.c.h.b16 %v7820
  %v8637 = vunpack.c.l.b16 %v7821
  %v8638 = vunpack.c.h.b16 %v7821
  %v8639 = vunpack.c.l.b16 %v7822
  %v8640 = vunpack.c.h.b16 %v7822
  %v8641 = vunpack.c.l.b16 %v7823
  %v8642 = vunpack.c.h.b16 %v7823
  %v8643 = vunpack.c.l.b16 %v7824
  %v8644 = vunpack.c.h.b16 %v7824
  %v8645 = vunpack.c.l.b16 %v7825
  %v8646 = vunpack.c.h.b16 %v7825
  %v8647 = vunpack.c.l.b16 %v7826
  %v8648 = vunpack.c.h.b16 %v7826
  %v8649 = vunpack.c.l.b16 %v7827
  %v8650 = vunpack.c.h.b16 %v7827
  %v8651 = vunpack.c.l.b16 %v7828
  %v8652 = vunpack.c.h.b16 %v7828
  %v8653 = vunpack.c.l.b16 %v7829
  %v8654 = vunpack.c.h.b16 %v7829
  %v8655 = vunpack.c.l.b16 %v7830
  %v8656 = vunpack.c.h.b16 %v7830
  %v8657 = vunpack.c.l.b16 %v7831
  %v8658 = vunpack.c.h.b16 %v7831
  %v8659 = vunpack.c.l.b16 %v7832
  %v8660 = vunpack.c.h.b16 %v7832
  %v8661 = vunpack.c.l.b16 %v7833
  %v8662 = vunpack.c.h.b16 %v7833
  %v8663 = vunpack.c.l.b16 %v7834
  %v8664 = vunpack.c.h.b16 %v7834
  %v8665 = vunpack.c.l.b16 %v7835
  %v8666 = vunpack.c.h.b16 %v7835
  %v8667 = vunpack.c.l.b16 %v7836
  %v8668 = vunpack.c.h.b16 %v7836
  %v8669 = vunpack.c.l.b16 %v7837
  %v8670 = vunpack.c.h.b16 %v7837
  %v8671 = vunpack.c.l.b16 %v7838
  %v8672 = vunpack.c.h.b16 %v7838
  %v8673 = vunpack.c.l.b16 %v7839
  %v8674 = vunpack.c.h.b16 %v7839
  %v8675 = vunpack.c.l.b16 %v7840
  %v8676 = vunpack.c.h.b16 %v7840
  %v8677 = vunpack.c.l.b16 %v7841
  %v8678 = vunpack.c.h.b16 %v7841
  %v8679 = vunpack.c.l.b16 %v7842
  %v8680 = vunpack.c.h.b16 %v7842
  %v8681 = vunpack.c.l.b16 %v7843
  %v8682 = vunpack.c.h.b16 %v7843
  %v8683 = vunpack.c.l.b16 %v7844
  %v8684 = vunpack.c.h.b16 %v7844
  %v8685 = vunpack.c.l.b16 %v7845
  %v8686 = vunpack.c.h.b16 %v7845
  %v8687 = vunpack.c.l.b16 %v7846
  %v8688 = vunpack.c.h.b16 %v7846
  %v8689 = vunpack.c.l.b16 %v7847
  %v8690 = vunpack.c.h.b16 %v7847
  %v8691 = vunpack.c.l.b16 %v7848
  %v8692 = vunpack.c.h.b16 %v7848
  %v8693 = vunpack.c.l.b16 %v7849
  %v8694 = vunpack.c.h.b16 %v7849
  %v8695 = vunpack.c.l.b16 %v7850
  %v8696 = vunpack.c.h.b16 %v7850
  %v8697 = vunpack.c.l.b16 %v7851
  %v8698 = vunpack.c.h.b16 %v7851
  %v8699 = vunpack.c.l.b16 %v7852
  %v8700 = vunpack.c.h.b16 %v7852
  %v8701 = vunpack.c.l.b16 %v7853
  %v8702 = vunpack.c.h.b16 %v7853
  %v8703 = vunpack.c.l.b16 %v7854
  %v8704 = vunpack.c.h.b16 %v7854
  %v8705 = vunpack.c.l.b16 %v7855
  %v8706 = vunpack.c.h.b16 %v7855
  %v8707 = vunpack.c.l.b16 %v7856
  %v8708 = vunpack.c.h.b16 %v7856
  %v8709 = vunpack.c.l.b16 %v7857
  %v8710 = vunpack.c.h.b16 %v7857
  %v8711 = vunpack.c.l.b16 %v7858
  %v8712 = vunpack.c.h.b16 %v7858
  %v8713 = vunpack.c.l.b16 %v7859
  %v8714 = vunpack.c.h.b16 %v7859
  %v8715 = vunpack.c.l.b16 %v7860
  %v8716 = vunpack.c.h.b16 %v7860
  %v8717 = vunpack.c.l.b16 %v7861
  %v8718 = vunpack.c.h.b16 %v7861
  %v8719 = vunpack.c.l.b16 %v7862
  %v8720 = vunpack.c.h.b16 %v7862
  %v8721 = vunpack.c.l.b16 %v7863
  %v8722 = vunpack.c.h.b16 %v7863
  %v8723 = vunpack.c.l.b16 %v7864
  %v8724 = vunpack.c.h.b16 %v7864
  %v8725 = vunpack.c.l.b16 %v7865
  %v8726 = vunpack.c.h.b16 %v7865
  %v8727 = vunpack.c.l.b16 %v7866
  %v8728 = vunpack.c.h.b16 %v7866
  %v8729 = vunpack.c.l.b16 %v7867
  %v8730 = vunpack.c.h.b16 %v7867
  %v8731 = vunpack.c.l.b16 %v7868
  %v8732 = vunpack.c.h.b16 %v7868
  %v8733 = vunpack.c.l.b16 %v7869
  %v8734 = vunpack.c.h.b16 %v7869
  %v8735 = vunpack.c.l.b16 %v7870
  %v8736 = vunpack.c.h.b16 %v7870
  %v8737 = vunpack.c.l.b16 %v7871
  %v8738 = vunpack.c.h.b16 %v7871
  %v8739 = vunpack.c.l.b16 %v7872
  %v8740 = vunpack.c.h.b16 %v7872
  %v8741 = vunpack.c.l.b16 %v7873
  %v8742 = vunpack.c.h.b16 %v7873
  %v8743 = vunpack.c.l.b16 %v7874
  %v8744 = vunpack.c.h.b16 %v7874
  %v8745 = vunpack.c.l.b16 %v7875
  %v8746 = vunpack.c.h.b16 %v7875
  %v8747 = vunpack.c.l.b16 %v7876
  %v8748 = vunpack.c.h.b16 %v7876
  %v8749 = vunpack.c.l.b16 %v7877
  %v8750 = vunpack.c.h.b16 %v7877
  %v8751 = vunpack.c.l.b16 %v7878
  %v8752 = vunpack.c.h.b16 %v7878
  %v8753 = vunpack.c.l.b16 %v7879
  %v8754 = vunpack.c.h.b16 %v7879
  %v8755 = vunpack.c.l.b16 %v7880
  %v8756 = vunpack.c.h.b16 %v7880
  %v8757 = vunpack.c.l.b16 %v7881
  %v8758 = vunpack.c.h.b16 %v7881
  %v8759 = vunpack.c.l.b16 %v7882
  %v8760 = vunpack.c.h.b16 %v7882
  %v8761 = vunpack.c.l.b16 %v7883
  %v8762 = vunpack.c.h.b16 %v7883
  %v8763 = vunpack.c.l.b16 %v7884
  %v8764 = vunpack.c.h.b16 %v7884
  %v8765 = vunpack.c.l.b16 %v7885
  %v8766 = vunpack.c.h.b16 %v7885
  %v8767 = vunpack.c.l.b16 %v7886
  %v8768 = vunpack.c.h.b16 %v7886
  %v8769 = vunpack.c.l.b16 %v7887
  %v8770 = vunpack.c.h.b16 %v7887
  %v8771 = vunpack.c.l.b16 %v7888
  %v8772 = vunpack.c.h.b16 %v7888
  %v8773 = vunpack.c.l.b16 %v7889
  %v8774 = vunpack.c.h.b16 %v7889
  %v8775 = vunpack.c.l.b16 %v7890
  %v8776 = vunpack.c.h.b16 %v7890
  %v8777 = vunpack.c.l.b16 %v7891
  %v8778 = vunpack.c.h.b16 %v7891
  %v8779 = vunpack.c.l.b16 %v7892
  %v8780 = vunpack.c.h.b16 %v7892
  %v8781 = vunpack.c.l.b16 %v7893
  %v8782 = vunpack.c.h.b16 %v7893
  %v8783 = vunpack.c.l.b16 %v7894
  %v8784 = vunpack.c.h.b16 %v7894
  %v8785 = vunpack.c.l.b16 %v7895
  %v8786 = vunpack.c.h.b16 %v7895
  %v8787 = vunpack.c.l.b16 %v7896
  %v8788 = vunpack.c.h.b16 %v7896
  %v8789 = vunpack.c.l.b16 %v7897
  %v8790 = vunpack.c.h.b16 %v7897
  %v8791 = vunpack.c.l.b16 %v7898
  %v8792 = vunpack.c.h.b16 %v7898
  %v8793 = vunpack.c.l.b16 %v7899
  %v8794 = vunpack.c.h.b16 %v7899
  %v8795 = vunpack.c.l.b16 %v7900
  %v8796 = vunpack.c.h.b16 %v7900
  %v8797 = vunpack.c.l.b16 %v7901
  %v8798 = vunpack.c.h.b16 %v7901
  %v8799 = vunpack.c.l.b16 %v7902
  %v8800 = vunpack.c.h.b16 %v7902
  %v8801 = vunpack.c.l.b16 %v7903
  %v8802 = vunpack.c.h.b16 %v7903
  %v8803 = vunpack.c.l.b16 %v7904
  %v8804 = vunpack.c.h.b16 %v7904
  %v8805 = vunpack.c.l.b16 %v7905
  %v8806 = vunpack.c.h.b16 %v7905
  %v8807 = vunpack.c.l.b16 %v7906
  %v8808 = vunpack.c.h.b16 %v7906
  %v8809 = vunpack.c.l.b16 %v7907
  %v8810 = vunpack.c.h.b16 %v7907
  %v8811 = vunpack.c.l.b16 %v7908
  %v8812 = vunpack.c.h.b16 %v7908
  %v8813 = vunpack.c.l.b16 %v7909
  %v8814 = vunpack.c.h.b16 %v7909
  %v8815 = vunpack.c.l.b16 %v7910
  %v8816 = vunpack.c.h.b16 %v7910
  %v8817 = vunpack.c.l.b16 %v7911
  %v8818 = vunpack.c.h.b16 %v7911
  %v8819 = vunpack.c.l.b16 %v7912
  %v8820 = vunpack.c.h.b16 %v7912
  %v8821 = vunpack.c.l.b16 %v7913
  %v8822 = vunpack.c.h.b16 %v7913
  %v8823 = vunpack.c.l.b16 %v7914
  %v8824 = vunpack.c.h.b16 %v7914
  %v8825 = vunpack.c.l.b16 %v7915
  %v8826 = vunpack.c.h.b16 %v7915
  %v8827 = vunpack.c.l.b16 %v7916
  %v8828 = vunpack.c.h.b16 %v7916
  %v8829 = vunpack.c.l.b16 %v7917
  %v8830 = vunpack.c.h.b16 %v7917
  %v8831 = vunpack.c.l.b16 %v7918
  %v8832 = vunpack.c.h.b16 %v7918
  %v8833 = vunpack.c.l.b16 %v7919
  %v8834 = vunpack.c.h.b16 %v7919
  %v8835 = vunpack.c.l.b16 %v7920
  %v8836 = vunpack.c.h.b16 %v7920
  %v8837 = vunpack.c.l.b16 %v7921
  %v8838 = vunpack.c.h.b16 %v7921
  %v8839 = vunpack.c.l.b16 %v7922
  %v8840 = vunpack.c.h.b16 %v7922
  %v8841 = vunpack.c.l.b16 %v7923
  %v8842 = vunpack.c.h.b16 %v7923
  %v8843 = vunpack.c.l.b16 %v7924
  %v8844 = vunpack.c.h.b16 %v7924
  %v8845 = vunpack.c.l.b16 %v7925
  %v8846 = vunpack.c.h.b16 %v7925
  %v8847 = vunpack.c.l.b16 %v7926
  %v8848 = vunpack.c.h.b16 %v7926
  %v8849 = vunpack.c.l.b16 %v7927
  %v8850 = vunpack.c.h.b16 %v7927
  %v8851 = vunpack.c.l.b16 %v7928
  %v8852 = vunpack.c.h.b16 %v7928
  %v8853 = vunpack.c.l.b16 %v7929
  %v8854 = vunpack.c.h.b16 %v7929
  %v8855 = vunpack.c.l.b16 %v7930
  %v8856 = vunpack.c.h.b16 %v7930
  %v8857 = vunpack.c.l.b16 %v7931
  %v8858 = vunpack.c.h.b16 %v7931
  %v8859 = vunpack.c.l.b16 %v7932
  %v8860 = vunpack.c.h.b16 %v7932
  %v8861 = vunpack.c.l.b16 %v7933
  %v8862 = vunpack.c.h.b16 %v7933
  %v8863 = vunpack.c.l.b16 %v7934
  %v8864 = vunpack.c.h.b16 %v7934
  %v8865 = vunpack.c.l.b16 %v7935
  %v8866 = vunpack.c.h.b16 %v7935
  %v8867 = vunpack.c.l.b16 %v7936
  %v8868 = vunpack.c.h.b16 %v7936
  %v8869 = vunpack.c.l.b16 %v7937
  %v8870 = vunpack.c.h.b16 %v7937
  %v8871 = vunpack.c.l.b16 %v7938
  %v8872 = vunpack.c.h.b16 %v7938
  %v8873 = vunpack.c.l.b16 %v7939
  %v8874 = vunpack.c.h.b16 %v7939
  %v8875 = vunpack.c.l.b16 %v7940
  %v8876 = vunpack.c.h.b16 %v7940
  %v8877 = vunpack.c.l.b16 %v7941
  %v8878 = vunpack.c.h.b16 %v7941
  %v8879 = vunpack.c.l.b16 %v7942
  %v8880 = vunpack.c.h.b16 %v7942
  %v8881 = vunpack.c.l.b16 %v7943
  %v8882 = vunpack.c.h.b16 %v7943
  %v8883 = vunpack.c.l.b16 %v7944
  %v8884 = vunpack.c.h.b16 %v7944
  %v8885 = vunpack.c.l.b16 %v7945
  %v8886 = vunpack.c.h.b16 %v7945
  %v8887 = vunpack.c.l.b16 %v7946
  %v8888 = vunpack.c.h.b16 %v7946
  %v8889 = vunpack.c.l.b16 %v7947
  %v8890 = vunpack.c.h.b16 %v7947
  %v8891 = vunpack.c.l.b16 %v7948
  %v8892 = vunpack.c.h.b16 %v7948
  %v8893 = vunpack.c.l.b16 %v7949
  %v8894 = vunpack.c.h.b16 %v7949
  %v8895 = vunpack.c.l.b16 %v7950
  %v8896 = vunpack.c.h.b16 %v7950
  %v8897 = vunpack.c.l.b16 %v7951
  %v8898 = vunpack.c.h.b16 %v7951
  %v8899 = vunpack.c.l.b16 %v7952
  %v8900 = vunpack.c.h.b16 %v7952
  %v8901 = vunpack.c.l.b16 %v7953
  %v8902 = vunpack.c.h.b16 %v7953
  %v8903 = vunpack.c.l.b16 %v7954
  %v8904 = vunpack.c.h.b16 %v7954
  %v8905 = vunpack.c.l.b16 %v7955
  %v8906 = vunpack.c.h.b16 %v7955
  %v8907 = vunpack.c.l.b16 %v7956
  %v8908 = vunpack.c.h.b16 %v7956
  %v8909 = vunpack.c.l.b16 %v7957
  %v8910 = vunpack.c.h.b16 %v7957
  %v8911 = vunpack.c.l.b16 %v7958
  %v8912 = vunpack.c.h.b16 %v7958
  %v8913 = vunpack.c.l.b16 %v7959
  %v8914 = vunpack.c.h.b16 %v7959
  %v8915 = vunpack.c.l.b16 %v7960
  %v8916 = vunpack.c.h.b16 %v7960
  %v8917 = vunpack.c.l.b16 %v7961
  %v8918 = vunpack.c.h.b16 %v7961
  %v8919 = vunpack.c.l.b16 %v7962
  %v8920 = vunpack.c.h.b16 %v7962
  %v8921 = vunpack.c.l.b16 %v7963
  %v8922 = vunpack.c.h.b16 %v7963
  %v8923 = vunpack.c.l.b16 %v7964
  %v8924 = vunpack.c.h.b16 %v7964
  %v8925 = vunpack.c.l.b16 %v7965
  %v8926 = vunpack.c.h.b16 %v7965
  %v8927 = vunpack.c.l.b16 %v7966
  %v8928 = vunpack.c.h.b16 %v7966
  %v8929 = vunpack.c.l.b16 %v7967
  %v8930 = vunpack.c.h.b16 %v7967
  %v8931 = vunpack.c.l.b16 %v7968
  %v8932 = vunpack.c.h.b16 %v7968
  %v8933 = vunpack.c.l.b16 %v7969
  %v8934 = vunpack.c.h.b16 %v7969
  %v8935 = vunpack.c.l.b16 %v7970
  %v8936 = vunpack.c.h.b16 %v7970
  %v8937 = vunpack.c.l.b16 %v7971
  %v8938 = vunpack.c.h.b16 %v7971
  %v8939 = vunpack.c.l.b16 %v7972
  %v8940 = vunpack.c.h.b16 %v7972
  %v8941 = vunpack.c.l.b16 %v7973
  %v8942 = vunpack.c.h.b16 %v7973
  %v8943 = vunpack.c.l.b16 %v7974
  %v8944 = vunpack.c.h.b16 %v7974
  %v8945 = vunpack.c.l.b16 %v7975
  %v8946 = vunpack.c.h.b16 %v7975
  %v8947 = vunpack.c.l.b16 %v7976
  %v8948 = vunpack.c.h.b16 %v7976
  %v8949 = vunpack.c.l.b16 %v7977
  %v8950 = vunpack.c.h.b16 %v7977
  %v8951 = vunpack.c.l.b16 %v7978
  %v8952 = vunpack.c.h.b16 %v7978
  %v8953 = vunpack.c.l.b16 %v7979
  %v8954 = vunpack.c.h.b16 %v7979
  %v8955 = vunpack.c.l.b16 %v7980
  %v8956 = vunpack.c.h.b16 %v7980
  %v8957 = vunpack.c.l.b16 %v7981
  %v8958 = vunpack.c.h.b16 %v7981
  %v8959 = vunpack.c.l.b16 %v7982
  %v8960 = vunpack.c.h.b16 %v7982
  %v8961 = vunpack.c.l.b16 %v7983
  %v8962 = vunpack.c.h.b16 %v7983
  %v8963 = vunpack.c.l.b16 %v7984
  %v8964 = vunpack.c.h.b16 %v7984
  %v8965 = vunpack.c.l.b16 %v7985
  %v8966 = vunpack.c.h.b16 %v7985
  %v8967 = vunpack.c.l.b16 %v7986
  %v8968 = vunpack.c.h.b16 %v7986
  %v8969 = vunpack.c.l.b16 %v7987
  %v8970 = vunpack.c.h.b16 %v7987
  %v8971 = vunpack.c.l.b16 %v7988
  %v8972 = vunpack.c.h.b16 %v7988
  %v8973 = vunpack.c.l.b16 %v7989
  %v8974 = vunpack.c.h.b16 %v7989
  %v8975 = vunpack.c.l.b16 %v7990
  %v8976 = vunpack.c.h.b16 %v7990
  %v8977 = vunpack.c.l.b16 %v7991
  %v8978 = vunpack.c.h.b16 %v7991
  %v8979 = vunpack.c.l.b16 %v7992
  %v8980 = vunpack.c.h.b16 %v7992
  %v8981 = vunpack.c.l.b16 %v7993
  %v8982 = vunpack.c.h.b16 %v7993
  %v8983 = vunpack.c.l.b16 %v7994
  %v8984 = vunpack.c.h.b16 %v7994
  %v8985 = vunpack.c.l.b16 %v7995
  %v8986 = vunpack.c.h.b16 %v7995
  %v8987 = vunpack.c.l.b16 %v7996
  %v8988 = vunpack.c.h.b16 %v7996
  %v8989 = vunpack.c.l.b16 %v7997
  %v8990 = vunpack.c.h.b16 %v7997
  %v8991 = vunpack.c.l.b16 %v7998
  %v8992 = vunpack.c.h.b16 %v7998
  %v8993 = vunpack.c.l.b16 %v7999
  %v8994 = vunpack.c.h.b16 %v7999
  %v8995 = vunpack.c.l.b16 %v8000
  %v8996 = vunpack.c.h.b16 %v8000
  %v8997 = vunpack.c.l.b16 %v8001
  %v8998 = vunpack.c.h.b16 %v8001
  %v8999 = vunpack.c.l.b16 %v8002
  %v9000 = vunpack.c.h.b16 %v8002
  %v9001 = vunpack.c.l.b16 %v8003
  %v9002 = vunpack.c.h.b16 %v8003
  %v9003 = vunpack.c.l.b16 %v8004
  %v9004 = vunpack.c.h.b16 %v8004
  %v9005 = vunpack.c.l.b16 %v8005
  %v9006 = vunpack.c.h.b16 %v8005
  %v9007 = vunpack.c.l.b16 %v8006
  %v9008 = vunpack.c.h.b16 %v8006
  %v9009 = vunpack.c.l.b16 %v8007
  %v9010 = vunpack.c.h.b16 %v8007
  %v9011 = vunpack.c.l.b16 %v8008
  %v9012 = vunpack.c.h.b16 %v8008
  %v9013 = vunpack.c.l.b16 %v8009
  %v9014 = vunpack.c.h.b16 %v8009
  %v9015 = vunpack.c.l.b16 %v8010
  %v9016 = vunpack.c.h.b16 %v8010
  %v9017 = vunpack.c.l.b16 %v8011
  %v9018 = vunpack.c.h.b16 %v8011
  %v9019 = vunpack.c.l.b16 %v8012
  %v9020 = vunpack.c.h.b16 %v8012
  %v9021 = vunpack.c.l.b16 %v8013
  %v9022 = vunpack.c.h.b16 %v8013
  %v9023 = vunpack.c.l.b16 %v8014
  %v9024 = vunpack.c.h.b16 %v8014
  %v9025 = vunpack.c.l.b16 %v8015
  %v9026 = vunpack.c.h.b16 %v8015
  %v9027 = vunpack.c.l.b16 %v8016
  %v9028 = vunpack.c.h.b16 %v8016
  %v9029 = vunpack.c.l.b16 %v8017
  %v9030 = vunpack.c.h.b16 %v8017
  %v9031 = vunpack.c.l.b16 %v8018
  %v9032 = vunpack.c.h.b16 %v8018
  %v9033 = vunpack.c.l.b16 %v8019
  %v9034 = vunpack.c.h.b16 %v8019
  %v9035 = vunpack.c.l.b16 %v8020
  %v9036 = vunpack.c.h.b16 %v8020
  %v9037 = vunpack.c.l.b16 %v8021
  %v9038 = vunpack.c.h.b16 %v8021
  %v9039 = vunpack.c.l.b16 %v8022
  %v9040 = vunpack.c.h.b16 %v8022
  %v9041 = vunpack.c.l.b16 %v8023
  %v9042 = vunpack.c.h.b16 %v8023
  %v9043 = vunpack.c.l.b16 %v8024
  %v9044 = vunpack.c.h.b16 %v8024
  %v9045 = vunpack.c.l.b16 %v8025
  %v9046 = vunpack.c.h.b16 %v8025
  %v9047 = vunpack.c.l.b16 %v8026
  %v9048 = vunpack.c.h.b16 %v8026
  %v9049 = vunpack.c.l.b16 %v8027
  %v9050 = vunpack.c.h.b16 %v8027
  %v9051 = vunpack.c.l.b16 %v8028
  %v9052 = vunpack.c.h.b16 %v8028
  %v9053 = vunpack.c.l.b16 %v8029
  %v9054 = vunpack.c.h.b16 %v8029
  %v9055 = vunpack.c.l.b16 %v8030
  %v9056 = vunpack.c.h.b16 %v8030
  %v9057 = vunpack.c.l.b16 %v8031
  %v9058 = vunpack.c.h.b16 %v8031
  %v9059 = vunpack.c.l.b16 %v8032
  %v9060 = vunpack.c.h.b16 %v8032
  %v9061 = vunpack.c.l.b16 %v8033
  %v9062 = vunpack.c.h.b16 %v8033
  %v9063 = vunpack.c.l.b16 %v8034
  %v9064 = vunpack.c.h.b16 %v8034
  %v9065 = vunpack.c.l.b16 %v8035
  %v9066 = vunpack.c.h.b16 %v8035
  %v9067 = vunpack.c.l.b16 %v8036
  %v9068 = vunpack.c.h.b16 %v8036
  %v9069 = vunpack.c.l.b16 %v8037
  %v9070 = vunpack.c.h.b16 %v8037
  %v9071 = vunpack.c.l.b16 %v8038
  %v9072 = vunpack.c.h.b16 %v8038
  %v9073 = vunpack.c.l.b16 %v8039
  %v9074 = vunpack.c.h.b16 %v8039
  %v9075 = vunpack.c.l.b16 %v8040
  %v9076 = vunpack.c.h.b16 %v8040
  %v9077 = vunpack.c.l.b16 %v8041
  %v9078 = vunpack.c.h.b16 %v8041
  %v9079 = vunpack.c.l.b16 %v8042
  %v9080 = vunpack.c.h.b16 %v8042
  %v9081 = vunpack.c.l.b16 %v8043
  %v9082 = vunpack.c.h.b16 %v8043
  %v9083 = vunpack.c.l.b16 %v8044
  %v9084 = vunpack.c.h.b16 %v8044
  %v9085 = vunpack.c.l.b16 %v8045
  %v9086 = vunpack.c.h.b16 %v8045
  %v9087 = vunpack.c.l.b16 %v8046
  %v9088 = vunpack.c.h.b16 %v8046
  %v9089 = vunpack.c.l.b16 %v8047
  %v9090 = vunpack.c.h.b16 %v8047
  %v9091 = vunpack.c.l.b16 %v8048
  %v9092 = vunpack.c.h.b16 %v8048
  %v9093 = vunpack.c.l.b16 %v8049
  %v9094 = vunpack.c.h.b16 %v8049
  %v9095 = vunpack.c.l.b16 %v8050
  %v9096 = vunpack.c.h.b16 %v8050
  %v9097 = vunpack.c.l.b16 %v8051
  %v9098 = vunpack.c.h.b16 %v8051
  %v9099 = vunpack.c.l.b16 %v8052
  %v9100 = vunpack.c.h.b16 %v8052
  %v9101 = vunpack.c.l.b16 %v8053
  %v9102 = vunpack.c.h.b16 %v8053
  %v9103 = vunpack.c.l.b16 %v8054
  %v9104 = vunpack.c.h.b16 %v8054
  %v9105 = vunpack.c.l.b16 %v8055
  %v9106 = vunpack.c.h.b16 %v8055
  %v9107 = vunpack.c.l.b16 %v8056
  %v9108 = vunpack.c.h.b16 %v8056
  %v9109 = vunpack.c.l.b16 %v8057
  %v9110 = vunpack.c.h.b16 %v8057
  %v9111 = vunpack.c.l.b16 %v8058
  %v9112 = vunpack.c.h.b16 %v8058
  %v9113 = vunpack.c.l.b16 %v8059
  %v9114 = vunpack.c.h.b16 %v8059
  %v9115 = vunpack.c.l.b16 %v8060
  %v9116 = vunpack.c.h.b16 %v8060
  %v9117 = vunpack.c.l.b16 %v8061
  %v9118 = vunpack.c.h.b16 %v8061
  %v9119 = vunpack.c.l.b16 %v8062
  %v9120 = vunpack.c.h.b16 %v8062
  %v9121 = vunpack.c.l.b16 %v8063
  %v9122 = vunpack.c.h.b16 %v8063
  %v9123 = vunpack.c.l.b16 %v8064
  %v9124 = vunpack.c.h.b16 %v8064
  %v9125 = vunpack.c.l.b16 %v8065
  %v9126 = vunpack.c.h.b16 %v8065
  %v9127 = vunpack.c.l.b16 %v8066
  %v9128 = vunpack.c.h.b16 %v8066
  %v9129 = vunpack.c.l.b16 %v8067
  %v9130 = vunpack.c.h.b16 %v8067
  %v9131 = vunpack.c.l.b16 %v8068
  %v9132 = vunpack.c.h.b16 %v8068
  %v9133 = vunpack.c.l.b16 %v8069
  %v9134 = vunpack.c.h.b16 %v8069
  %v9135 = vunpack.c.l.b16 %v8070
  %v9136 = vunpack.c.h.b16 %v8070
  %v9137 = vunpack.c.l.b16 %v8071
  %v9138 = vunpack.c.h.b16 %v8071
  %v9139 = vunpack.c.l.b16 %v8072
  %v9140 = vunpack.c.h.b16 %v8072
  %v9141 = vunpack.c.l.b16 %v8073
  %v9142 = vunpack.c.h.b16 %v8073
  %v9143 = vunpack.c.l.b16 %v8074
  %v9144 = vunpack.c.h.b16 %v8074
  %v9145 = vunpack.c.l.b16 %v8075
  %v9146 = vunpack.c.h.b16 %v8075
  %v9147 = vunpack.c.l.b16 %v8076
  %v9148 = vunpack.c.h.b16 %v8076
  %v9149 = vunpack.c.l.b16 %v8077
  %v9150 = vunpack.c.h.b16 %v8077
  %v9151 = vunpack.c.l.b16 %v8078
  %v9152 = vunpack.c.h.b16 %v8078
  %v9153 = vunpack.c.l.b16 %v8079
  %v9154 = vunpack.c.h.b16 %v8079
  %v9155 = vunpack.c.l.b16 %v8080
  %v9156 = vunpack.c.h.b16 %v8080
  %v9157 = vunpack.c.l.b16 %v8081
  %v9158 = vunpack.c.h.b16 %v8081
  %v9159 = vunpack.c.l.b16 %v8082
  %v9160 = vunpack.c.h.b16 %v8082
  %v9161 = vunpack.c.l.b16 %v8083
  %v9162 = vunpack.c.h.b16 %v8083
  %v9163 = vunpack.c.l.b16 %v8084
  %v9164 = vunpack.c.h.b16 %v8084
  %v9165 = vunpack.c.l.b16 %v8085
  %v9166 = vunpack.c.h.b16 %v8085
  %v9167 = vunpack.c.l.b16 %v8086
  %v9168 = vunpack.c.h.b16 %v8086
  %v9169 = vunpack.c.l.b16 %v8087
  %v9170 = vunpack.c.h.b16 %v8087
  %v9171 = vunpack.c.l.b16 %v8088
  %v9172 = vunpack.c.h.b16 %v8088
  %v9173 = vunpack.c.l.b16 %v8089
  %v9174 = vunpack.c.h.b16 %v8089
  %v9175 = vunpack.c.l.b16 %v8090
  %v9176 = vunpack.c.h.b16 %v8090
  %v9177 = vunpack.c.l.b16 %v8091
  %v9178 = vunpack.c.h.b16 %v8091
  %v9179 = vunpack.c.l.b16 %v8092
  %v9180 = vunpack.c.h.b16 %v8092
  %v9181 = vunpack.c.l.b16 %v8093
  %v9182 = vunpack.c.h.b16 %v8093
  %v9183 = vunpack.c.l.b16 %v8094
  %v9184 = vunpack.c.h.b16 %v8094
  %v9185 = vunpack.c.l.b16 %v8095
  %v9186 = vunpack.c.h.b16 %v8095
  %v9187 = vunpack.c.l.b16 %v8096
  %v9188 = vunpack.c.h.b16 %v8096
  %v9189 = vunpack.c.l.b16 %v8097
  %v9190 = vunpack.c.h.b16 %v8097
  %v9191 = vunpack.c.l.b16 %v8098
  %v9192 = vunpack.c.h.b16 %v8098
  %v9193 = vunpack.c.l.b16 %v8099
  %v9194 = vunpack.c.h.b16 %v8099
  %v9195 = vunpack.c.l.b16 %v8100
  %v9196 = vunpack.c.h.b16 %v8100
  %v9197 = vunpack.c.l.b16 %v8101
  %v9198 = vunpack.c.h.b16 %v8101
  %v9199 = vunpack.c.l.b16 %v8102
  %v9200 = vunpack.c.h.b16 %v8102
  %v9201 = vunpack.c.l.b16 %v8103
  %v9202 = vunpack.c.h.b16 %v8103
  %v9203 = vunpack.c.l.b16 %v8104
  %v9204 = vunpack.c.h.b16 %v8104
  %v9205 = vunpack.c.l.b16 %v8105
  %v9206 = vunpack.c.h.b16 %v8105
  %v9207 = vunpack.c.l.b16 %v8106
  %v9208 = vunpack.c.h.b16 %v8106
  %v9209 = vunpack.c.l.b16 %v8107
  %v9210 = vunpack.c.h.b16 %v8107
  %v9211 = vunpack.c.l.b16 %v8108
  %v9212 = vunpack.c.h.b16 %v8108
  %v9213 = vunpack.c.l.b16 %v8109
  %v9214 = vunpack.c.h.b16 %v8109
  %v9215 = vunpack.c.l.b16 %v8110
  %v9216 = vunpack.c.h.b16 %v8110
  %v9217 = vunpack.c.l.b16 %v8111
  %v9218 = vunpack.c.h.b16 %v8111
  %v9219 = vunpack.c.l.b16 %v8112
  %v9220 = vunpack.c.h.b16 %v8112
  %v9221 = vunpack.c.l.b16 %v8113
  %v9222 = vunpack.c.h.b16 %v8113
  %v9223 = vunpack.c.l.b16 %v8114
  %v9224 = vunpack.c.h.b16 %v8114
  %v9225 = vunpack.c.l.b16 %v8115
  %v9226 = vunpack.c.h.b16 %v8115
  %v9227 = vunpack.c.l.b16 %v8116
  %v9228 = vunpack.c.h.b16 %v8116
  %v9229 = vunpack.c.l.b16 %v8117
  %v9230 = vunpack.c.h.b16 %v8117
  %v9231 = vunpack.c.l.b16 %v8118
  %v9232 = vunpack.c.h.b16 %v8118
  %v9233 = vunpack.c.l.b16 %v8119
  %v9234 = vunpack.c.h.b16 %v8119
  %v9235 = vunpack.c.l.b16 %v8120
  %v9236 = vunpack.c.h.b16 %v8120
  %v9237 = vunpack.c.l.b16 %v8121
  %v9238 = vunpack.c.h.b16 %v8121
  %v9239 = vunpack.c.l.b16 %v8122
  %v9240 = vunpack.c.h.b16 %v8122
  %v9241 = vunpack.c.l.b16 %v8123
  %v9242 = vunpack.c.h.b16 %v8123
  %v9243 = vunpack.c.l.b16 %v8124
  %v9244 = vunpack.c.h.b16 %v8124
  %v9245 = vunpack.c.l.b16 %v8125
  %v9246 = vunpack.c.h.b16 %v8125
  %v9247 = vunpack.c.l.b16 %v8126
  %v9248 = vunpack.c.h.b16 %v8126
  %v9249 = vunpack.c.l.b16 %v8127
  %v9250 = vunpack.c.h.b16 %v8127
  %v9251 = vunpack.c.l.b16 %v8128
  %v9252 = vunpack.c.h.b16 %v8128
  %v9253 = vunpack.c.l.b16 %v8129
  %v9254 = vunpack.c.h.b16 %v8129
  %v9255 = vunpack.c.l.b16 %v8130
  %v9256 = vunpack.c.h.b16 %v8130
  %v9257 = vunpack.c.l.b16 %v8131
  %v9258 = vunpack.c.h.b16 %v8131
  %v9259 = vunpack.c.l.b16 %v8132
  %v9260 = vunpack.c.h.b16 %v8132
  %v9261 = vunpack.c.l.b16 %v8133
  %v9262 = vunpack.c.h.b16 %v8133
  %v9263 = vunpack.c.l.b16 %v8134
  %v9264 = vunpack.c.h.b16 %v8134
  %v9265 = vunpack.c.l.b16 %v8135
  %v9266 = vunpack.c.h.b16 %v8135
  %v9267 = vunpack.c.l.b16 %v8136
  %v9268 = vunpack.c.h.b16 %v8136
  %v9269 = vunpack.c.l.b16 %v8137
  %v9270 = vunpack.c.h.b16 %v8137
  %v9271 = vunpack.c.l.b16 %v8138
  %v9272 = vunpack.c.h.b16 %v8138
  %v9273 = vunpack.c.l.b16 %v8139
  %v9274 = vunpack.c.h.b16 %v8139
  %v9275 = vunpack.c.l.b16 %v8140
  %v9276 = vunpack.c.h.b16 %v8140
  %v9277 = vunpack.c.l.b16 %v8141
  %v9278 = vunpack.c.h.b16 %v8141
  %v9279 = vunpack.c.l.b16 %v8142
  %v9280 = vunpack.c.h.b16 %v8142
  %v9281 = vunpack.c.l.b16 %v8143
  %v9282 = vunpack.c.h.b16 %v8143
  %v9283 = vunpack.c.l.b16 %v8144
  %v9284 = vunpack.c.h.b16 %v8144
  %v9285 = vunpack.c.l.b16 %v8145
  %v9286 = vunpack.c.h.b16 %v8145
  %v9287 = vunpack.c.l.b16 %v8146
  %v9288 = vunpack.c.h.b16 %v8146
  %v9289 = vunpack.c.l.b16 %v8147
  %v9290 = vunpack.c.h.b16 %v8147
  %v9291 = vunpack.c.l.b16 %v8148
  %v9292 = vunpack.c.h.b16 %v8148
  %v9293 = vunpack.c.l.b16 %v8149
  %v9294 = vunpack.c.h.b16 %v8149
  %v9295 = vunpack.c.l.b16 %v8150
  %v9296 = vunpack.c.h.b16 %v8150
  %v9297 = vunpack.c.l.b16 %v8151
  %v9298 = vunpack.c.h.b16 %v8151
  %v9299 = vunpack.c.l.b16 %v8152
  %v9300 = vunpack.c.h.b16 %v8152
  %v9301 = vunpack.c.l.b16 %v8153
  %v9302 = vunpack.c.h.b16 %v8153
  %v9303 = vunpack.c.l.b16 %v8154
  %v9304 = vunpack.c.h.b16 %v8154
  %v9305 = vunpack.c.l.b16 %v8155
  %v9306 = vunpack.c.h.b16 %v8155
  %v9307 = vunpack.c.l.b16 %v8156
  %v9308 = vunpack.c.h.b16 %v8156
  %v9309 = vpack.c.b16 %v8545, %v8541
  %v9310 = vpack.c.b16 %v8546, %v8542
  %v9311 = vpack.c.b16 %v8547, %v8543
  %v9312 = vpack.c.b16 %v8548, %v8544
  %v9313 = vpack.c.b16 %v8553, %v8549
  %v9314 = vpack.c.b16 %v8554, %v8550
  %v9315 = vpack.c.b16 %v8555, %v8551
  %v9316 = vpack.c.b16 %v8556, %v8552
  %v9317 = vpack.c.b16 %v8561, %v8557
  %v9318 = vpack.c.b16 %v8562, %v8558
  %v9319 = vpack.c.b16 %v8563, %v8559
  %v9320 = vpack.c.b16 %v8564, %v8560
  %v9321 = vpack.c.b16 %v8569, %v8565
  %v9322 = vpack.c.b16 %v8570, %v8566
  %v9323 = vpack.c.b16 %v8571, %v8567
  %v9324 = vpack.c.b16 %v8572, %v8568
  %v9325 = vpack.c.b16 %v8577, %v8573
  %v9326 = vpack.c.b16 %v8578, %v8574
  %v9327 = vpack.c.b16 %v8579, %v8575
  %v9328 = vpack.c.b16 %v8580, %v8576
  %v9329 = vpack.c.b16 %v8585, %v8581
  %v9330 = vpack.c.b16 %v8586, %v8582
  %v9331 = vpack.c.b16 %v8587, %v8583
  %v9332 = vpack.c.b16 %v8588, %v8584
  %v9333 = vpack.c.b16 %v8593, %v8589
  %v9334 = vpack.c.b16 %v8594, %v8590
  %v9335 = vpack.c.b16 %v8595, %v8591
  %v9336 = vpack.c.b16 %v8596, %v8592
  %v9337 = vpack.c.b16 %v8601, %v8597
  %v9338 = vpack.c.b16 %v8602, %v8598
  %v9339 = vpack.c.b16 %v8603, %v8599
  %v9340 = vpack.c.b16 %v8604, %v8600
  %v9341 = vpack.c.b16 %v8609, %v8605
  %v9342 = vpack.c.b16 %v8610, %v8606
  %v9343 = vpack.c.b16 %v8611, %v8607
  %v9344 = vpack.c.b16 %v8612, %v8608
  %v9345 = vpack.c.b16 %v8617, %v8613
  %v9346 = vpack.c.b16 %v8618, %v8614
  %v9347 = vpack.c.b16 %v8619, %v8615
  %v9348 = vpack.c.b16 %v8620, %v8616
  %v9349 = vpack.c.b16 %v8625, %v8621
  %v9350 = vpack.c.b16 %v8626, %v8622
  %v9351 = vpack.c.b16 %v8627, %v8623
  %v9352 = vpack.c.b16 %v8628, %v8624
  %v9353 = vpack.c.b16 %v8633, %v8629
  %v9354 = vpack.c.b16 %v8634, %v8630
  %v9355 = vpack.c.b16 %v8635, %v8631
  %v9356 = vpack.c.b16 %v8636, %v8632
  %v9357 = vpack.c.b16 %v8641, %v8637
  %v9358 = vpack.c.b16 %v8642, %v8638
  %v9359 = vpack.c.b16 %v8643, %v8639
  %v9360 = vpack.c.b16 %v8644, %v8640
  %v9361 = vpack.c.b16 %v8649, %v8645
  %v9362 = vpack.c.b16 %v8650, %v8646
  %v9363 = vpack.c.b16 %v8651, %v8647
  %v9364 = vpack.c.b16 %v8652, %v8648
  %v9365 = vpack.c.b16 %v8657, %v8653
  %v9366 = vpack.c.b16 %v8658, %v8654
  %v9367 = vpack.c.b16 %v8659, %v8655
  %v9368 = vpack.c.b16 %v8660, %v8656
  %v9369 = vpack.c.b16 %v8665, %v8661
  %v9370 = vpack.c.b16 %v8666, %v8662
  %v9371 = vpack.c.b16 %v8667, %v8663
  %v9372 = vpack.c.b16 %v8668, %v8664
  %v9373 = vpack.c.b16 %v8673, %v8669
  %v9374 = vpack.c.b16 %v8674, %v8670
  %v9375 = vpack.c.b16 %v8675, %v8671
  %v9376 = vpack.c.b16 %v8676, %v8672
  %v9377 = vpack.c.b16 %v8681, %v8677
  %v9378 = vpack.c.b16 %v8682, %v8678
  %v9379 = vpack.c.b16 %v8683, %v8679
  %v9380 = vpack.c.b16 %v8684, %v8680
  %v9381 = vpack.c.b16 %v8689, %v8685
  %v9382 = vpack.c.b16 %v8690, %v8686
  %v9383 = vpack.c.b16 %v8691, %v8687
  %v9384 = vpack.c.b16 %v8692, %v8688
  %v9385 = vpack.c.b16 %v8697, %v8693
  %v9386 = vpack.c.b16 %v8698, %v8694
  %v9387 = vpack.c.b16 %v8699, %v8695
  %v9388 = vpack.c.b16 %v8700, %v8696
  %v9389 = vpack.c.b16 %v8705, %v8701
  %v9390 = vpack.c.b16 %v8706, %v8702
  %v9391 = vpack.c.b16 %v8707, %v8703
  %v9392 = vpack.c.b16 %v8708, %v8704
  %v9393 = vpack.c.b16 %v8713, %v8709
  %v9394 = vpack.c.b16 %v8714, %v8710
  %v9395 = vpack.c.b16 %v8715, %v8711
  %v9396 = vpack.c.b16 %v8716, %v8712
  %v9397 = vpack.c.b16 %v8721, %v8717
  %v9398 = vpack.c.b16 %v8722, %v8718
  %v9399 = vpack.c.b16 %v8723, %v8719
  %v9400 = vpack.c.b16 %v8724, %v8720
  %v9401 = vpack.c.b16 %v8729, %v8725
  %v9402 = vpack.c.b16 %v8730, %v8726
  %v9403 = vpack.c.b16 %v8731, %v8727
  %v9404 = vpack.c.b16 %v8732, %v8728
  %v9405 = vpack.c.b16 %v8737, %v8733
  %v9406 = vpack.c.b16 %v8738, %v8734
  %v9407 = vpack.c.b16 %v8739, %v8735
  %v9408 = vpack.c.b16 %v8740, %v8736
  %v9409 = vpack.c.b16 %v8745, %v8741
  %v9410 = vpack.c.b16 %v8746, %v8742
  %v9411 = vpack.c.b16 %v8747, %v8743
  %v9412 = vpack.c.b16 %v8748, %v8744
  %v9413 = vpack.c.b16 %v8753, %v8749
  %v9414 = vpack.c.b16 %v8754, %v8750
  %v9415 = vpack.c.b16 %v8755, %v8751
  %v9416 = vpack.c.b16 %v8756, %v8752
  %v9417 = vpack.c.b16 %v8761, %v8757
  %v9418 = vpack.c.b16 %v8762, %v8758
  %v9419 = vpack.c.b16 %v8763, %v8759
  %v9420 = vpack.c.b16 %v8764, %v8760
  %v9421 = vpack.c.b16 %v8769, %v8765
  %v9422 = vpack.c.b16 %v8770, %v8766
  %v9423 = vpack.c.b16 %v8771, %v8767
  %v9424 = vpack.c.b16 %v8772, %v8768
  %v9425 = vpack.c.b16 %v8777, %v8773
  %v9426 = vpack.c.b16 %v8778, %v8774
  %v9427 = vpack.c.b16 %v8779, %v8775
  %v9428 = vpack.c.b16 %v8780, %v8776
  %v9429 = vpack.c.b16 %v8785, %v8781
  %v9430 = vpack.c.b16 %v8786, %v8782
  %v9431 = vpack.c.b16 %v8787, %v8783
  %v9432 = vpack.c.b16 %v8788, %v8784
  %v9433 = vpack.c.b16 %v8793, %v8789
  %v9434 = vpack.c.b16 %v8794, %v8790
  %v9435 = vpack.c.b16 %v8795, %v8791
  %v9436 = vpack.c.b16 %v8796, %v8792
  %v9437 = vpack.c.b16 %v8801, %v8797
  %v9438 = vpack.c.b16 %v8802, %v8798
  %v9439 = vpack.c.b16 %v8803, %v8799
  %v9440 = vpack.c.b16 %v8804, %v8800
  %v9441 = vpack.c.b16 %v8809, %v8805
  %v9442 = vpack.c.b16 %v8810, %v8806
  %v9443 = vpack.c.b16 %v8811, %v8807
  %v9444 = vpack.c.b16 %v8812, %v8808
  %v9445 = vpack.c.b16 %v8817, %v8813
  %v9446 = vpack.c.b16 %v8818, %v8814
  %v9447 = vpack.c.b16 %v8819, %v8815
  %v9448 = vpack.c.b16 %v8820, %v8816
  %v9449 = vpack.c.b16 %v8825, %v8821
  %v9450 = vpack.c.b16 %v8826, %v8822
  %v9451 = vpack.c.b16 %v8827, %v8823
  %v9452 = vpack.c.b16 %v8828, %v8824
  %v9453 = vpack.c.b16 %v8833, %v8829
  %v9454 = vpack.c.b16 %v8834, %v8830
  %v9455 = vpack.c.b16 %v8835, %v8831
  %v9456 = vpack.c.b16 %v8836, %v8832
  %v9457 = vpack.c.b16 %v8841, %v8837
  %v9458 = vpack.c.b16 %v8842, %v8838
  %v9459 = vpack.c.b16 %v8843, %v8839
  %v9460 = vpack.c.b16 %v8844, %v8840
  %v9461 = vpack.c.b16 %v8849, %v8845
  %v9462 = vpack.c.b16 %v8850, %v8846
  %v9463 = vpack.c.b16 %v8851, %v8847
  %v9464 = vpack.c.b16 %v8852, %v8848
  %v9465 = vpack.c.b16 %v8857, %v8853
  %v9466 = vpack.c.b16 %v8858, %v8854
  %v9467 = vpack.c.b16 %v8859, %v8855
  %v9468 = vpack.c.b16 %v8860, %v8856
  %v9469 = vpack.c.b16 %v8865, %v8861
  %v9470 = vpack.c.b16 %v8866, %v8862
  %v9471 = vpack.c.b16 %v8867, %v8863
  %v9472 = vpack.c.b16 %v8868, %v8864
  %v9473 = vpack.c.b16 %v8873, %v8869
  %v9474 = vpack.c.b16 %v8874, %v8870
  %v9475 = vpack.c.b16 %v8875, %v8871
  %v9476 = vpack.c.b16 %v8876, %v8872
  %v9477 = vpack.c.b16 %v8881, %v8877
  %v9478 = vpack.c.b16 %v8882, %v8878
  %v9479 = vpack.c.b16 %v8883, %v8879
  %v9480 = vpack.c.b16 %v8884, %v8880
  %v9481 = vpack.c.b16 %v8889, %v8885
  %v9482 = vpack.c.b16 %v8890, %v8886
  %v9483 = vpack.c.b16 %v8891, %v8887
  %v9484 = vpack.c.b16 %v8892, %v8888
  %v9485 = vpack.c.b16 %v8897, %v8893
  %v9486 = vpack.c.b16 %v8898, %v8894
  %v9487 = vpack.c.b16 %v8899, %v8895
  %v9488 = vpack.c.b16 %v8900, %v8896
  %v9489 = vpack.c.b16 %v8905, %v8901
  %v9490 = vpack.c.b16 %v8906, %v8902
  %v9491 = vpack.c.b16 %v8907, %v8903
  %v9492 = vpack.c.b16 %v8908, %v8904
  %v9493 = vpack.c.b16 %v8913, %v8909
  %v9494 = vpack.c.b16 %v8914, %v8910
  %v9495 = vpack.c.b16 %v8915, %v8911
  %v9496 = vpack.c.b16 %v8916, %v8912
  %v9497 = vpack.c.b16 %v8921, %v8917
  %v9498 = vpack.c.b16 %v8922, %v8918
  %v9499 = vpack.c.b16 %v8923, %v8919
  %v9500 = vpack.c.b16 %v8924, %v8920
  %v9501 = vpack.c.b16 %v8929, %v8925
  %v9502 = vpack.c.b16 %v8930, %v8926
  %v9503 = vpack.c.b16 %v8931, %v8927
  %v9504 = vpack.c.b16 %v8932, %v8928
  %v9505 = vpack.c.b16 %v8937, %v8933
  %v9506 = vpack.c.b16 %v8938, %v8934
  %v9507 = vpack.c.b16 %v8939, %v8935
  %v9508 = vpack.c.b16 %v8940, %v8936
  %v9509 = vpack.c.b16 %v8945, %v8941
  %v9510 = vpack.c.b16 %v8946, %v8942
  %v9511 = vpack.c.b16 %v8947, %v8943
  %v9512 = vpack.c.b16 %v8948, %v8944
  %v9513 = vpack.c.b16 %v8953, %v8949
  %v9514 = vpack.c.b16 %v8954, %v8950
  %v9515 = vpack.c.b16 %v8955, %v8951
  %v9516 = vpack.c.b16 %v8956, %v8952
  %v9517 = vpack.c.b16 %v8961, %v8957
  %v9518 = vpack.c.b16 %v8962, %v8958
  %v9519 = vpack.c.b16 %v8963, %v8959
  %v9520 = vpack.c.b16 %v8964, %v8960
  %v9521 = vpack.c.b16 %v8969, %v8965
  %v9522 = vpack.c.b16 %v8970, %v8966
  %v9523 = vpack.c.b16 %v8971, %v8967
  %v9524 = vpack.c.b16 %v8972, %v8968
  %v9525 = vpack.c.b16 %v8977, %v8973
  %v9526 = vpack.c.b16 %v8978, %v8974
  %v9527 = vpack.c.b16 %v8979, %v8975
  %v9528 = vpack.c.b16 %v8980, %v8976
  %v9529 = vpack.c.b16 %v8985, %v8981
  %v9530 = vpack.c.b16 %v8986, %v8982
  %v9531 = vpack.c.b16 %v8987, %v8983
  %v9532 = vpack.c.b16 %v8988, %v8984
  %v9533 = vpack.c.b16 %v8993, %v8989
  %v9534 = vpack.c.b16 %v8994, %v8990
  %v9535 = vpack.c.b16 %v8995, %v8991
  %v9536 = vpack.c.b16 %v8996, %v8992
  %v9537 = vpack.c.b16 %v9001, %v8997
  %v9538 = vpack.c.b16 %v9002, %v8998
  %v9539 = vpack.c.b16 %v9003, %v8999
  %v9540 = vpack.c.b16 %v9004, %v9000
  %v9541 = vpack.c.b16 %v9009, %v9005
  %v9542 = vpack.c.b16 %v9010, %v9006
  %v9543 = vpack.c.b16 %v9011, %v9007
  %v9544 = vpack.c.b16 %v9012, %v9008
  %v9545 = vpack.c.b16 %v9017, %v9013
  %v9546 = vpack.c.b16 %v9018, %v9014
  %v9547 = vpack.c.b16 %v9019, %v9015
  %v9548 = vpack.c.b16 %v9020, %v9016
  %v9549 = vpack.c.b16 %v9025, %v9021
  %v9550 = vpack.c.b16 %v9026, %v9022
  %v9551 = vpack.c.b16 %v9027, %v9023
  %v9552 = vpack.c.b16 %v9028, %v9024
  %v9553 = vpack.c.b16 %v9033, %v9029
  %v9554 = vpack.c.b16 %v9034, %v9030
  %v9555 = vpack.c.b16 %v9035, %v9031
  %v9556 = vpack.c.b16 %v9036, %v9032
  %v9557 = vpack.c.b16 %v9041, %v9037
  %v9558 = vpack.c.b16 %v9042, %v9038
  %v9559 = vpack.c.b16 %v9043, %v9039
  %v9560 = vpack.c.b16 %v9044, %v9040
  %v9561 = vpack.c.b16 %v9049, %v9045
  %v9562 = vpack.c.b16 %v9050, %v9046
  %v9563 = vpack.c.b16 %v9051, %v9047
  %v9564 = vpack.c.b16 %v9052, %v9048
  %v9565 = vpack.c.b16 %v9057, %v9053
  %v9566 = vpack.c.b16 %v9058, %v9054
  %v9567 = vpack.c.b16 %v9059, %v9055
  %v9568 = vpack.c.b16 %v9060, %v9056
  %v9569 = vpack.c.b16 %v9065, %v9061
  %v9570 = vpack.c.b16 %v9066, %v9062
  %v9571 = vpack.c.b16 %v9067, %v9063
  %v9572 = vpack.c.b16 %v9068, %v9064
  %v9573 = vpack.c.b16 %v9073, %v9069
  %v9574 = vpack.c.b16 %v9074, %v9070
  %v9575 = vpack.c.b16 %v9075, %v9071
  %v9576 = vpack.c.b16 %v9076, %v9072
  %v9577 = vpack.c.b16 %v9081, %v9077
  %v9578 = vpack.c.b16 %v9082, %v9078
  %v9579 = vpack.c.b16 %v9083, %v9079
  %v9580 = vpack.c.b16 %v9084, %v9080
  %v9581 = vpack.c.b16 %v9089, %v9085
  %v9582 = vpack.c.b16 %v9090, %v9086
  %v9583 = vpack.c.b16 %v9091, %v9087
  %v9584 = vpack.c.b16 %v9092, %v9088
  %v9585 = vpack.c.b16 %v9097, %v9093
  %v9586 = vpack.c.b16 %v9098, %v9094
  %v9587 = vpack.c.b16 %v9099, %v9095
  %v9588 = vpack.c.b16 %v9100, %v9096
  %v9589 = vpack.c.b16 %v9105, %v9101
  %v9590 = vpack.c.b16 %v9106, %v9102
  %v9591 = vpack.c.b16 %v9107, %v9103
  %v9592 = vpack.c.b16 %v9108, %v9104
  %v9593 = vpack.c.b16 %v9113, %v9109
  %v9594 = vpack.c.b16 %v9114, %v9110
  %v9595 = vpack.c.b16 %v9115, %v9111
  %v9596 = vpack.c.b16 %v9116, %v9112
  %v9597 = vpack.c.b16 %v9121, %v9117
  %v9598 = vpack.c.b16 %v9122, %v9118
  %v9599 = vpack.c.b16 %v9123, %v9119
  %v9600 = vpack.c.b16 %v9124, %v9120
  %v9601 = vpack.c.b16 %v9129, %v9125
  %v9602 = vpack.c.b16 %v9130, %v9126
  %v9603 = vpack.c.b16 %v9131, %v9127
  %v9604 = vpack.c.b16 %v9132, %v9128
  %v9605 = vpack.c.b16 %v9137, %v9133
  %v9606 = vpack.c.b16 %v9138, %v9134
  %v9607 = vpack.c.b16 %v9139, %v9135
  %v9608 = vpack.c.b16 %v9140, %v9136
  %v9609 = vpack.c.b16 %v9145, %v9141
  %v9610 = vpack.c.b16 %v9146, %v9142
  %v9611 = vpack.c.b16 %v9147, %v9143
  %v9612 = vpack.c.b16 %v9148, %v9144
  %v9613 = vpack.c.b16 %v9153, %v9149
  %v9614 = vpack.c.b16 %v9154, %v9150
  %v9615 = vpack.c.b16 %v9155, %v9151
  %v9616 = vpack.c.b16 %v9156, %v9152
  %v9617 = vpack.c.b16 %v9161, %v9157
  %v9618 = vpack.c.b16 %v9162, %v9158
  %v9619 = vpack.c.b16 %v9163, %v9159
  %v9620 = vpack.c.b16 %v9164, %v9160
  %v9621 = vpack.c.b16 %v9169, %v9165
  %v9622 = vpack.c.b16 %v9170, %v9166
  %v9623 = vpack.c.b16 %v9171, %v9167
  %v9624 = vpack.c.b16 %v9172, %v9168
  %v9625 = vpack.c.b16 %v9177, %v9173
  %v9626 = vpack.c.b16 %v9178, %v9174
  %v9627 = vpack.c.b16 %v9179, %v9175
  %v9628 = vpack.c.b16 %v9180, %v9176
  %v9629 = vpack.c.b16 %v9185, %v9181
  %v9630 = vpack.c.b16 %v9186, %v9182
  %v9631 = vpack.c.b16 %v9187, %v9183
  %v9632 = vpack.c.b16 %v9188, %v9184
  %v9633 = vpack.c.b16 %v9193, %v9189
  %v9634 = vpack.c.b16 %v9194, %v9190
  %v9635 = vpack.c.b16 %v9195, %v9191
  %v9636 = vpack.c.b16 %v9196, %v9192
  %v9637 = vpack.c.b16 %v9201, %v9197
  %v9638 = vpack.c.b16 %v9202, %v9198
  %v9639 = vpack.c.b16 %v9203, %v9199
  %v9640 = vpack.c.b16 %v9204, %v9200
  %v9641 = vpack.c.b16 %v9209, %v9205
  %v9642 = vpack.c.b16 %v9210, %v9206
  %v9643 = vpack.c.b16 %v9211, %v9207
  %v9644 = vpack.c.b16 %v9212, %v9208
  %v9645 = vpack.c.b16 %v9217, %v9213
  %v9646 = vpack.c.b16 %v9218, %v9214
  %v9647 = vpack.c.b16 %v9219, %v9215
  %v9648 = vpack.c.b16 %v9220, %v9216
  %v9649 = vpack.c.b16 %v9225, %v9221
  %v9650 = vpack.c.b16 %v9226, %v9222
  %v9651 = vpack.c.b16 %v9227, %v9223
  %v9652 = vpack.c.b16 %v9228, %v9224
  %v9653 = vpack.c.b16 %v9233, %v9229
  %v9654 = vpack.c.b16 %v9234, %v9230
  %v9655 = vpack.c.b16 %v9235, %v9231
  %v9656 = vpack.c.b16 %v9236, %v9232
  %v9657 = vpack.c.b16 %v9241, %v9237
  %v9658 = vpack.c.b16 %v9242, %v9238
  %v9659 = vpack.c.b16 %v9243, %v9239
  %v9660 = vpack.c.b16 %v9244, %v9240
  %v9661 = vpack.c.b16 %v9249, %v9245
  %v9662 = vpack.c.b16 %v9250, %v9246
  %v9663 = vpack.c.b16 %v9251, %v9247
  %v9664 = vpack.c.b16 %v9252, %v9248
  %v9665 = vpack.c.b16 %v9257, %v9253
  %v9666 = vpack.c.b16 %v9258, %v9254
  %v9667 = vpack.c.b16 %v9259, %v9255
  %v9668 = vpack.c.b16 %v9260, %v9256
  %v9669 = vpack.c.b16 %v9265, %v9261
  %v9670 = vpack.c.b16 %v9266, %v9262
  %v9671 = vpack.c.b16 %v9267, %v9263
  %v9672 = vpack.c.b16 %v9268, %v9264
  %v9673 = vpack.c.b16 %v9273, %v9269
  %v9674 = vpack.c.b16 %v9274, %v9270
  %v9675 = vpack.c.b16 %v9275, %v9271
  %v9676 = vpack.c.b16 %v9276, %v9272
  %v9677 = vpack.c.b16 %v9281, %v9277
  %v9678 = vpack.c.b16 %v9282, %v9278
  %v9679 = vpack.c.b16 %v9283, %v9279
  %v9680 = vpack.c.b16 %v9284, %v9280
  %v9681 = vpack.c.b16 %v9289, %v9285
  %v9682 = vpack.c.b16 %v9290, %v9286
  %v9683 = vpack.c.b16 %v9291, %v9287
  %v9684 = vpack.c.b16 %v9292, %v9288
  %v9685 = vpack.c.b16 %v9297, %v9293
  %v9686 = vpack.c.b16 %v9298, %v9294
  %v9687 = vpack.c.b16 %v9299, %v9295
  %v9688 = vpack.c.b16 %v9300, %v9296
  %v9689 = vpack.c.b16 %v9305, %v9301
  %v9690 = vpack.c.b16 %v9306, %v9302
  %v9691 = vpack.c.b16 %v9307, %v9303
  %v9692 = vpack.c.b16 %v9308, %v9304
  %10077 = vmatpush.bf16.msra.mxu0 %v9337
  %10078 = vmatpush.bf16.msra.mxu0 %v9333
  %10079 = vmatpush.bf16.msra.mxu0 %v9329
  %10080 = vmatpush.bf16.msra.mxu0 %v9325
  %10081 = vmatpush.bf16.msra.mxu0 %v9321
  %10082 = vmatpush.bf16.msra.mxu0 %v9317
  %10083 = vmatpush.bf16.msra.mxu0 %v9313
  %10084 = vmatpush.bf16.msra.mxu0 %v9309
  %10085 = vmatmul.bf16.gmra.mxu0 %v7741
  %v10086 = vpop.f32.mrf.mxu0
  %v10087 = vadd.f32 0.0, %v10086
  %v10088 = vpop.f32.mrf.mxu0
  %v10089 = vadd.f32 0.0, %v10088
  %10090 = vdwg.mxu0
  %10091 = vmatpush.bf16.msra.mxu0 %v9369
  %10092 = vmatpush.bf16.msra.mxu0 %v9365
  %10093 = vmatpush.bf16.msra.mxu0 %v9361
  %10094 = vmatpush.bf16.msra.mxu0 %v9357
  %10095 = vmatpush.bf16.msra.mxu0 %v9353
  %10096 = vmatpush.bf16.msra.mxu0 %v9349
  %10097 = vmatpush.bf16.msra.mxu0 %v9345
  %10098 = vmatpush.bf16.msra.mxu0 %v9341
  %10099 = vmatmul.bf16.gmra.mxu0 %v7742
  %v10100 = vpop.f32.mrf.mxu0
  %v10101 = vadd.f32 %v10087, %v10100
  %v10102 = vpop.f32.mrf.mxu0
  %v10103 = vadd.f32 %v10089, %v10102
  %10104 = vdwg.mxu0
  %10105 = vmatpush.bf16.msra.mxu0 %v9401
  %10106 = vmatpush.bf16.msra.mxu0 %v9397
  %10107 = vmatpush.bf16.msra.mxu0 %v9393
  %10108 = vmatpush.bf16.msra.mxu0 %v9389
  %10109 = vmatpush.bf16.msra.mxu0 %v9385
  %10110 = vmatpush.bf16.msra.mxu0 %v9381
  %10111 = vmatpush.bf16.msra.mxu0 %v9377
  %10112 = vmatpush.bf16.msra.mxu0 %v9373
  %10113 = vmatmul.bf16.gmra.mxu0 %v7743
  %v10114 = vpop.f32.mrf.mxu0
  %v10115 = vadd.f32 %v10101, %v10114
  %v10116 = vpop.f32.mrf.mxu0
  %v10117 = vadd.f32 %v10103, %v10116
  %10118 = vdwg.mxu0
  %10119 = vmatpush.bf16.msra.mxu0 %v9433
  %10120 = vmatpush.bf16.msra.mxu0 %v9429
  %10121 = vmatpush.bf16.msra.mxu0 %v9425
  %10122 = vmatpush.bf16.msra.mxu0 %v9421
  %10123 = vmatpush.bf16.msra.mxu0 %v9417
  %10124 = vmatpush.bf16.msra.mxu0 %v9413
  %10125 = vmatpush.bf16.msra.mxu0 %v9409
  %10126 = vmatpush.bf16.msra.mxu0 %v9405
  %10127 = vmatmul.bf16.gmra.mxu0 %v7744
  %v10128 = vpop.f32.mrf.mxu0
  %v10129 = vadd.f32 %v10115, %v10128
  %v10130 = vpop.f32.mrf.mxu0
  %v10131 = vadd.f32 %v10117, %v10130
  %10132 = vdwg.mxu0
  %10133 = vmatpush.bf16.msra.mxu0 %v9465
  %10134 = vmatpush.bf16.msra.mxu0 %v9461
  %10135 = vmatpush.bf16.msra.mxu0 %v9457
  %10136 = vmatpush.bf16.msra.mxu0 %v9453
  %10137 = vmatpush.bf16.msra.mxu0 %v9449
  %10138 = vmatpush.bf16.msra.mxu0 %v9445
  %10139 = vmatpush.bf16.msra.mxu0 %v9441
  %10140 = vmatpush.bf16.msra.mxu0 %v9437
  %10141 = vmatmul.bf16.gmra.mxu0 %v7633
  %v10142 = vpop.f32.mrf.mxu0
  %v10143 = vadd.f32 %v10129, %v10142
  %v10144 = vpop.f32.mrf.mxu0
  %v10145 = vadd.f32 %v10131, %v10144
  %10146 = vdwg.mxu0
  %10147 = vmatpush.bf16.msra.mxu0 %v9497
  %10148 = vmatpush.bf16.msra.mxu0 %v9493
  %10149 = vmatpush.bf16.msra.mxu0 %v9489
  %10150 = vmatpush.bf16.msra.mxu0 %v9485
  %10151 = vmatpush.bf16.msra.mxu0 %v9481
  %10152 = vmatpush.bf16.msra.mxu0 %v9477
  %10153 = vmatpush.bf16.msra.mxu0 %v9473
  %10154 = vmatpush.bf16.msra.mxu0 %v9469
  %10155 = vmatmul.bf16.gmra.mxu0 %v7634
  %v10156 = vpop.f32.mrf.mxu0
  %v10157 = vadd.f32 %v10143, %v10156
  %v10158 = vpop.f32.mrf.mxu0
  %v10159 = vadd.f32 %v10145, %v10158
  %10160 = vdwg.mxu0
  %10161 = vmatpush.bf16.msra.mxu0 %v9529
  %10162 = vmatpush.bf16.msra.mxu0 %v9525
  %10163 = vmatpush.bf16.msra.mxu0 %v9521
  %10164 = vmatpush.bf16.msra.mxu0 %v9517
  %10165 = vmatpush.bf16.msra.mxu0 %v9513
  %10166 = vmatpush.bf16.msra.mxu0 %v9509
  %10167 = vmatpush.bf16.msra.mxu0 %v9505
  %10168 = vmatpush.bf16.msra.mxu0 %v9501
  %10169 = vmatmul.bf16.gmra.mxu0 %v7635
  %v10170 = vpop.f32.mrf.mxu0
  %v10171 = vadd.f32 %v10157, %v10170
  %v10172 = vpop.f32.mrf.mxu0
  %v10173 = vadd.f32 %v10159, %v10172
  %10174 = vdwg.mxu0
  %10175 = vmatpush.bf16.msra.mxu0 %v9561
  %10176 = vmatpush.bf16.msra.mxu0 %v9557
  %10177 = vmatpush.bf16.msra.mxu0 %v9553
  %10178 = vmatpush.bf16.msra.mxu0 %v9549
  %10179 = vmatpush.bf16.msra.mxu0 %v9545
  %10180 = vmatpush.bf16.msra.mxu0 %v9541
  %10181 = vmatpush.bf16.msra.mxu0 %v9537
  %10182 = vmatpush.bf16.msra.mxu0 %v9533
  %10183 = vmatmul.bf16.gmra.mxu0 %v7636
  %v10184 = vpop.f32.mrf.mxu0
  %v10185 = vadd.f32 %v10171, %v10184
  %v10186 = vpop.f32.mrf.mxu0
  %v10187 = vadd.f32 %v10173, %v10186
  %10188 = vdwg.mxu0
  %10189 = vmatpush.bf16.msra.mxu0 %v9593
  %10190 = vmatpush.bf16.msra.mxu0 %v9589
  %10191 = vmatpush.bf16.msra.mxu0 %v9585
  %10192 = vmatpush.bf16.msra.mxu0 %v9581
  %10193 = vmatpush.bf16.msra.mxu0 %v9577
  %10194 = vmatpush.bf16.msra.mxu0 %v9573
  %10195 = vmatpush.bf16.msra.mxu0 %v9569
  %10196 = vmatpush.bf16.msra.mxu0 %v9565
  %10197 = vmatmul.bf16.gmra.mxu0 %v7765
  %v10198 = vpop.f32.mrf.mxu0
  %v10199 = vadd.f32 %v10185, %v10198
  %v10200 = vpop.f32.mrf.mxu0
  %v10201 = vadd.f32 %v10187, %v10200
  %10202 = vdwg.mxu0
  %10203 = vmatpush.bf16.msra.mxu0 %v9625
  %10204 = vmatpush.bf16.msra.mxu0 %v9621
  %10205 = vmatpush.bf16.msra.mxu0 %v9617
  %10206 = vmatpush.bf16.msra.mxu0 %v9613
  %10207 = vmatpush.bf16.msra.mxu0 %v9609
  %10208 = vmatpush.bf16.msra.mxu0 %v9605
  %10209 = vmatpush.bf16.msra.mxu0 %v9601
  %10210 = vmatpush.bf16.msra.mxu0 %v9597
  %10211 = vmatmul.bf16.gmra.mxu0 %v7766
  %v10212 = vpop.f32.mrf.mxu0
  %v10213 = vadd.f32 %v10199, %v10212
  %v10214 = vpop.f32.mrf.mxu0
  %v10215 = vadd.f32 %v10201, %v10214
  %10216 = vdwg.mxu0
  %10217 = vmatpush.bf16.msra.mxu0 %v9657
  %10218 = vmatpush.bf16.msra.mxu0 %v9653
  %10219 = vmatpush.bf16.msra.mxu0 %v9649
  %10220 = vmatpush.bf16.msra.mxu0 %v9645
  %10221 = vmatpush.bf16.msra.mxu0 %v9641
  %10222 = vmatpush.bf16.msra.mxu0 %v9637
  %10223 = vmatpush.bf16.msra.mxu0 %v9633
  %10224 = vmatpush.bf16.msra.mxu0 %v9629
  %10225 = vmatmul.bf16.gmra.mxu0 %v7767
  %v10226 = vpop.f32.mrf.mxu0
  %v10227 = vadd.f32 %v10213, %v10226
  %v10228 = vpop.f32.mrf.mxu0
  %v10229 = vadd.f32 %v10215, %v10228
  %10230 = vdwg.mxu0
  %10231 = vmatpush.bf16.msra.mxu0 %v9689
  %10232 = vmatpush.bf16.msra.mxu0 %v9685
  %10233 = vmatpush.bf16.msra.mxu0 %v9681
  %10234 = vmatpush.bf16.msra.mxu0 %v9677
  %10235 = vmatpush.bf16.msra.mxu0 %v9673
  %10236 = vmatpush.bf16.msra.mxu0 %v9669
  %10237 = vmatpush.bf16.msra.mxu0 %v9665
  %10238 = vmatpush.bf16.msra.mxu0 %v9661
  %10239 = vmatmul.bf16.gmra.mxu0 %v7768
  %v10240 = vpop.f32.mrf.mxu0
  %v10241 = vadd.f32 %v10227, %v10240
  %v10242 = vpop.f32.mrf.mxu0
  %v10243 = vadd.f32 %v10229, %v10242
  %10244 = vdwg.mxu0
  %10245 = vmatpush.bf16.msra.mxu0 %v9338
  %10246 = vmatpush.bf16.msra.mxu0 %v9334
  %10247 = vmatpush.bf16.msra.mxu0 %v9330
  %10248 = vmatpush.bf16.msra.mxu0 %v9326
  %10249 = vmatpush.bf16.msra.mxu0 %v9322
  %10250 = vmatpush.bf16.msra.mxu0 %v9318
  %10251 = vmatpush.bf16.msra.mxu0 %v9314
  %10252 = vmatpush.bf16.msra.mxu0 %v9310
  %10253 = vmatmul.bf16.gmra.mxu0 %v7741
  %v10254 = vpop.f32.mrf.mxu0
  %v10255 = vadd.f32 0.0, %v10254
  %v10256 = vpop.f32.mrf.mxu0
  %v10257 = vadd.f32 0.0, %v10256
  %10258 = vdwg.mxu0
  %10259 = vmatpush.bf16.msra.mxu0 %v9370
  %10260 = vmatpush.bf16.msra.mxu0 %v9366
  %10261 = vmatpush.bf16.msra.mxu0 %v9362
  %10262 = vmatpush.bf16.msra.mxu0 %v9358
  %10263 = vmatpush.bf16.msra.mxu0 %v9354
  %10264 = vmatpush.bf16.msra.mxu0 %v9350
  %10265 = vmatpush.bf16.msra.mxu0 %v9346
  %10266 = vmatpush.bf16.msra.mxu0 %v9342
  %10267 = vmatmul.bf16.gmra.mxu0 %v7742
  %v10268 = vpop.f32.mrf.mxu0
  %v10269 = vadd.f32 %v10255, %v10268
  %v10270 = vpop.f32.mrf.mxu0
  %v10271 = vadd.f32 %v10257, %v10270
  %10272 = vdwg.mxu0
  %10273 = vmatpush.bf16.msra.mxu0 %v9402
  %10274 = vmatpush.bf16.msra.mxu0 %v9398
  %10275 = vmatpush.bf16.msra.mxu0 %v9394
  %10276 = vmatpush.bf16.msra.mxu0 %v9390
  %10277 = vmatpush.bf16.msra.mxu0 %v9386
  %10278 = vmatpush.bf16.msra.mxu0 %v9382
  %10279 = vmatpush.bf16.msra.mxu0 %v9378
  %10280 = vmatpush.bf16.msra.mxu0 %v9374
  %10281 = vmatmul.bf16.gmra.mxu0 %v7743
  %v10282 = vpop.f32.mrf.mxu0
  %v10283 = vadd.f32 %v10269, %v10282
  %v10284 = vpop.f32.mrf.mxu0
  %v10285 = vadd.f32 %v10271, %v10284
  %10286 = vdwg.mxu0
  %10287 = vmatpush.bf16.msra.mxu0 %v9434
  %10288 = vmatpush.bf16.msra.mxu0 %v9430
  %10289 = vmatpush.bf16.msra.mxu0 %v9426
  %10290 = vmatpush.bf16.msra.mxu0 %v9422
  %10291 = vmatpush.bf16.msra.mxu0 %v9418
  %10292 = vmatpush.bf16.msra.mxu0 %v9414
  %10293 = vmatpush.bf16.msra.mxu0 %v9410
  %10294 = vmatpush.bf16.msra.mxu0 %v9406
  %10295 = vmatmul.bf16.gmra.mxu0 %v7744
  %v10296 = vpop.f32.mrf.mxu0
  %v10297 = vadd.f32 %v10283, %v10296
  %v10298 = vpop.f32.mrf.mxu0
  %v10299 = vadd.f32 %v10285, %v10298
  %10300 = vdwg.mxu0
  %10301 = vmatpush.bf16.msra.mxu0 %v9466
  %10302 = vmatpush.bf16.msra.mxu0 %v9462
  %10303 = vmatpush.bf16.msra.mxu0 %v9458
  %10304 = vmatpush.bf16.msra.mxu0 %v9454
  %10305 = vmatpush.bf16.msra.mxu0 %v9450
  %10306 = vmatpush.bf16.msra.mxu0 %v9446
  %10307 = vmatpush.bf16.msra.mxu0 %v9442
  %10308 = vmatpush.bf16.msra.mxu0 %v9438
  %10309 = vmatmul.bf16.gmra.mxu0 %v7633
  %v10310 = vpop.f32.mrf.mxu0
  %v10311 = vadd.f32 %v10297, %v10310
  %v10312 = vpop.f32.mrf.mxu0
  %v10313 = vadd.f32 %v10299, %v10312
  %10314 = vdwg.mxu0
  %10315 = vmatpush.bf16.msra.mxu0 %v9498
  %10316 = vmatpush.bf16.msra.mxu0 %v9494
  %10317 = vmatpush.bf16.msra.mxu0 %v9490
  %10318 = vmatpush.bf16.msra.mxu0 %v9486
  %10319 = vmatpush.bf16.msra.mxu0 %v9482
  %10320 = vmatpush.bf16.msra.mxu0 %v9478
  %10321 = vmatpush.bf16.msra.mxu0 %v9474
  %10322 = vmatpush.bf16.msra.mxu0 %v9470
  %10323 = vmatmul.bf16.gmra.mxu0 %v7634
  %v10324 = vpop.f32.mrf.mxu0
  %v10325 = vadd.f32 %v10311, %v10324
  %v10326 = vpop.f32.mrf.mxu0
  %v10327 = vadd.f32 %v10313, %v10326
  %10328 = vdwg.mxu0
  %10329 = vmatpush.bf16.msra.mxu0 %v9530
  %10330 = vmatpush.bf16.msra.mxu0 %v9526
  %10331 = vmatpush.bf16.msra.mxu0 %v9522
  %10332 = vmatpush.bf16.msra.mxu0 %v9518
  %10333 = vmatpush.bf16.msra.mxu0 %v9514
  %10334 = vmatpush.bf16.msra.mxu0 %v9510
  %10335 = vmatpush.bf16.msra.mxu0 %v9506
  %10336 = vmatpush.bf16.msra.mxu0 %v9502
  %10337 = vmatmul.bf16.gmra.mxu0 %v7635
  %v10338 = vpop.f32.mrf.mxu0
  %v10339 = vadd.f32 %v10325, %v10338
  %v10340 = vpop.f32.mrf.mxu0
  %v10341 = vadd.f32 %v10327, %v10340
  %10342 = vdwg.mxu0
  %10343 = vmatpush.bf16.msra.mxu0 %v9562
  %10344 = vmatpush.bf16.msra.mxu0 %v9558
  %10345 = vmatpush.bf16.msra.mxu0 %v9554
  %10346 = vmatpush.bf16.msra.mxu0 %v9550
  %10347 = vmatpush.bf16.msra.mxu0 %v9546
  %10348 = vmatpush.bf16.msra.mxu0 %v9542
  %10349 = vmatpush.bf16.msra.mxu0 %v9538
  %10350 = vmatpush.bf16.msra.mxu0 %v9534
  %10351 = vmatmul.bf16.gmra.mxu0 %v7636
  %v10352 = vpop.f32.mrf.mxu0
  %v10353 = vadd.f32 %v10339, %v10352
  %v10354 = vpop.f32.mrf.mxu0
  %v10355 = vadd.f32 %v10341, %v10354
  %10356 = vdwg.mxu0
  %10357 = vmatpush.bf16.msra.mxu0 %v9594
  %10358 = vmatpush.bf16.msra.mxu0 %v9590
  %10359 = vmatpush.bf16.msra.mxu0 %v9586
  %10360 = vmatpush.bf16.msra.mxu0 %v9582
  %10361 = vmatpush.bf16.msra.mxu0 %v9578
  %10362 = vmatpush.bf16.msra.mxu0 %v9574
  %10363 = vmatpush.bf16.msra.mxu0 %v9570
  %10364 = vmatpush.bf16.msra.mxu0 %v9566
  %10365 = vmatmul.bf16.gmra.mxu0 %v7765
  %v10366 = vpop.f32.mrf.mxu0
  %v10367 = vadd.f32 %v10353, %v10366
  %v10368 = vpop.f32.mrf.mxu0
  %v10369 = vadd.f32 %v10355, %v10368
  %10370 = vdwg.mxu0
  %10371 = vmatpush.bf16.msra.mxu0 %v9626
  %10372 = vmatpush.bf16.msra.mxu0 %v9622
  %10373 = vmatpush.bf16.msra.mxu0 %v9618
  %10374 = vmatpush.bf16.msra.mxu0 %v9614
  %10375 = vmatpush.bf16.msra.mxu0 %v9610
  %10376 = vmatpush.bf16.msra.mxu0 %v9606
  %10377 = vmatpush.bf16.msra.mxu0 %v9602
  %10378 = vmatpush.bf16.msra.mxu0 %v9598
  %10379 = vmatmul.bf16.gmra.mxu0 %v7766
  %v10380 = vpop.f32.mrf.mxu0
  %v10381 = vadd.f32 %v10367, %v10380
  %v10382 = vpop.f32.mrf.mxu0
  %v10383 = vadd.f32 %v10369, %v10382
  %10384 = vdwg.mxu0
  %10385 = vmatpush.bf16.msra.mxu0 %v9658
  %10386 = vmatpush.bf16.msra.mxu0 %v9654
  %10387 = vmatpush.bf16.msra.mxu0 %v9650
  %10388 = vmatpush.bf16.msra.mxu0 %v9646
  %10389 = vmatpush.bf16.msra.mxu0 %v9642
  %10390 = vmatpush.bf16.msra.mxu0 %v9638
  %10391 = vmatpush.bf16.msra.mxu0 %v9634
  %10392 = vmatpush.bf16.msra.mxu0 %v9630
  %10393 = vmatmul.bf16.gmra.mxu0 %v7767
  %v10394 = vpop.f32.mrf.mxu0
  %v10395 = vadd.f32 %v10381, %v10394
  %v10396 = vpop.f32.mrf.mxu0
  %v10397 = vadd.f32 %v10383, %v10396
  %10398 = vdwg.mxu0
  %10399 = vmatpush.bf16.msra.mxu0 %v9690
  %10400 = vmatpush.bf16.msra.mxu0 %v9686
  %10401 = vmatpush.bf16.msra.mxu0 %v9682
  %10402 = vmatpush.bf16.msra.mxu0 %v9678
  %10403 = vmatpush.bf16.msra.mxu0 %v9674
  %10404 = vmatpush.bf16.msra.mxu0 %v9670
  %10405 = vmatpush.bf16.msra.mxu0 %v9666
  %10406 = vmatpush.bf16.msra.mxu0 %v9662
  %10407 = vmatmul.bf16.gmra.mxu0 %v7768
  %v10408 = vpop.f32.mrf.mxu0
  %v10409 = vadd.f32 %v10395, %v10408
  %v10410 = vpop.f32.mrf.mxu0
  %v10411 = vadd.f32 %v10397, %v10410
  %10412 = vdwg.mxu0
  %10413 = vmatpush.bf16.msra.mxu0 %v9339
  %10414 = vmatpush.bf16.msra.mxu0 %v9335
  %10415 = vmatpush.bf16.msra.mxu0 %v9331
  %10416 = vmatpush.bf16.msra.mxu0 %v9327
  %10417 = vmatpush.bf16.msra.mxu0 %v9323
  %10418 = vmatpush.bf16.msra.mxu0 %v9319
  %10419 = vmatpush.bf16.msra.mxu0 %v9315
  %10420 = vmatpush.bf16.msra.mxu0 %v9311
  %10421 = vmatmul.bf16.gmra.mxu0 %v7741
  %v10422 = vpop.f32.mrf.mxu0
  %v10423 = vadd.f32 0.0, %v10422
  %v10424 = vpop.f32.mrf.mxu0
  %v10425 = vadd.f32 0.0, %v10424
  %10426 = vdwg.mxu0
  %10427 = vmatpush.bf16.msra.mxu0 %v9371
  %10428 = vmatpush.bf16.msra.mxu0 %v9367
  %10429 = vmatpush.bf16.msra.mxu0 %v9363
  %10430 = vmatpush.bf16.msra.mxu0 %v9359
  %10431 = vmatpush.bf16.msra.mxu0 %v9355
  %10432 = vmatpush.bf16.msra.mxu0 %v9351
  %10433 = vmatpush.bf16.msra.mxu0 %v9347
  %10434 = vmatpush.bf16.msra.mxu0 %v9343
  %10435 = vmatmul.bf16.gmra.mxu0 %v7742
  %v10436 = vpop.f32.mrf.mxu0
  %v10437 = vadd.f32 %v10423, %v10436
  %v10438 = vpop.f32.mrf.mxu0
  %v10439 = vadd.f32 %v10425, %v10438
  %10440 = vdwg.mxu0
  %10441 = vmatpush.bf16.msra.mxu0 %v9403
  %10442 = vmatpush.bf16.msra.mxu0 %v9399
  %10443 = vmatpush.bf16.msra.mxu0 %v9395
  %10444 = vmatpush.bf16.msra.mxu0 %v9391
  %10445 = vmatpush.bf16.msra.mxu0 %v9387
  %10446 = vmatpush.bf16.msra.mxu0 %v9383
  %10447 = vmatpush.bf16.msra.mxu0 %v9379
  %10448 = vmatpush.bf16.msra.mxu0 %v9375
  %10449 = vmatmul.bf16.gmra.mxu0 %v7743
  %v10450 = vpop.f32.mrf.mxu0
  %v10451 = vadd.f32 %v10437, %v10450
  %v10452 = vpop.f32.mrf.mxu0
  %v10453 = vadd.f32 %v10439, %v10452
  %10454 = vdwg.mxu0
  %10455 = vmatpush.bf16.msra.mxu0 %v9435
  %10456 = vmatpush.bf16.msra.mxu0 %v9431
  %10457 = vmatpush.bf16.msra.mxu0 %v9427
  %10458 = vmatpush.bf16.msra.mxu0 %v9423
  %10459 = vmatpush.bf16.msra.mxu0 %v9419
  %10460 = vmatpush.bf16.msra.mxu0 %v9415
  %10461 = vmatpush.bf16.msra.mxu0 %v9411
  %10462 = vmatpush.bf16.msra.mxu0 %v9407
  %10463 = vmatmul.bf16.gmra.mxu0 %v7744
  %v10464 = vpop.f32.mrf.mxu0
  %v10465 = vadd.f32 %v10451, %v10464
  %v10466 = vpop.f32.mrf.mxu0
  %v10467 = vadd.f32 %v10453, %v10466
  %10468 = vdwg.mxu0
  %10469 = vmatpush.bf16.msra.mxu0 %v9467
  %10470 = vmatpush.bf16.msra.mxu0 %v9463
  %10471 = vmatpush.bf16.msra.mxu0 %v9459
  %10472 = vmatpush.bf16.msra.mxu0 %v9455
  %10473 = vmatpush.bf16.msra.mxu0 %v9451
  %10474 = vmatpush.bf16.msra.mxu0 %v9447
  %10475 = vmatpush.bf16.msra.mxu0 %v9443
  %10476 = vmatpush.bf16.msra.mxu0 %v9439
  %10477 = vmatmul.bf16.gmra.mxu0 %v7633
  %v10478 = vpop.f32.mrf.mxu0
  %v10479 = vadd.f32 %v10465, %v10478
  %v10480 = vpop.f32.mrf.mxu0
  %v10481 = vadd.f32 %v10467, %v10480
  %10482 = vdwg.mxu0
  %10483 = vmatpush.bf16.msra.mxu0 %v9499
  %10484 = vmatpush.bf16.msra.mxu0 %v9495
  %10485 = vmatpush.bf16.msra.mxu0 %v9491
  %10486 = vmatpush.bf16.msra.mxu0 %v9487
  %10487 = vmatpush.bf16.msra.mxu0 %v9483
  %10488 = vmatpush.bf16.msra.mxu0 %v9479
  %10489 = vmatpush.bf16.msra.mxu0 %v9475
  %10490 = vmatpush.bf16.msra.mxu0 %v9471
  %10491 = vmatmul.bf16.gmra.mxu0 %v7634
  %v10492 = vpop.f32.mrf.mxu0
  %v10493 = vadd.f32 %v10479, %v10492
  %v10494 = vpop.f32.mrf.mxu0
  %v10495 = vadd.f32 %v10481, %v10494
  %10496 = vdwg.mxu0
  %10497 = vmatpush.bf16.msra.mxu0 %v9531
  %10498 = vmatpush.bf16.msra.mxu0 %v9527
  %10499 = vmatpush.bf16.msra.mxu0 %v9523
  %10500 = vmatpush.bf16.msra.mxu0 %v9519
  %10501 = vmatpush.bf16.msra.mxu0 %v9515
  %10502 = vmatpush.bf16.msra.mxu0 %v9511
  %10503 = vmatpush.bf16.msra.mxu0 %v9507
  %10504 = vmatpush.bf16.msra.mxu0 %v9503
  %10505 = vmatmul.bf16.gmra.mxu0 %v7635
  %v10506 = vpop.f32.mrf.mxu0
  %v10507 = vadd.f32 %v10493, %v10506
  %v10508 = vpop.f32.mrf.mxu0
  %v10509 = vadd.f32 %v10495, %v10508
  %10510 = vdwg.mxu0
  %10511 = vmatpush.bf16.msra.mxu0 %v9563
  %10512 = vmatpush.bf16.msra.mxu0 %v9559
  %10513 = vmatpush.bf16.msra.mxu0 %v9555
  %10514 = vmatpush.bf16.msra.mxu0 %v9551
  %10515 = vmatpush.bf16.msra.mxu0 %v9547
  %10516 = vmatpush.bf16.msra.mxu0 %v9543
  %10517 = vmatpush.bf16.msra.mxu0 %v9539
  %10518 = vmatpush.bf16.msra.mxu0 %v9535
  %10519 = vmatmul.bf16.gmra.mxu0 %v7636
  %v10520 = vpop.f32.mrf.mxu0
  %v10521 = vadd.f32 %v10507, %v10520
  %v10522 = vpop.f32.mrf.mxu0
  %v10523 = vadd.f32 %v10509, %v10522
  %10524 = vdwg.mxu0
  %10525 = vmatpush.bf16.msra.mxu0 %v9595
  %10526 = vmatpush.bf16.msra.mxu0 %v9591
  %10527 = vmatpush.bf16.msra.mxu0 %v9587
  %10528 = vmatpush.bf16.msra.mxu0 %v9583
  %10529 = vmatpush.bf16.msra.mxu0 %v9579
  %10530 = vmatpush.bf16.msra.mxu0 %v9575
  %10531 = vmatpush.bf16.msra.mxu0 %v9571
  %10532 = vmatpush.bf16.msra.mxu0 %v9567
  %10533 = vmatmul.bf16.gmra.mxu0 %v7765
  %v10534 = vpop.f32.mrf.mxu0
  %v10535 = vadd.f32 %v10521, %v10534
  %v10536 = vpop.f32.mrf.mxu0
  %v10537 = vadd.f32 %v10523, %v10536
  %10538 = vdwg.mxu0
  %10539 = vmatpush.bf16.msra.mxu0 %v9627
  %10540 = vmatpush.bf16.msra.mxu0 %v9623
  %10541 = vmatpush.bf16.msra.mxu0 %v9619
  %10542 = vmatpush.bf16.msra.mxu0 %v9615
  %10543 = vmatpush.bf16.msra.mxu0 %v9611
  %10544 = vmatpush.bf16.msra.mxu0 %v9607
  %10545 = vmatpush.bf16.msra.mxu0 %v9603
  %10546 = vmatpush.bf16.msra.mxu0 %v9599
  %10547 = vmatmul.bf16.gmra.mxu0 %v7766
  %v10548 = vpop.f32.mrf.mxu0
  %v10549 = vadd.f32 %v10535, %v10548
  %v10550 = vpop.f32.mrf.mxu0
  %v10551 = vadd.f32 %v10537, %v10550
  %10552 = vdwg.mxu0
  %10553 = vmatpush.bf16.msra.mxu0 %v9659
  %10554 = vmatpush.bf16.msra.mxu0 %v9655
  %10555 = vmatpush.bf16.msra.mxu0 %v9651
  %10556 = vmatpush.bf16.msra.mxu0 %v9647
  %10557 = vmatpush.bf16.msra.mxu0 %v9643
  %10558 = vmatpush.bf16.msra.mxu0 %v9639
  %10559 = vmatpush.bf16.msra.mxu0 %v9635
  %10560 = vmatpush.bf16.msra.mxu0 %v9631
  %10561 = vmatmul.bf16.gmra.mxu0 %v7767
  %v10562 = vpop.f32.mrf.mxu0
  %v10563 = vadd.f32 %v10549, %v10562
  %v10564 = vpop.f32.mrf.mxu0
  %v10565 = vadd.f32 %v10551, %v10564
  %10566 = vdwg.mxu0
  %10567 = vmatpush.bf16.msra.mxu0 %v9691
  %10568 = vmatpush.bf16.msra.mxu0 %v9687
  %10569 = vmatpush.bf16.msra.mxu0 %v9683
  %10570 = vmatpush.bf16.msra.mxu0 %v9679
  %10571 = vmatpush.bf16.msra.mxu0 %v9675
  %10572 = vmatpush.bf16.msra.mxu0 %v9671
  %10573 = vmatpush.bf16.msra.mxu0 %v9667
  %10574 = vmatpush.bf16.msra.mxu0 %v9663
  %10575 = vmatmul.bf16.gmra.mxu0 %v7768
  %v10576 = vpop.f32.mrf.mxu0
  %v10577 = vadd.f32 %v10563, %v10576
  %v10578 = vpop.f32.mrf.mxu0
  %v10579 = vadd.f32 %v10565, %v10578
  %10580 = vdwg.mxu0
  %10581 = vmatpush.bf16.msra.mxu0 %v9340
  %10582 = vmatpush.bf16.msra.mxu0 %v9336
  %10583 = vmatpush.bf16.msra.mxu0 %v9332
  %10584 = vmatpush.bf16.msra.mxu0 %v9328
  %10585 = vmatpush.bf16.msra.mxu0 %v9324
  %10586 = vmatpush.bf16.msra.mxu0 %v9320
  %10587 = vmatpush.bf16.msra.mxu0 %v9316
  %10588 = vmatpush.bf16.msra.mxu0 %v9312
  %10589 = vmatmul.bf16.gmra.mxu0 %v7741
  %v10590 = vpop.f32.mrf.mxu0
  %v10591 = vadd.f32 0.0, %v10590
  %v10592 = vpop.f32.mrf.mxu0
  %v10593 = vadd.f32 0.0, %v10592
  %10594 = vdwg.mxu0
  %10595 = vmatpush.bf16.msra.mxu0 %v9372
  %10596 = vmatpush.bf16.msra.mxu0 %v9368
  %10597 = vmatpush.bf16.msra.mxu0 %v9364
  %10598 = vmatpush.bf16.msra.mxu0 %v9360
  %10599 = vmatpush.bf16.msra.mxu0 %v9356
  %10600 = vmatpush.bf16.msra.mxu0 %v9352
  %10601 = vmatpush.bf16.msra.mxu0 %v9348
  %10602 = vmatpush.bf16.msra.mxu0 %v9344
  %10603 = vmatmul.bf16.gmra.mxu0 %v7742
  %v10604 = vpop.f32.mrf.mxu0
  %v10605 = vadd.f32 %v10591, %v10604
  %v10606 = vpop.f32.mrf.mxu0
  %v10607 = vadd.f32 %v10593, %v10606
  %10608 = vdwg.mxu0
  %10609 = vmatpush.bf16.msra.mxu0 %v9404
  %10610 = vmatpush.bf16.msra.mxu0 %v9400
  %10611 = vmatpush.bf16.msra.mxu0 %v9396
  %10612 = vmatpush.bf16.msra.mxu0 %v9392
  %10613 = vmatpush.bf16.msra.mxu0 %v9388
  %10614 = vmatpush.bf16.msra.mxu0 %v9384
  %10615 = vmatpush.bf16.msra.mxu0 %v9380
  %10616 = vmatpush.bf16.msra.mxu0 %v9376
  %10617 = vmatmul.bf16.gmra.mxu0 %v7743
  %v10618 = vpop.f32.mrf.mxu0
  %v10619 = vadd.f32 %v10605, %v10618
  %v10620 = vpop.f32.mrf.mxu0
  %v10621 = vadd.f32 %v10607, %v10620
  %10622 = vdwg.mxu0
  %10623 = vmatpush.bf16.msra.mxu0 %v9436
  %10624 = vmatpush.bf16.msra.mxu0 %v9432
  %10625 = vmatpush.bf16.msra.mxu0 %v9428
  %10626 = vmatpush.bf16.msra.mxu0 %v9424
  %10627 = vmatpush.bf16.msra.mxu0 %v9420
  %10628 = vmatpush.bf16.msra.mxu0 %v9416
  %10629 = vmatpush.bf16.msra.mxu0 %v9412
  %10630 = vmatpush.bf16.msra.mxu0 %v9408
  %10631 = vmatmul.bf16.gmra.mxu0 %v7744
  %v10632 = vpop.f32.mrf.mxu0
  %v10633 = vadd.f32 %v10619, %v10632
  %v10634 = vpop.f32.mrf.mxu0
  %v10635 = vadd.f32 %v10621, %v10634
  %10636 = vdwg.mxu0
  %10637 = vmatpush.bf16.msra.mxu0 %v9468
  %10638 = vmatpush.bf16.msra.mxu0 %v9464
  %10639 = vmatpush.bf16.msra.mxu0 %v9460
  %10640 = vmatpush.bf16.msra.mxu0 %v9456
  %10641 = vmatpush.bf16.msra.mxu0 %v9452
  %10642 = vmatpush.bf16.msra.mxu0 %v9448
  %10643 = vmatpush.bf16.msra.mxu0 %v9444
  %10644 = vmatpush.bf16.msra.mxu0 %v9440
  %10645 = vmatmul.bf16.gmra.mxu0 %v7633
  %v10646 = vpop.f32.mrf.mxu0
  %v10647 = vadd.f32 %v10633, %v10646
  %v10648 = vpop.f32.mrf.mxu0
  %v10649 = vadd.f32 %v10635, %v10648
  %10650 = vdwg.mxu0
  %10651 = vmatpush.bf16.msra.mxu0 %v9500
  %10652 = vmatpush.bf16.msra.mxu0 %v9496
  %10653 = vmatpush.bf16.msra.mxu0 %v9492
  %10654 = vmatpush.bf16.msra.mxu0 %v9488
  %10655 = vmatpush.bf16.msra.mxu0 %v9484
  %10656 = vmatpush.bf16.msra.mxu0 %v9480
  %10657 = vmatpush.bf16.msra.mxu0 %v9476
  %10658 = vmatpush.bf16.msra.mxu0 %v9472
  %10659 = vmatmul.bf16.gmra.mxu0 %v7634
  %v10660 = vpop.f32.mrf.mxu0
  %v10661 = vadd.f32 %v10647, %v10660
  %v10662 = vpop.f32.mrf.mxu0
  %v10663 = vadd.f32 %v10649, %v10662
  %10664 = vdwg.mxu0
  %10665 = vmatpush.bf16.msra.mxu0 %v9532
  %10666 = vmatpush.bf16.msra.mxu0 %v9528
  %10667 = vmatpush.bf16.msra.mxu0 %v9524
  %10668 = vmatpush.bf16.msra.mxu0 %v9520
  %10669 = vmatpush.bf16.msra.mxu0 %v9516
  %10670 = vmatpush.bf16.msra.mxu0 %v9512
  %10671 = vmatpush.bf16.msra.mxu0 %v9508
  %10672 = vmatpush.bf16.msra.mxu0 %v9504
  %10673 = vmatmul.bf16.gmra.mxu0 %v7635
  %v10674 = vpop.f32.mrf.mxu0
  %v10675 = vadd.f32 %v10661, %v10674
  %v10676 = vpop.f32.mrf.mxu0
  %v10677 = vadd.f32 %v10663, %v10676
  %10678 = vdwg.mxu0
  %10679 = vmatpush.bf16.msra.mxu0 %v9564
  %10680 = vmatpush.bf16.msra.mxu0 %v9560
  %10681 = vmatpush.bf16.msra.mxu0 %v9556
  %10682 = vmatpush.bf16.msra.mxu0 %v9552
  %10683 = vmatpush.bf16.msra.mxu0 %v9548
  %10684 = vmatpush.bf16.msra.mxu0 %v9544
  %10685 = vmatpush.bf16.msra.mxu0 %v9540
  %10686 = vmatpush.bf16.msra.mxu0 %v9536
  %10687 = vmatmul.bf16.gmra.mxu0 %v7636
  %v10688 = vpop.f32.mrf.mxu0
  %v10689 = vadd.f32 %v10675, %v10688
  %v10690 = vpop.f32.mrf.mxu0
  %v10691 = vadd.f32 %v10677, %v10690
  %10692 = vdwg.mxu0
  %10693 = vmatpush.bf16.msra.mxu0 %v9596
  %10694 = vmatpush.bf16.msra.mxu0 %v9592
  %10695 = vmatpush.bf16.msra.mxu0 %v9588
  %10696 = vmatpush.bf16.msra.mxu0 %v9584
  %10697 = vmatpush.bf16.msra.mxu0 %v9580
  %10698 = vmatpush.bf16.msra.mxu0 %v9576
  %10699 = vmatpush.bf16.msra.mxu0 %v9572
  %10700 = vmatpush.bf16.msra.mxu0 %v9568
  %10701 = vmatmul.bf16.gmra.mxu0 %v7765
  %v10702 = vpop.f32.mrf.mxu0
  %v10703 = vadd.f32 %v10689, %v10702
  %v10704 = vpop.f32.mrf.mxu0
  %v10705 = vadd.f32 %v10691, %v10704
  %10706 = vdwg.mxu0
  %10707 = vmatpush.bf16.msra.mxu0 %v9628
  %10708 = vmatpush.bf16.msra.mxu0 %v9624
  %10709 = vmatpush.bf16.msra.mxu0 %v9620
  %10710 = vmatpush.bf16.msra.mxu0 %v9616
  %10711 = vmatpush.bf16.msra.mxu0 %v9612
  %10712 = vmatpush.bf16.msra.mxu0 %v9608
  %10713 = vmatpush.bf16.msra.mxu0 %v9604
  %10714 = vmatpush.bf16.msra.mxu0 %v9600
  %10715 = vmatmul.bf16.gmra.mxu0 %v7766
  %v10716 = vpop.f32.mrf.mxu0
  %v10717 = vadd.f32 %v10703, %v10716
  %v10718 = vpop.f32.mrf.mxu0
  %v10719 = vadd.f32 %v10705, %v10718
  %10720 = vdwg.mxu0
  %10721 = vmatpush.bf16.msra.mxu0 %v9660
  %10722 = vmatpush.bf16.msra.mxu0 %v9656
  %10723 = vmatpush.bf16.msra.mxu0 %v9652
  %10724 = vmatpush.bf16.msra.mxu0 %v9648
  %10725 = vmatpush.bf16.msra.mxu0 %v9644
  %10726 = vmatpush.bf16.msra.mxu0 %v9640
  %10727 = vmatpush.bf16.msra.mxu0 %v9636
  %10728 = vmatpush.bf16.msra.mxu0 %v9632
  %10729 = vmatmul.bf16.gmra.mxu0 %v7767
  %v10730 = vpop.f32.mrf.mxu0
  %v10731 = vadd.f32 %v10717, %v10730
  %v10732 = vpop.f32.mrf.mxu0
  %v10733 = vadd.f32 %v10719, %v10732
  %10734 = vdwg.mxu0
  %10735 = vmatpush.bf16.msra.mxu0 %v9692
  %10736 = vmatpush.bf16.msra.mxu0 %v9688
  %10737 = vmatpush.bf16.msra.mxu0 %v9684
  %10738 = vmatpush.bf16.msra.mxu0 %v9680
  %10739 = vmatpush.bf16.msra.mxu0 %v9676
  %10740 = vmatpush.bf16.msra.mxu0 %v9672
  %10741 = vmatpush.bf16.msra.mxu0 %v9668
  %10742 = vmatpush.bf16.msra.mxu0 %v9664
  %10743 = vmatmul.bf16.gmra.mxu0 %v7768
  %v10744 = vpop.f32.mrf.mxu0
  %v10745 = vadd.f32 %v10731, %v10744
  %v10746 = vpop.f32.mrf.mxu0
  %v10747 = vadd.f32 %v10733, %v10746
  %10748 = vdwg.mxu0
  %v10749 = vld [vmem:[%s17] ss:$2 sm:$0xf]
  %v10751 = vperm.slane %v10749, 0
  %v10752 = vperm.slane %v10749, 1
  %v10753 = vperm.slane %v10749, 2
  %v10754 = vperm.slane %v10749, 3
  %v10759 = vmul.f32 %v10241, %v10751
  %v10760 = vmul.f32 %v10409, %v10752
  %v10761 = vmul.f32 %v10577, %v10753
  %v10762 = vmul.f32 %v10745, %v10754
  %v10763 = vmul.f32 %v10243, %v10751
  %v10764 = vmul.f32 %v10411, %v10752
  %v10765 = vmul.f32 %v10579, %v10753
  %v10766 = vmul.f32 %v10747, %v10754
  %s10767 = scalar_lea.vmem %s17, 1
  %v10768 = vld [vmem:[%s10767] ss:$2 sm:$0xf]
  %v10770 = vperm.slane %v10768, 0
  %v10771 = vperm.slane %v10768, 1
  %v10772 = vperm.slane %v10768, 2
  %v10773 = vperm.slane %v10768, 3
  %v10778 = vadd.f32 %v10759, %v10770
  %v10779 = vadd.f32 %v10760, %v10771
  %v10780 = vadd.f32 %v10761, %v10772
  %v10781 = vadd.f32 %v10762, %v10773
  %v10782 = vadd.f32 %v10763, %v10770
  %v10783 = vadd.f32 %v10764, %v10771
  %v10784 = vadd.f32 %v10765, %v10772
  %v10785 = vadd.f32 %v10766, %v10773
  %v10786 = vunpack.c.l.bf16 %v4440
  %v10787 = vunpack.c.h.bf16 %v4440
  %v10788 = vunpack.c.l.bf16 %v4441
  %v10789 = vunpack.c.h.bf16 %v4441
  %v10790 = vunpack.c.l.bf16 %v4442
  %v10791 = vunpack.c.h.bf16 %v4442
  %v10792 = vunpack.c.l.bf16 %v4443
  %v10793 = vunpack.c.h.bf16 %v4443
  %v10794 = vadd.f32 %v10778, %v10786
  %v10795 = vadd.f32 %v10779, %v10787
  %v10796 = vadd.f32 %v10780, %v10788
  %v10797 = vadd.f32 %v10781, %v10789
  %v10798 = vadd.f32 %v10782, %v10790
  %v10799 = vadd.f32 %v10783, %v10791
  %v10800 = vadd.f32 %v10784, %v10792
  %v10801 = vadd.f32 %v10785, %v10793
  %v10802 = vld [vmem:[%s18] sm:$0xf]
  %v10804 = vperm.slane %v10802, 0
  %v10805 = vperm.slane %v10802, 1
  %v10806 = vperm.slane %v10802, 2
  %v10807 = vperm.slane %v10802, 3
  %v10812 = vmul.f32 %v10794, %v10804
  %v10813 = vmul.f32 %v10795, %v10805
  %v10814 = vmul.f32 %v10796, %v10806
  %v10815 = vmul.f32 %v10797, %v10807
  %v10816 = vmul.f32 %v10798, %v10804
  %v10817 = vmul.f32 %v10799, %v10805
  %v10818 = vmul.f32 %v10800, %v10806
  %v10819 = vmul.f32 %v10801, %v10807
  %v10820 = vadd.f32 %v10812, %v10813
  %v10821 = vadd.f32 %v10820, %v10814
  %v10822 = vadd.f32 %v10821, %v10815
  %10823 = vadd.xlane.f32.xlu0 %v10822
  %v10824 = vpop.xlane.xlu0 %10823
  %v10825 = vadd.f32 %v10816, %v10817
  %v10826 = vadd.f32 %v10825, %v10818
  %v10827 = vadd.f32 %v10826, %v10819
  %10828 = vadd.xlane.f32.xlu0 %v10827
  %v10829 = vpop.xlane.xlu0 %10828
  %v10830 = vld [vmem:[#allocation2] sm:$0x1]
  %v10832 = vperm.slane %v10830, 0
  %v10834 = vadd.f32 %v10824, %v10832
  %v10835 = vadd.f32 %v10829, %v10832
  %v10836 = vld [vmem:[%s1] sm:$0xff]
  %v10837 = vld [vmem:[%s1 + $0x8] sm:$0xff]
  %v10838 = vmul.f32 %v10834, %v10836
  %v10839 = vmul.f32 %v10835, %v10837
  %vm10840 = vcmask 7168
  %10841 = vst.msk [vmem:[%s20] sm:$0xff] %vm10840, %v10838
  %10842 = vst.msk [vmem:[%s20 + $0x8] sm:$0xff] %vm10840, %v10839
  // Predicated region
  $region82: #{cnn_forward.1} parent=0 // pred_check
    _
  $region83: #{cnn_forward.1} parent=0 // pred_check_branch
    %10844 = sbr.rel (0) target = $region85
  $region84: #{cnn_forward.1} parent=0 // pred_region
    _
  $region85: #{cnn_forward.1} parent=0 // pred_fallthru
    _
  // Predicated region
  $region86: #{cnn_forward.1} parent=0 // pred_check
    _
  $region87: #{cnn_forward.1} parent=0 // pred_check_branch
    %10846 = sbr.rel (0) target = $region89
  $region88: #{cnn_forward.1} parent=0 // pred_region
    _
  $region89: #{cnn_forward.1} parent=0 // pred_fallthru
    _

</llo_original>
